<compile_context>
chip_gen: v7x
topology: tpu7x:2x2x1
jax: 0.10.0
libtpu: 0.0.40
codegen_flags: <defaults>
</compile_context>

<pallas_src>
import numpy as np
import jax
import jax.numpy as jnp
from jax.experimental import pallas as pl
from jax.experimental.pallas import tpu as pltpu

# ----------------------------- model config ---------------------------------
VIEW = (-1, 1, 16, 16)          # small spatial size (module default is 28x28)
LAYERS_HIDDEN = [64, 32]        # KAN hidden dims; full dims are [256] + LAYERS_HIDDEN
CONV_CHANNELS = [(VIEW[1], 32), (32, 64), (64, 128), (128, 256)]   # EnhancedFeatureExtractor
GRID_MIN, GRID_MAX, NUM_GRIDS = -1.2, 0.2, 8
INV_DENOM = 0.5
LN_EPS = 1e-5
GRID_VALS = tuple(float(v) for v in np.linspace(GRID_MIN, GRID_MAX, NUM_GRIDS))
LANE = 128


def _round_up(x, m):
    return (x + m - 1) // m * m


# --------------------------- Pallas kernels ---------------------------------
def conv_pool(cols, w, b):
    """Fused 3x3 conv (as 4 pool-window matmuls) + bias + ReLU + 2x2 MaxPool.

    cols: (4, Mq, Kp) bf16 im2col patches, axis 0 = position inside the 2x2
          pool window, Mq = batch*(H/2)*(W/2) pooled output rows.
    w:    (Kp, Np) bf16 with Np a multiple of 128 (lane-dense output).
    b:    (1, Np) f32.
    Returns the already-pooled (Mq, Np) bf16 activation."""
    _, Mq, Kp = cols.shape
    Np = w.shape[1]
    Mq_pad = _round_up(Mq, 8)
    if Mq_pad > 64:
        # At least 2 grid steps (v7x megacore), tile capped at 512 rows.
        tm = min(512, _round_up((Mq_pad + 1) // 2, 8))
    else:
        tm = Mq_pad
    Mq_pad = _round_up(Mq_pad, tm)
    if Mq_pad != Mq:
        cols = jnp.pad(cols, ((0, 0), (0, Mq_pad - Mq), (0, 0)))

    def kernel(c_ref, w_ref, b_ref, o_ref):
        wv = w_ref[...]
        bv = b_ref[...]
        m = None
        for q in range(4):
            y = jnp.dot(c_ref[q], wv, preferred_element_type=jnp.float32) + bv
            y = jnp.maximum(y, 0.0)
            m = y if m is None else jnp.maximum(m, y)
        o_ref[...] = m.astype(o_ref.dtype)

    out = pl.pallas_call(
        kernel,
        out_shape=jax.ShapeDtypeStruct((Mq_pad, Np), jnp.bfloat16),
        grid=(Mq_pad // tm,),
        in_specs=[
            pl.BlockSpec((4, tm, Kp), lambda i: (0, i, 0)),
            pl.BlockSpec((Kp, Np), lambda i: (0, 0)),
            pl.BlockSpec((1, Np), lambda i: (0, 0)),
        ],
        out_specs=pl.BlockSpec((tm, Np), lambda i: (i, 0)),
        compiler_params=pltpu.CompilerParams(
            dimension_semantics=("parallel",)),
        cost_estimate=pl.CostEstimate(
            flops=2 * 4 * Mq_pad * Kp * Np,
            transcendentals=0,
            bytes_accessed=4 * Mq_pad * Kp * 2 + Kp * Np * 2 + Np * 4 + Mq_pad * Np * 2),
    )(cols, w, b)
    return out[:Mq]


def fused_head(cols3, batch, conv3_p, conv4_p, kan_p):
    """conv3 + MaxPool + conv4 + AdaptiveAvgPool2d((1,1)) + all FasterKAN
    layers fused into one pallas_call, tiled over the batch.

    cols3: (16, batch, K3) bf16 — axis 0 is the conv3 output position on the
           4x4 feature map (i*4 + j); K3 = 9*64 patches of the conv2 output.
    conv3_p = (w3 (K3p, 128) bf16, b3 (1, 128) f32)
    conv4_p = (w4 (9*128, 256) bf16 with per-offset 128-row blocks, b4 (1,256) f32)
    kan_p[l] = (gamma (1,D) f32, beta (1,D) f32, wflat (G*D, Opad) bf16, O_true)
    """
    w3, b3 = conv3_p
    w4, b4 = conv4_p
    K3p, N3 = w3.shape
    C4 = w4.shape[0] // 9
    N4 = w4.shape[1]
    P3, B_, K3 = cols3.shape
    if K3 != K3p:
        cols3 = jnp.pad(cols3, ((0, 0), (0, 0), (0, K3p - K3)))

    Mp = _round_up(max(batch, 8), 8)
    BP = min(128, Mp)                 # batch rows per grid step, scales with batch
    Mp = _round_up(Mp, BP)
    if Mp != B_:
        cols3 = jnp.pad(cols3, ((0, 0), (0, Mp - B_), (0, 0)))

    n_layers = len(kan_p)
    dims = [g.shape[1] for (g, _, _, _) in kan_p]
    true_out = [od for (_, _, _, od) in kan_p]
    o_lastp = kan_p[-1][2].shape[1]

    def kernel(*refs):
        c3_ref, w3_ref, b3_ref, w4_ref, b4_ref = refs[:5]
        o_ref = refs[-1]

        # --- conv3 (3x3 pad 1 on the 4x4 map) + ReLU + 2x2 MaxPool -----------
        w3v = w3_ref[...]
        b3v = b3_ref[...]
        pooled = []                                   # 2x2 pooled map, (BP, 128) bf16
        for io in range(2):
            for jo in range(2):
                m = None
                for qi in range(2):
                    for qj in range(2):
                        pos = (2 * io + qi) * 4 + (2 * jo + qj)
                        y = jnp.dot(c3_ref[pos], w3v,
                                    preferred_element_type=jnp.float32) + b3v
                        y = jnp.maximum(y, 0.0)
                        m = y if m is None else jnp.maximum(m, y)
                pooled.append(m.astype(jnp.bfloat16))

        # --- conv4 (3x3 pad 1 on the 2x2 map) + ReLU + global average pool ---
        b4v = b4_ref[...]
        h = None
        for i in range(2):
            for j in range(2):
                acc = None
                for ka in range(3):
                    for kb in range(3):
                        ii, jj = i + ka - 1, j + kb - 1
                        if 0 <= ii < 2 and 0 <= jj < 2:
                            idx9 = ka * 3 + kb
                            t = jnp.dot(pooled[ii * 2 + jj],
                                        w4_ref[pl.ds(idx9 * C4, C4), :],
                                        preferred_element_type=jnp.float32)
                            acc = t if acc is None else acc + t
                y4 = jnp.maximum(acc + b4v, 0.0)
                h = y4 if h is None else h + y4
        h = h * 0.25                                   # AdaptiveAvgPool2d((1,1)), f32

        # --- FasterKAN layers: LayerNorm -> RSWAF basis -> spline matmuls ----
        for l in range(n_layers):
            g_ref, be_ref, wl_ref = refs[5 + 3 * l: 8 + 3 * l]
            D = dims[l]
            mean = jnp.mean(h, axis=-1, keepdims=True)
            var = jnp.mean((h - mean) ** 2, axis=-1, keepdims=True)
            xn = (h - mean) * jax.lax.rsqrt(var + LN_EPS)
            xn = xn * g_ref[...] + be_ref[...]
            # TODO(synk): at large batch replace the 8 tanh evaluations with the
            # shared-tanh identity (one tanh + pl.reciprocal per grid point) to
            # relieve the single EUP unit.
            acc = None
            for gi in range(NUM_GRIDS):
                basis = 1.0 - jnp.tanh((xn - GRID_VALS[gi]) * INV_DENOM) ** 2
                t = jnp.dot(basis.astype(jnp.bfloat16),
                            wl_ref[pl.ds(gi * D, D), :],
                            preferred_element_type=jnp.float32)
                acc = t if acc is None else acc + t
            h = acc if l == n_layers - 1 else acc[:, :true_out[l]]
        o_ref[...] = h

    in_specs = [
        pl.BlockSpec((16, BP, K3p), lambda i: (0, i, 0)),
        pl.BlockSpec((K3p, N3), lambda i: (0, 0)),
        pl.BlockSpec((1, N3), lambda i: (0, 0)),
        pl.BlockSpec((9 * C4, N4), lambda i: (0, 0)),
        pl.BlockSpec((1, N4), lambda i: (0, 0)),
    ]
    args = [cols3, w3, b3, w4, b4]
    flops = 2 * Mp * 16 * K3p * N3 + 2 * Mp * 16 * C4 * N4
    trans = 0
    bytes_acc = 16 * Mp * K3p * 2 + K3p * N3 * 2 + N3 * 4 + 9 * C4 * N4 * 2 + N4 * 4
    for (gm, be, wf, _od) in kan_p:
        D = gm.shape[1]
        Op = wf.shape[1]
        in_specs += [pl.BlockSpec((1, D), lambda i: (0, 0)),
                     pl.BlockSpec((1, D), lambda i: (0, 0)),
                     pl.BlockSpec((NUM_GRIDS * D, Op), lambda i: (0, 0))]
        args += [gm, be, wf]
        flops += 2 * Mp * NUM_GRIDS * D * Op
        trans += Mp * NUM_GRIDS * D
        bytes_acc += wf.size * 2 + 2 * D * 4
    bytes_acc += Mp * o_lastp * 4

    # Note: at batch <= 8 the grid has a single step (one v7x TensorCore idles);
    # per-step VMEM at BP=128 is ~7 MiB, well inside the scoped limit on all gens.
    out = pl.pallas_call(
        kernel,
        out_shape=jax.ShapeDtypeStruct((Mp, o_lastp), jnp.float32),
        grid=(Mp // BP,),
        in_specs=in_specs,
        out_specs=pl.BlockSpec((BP, o_lastp), lambda i: (i, 0)),
        compiler_params=pltpu.CompilerParams(
            dimension_semantics=("parallel",)),
        cost_estimate=pl.CostEstimate(
            flops=int(flops), transcendentals=int(trans),
            bytes_accessed=int(bytes_acc)),
    )(*args)
    return out[:batch, :true_out[-1]]


# ------------------------------ JAX glue -------------------------------------
def _im2col(x):
    """x: (B, H, W, C) -> (B, H, W, 9*C) 3x3 pad-1 patches, (di, dj, c) column order."""
    B, H, W, C = x.shape
    xp = jnp.pad(x, ((0, 0), (1, 1), (1, 1), (0, 0)))
    slabs = [xp[:, di:di + H, dj:dj + W, :] for di in range(3) for dj in range(3)]
    return jnp.concatenate(slabs, axis=-1)


def im2col_pool_split(x):
    """(B, H, W, C) -> (4, B*(H//2)*(W//2), 9*C); axis 0 = position in the 2x2 pool window."""
    B, H, W, C = x.shape
    p = _im2col(x).reshape(B, H // 2, 2, W // 2, 2, 9 * C)
    p = jnp.transpose(p, (2, 4, 0, 1, 3, 5))
    return p.reshape(4, B * (H // 2) * (W // 2), 9 * C)


def im2col_positions(x):
    """(B, H, W, C) -> (H*W, B, 9*C); axis 0 = conv output position i*W + j."""
    B, H, W, C = x.shape
    p = _im2col(x).reshape(B, H * W, 9 * C)
    return jnp.transpose(p, (1, 0, 2))


def maxpool_2x2(x):
    B, H, W, C = x.shape
    return x.reshape(B, H // 2, 2, W // 2, 2, C).max(axis=(2, 4))


def forward(x_in, kp):
    """Full FasterKANvolver forward.  x_in: any shape reshapable to VIEW (NCHW)."""
    C, H, W = VIEW[1], VIEW[2], VIEW[3]
    x = jnp.transpose(x_in.reshape(-1, C, H, W), (0, 2, 3, 1)).astype(jnp.bfloat16)
    batch = x.shape[0]
    # conv1 + pool, conv2 + pool: one fused Pallas kernel each (pool in-kernel)
    for (wf, bf, cout) in kp["convs"]:
        B_, H_, W_, _ = x.shape
        cols = im2col_pool_split(x)                      # (4, B*H/2*W/2, 9*Cin)
        Kp = wf.shape[0]
        if cols.shape[-1] != Kp:
            cols = jnp.pad(cols, ((0, 0), (0, 0), (0, Kp - cols.shape[-1])))
        y = conv_pool(cols, wf, bf)                      # pooled (B*H/2*W/2, Np)
        x = y[:, :cout].reshape(B_, H_ // 2, W_ // 2, cout)
    # conv3 + pool + conv4 + avg pool + all FasterKAN layers: one fused kernel
    cols3 = im2col_positions(x)                          # (16, B, 9*64)
    return fused_head(cols3, batch, kp["conv3"], kp["conv4"], kp["kan"])


# ------------------------- pure-JAX f32 reference -----------------------------
def reference_forward(x_in, params):
    C, H, W = VIEW[1], VIEW[2], VIEW[3]
    x = jnp.transpose(x_in.reshape(-1, C, H, W), (0, 2, 3, 1))
    for i, (wc, bc) in enumerate(params["convs"]):
        Bc, Hc, Wc, _ = x.shape
        cols = _im2col(x).reshape(Bc * Hc * Wc, -1)
        y = jnp.maximum(cols @ wc.reshape(-1, wc.shape[-1]) + bc, 0.0)
        x = y.reshape(Bc, Hc, Wc, -1)
        if i < 3:
            x = maxpool_2x2(x)
    h = jnp.mean(x, axis=(1, 2))            # AdaptiveAvgPool2d((1,1)) + flatten
    grid = jnp.asarray(GRID_VALS, jnp.float32)
    for (gamma, beta, w3) in params["kan"]:
        mean = h.mean(-1, keepdims=True)
        var = ((h - mean) ** 2).mean(-1, keepdims=True)
        xn = (h - mean) / jnp.sqrt(var + LN_EPS) * gamma + beta
        basis = 1.0 - jnp.tanh((xn[..., None] - grid) * INV_DENOM) ** 2   # (B, D, G)
        G, D, O = w3.shape
        w_flat = jnp.transpose(w3, (1, 0, 2)).reshape(D * G, O)           # torch d*G+g order
        h = basis.reshape(h.shape[0], -1) @ w_flat
    return h


# ------------------------------ params ----------------------------------------
def init_params(key):
    params = {"convs": [], "kan": []}
    for cin, cout in CONV_CHANNELS:
        key, k1, k2 = jax.random.split(key, 3)
        wc = jax.random.normal(k1, (3, 3, cin, cout), jnp.float32) / np.sqrt(9 * cin)
        bc = 0.01 * jax.random.normal(k2, (cout,), jnp.float32)
        params["convs"].append((wc, bc))
    dims = [256] + LAYERS_HIDDEN
    for din, dout in zip(dims[:-1], dims[1:]):
        key, k1 = jax.random.split(key)
        gamma = jnp.ones((din,), jnp.float32)       # torch LayerNorm default affine init
        beta = jnp.zeros((din,), jnp.float32)
        w3 = jax.random.normal(k1, (NUM_GRIDS, din, dout), jnp.float32) / np.sqrt(din * NUM_GRIDS)
        params["kan"].append((gamma, beta, w3))
    return params


def pack_params(params):
    """Torch-layout f32 params -> kernel layout: bf16 matmul operands, weights
    flattened for im2col / per-offset / spline matmuls, K and output channels
    padded to 128 lanes where profitable."""
    kp = {"convs": [], "conv3": None, "conv4": None, "kan": []}
    for idx, (wc, bc) in enumerate(params["convs"]):
        cin, cout = wc.shape[2], wc.shape[3]
        K = 9 * cin
        Kp = K if K < LANE else _round_up(K, LANE)     # conv1 keeps K=9 (avoid HBM blowup)
        Np = _round_up(cout, LANE)
        wf = jnp.pad(wc.reshape(K, cout),
                     ((0, Kp - K), (0, Np - cout))).astype(jnp.bfloat16)
        bf = jnp.pad(bc, (0, Np - cout)).reshape(1, Np).astype(jnp.float32)
        if idx < 2:
            kp["convs"].append((wf, bf, cout))
        elif idx == 2:
            kp["conv3"] = (wf, bf)                     # (640, 128) / (1, 128)
        else:
            kp["conv4"] = (wf, bf)                     # (1152, 256) per-offset 128-row blocks
    for (gamma, beta, w3) in params["kan"]:
        G, D, O = w3.shape
        opad = _round_up(O, LANE)
        # row order g*D + d  <->  torch spline weight column d*G + g (same (g,d,o) element)
        wflat = jnp.pad(w3.reshape(G * D, O), ((0, 0), (0, opad - O))).astype(jnp.bfloat16)
        kp["kan"].append((gamma.reshape(1, D).astype(jnp.float32),
                          beta.reshape(1, D).astype(jnp.float32),
                          wflat, O))
    return kp


# --------------------------------- main ---------------------------------------
if __name__ == "__main__":
    key = jax.random.PRNGKey(0)
    key, kx = jax.random.split(key)
    params = init_params(key)
    kparams = pack_params(params)

    # input: batch=2, NCHW, reshaped by the module's view = (-1, 1, 16, 16)
    x = jax.random.normal(kx, (2, VIEW[1], VIEW[2], VIEW[3]), jnp.float32)

    out = jax.jit(lambda xx: forward(xx, kparams))(x)
    out = jax.block_until_ready(out)

    ref = reference_forward(x, params)
    # bf16 MXU operands (f32 accumulate) vs. pure-f32 reference -> 3e-2 tolerance
    np.testing.assert_allclose(np.asarray(out, np.float32), np.asarray(ref),
                               rtol=3e-2, atol=3e-2)
    assert out.shape == (2, LAYERS_HIDDEN[-1])

    print("KERNEL_OK")
</pallas_src>

<mosaic_0001>
module attributes {stable_mosaic.version = 11 : i64} {
  func.func @kernel(%arg0: i32, %arg1: memref<4x64x9xbf16, #tpu.memory_space<vmem>>, %arg2: memref<9x128xbf16, #tpu.memory_space<vmem>>, %arg3: memref<1x128xf32, #tpu.memory_space<vmem>>, %arg4: memref<64x128xbf16, #tpu.memory_space<vmem>>) attributes {dimension_semantics = [#tpu.dimension_semantics<parallel>], iteration_bounds = array<i64: 2>, scalar_prefetch = 0 : i64, scratch_operands = 0 : i64, tpu.core_type = #tpu.core_type<tc>, window_params = [{transform_indices = @transform_0, window_bounds = array<i64: 4, 64, 9>}, {pipeline_mode = #tpu.pipeline_mode<synchronous>, transform_indices = @transform_1, window_bounds = array<i64: 9, 128>}, {pipeline_mode = #tpu.pipeline_mode<synchronous>, transform_indices = @transform_2, window_bounds = array<i64: 1, 128>}, {transform_indices = @transform_3, window_bounds = array<i64: 64, 128>}]} {
    %c0 = arith.constant 0 : index
    %c0_0 = arith.constant 0 : index
    %0 = vector.load %arg2[%c0, %c0_0] : memref<9x128xbf16, #tpu.memory_space<vmem>>, vector<9x128xbf16>
    %c0_1 = arith.constant 0 : index
    %c0_2 = arith.constant 0 : index
    %1 = vector.load %arg3[%c0_1, %c0_2] : memref<1x128xf32, #tpu.memory_space<vmem>>, vector<1x128xf32>
    %c0_3 = arith.constant 0 : index
    %c0_4 = arith.constant 0 : index
    %c0_5 = arith.constant 0 : index
    %2 = vector.load %arg1[%c0_3, %c0_4, %c0_5] : memref<4x64x9xbf16, #tpu.memory_space<vmem>>, vector<1x64x9xbf16>
    %3 = vector.shape_cast %2 : vector<1x64x9xbf16> to vector<64x9xbf16>
    %cst = arith.constant dense<0.000000e+00> : vector<64x128xf32>
    %4 = tpu.matmul %3, %0, %cst {dimension_numbers = #tpu.dot_dimension_numbers<[1], [0], [0], [1], [0, 0, 1, 1], [], []>} : vector<64x9xbf16>, vector<9x128xbf16>, vector<64x128xf32> -> vector<64x128xf32>
    %5 = vector.broadcast %1 : vector<1x128xf32> to vector<64x128xf32>
    %6 = arith.addf %4, %5 : vector<64x128xf32>
    %cst_6 = arith.constant 0.000000e+00 : f32
    %7 = vector.broadcast %cst_6 : f32 to vector<64x128xf32>
    %8 = arith.maximumf %6, %7 : vector<64x128xf32>
    %c1 = arith.constant 1 : index
    %c0_7 = arith.constant 0 : index
    %c0_8 = arith.constant 0 : index
    %9 = vector.load %arg1[%c1, %c0_7, %c0_8] : memref<4x64x9xbf16, #tpu.memory_space<vmem>>, vector<1x64x9xbf16>
    %10 = vector.shape_cast %9 : vector<1x64x9xbf16> to vector<64x9xbf16>
    %cst_9 = arith.constant dense<0.000000e+00> : vector<64x128xf32>
    %11 = tpu.matmul %10, %0, %cst_9 {dimension_numbers = #tpu.dot_dimension_numbers<[1], [0], [0], [1], [0, 0, 1, 1], [], []>} : vector<64x9xbf16>, vector<9x128xbf16>, vector<64x128xf32> -> vector<64x128xf32>
    %12 = vector.broadcast %1 : vector<1x128xf32> to vector<64x128xf32>
    %13 = arith.addf %11, %12 : vector<64x128xf32>
    %cst_10 = arith.constant 0.000000e+00 : f32
    %14 = vector.broadcast %cst_10 : f32 to vector<64x128xf32>
    %15 = arith.maximumf %13, %14 : vector<64x128xf32>
    %16 = arith.maximumf %8, %15 : vector<64x128xf32>
    %c2 = arith.constant 2 : index
    %c0_11 = arith.constant 0 : index
    %c0_12 = arith.constant 0 : index
    %17 = vector.load %arg1[%c2, %c0_11, %c0_12] : memref<4x64x9xbf16, #tpu.memory_space<vmem>>, vector<1x64x9xbf16>
    %18 = vector.shape_cast %17 : vector<1x64x9xbf16> to vector<64x9xbf16>
    %cst_13 = arith.constant dense<0.000000e+00> : vector<64x128xf32>
    %19 = tpu.matmul %18, %0, %cst_13 {dimension_numbers = #tpu.dot_dimension_numbers<[1], [0], [0], [1], [0, 0, 1, 1], [], []>} : vector<64x9xbf16>, vector<9x128xbf16>, vector<64x128xf32> -> vector<64x128xf32>
    %20 = vector.broadcast %1 : vector<1x128xf32> to vector<64x128xf32>
    %21 = arith.addf %19, %20 : vector<64x128xf32>
    %cst_14 = arith.constant 0.000000e+00 : f32
    %22 = vector.broadcast %cst_14 : f32 to vector<64x128xf32>
    %23 = arith.maximumf %21, %22 : vector<64x128xf32>
    %24 = arith.maximumf %16, %23 : vector<64x128xf32>
    %c3 = arith.constant 3 : index
    %c0_15 = arith.constant 0 : index
    %c0_16 = arith.constant 0 : index
    %25 = vector.load %arg1[%c3, %c0_15, %c0_16] : memref<4x64x9xbf16, #tpu.memory_space<vmem>>, vector<1x64x9xbf16>
    %26 = vector.shape_cast %25 : vector<1x64x9xbf16> to vector<64x9xbf16>
    %cst_17 = arith.constant dense<0.000000e+00> : vector<64x128xf32>
    %27 = tpu.matmul %26, %0, %cst_17 {dimension_numbers = #tpu.dot_dimension_numbers<[1], [0], [0], [1], [0, 0, 1, 1], [], []>} : vector<64x9xbf16>, vector<9x128xbf16>, vector<64x128xf32> -> vector<64x128xf32>
    %28 = vector.broadcast %1 : vector<1x128xf32> to vector<64x128xf32>
    %29 = arith.addf %27, %28 : vector<64x128xf32>
    %cst_18 = arith.constant 0.000000e+00 : f32
    %30 = vector.broadcast %cst_18 : f32 to vector<64x128xf32>
    %31 = arith.maximumf %29, %30 : vector<64x128xf32>
    %32 = arith.maximumf %24, %31 : vector<64x128xf32>
    %33 = arith.truncf %32 : vector<64x128xf32> to vector<64x128xbf16>
    %c0_19 = arith.constant 0 : index
    %c0_20 = arith.constant 0 : index
    %34 = vector.load %arg4[%c0_19, %c0_20] : memref<64x128xbf16, #tpu.memory_space<vmem>>, vector<64x128xbf16>
    tpu.vector_store %arg4[%c0_19, %c0_20], %33 {strides = array<i32>} : memref<64x128xbf16, #tpu.memory_space<vmem>>, vector<64x128xbf16>,
    return
  }
  func.func @transform_0(%arg0: i32) -> (i32, i32, i32) {
    %c0_i32 = arith.constant 0 : i32
    %c0_i32_0 = arith.constant 0 : i32
    %c0_i32_1 = arith.constant 0 : i32
    return %c0_i32, %arg0, %c0_i32_0 : i32, i32, i32
  }
  func.func @transform_1(%arg0: i32) -> (i32, i32) {
    %c0_i32 = arith.constant 0 : i32
    %c0_i32_0 = arith.constant 0 : i32
    %c0_i32_1 = arith.constant 0 : i32
    return %c0_i32, %c0_i32_0 : i32, i32
  }
  func.func @transform_2(%arg0: i32) -> (i32, i32) {
    %c0_i32 = arith.constant 0 : i32
    %c0_i32_0 = arith.constant 0 : i32
    %c0_i32_1 = arith.constant 0 : i32
    return %c0_i32, %c0_i32_0 : i32, i32
  }
  func.func @transform_3(%arg0: i32) -> (i32, i32) {
    %c0_i32 = arith.constant 0 : i32
    %c0_i32_0 = arith.constant 0 : i32
    return %arg0, %c0_i32 : i32, i32
  }
}

module attributes {stable_mosaic.version = 11 : i64} {
  func.func @kernel(%arg0: i32, %arg1: memref<4x32x384xbf16, #tpu.memory_space<vmem>>, %arg2: memref<384x128xbf16, #tpu.memory_space<vmem>>, %arg3: memref<1x128xf32, #tpu.memory_space<vmem>>, %arg4: memref<32x128xbf16, #tpu.memory_space<vmem>>) attributes {dimension_semantics = [#tpu.dimension_semantics<parallel>], iteration_bounds = array<i64: 1>, scalar_prefetch = 0 : i64, scratch_operands = 0 : i64, tpu.core_type = #tpu.core_type<tc>, window_params = [{transform_indices = @transform_0, window_bounds = array<i64: 4, 32, 384>}, {pipeline_mode = #tpu.pipeline_mode<synchronous>, transform_indices = @transform_1, window_bounds = array<i64: 384, 128>}, {pipeline_mode = #tpu.pipeline_mode<synchronous>, transform_indices = @transform_2, window_bounds = array<i64: 1, 128>}, {transform_indices = @transform_3, window_bounds = array<i64: 32, 128>}]} {
    %c0 = arith.constant 0 : index
    %c0_0 = arith.constant 0 : index
    %0 = vector.load %arg2[%c0, %c0_0] : memref<384x128xbf16, #tpu.memory_space<vmem>>, vector<384x128xbf16>
    %c0_1 = arith.constant 0 : index
    %c0_2 = arith.constant 0 : index
    %1 = vector.load %arg3[%c0_1, %c0_2] : memref<1x128xf32, #tpu.memory_space<vmem>>, vector<1x128xf32>
    %c0_3 = arith.constant 0 : index
    %c0_4 = arith.constant 0 : index
    %c0_5 = arith.constant 0 : index
    %2 = vector.load %arg1[%c0_3, %c0_4, %c0_5] : memref<4x32x384xbf16, #tpu.memory_space<vmem>>, vector<1x32x384xbf16>
    %3 = vector.shape_cast %2 : vector<1x32x384xbf16> to vector<32x384xbf16>
    %cst = arith.constant dense<0.000000e+00> : vector<32x128xf32>
    %4 = tpu.matmul %3, %0, %cst {dimension_numbers = #tpu.dot_dimension_numbers<[1], [0], [0], [1], [0, 0, 1, 1], [], []>} : vector<32x384xbf16>, vector<384x128xbf16>, vector<32x128xf32> -> vector<32x128xf32>
    %5 = vector.broadcast %1 : vector<1x128xf32> to vector<32x128xf32>
    %6 = arith.addf %4, %5 : vector<32x128xf32>
    %cst_6 = arith.constant 0.000000e+00 : f32
    %7 = vector.broadcast %cst_6 : f32 to vector<32x128xf32>
    %8 = arith.maximumf %6, %7 : vector<32x128xf32>
    %c1 = arith.constant 1 : index
    %c0_7 = arith.constant 0 : index
    %c0_8 = arith.constant 0 : index
    %9 = vector.load %arg1[%c1, %c0_7, %c0_8] : memref<4x32x384xbf16, #tpu.memory_space<vmem>>, vector<1x32x384xbf16>
    %10 = vector.shape_cast %9 : vector<1x32x384xbf16> to vector<32x384xbf16>
    %cst_9 = arith.constant dense<0.000000e+00> : vector<32x128xf32>
    %11 = tpu.matmul %10, %0, %cst_9 {dimension_numbers = #tpu.dot_dimension_numbers<[1], [0], [0], [1], [0, 0, 1, 1], [], []>} : vector<32x384xbf16>, vector<384x128xbf16>, vector<32x128xf32> -> vector<32x128xf32>
    %12 = vector.broadcast %1 : vector<1x128xf32> to vector<32x128xf32>
    %13 = arith.addf %11, %12 : vector<32x128xf32>
    %cst_10 = arith.constant 0.000000e+00 : f32
    %14 = vector.broadcast %cst_10 : f32 to vector<32x128xf32>
    %15 = arith.maximumf %13, %14 : vector<32x128xf32>
    %16 = arith.maximumf %8, %15 : vector<32x128xf32>
    %c2 = arith.constant 2 : index
    %c0_11 = arith.constant 0 : index
    %c0_12 = arith.constant 0 : index
    %17 = vector.load %arg1[%c2, %c0_11, %c0_12] : memref<4x32x384xbf16, #tpu.memory_space<vmem>>, vector<1x32x384xbf16>
    %18 = vector.shape_cast %17 : vector<1x32x384xbf16> to vector<32x384xbf16>
    %cst_13 = arith.constant dense<0.000000e+00> : vector<32x128xf32>
    %19 = tpu.matmul %18, %0, %cst_13 {dimension_numbers = #tpu.dot_dimension_numbers<[1], [0], [0], [1], [0, 0, 1, 1], [], []>} : vector<32x384xbf16>, vector<384x128xbf16>, vector<32x128xf32> -> vector<32x128xf32>
    %20 = vector.broadcast %1 : vector<1x128xf32> to vector<32x128xf32>
    %21 = arith.addf %19, %20 : vector<32x128xf32>
    %cst_14 = arith.constant 0.000000e+00 : f32
    %22 = vector.broadcast %cst_14 : f32 to vector<32x128xf32>
    %23 = arith.maximumf %21, %22 : vector<32x128xf32>
    %24 = arith.maximumf %16, %23 : vector<32x128xf32>
    %c3 = arith.constant 3 : index
    %c0_15 = arith.constant 0 : index
    %c0_16 = arith.constant 0 : index
    %25 = vector.load %arg1[%c3, %c0_15, %c0_16] : memref<4x32x384xbf16, #tpu.memory_space<vmem>>, vector<1x32x384xbf16>
    %26 = vector.shape_cast %25 : vector<1x32x384xbf16> to vector<32x384xbf16>
    %cst_17 = arith.constant dense<0.000000e+00> : vector<32x128xf32>
    %27 = tpu.matmul %26, %0, %cst_17 {dimension_numbers = #tpu.dot_dimension_numbers<[1], [0], [0], [1], [0, 0, 1, 1], [], []>} : vector<32x384xbf16>, vector<384x128xbf16>, vector<32x128xf32> -> vector<32x128xf32>
    %28 = vector.broadcast %1 : vector<1x128xf32> to vector<32x128xf32>
    %29 = arith.addf %27, %28 : vector<32x128xf32>
    %cst_18 = arith.constant 0.000000e+00 : f32
    %30 = vector.broadcast %cst_18 : f32 to vector<32x128xf32>
    %31 = arith.maximumf %29, %30 : vector<32x128xf32>
    %32 = arith.maximumf %24, %31 : vector<32x128xf32>
    %33 = arith.truncf %32 : vector<32x128xf32> to vector<32x128xbf16>
    %c0_19 = arith.constant 0 : index
    %c0_20 = arith.constant 0 : index
    %34 = vector.load %arg4[%c0_19, %c0_20] : memref<32x128xbf16, #tpu.memory_space<vmem>>, vector<32x128xbf16>
    tpu.vector_store %arg4[%c0_19, %c0_20], %33 {strides = array<i32>} : memref<32x128xbf16, #tpu.memory_space<vmem>>, vector<32x128xbf16>,
    return
  }
  func.func @transform_0(%arg0: i32) -> (i32, i32, i32) {
    %c0_i32 = arith.constant 0 : i32
    %c0_i32_0 = arith.constant 0 : i32
    %c0_i32_1 = arith.constant 0 : i32
    return %c0_i32, %arg0, %c0_i32_0 : i32, i32, i32
  }
  func.func @transform_1(%arg0: i32) -> (i32, i32) {
    %c0_i32 = arith.constant 0 : i32
    %c0_i32_0 = arith.constant 0 : i32
    %c0_i32_1 = arith.constant 0 : i32
    return %c0_i32, %c0_i32_0 : i32, i32
  }
  func.func @transform_2(%arg0: i32) -> (i32, i32) {
    %c0_i32 = arith.constant 0 : i32
    %c0_i32_0 = arith.constant 0 : i32
    %c0_i32_1 = arith.constant 0 : i32
    return %c0_i32, %c0_i32_0 : i32, i32
  }
  func.func @transform_3(%arg0: i32) -> (i32, i32) {
    %c0_i32 = arith.constant 0 : i32
    %c0_i32_0 = arith.constant 0 : i32
    return %arg0, %c0_i32 : i32, i32
  }
}

module attributes {stable_mosaic.version = 11 : i64} {
  func.func @kernel(%arg0: i32, %arg1: memref<16x8x640xbf16, #tpu.memory_space<vmem>>, %arg2: memref<640x128xbf16, #tpu.memory_space<vmem>>, %arg3: memref<1x128xf32, #tpu.memory_space<vmem>>, %arg4: memref<1152x256xbf16, #tpu.memory_space<vmem>>, %arg5: memref<1x256xf32, #tpu.memory_space<vmem>>, %arg6: memref<1x256xf32, #tpu.memory_space<vmem>>, %arg7: memref<1x256xf32, #tpu.memory_space<vmem>>, %arg8: memref<2048x128xbf16, #tpu.memory_space<vmem>>, %arg9: memref<1x64xf32, #tpu.memory_space<vmem>>, %arg10: memref<1x64xf32, #tpu.memory_space<vmem>>, %arg11: memref<512x128xbf16, #tpu.memory_space<vmem>>, %arg12: memref<8x128xf32, #tpu.memory_space<vmem>>) attributes {dimension_semantics = [#tpu.dimension_semantics<parallel>], iteration_bounds = array<i64: 1>, scalar_prefetch = 0 : i64, scratch_operands = 0 : i64, tpu.core_type = #tpu.core_type<tc>, window_params = [{transform_indices = @transform_0, window_bounds = array<i64: 16, 8, 640>}, {pipeline_mode = #tpu.pipeline_mode<synchronous>, transform_indices = @transform_1, window_bounds = array<i64: 640, 128>}, {pipeline_mode = #tpu.pipeline_mode<synchronous>, transform_indices = @transform_2, window_bounds = array<i64: 1, 128>}, {pipeline_mode = #tpu.pipeline_mode<synchronous>, transform_indices = @transform_3, window_bounds = array<i64: 1152, 256>}, {pipeline_mode = #tpu.pipeline_mode<synchronous>, transform_indices = @transform_4, window_bounds = array<i64: 1, 256>}, {pipeline_mode = #tpu.pipeline_mode<synchronous>, transform_indices = @transform_5, window_bounds = array<i64: 1, 256>}, {pipeline_mode = #tpu.pipeline_mode<synchronous>, transform_indices = @transform_6, window_bounds = array<i64: 1, 256>}, {pipeline_mode = #tpu.pipeline_mode<synchronous>, transform_indices = @transform_7, window_bounds = array<i64: 2048, 128>}, {pipeline_mode = #tpu.pipeline_mode<synchronous>, transform_indices = @transform_8, window_bounds = array<i64: 1, 64>}, {pipeline_mode = #tpu.pipeline_mode<synchronous>, transform_indices = @transform_9, window_bounds = array<i64: 1, 64>}, {pipeline_mode = #tpu.pipeline_mode<synchronous>, transform_indices = @transform_10, window_bounds = array<i64: 512, 128>}, {transform_indices = @transform_11, window_bounds = array<i64: 8, 128>}]} {
    %c0 = arith.constant 0 : index
    %c0_0 = arith.constant 0 : index
    %0 = vector.load %arg2[%c0, %c0_0] : memref<640x128xbf16, #tpu.memory_space<vmem>>, vector<640x128xbf16>
    %c0_1 = arith.constant 0 : index
    %c0_2 = arith.constant 0 : index
    %1 = vector.load %arg3[%c0_1, %c0_2] : memref<1x128xf32, #tpu.memory_space<vmem>>, vector<1x128xf32>
    %c0_3 = arith.constant 0 : index
    %c0_4 = arith.constant 0 : index
    %c0_5 = arith.constant 0 : index
    %2 = vector.load %arg1[%c0_3, %c0_4, %c0_5] : memref<16x8x640xbf16, #tpu.memory_space<vmem>>, vector<1x8x640xbf16>
    %3 = vector.shape_cast %2 : vector<1x8x640xbf16> to vector<8x640xbf16>
    %cst = arith.constant dense<0.000000e+00> : vector<8x128xf32>
    %4 = tpu.matmul %3, %0, %cst {dimension_numbers = #tpu.dot_dimension_numbers<[1], [0], [0], [1], [0, 0, 1, 1], [], []>} : vector<8x640xbf16>, vector<640x128xbf16>, vector<8x128xf32> -> vector<8x128xf32>
    %5 = vector.broadcast %1 : vector<1x128xf32> to vector<8x128xf32>
    %6 = arith.addf %4, %5 : vector<8x128xf32>
    %cst_6 = arith.constant 0.000000e+00 : f32
    %7 = vector.broadcast %cst_6 : f32 to vector<8x128xf32>
    %8 = arith.maximumf %6, %7 : vector<8x128xf32>
    %c1 = arith.constant 1 : index
    %c0_7 = arith.constant 0 : index
    %c0_8 = arith.constant 0 : index
    %9 = vector.load %arg1[%c1, %c0_7, %c0_8] : memref<16x8x640xbf16, #tpu.memory_space<vmem>>, vector<1x8x640xbf16>
    %10 = vector.shape_cast %9 : vector<1x8x640xbf16> to vector<8x640xbf16>
    %cst_9 = arith.constant dense<0.000000e+00> : vector<8x128xf32>
    %11 = tpu.matmul %10, %0, %cst_9 {dimension_numbers = #tpu.dot_dimension_numbers<[1], [0], [0], [1], [0, 0, 1, 1], [], []>} : vector<8x640xbf16>, vector<640x128xbf16>, vector<8x128xf32> -> vector<8x128xf32>
    %12 = vector.broadcast %1 : vector<1x128xf32> to vector<8x128xf32>
    %13 = arith.addf %11, %12 : vector<8x128xf32>
    %cst_10 = arith.constant 0.000000e+00 : f32
    %14 = vector.broadcast %cst_10 : f32 to vector<8x128xf32>
    %15 = arith.maximumf %13, %14 : vector<8x128xf32>
    %16 = arith.maximumf %8, %15 : vector<8x128xf32>
    %c4 = arith.constant 4 : index
    %c0_11 = arith.constant 0 : index
    %c0_12 = arith.constant 0 : index
    %17 = vector.load %arg1[%c4, %c0_11, %c0_12] : memref<16x8x640xbf16, #tpu.memory_space<vmem>>, vector<1x8x640xbf16>
    %18 = vector.shape_cast %17 : vector<1x8x640xbf16> to vector<8x640xbf16>
    %cst_13 = arith.constant dense<0.000000e+00> : vector<8x128xf32>
    %19 = tpu.matmul %18, %0, %cst_13 {dimension_numbers = #tpu.dot_dimension_numbers<[1], [0], [0], [1], [0, 0, 1, 1], [], []>} : vector<8x640xbf16>, vector<640x128xbf16>, vector<8x128xf32> -> vector<8x128xf32>
    %20 = vector.broadcast %1 : vector<1x128xf32> to vector<8x128xf32>
    %21 = arith.addf %19, %20 : vector<8x128xf32>
    %cst_14 = arith.constant 0.000000e+00 : f32
    %22 = vector.broadcast %cst_14 : f32 to vector<8x128xf32>
    %23 = arith.maximumf %21, %22 : vector<8x128xf32>
    %24 = arith.maximumf %16, %23 : vector<8x128xf32>
    %c5 = arith.constant 5 : index
    %c0_15 = arith.constant 0 : index
    %c0_16 = arith.constant 0 : index
    %25 = vector.load %arg1[%c5, %c0_15, %c0_16] : memref<16x8x640xbf16, #tpu.memory_space<vmem>>, vector<1x8x640xbf16>
    %26 = vector.shape_cast %25 : vector<1x8x640xbf16> to vector<8x640xbf16>
    %cst_17 = arith.constant dense<0.000000e+00> : vector<8x128xf32>
    %27 = tpu.matmul %26, %0, %cst_17 {dimension_numbers = #tpu.dot_dimension_numbers<[1], [0], [0], [1], [0, 0, 1, 1], [], []>} : vector<8x640xbf16>, vector<640x128xbf16>, vector<8x128xf32> -> vector<8x128xf32>
    %28 = vector.broadcast %1 : vector<1x128xf32> to vector<8x128xf32>
    %29 = arith.addf %27, %28 : vector<8x128xf32>
    %cst_18 = arith.constant 0.000000e+00 : f32
    %30 = vector.broadcast %cst_18 : f32 to vector<8x128xf32>
    %31 = arith.maximumf %29, %30 : vector<8x128xf32>
    %32 = arith.maximumf %24, %31 : vector<8x128xf32>
    %33 = arith.truncf %32 : vector<8x128xf32> to vector<8x128xbf16>
    %c2 = arith.constant 2 : index
    %c0_19 = arith.constant 0 : index
    %c0_20 = arith.constant 0 : index
    %34 = vector.load %arg1[%c2, %c0_19, %c0_20] : memref<16x8x640xbf16, #tpu.memory_space<vmem>>, vector<1x8x640xbf16>
    %35 = vector.shape_cast %34 : vector<1x8x640xbf16> to vector<8x640xbf16>
    %cst_21 = arith.constant dense<0.000000e+00> : vector<8x128xf32>
    %36 = tpu.matmul %35, %0, %cst_21 {dimension_numbers = #tpu.dot_dimension_numbers<[1], [0], [0], [1], [0, 0, 1, 1], [], []>} : vector<8x640xbf16>, vector<640x128xbf16>, vector<8x128xf32> -> vector<8x128xf32>
    %37 = vector.broadcast %1 : vector<1x128xf32> to vector<8x128xf32>
    %38 = arith.addf %36, %37 : vector<8x128xf32>
    %cst_22 = arith.constant 0.000000e+00 : f32
    %39 = vector.broadcast %cst_22 : f32 to vector<8x128xf32>
    %40 = arith.maximumf %38, %39 : vector<8x128xf32>
    %c3 = arith.constant 3 : index
    %c0_23 = arith.constant 0 : index
    %c0_24 = arith.constant 0 : index
    %41 = vector.load %arg1[%c3, %c0_23, %c0_24] : memref<16x8x640xbf16, #tpu.memory_space<vmem>>, vector<1x8x640xbf16>
    %42 = vector.shape_cast %41 : vector<1x8x640xbf16> to vector<8x640xbf16>
    %cst_25 = arith.constant dense<0.000000e+00> : vector<8x128xf32>
    %43 = tpu.matmul %42, %0, %cst_25 {dimension_numbers = #tpu.dot_dimension_numbers<[1], [0], [0], [1], [0, 0, 1, 1], [], []>} : vector<8x640xbf16>, vector<640x128xbf16>, vector<8x128xf32> -> vector<8x128xf32>
    %44 = vector.broadcast %1 : vector<1x128xf32> to vector<8x128xf32>
    %45 = arith.addf %43, %44 : vector<8x128xf32>
    %cst_26 = arith.constant 0.000000e+00 : f32
    %46 = vector.broadcast %cst_26 : f32 to vector<8x128xf32>
    %47 = arith.maximumf %45, %46 : vector<8x128xf32>
    %48 = arith.maximumf %40, %47 : vector<8x128xf32>
    %c6 = arith.constant 6 : index
    %c0_27 = arith.constant 0 : index
    %c0_28 = arith.constant 0 : index
    %49 = vector.load %arg1[%c6, %c0_27, %c0_28] : memref<16x8x640xbf16, #tpu.memory_space<vmem>>, vector<1x8x640xbf16>
    %50 = vector.shape_cast %49 : vector<1x8x640xbf16> to vector<8x640xbf16>
    %cst_29 = arith.constant dense<0.000000e+00> : vector<8x128xf32>
    %51 = tpu.matmul %50, %0, %cst_29 {dimension_numbers = #tpu.dot_dimension_numbers<[1], [0], [0], [1], [0, 0, 1, 1], [], []>} : vector<8x640xbf16>, vector<640x128xbf16>, vector<8x128xf32> -> vector<8x128xf32>
    %52 = vector.broadcast %1 : vector<1x128xf32> to vector<8x128xf32>
    %53 = arith.addf %51, %52 : vector<8x128xf32>
    %cst_30 = arith.constant 0.000000e+00 : f32
    %54 = vector.broadcast %cst_30 : f32 to vector<8x128xf32>
    %55 = arith.maximumf %53, %54 : vector<8x128xf32>
    %56 = arith.maximumf %48, %55 : vector<8x128xf32>
    %c7 = arith.constant 7 : index
    %c0_31 = arith.constant 0 : index
    %c0_32 = arith.constant 0 : index
    %57 = vector.load %arg1[%c7, %c0_31, %c0_32] : memref<16x8x640xbf16, #tpu.memory_space<vmem>>, vector<1x8x640xbf16>
    %58 = vector.shape_cast %57 : vector<1x8x640xbf16> to vector<8x640xbf16>
    %cst_33 = arith.constant dense<0.000000e+00> : vector<8x128xf32>
    %59 = tpu.matmul %58, %0, %cst_33 {dimension_numbers = #tpu.dot_dimension_numbers<[1], [0], [0], [1], [0, 0, 1, 1], [], []>} : vector<8x640xbf16>, vector<640x128xbf16>, vector<8x128xf32> -> vector<8x128xf32>
    %60 = vector.broadcast %1 : vector<1x128xf32> to vector<8x128xf32>
    %61 = arith.addf %59, %60 : vector<8x128xf32>
    %cst_34 = arith.constant 0.000000e+00 : f32
    %62 = vector.broadcast %cst_34 : f32 to vector<8x128xf32>
    %63 = arith.maximumf %61, %62 : vector<8x128xf32>
    %64 = arith.maximumf %56, %63 : vector<8x128xf32>
    %65 = arith.truncf %64 : vector<8x128xf32> to vector<8x128xbf16>
    %c8 = arith.constant 8 : index
    %c0_35 = arith.constant 0 : index
    %c0_36 = arith.constant 0 : index
    %66 = vector.load %arg1[%c8, %c0_35, %c0_36] : memref<16x8x640xbf16, #tpu.memory_space<vmem>>, vector<1x8x640xbf16>
    %67 = vector.shape_cast %66 : vector<1x8x640xbf16> to vector<8x640xbf16>
    %cst_37 = arith.constant dense<0.000000e+00> : vector<8x128xf32>
    %68 = tpu.matmul %67, %0, %cst_37 {dimension_numbers = #tpu.dot_dimension_numbers<[1], [0], [0], [1], [0, 0, 1, 1], [], []>} : vector<8x640xbf16>, vector<640x128xbf16>, vector<8x128xf32> -> vector<8x128xf32>
    %69 = vector.broadcast %1 : vector<1x128xf32> to vector<8x128xf32>
    %70 = arith.addf %68, %69 : vector<8x128xf32>
    %cst_38 = arith.constant 0.000000e+00 : f32
    %71 = vector.broadcast %cst_38 : f32 to vector<8x128xf32>
    %72 = arith.maximumf %70, %71 : vector<8x128xf32>
    %c9 = arith.constant 9 : index
    %c0_39 = arith.constant 0 : index
    %c0_40 = arith.constant 0 : index
    %73 = vector.load %arg1[%c9, %c0_39, %c0_40] : memref<16x8x640xbf16, #tpu.memory_space<vmem>>, vector<1x8x640xbf16>
    %74 = vector.shape_cast %73 : vector<1x8x640xbf16> to vector<8x640xbf16>
    %cst_41 = arith.constant dense<0.000000e+00> : vector<8x128xf32>
    %75 = tpu.matmul %74, %0, %cst_41 {dimension_numbers = #tpu.dot_dimension_numbers<[1], [0], [0], [1], [0, 0, 1, 1], [], []>} : vector<8x640xbf16>, vector<640x128xbf16>, vector<8x128xf32> -> vector<8x128xf32>
    %76 = vector.broadcast %1 : vector<1x128xf32> to vector<8x128xf32>
    %77 = arith.addf %75, %76 : vector<8x128xf32>
    %cst_42 = arith.constant 0.000000e+00 : f32
    %78 = vector.broadcast %cst_42 : f32 to vector<8x128xf32>
    %79 = arith.maximumf %77, %78 : vector<8x128xf32>
    %80 = arith.maximumf %72, %79 : vector<8x128xf32>
    %c12 = arith.constant 12 : index
    %c0_43 = arith.constant 0 : index
    %c0_44 = arith.constant 0 : index
    %81 = vector.load %arg1[%c12, %c0_43, %c0_44] : memref<16x8x640xbf16, #tpu.memory_space<vmem>>, vector<1x8x640xbf16>
    %82 = vector.shape_cast %81 : vector<1x8x640xbf16> to vector<8x640xbf16>
    %cst_45 = arith.constant dense<0.000000e+00> : vector<8x128xf32>
    %83 = tpu.matmul %82, %0, %cst_45 {dimension_numbers = #tpu.dot_dimension_numbers<[1], [0], [0], [1], [0, 0, 1, 1], [], []>} : vector<8x640xbf16>, vector<640x128xbf16>, vector<8x128xf32> -> vector<8x128xf32>
    %84 = vector.broadcast %1 : vector<1x128xf32> to vector<8x128xf32>
    %85 = arith.addf %83, %84 : vector<8x128xf32>
    %cst_46 = arith.constant 0.000000e+00 : f32
    %86 = vector.broadcast %cst_46 : f32 to vector<8x128xf32>
    %87 = arith.maximumf %85, %86 : vector<8x128xf32>
    %88 = arith.maximumf %80, %87 : vector<8x128xf32>
    %c13 = arith.constant 13 : index
    %c0_47 = arith.constant 0 : index
    %c0_48 = arith.constant 0 : index
    %89 = vector.load %arg1[%c13, %c0_47, %c0_48] : memref<16x8x640xbf16, #tpu.memory_space<vmem>>, vector<1x8x640xbf16>
    %90 = vector.shape_cast %89 : vector<1x8x640xbf16> to vector<8x640xbf16>
    %cst_49 = arith.constant dense<0.000000e+00> : vector<8x128xf32>
    %91 = tpu.matmul %90, %0, %cst_49 {dimension_numbers = #tpu.dot_dimension_numbers<[1], [0], [0], [1], [0, 0, 1, 1], [], []>} : vector<8x640xbf16>, vector<640x128xbf16>, vector<8x128xf32> -> vector<8x128xf32>
    %92 = vector.broadcast %1 : vector<1x128xf32> to vector<8x128xf32>
    %93 = arith.addf %91, %92 : vector<8x128xf32>
    %cst_50 = arith.constant 0.000000e+00 : f32
    %94 = vector.broadcast %cst_50 : f32 to vector<8x128xf32>
    %95 = arith.maximumf %93, %94 : vector<8x128xf32>
    %96 = arith.maximumf %88, %95 : vector<8x128xf32>
    %97 = arith.truncf %96 : vector<8x128xf32> to vector<8x128xbf16>
    %c10 = arith.constant 10 : index
    %c0_51 = arith.constant 0 : index
    %c0_52 = arith.constant 0 : index
    %98 = vector.load %arg1[%c10, %c0_51, %c0_52] : memref<16x8x640xbf16, #tpu.memory_space<vmem>>, vector<1x8x640xbf16>
    %99 = vector.shape_cast %98 : vector<1x8x640xbf16> to vector<8x640xbf16>
    %cst_53 = arith.constant dense<0.000000e+00> : vector<8x128xf32>
    %100 = tpu.matmul %99, %0, %cst_53 {dimension_numbers = #tpu.dot_dimension_numbers<[1], [0], [0], [1], [0, 0, 1, 1], [], []>} : vector<8x640xbf16>, vector<640x128xbf16>, vector<8x128xf32> -> vector<8x128xf32>
    %101 = vector.broadcast %1 : vector<1x128xf32> to vector<8x128xf32>
    %102 = arith.addf %100, %101 : vector<8x128xf32>
    %cst_54 = arith.constant 0.000000e+00 : f32
    %103 = vector.broadcast %cst_54 : f32 to vector<8x128xf32>
    %104 = arith.maximumf %102, %103 : vector<8x128xf32>
    %c11 = arith.constant 11 : index
    %c0_55 = arith.constant 0 : index
    %c0_56 = arith.constant 0 : index
    %105 = vector.load %arg1[%c11, %c0_55, %c0_56] : memref<16x8x640xbf16, #tpu.memory_space<vmem>>, vector<1x8x640xbf16>
    %106 = vector.shape_cast %105 : vector<1x8x640xbf16> to vector<8x640xbf16>
    %cst_57 = arith.constant dense<0.000000e+00> : vector<8x128xf32>
    %107 = tpu.matmul %106, %0, %cst_57 {dimension_numbers = #tpu.dot_dimension_numbers<[1], [0], [0], [1], [0, 0, 1, 1], [], []>} : vector<8x640xbf16>, vector<640x128xbf16>, vector<8x128xf32> -> vector<8x128xf32>
    %108 = vector.broadcast %1 : vector<1x128xf32> to vector<8x128xf32>
    %109 = arith.addf %107, %108 : vector<8x128xf32>
    %cst_58 = arith.constant 0.000000e+00 : f32
    %110 = vector.broadcast %cst_58 : f32 to vector<8x128xf32>
    %111 = arith.maximumf %109, %110 : vector<8x128xf32>
    %112 = arith.maximumf %104, %111 : vector<8x128xf32>
    %c14 = arith.constant 14 : index
    %c0_59 = arith.constant 0 : index
    %c0_60 = arith.constant 0 : index
    %113 = vector.load %arg1[%c14, %c0_59, %c0_60] : memref<16x8x640xbf16, #tpu.memory_space<vmem>>, vector<1x8x640xbf16>
    %114 = vector.shape_cast %113 : vector<1x8x640xbf16> to vector<8x640xbf16>
    %cst_61 = arith.constant dense<0.000000e+00> : vector<8x128xf32>
    %115 = tpu.matmul %114, %0, %cst_61 {dimension_numbers = #tpu.dot_dimension_numbers<[1], [0], [0], [1], [0, 0, 1, 1], [], []>} : vector<8x640xbf16>, vector<640x128xbf16>, vector<8x128xf32> -> vector<8x128xf32>
    %116 = vector.broadcast %1 : vector<1x128xf32> to vector<8x128xf32>
    %117 = arith.addf %115, %116 : vector<8x128xf32>
    %cst_62 = arith.constant 0.000000e+00 : f32
    %118 = vector.broadcast %cst_62 : f32 to vector<8x128xf32>
    %119 = arith.maximumf %117, %118 : vector<8x128xf32>
    %120 = arith.maximumf %112, %119 : vector<8x128xf32>
    %c15 = arith.constant 15 : index
    %c0_63 = arith.constant 0 : index
    %c0_64 = arith.constant 0 : index
    %121 = vector.load %arg1[%c15, %c0_63, %c0_64] : memref<16x8x640xbf16, #tpu.memory_space<vmem>>, vector<1x8x640xbf16>
    %122 = vector.shape_cast %121 : vector<1x8x640xbf16> to vector<8x640xbf16>
    %cst_65 = arith.constant dense<0.000000e+00> : vector<8x128xf32>
    %123 = tpu.matmul %122, %0, %cst_65 {dimension_numbers = #tpu.dot_dimension_numbers<[1], [0], [0], [1], [0, 0, 1, 1], [], []>} : vector<8x640xbf16>, vector<640x128xbf16>, vector<8x128xf32> -> vector<8x128xf32>
    %124 = vector.broadcast %1 : vector<1x128xf32> to vector<8x128xf32>
    %125 = arith.addf %123, %124 : vector<8x128xf32>
    %cst_66 = arith.constant 0.000000e+00 : f32
    %126 = vector.broadcast %cst_66 : f32 to vector<8x128xf32>
    %127 = arith.maximumf %125, %126 : vector<8x128xf32>
    %128 = arith.maximumf %120, %127 : vector<8x128xf32>
    %129 = arith.truncf %128 : vector<8x128xf32> to vector<8x128xbf16>
    %c0_67 = arith.constant 0 : index
    %c0_68 = arith.constant 0 : index
    %130 = vector.load %arg5[%c0_67, %c0_68] : memref<1x256xf32, #tpu.memory_space<vmem>>, vector<1x256xf32>
    %c512 = arith.constant 512 : index
    %c0_69 = arith.constant 0 : index
    %131 = vector.load %arg4[%c512, %c0_69] : memref<1152x256xbf16, #tpu.memory_space<vmem>>, vector<128x256xbf16>
    %cst_70 = arith.constant dense<0.000000e+00> : vector<8x256xf32>
    %132 = tpu.matmul %33, %131, %cst_70 {dimension_numbers = #tpu.dot_dimension_numbers<[1], [0], [0], [1], [0, 0, 1, 1], [], []>} : vector<8x128xbf16>, vector<128x256xbf16>, vector<8x256xf32> -> vector<8x256xf32>
    %c640 = arith.constant 640 : index
    %c0_71 = arith.constant 0 : index
    %133 = vector.load %arg4[%c640, %c0_71] : memref<1152x256xbf16, #tpu.memory_space<vmem>>, vector<128x256xbf16>
    %cst_72 = arith.constant dense<0.000000e+00> : vector<8x256xf32>
    %134 = tpu.matmul %65, %133, %cst_72 {dimension_numbers = #tpu.dot_dimension_numbers<[1], [0], [0], [1], [0, 0, 1, 1], [], []>} : vector<8x128xbf16>, vector<128x256xbf16>, vector<8x256xf32> -> vector<8x256xf32>
    %135 = arith.addf %132, %134 : vector<8x256xf32>
    %c896 = arith.constant 896 : index
    %c0_73 = arith.constant 0 : index
    %136 = vector.load %arg4[%c896, %c0_73] : memref<1152x256xbf16, #tpu.memory_space<vmem>>, vector<128x256xbf16>
    %cst_74 = arith.constant dense<0.000000e+00> : vector<8x256xf32>
    %137 = tpu.matmul %97, %136, %cst_74 {dimension_numbers = #tpu.dot_dimension_numbers<[1], [0], [0], [1], [0, 0, 1, 1], [], []>} : vector<8x128xbf16>, vector<128x256xbf16>, vector<8x256xf32> -> vector<8x256xf32>
    %138 = arith.addf %135, %137 : vector<8x256xf32>
    %c1024 = arith.constant 1024 : index
    %c0_75 = arith.constant 0 : index
    %139 = vector.load %arg4[%c1024, %c0_75] : memref<1152x256xbf16, #tpu.memory_space<vmem>>, vector<128x256xbf16>
    %cst_76 = arith.constant dense<0.000000e+00> : vector<8x256xf32>
    %140 = tpu.matmul %129, %139, %cst_76 {dimension_numbers = #tpu.dot_dimension_numbers<[1], [0], [0], [1], [0, 0, 1, 1], [], []>} : vector<8x128xbf16>, vector<128x256xbf16>, vector<8x256xf32> -> vector<8x256xf32>
    %141 = arith.addf %138, %140 : vector<8x256xf32>
    %142 = vector.broadcast %130 : vector<1x256xf32> to vector<8x256xf32>
    %143 = arith.addf %141, %142 : vector<8x256xf32>
    %cst_77 = arith.constant 0.000000e+00 : f32
    %144 = vector.broadcast %cst_77 : f32 to vector<8x256xf32>
    %145 = arith.maximumf %143, %144 : vector<8x256xf32>
    %c384 = arith.constant 384 : index
    %c0_78 = arith.constant 0 : index
    %146 = vector.load %arg4[%c384, %c0_78] : memref<1152x256xbf16, #tpu.memory_space<vmem>>, vector<128x256xbf16>
    %cst_79 = arith.constant dense<0.000000e+00> : vector<8x256xf32>
    %147 = tpu.matmul %33, %146, %cst_79 {dimension_numbers = #tpu.dot_dimension_numbers<[1], [0], [0], [1], [0, 0, 1, 1], [], []>} : vector<8x128xbf16>, vector<128x256xbf16>, vector<8x256xf32> -> vector<8x256xf32>
    %c512_80 = arith.constant 512 : index
    %c0_81 = arith.constant 0 : index
    %148 = vector.load %arg4[%c512_80, %c0_81] : memref<1152x256xbf16, #tpu.memory_space<vmem>>, vector<128x256xbf16>
    %cst_82 = arith.constant dense<0.000000e+00> : vector<8x256xf32>
    %149 = tpu.matmul %65, %148, %cst_82 {dimension_numbers = #tpu.dot_dimension_numbers<[1], [0], [0], [1], [0, 0, 1, 1], [], []>} : vector<8x128xbf16>, vector<128x256xbf16>, vector<8x256xf32> -> vector<8x256xf32>
    %150 = arith.addf %147, %149 : vector<8x256xf32>
    %c768 = arith.constant 768 : index
    %c0_83 = arith.constant 0 : index
    %151 = vector.load %arg4[%c768, %c0_83] : memref<1152x256xbf16, #tpu.memory_space<vmem>>, vector<128x256xbf16>
    %cst_84 = arith.constant dense<0.000000e+00> : vector<8x256xf32>
    %152 = tpu.matmul %97, %151, %cst_84 {dimension_numbers = #tpu.dot_dimension_numbers<[1], [0], [0], [1], [0, 0, 1, 1], [], []>} : vector<8x128xbf16>, vector<128x256xbf16>, vector<8x256xf32> -> vector<8x256xf32>
    %153 = arith.addf %150, %152 : vector<8x256xf32>
    %c896_85 = arith.constant 896 : index
    %c0_86 = arith.constant 0 : index
    %154 = vector.load %arg4[%c896_85, %c0_86] : memref<1152x256xbf16, #tpu.memory_space<vmem>>, vector<128x256xbf16>
    %cst_87 = arith.constant dense<0.000000e+00> : vector<8x256xf32>
    %155 = tpu.matmul %129, %154, %cst_87 {dimension_numbers = #tpu.dot_dimension_numbers<[1], [0], [0], [1], [0, 0, 1, 1], [], []>} : vector<8x128xbf16>, vector<128x256xbf16>, vector<8x256xf32> -> vector<8x256xf32>
    %156 = arith.addf %153, %155 : vector<8x256xf32>
    %157 = vector.broadcast %130 : vector<1x256xf32> to vector<8x256xf32>
    %158 = arith.addf %156, %157 : vector<8x256xf32>
    %cst_88 = arith.constant 0.000000e+00 : f32
    %159 = vector.broadcast %cst_88 : f32 to vector<8x256xf32>
    %160 = arith.maximumf %158, %159 : vector<8x256xf32>
    %161 = arith.addf %145, %160 : vector<8x256xf32>
    %c128 = arith.constant 128 : index
    %c0_89 = arith.constant 0 : index
    %162 = vector.load %arg4[%c128, %c0_89] : memref<1152x256xbf16, #tpu.memory_space<vmem>>, vector<128x256xbf16>
    %cst_90 = arith.constant dense<0.000000e+00> : vector<8x256xf32>
    %163 = tpu.matmul %33, %162, %cst_90 {dimension_numbers = #tpu.dot_dimension_numbers<[1], [0], [0], [1], [0, 0, 1, 1], [], []>} : vector<8x128xbf16>, vector<128x256xbf16>, vector<8x256xf32> -> vector<8x256xf32>
    %c256 = arith.constant 256 : index
    %c0_91 = arith.constant 0 : index
    %164 = vector.load %arg4[%c256, %c0_91] : memref<1152x256xbf16, #tpu.memory_space<vmem>>, vector<128x256xbf16>
    %cst_92 = arith.constant dense<0.000000e+00> : vector<8x256xf32>
    %165 = tpu.matmul %65, %164, %cst_92 {dimension_numbers = #tpu.dot_dimension_numbers<[1], [0], [0], [1], [0, 0, 1, 1], [], []>} : vector<8x128xbf16>, vector<128x256xbf16>, vector<8x256xf32> -> vector<8x256xf32>
    %166 = arith.addf %163, %165 : vector<8x256xf32>
    %c512_93 = arith.constant 512 : index
    %c0_94 = arith.constant 0 : index
    %167 = vector.load %arg4[%c512_93, %c0_94] : memref<1152x256xbf16, #tpu.memory_space<vmem>>, vector<128x256xbf16>
    %cst_95 = arith.constant dense<0.000000e+00> : vector<8x256xf32>
    %168 = tpu.matmul %97, %167, %cst_95 {dimension_numbers = #tpu.dot_dimension_numbers<[1], [0], [0], [1], [0, 0, 1, 1], [], []>} : vector<8x128xbf16>, vector<128x256xbf16>, vector<8x256xf32> -> vector<8x256xf32>
    %169 = arith.addf %166, %168 : vector<8x256xf32>
    %c640_96 = arith.constant 640 : index
    %c0_97 = arith.constant 0 : index
    %170 = vector.load %arg4[%c640_96, %c0_97] : memref<1152x256xbf16, #tpu.memory_space<vmem>>, vector<128x256xbf16>
    %cst_98 = arith.constant dense<0.000000e+00> : vector<8x256xf32>
    %171 = tpu.matmul %129, %170, %cst_98 {dimension_numbers = #tpu.dot_dimension_numbers<[1], [0], [0], [1], [0, 0, 1, 1], [], []>} : vector<8x128xbf16>, vector<128x256xbf16>, vector<8x256xf32> -> vector<8x256xf32>
    %172 = arith.addf %169, %171 : vector<8x256xf32>
    %173 = vector.broadcast %130 : vector<1x256xf32> to vector<8x256xf32>
    %174 = arith.addf %172, %173 : vector<8x256xf32>
    %cst_99 = arith.constant 0.000000e+00 : f32
    %175 = vector.broadcast %cst_99 : f32 to vector<8x256xf32>
    %176 = arith.maximumf %174, %175 : vector<8x256xf32>
    %177 = arith.addf %161, %176 : vector<8x256xf32>
    %c0_100 = arith.constant 0 : index
    %c0_101 = arith.constant 0 : index
    %178 = vector.load %arg4[%c0_100, %c0_101] : memref<1152x256xbf16, #tpu.memory_space<vmem>>, vector<128x256xbf16>
    %cst_102 = arith.constant dense<0.000000e+00> : vector<8x256xf32>
    %179 = tpu.matmul %33, %178, %cst_102 {dimension_numbers = #tpu.dot_dimension_numbers<[1], [0], [0], [1], [0, 0, 1, 1], [], []>} : vector<8x128xbf16>, vector<128x256xbf16>, vector<8x256xf32> -> vector<8x256xf32>
    %c128_103 = arith.constant 128 : index
    %c0_104 = arith.constant 0 : index
    %180 = vector.load %arg4[%c128_103, %c0_104] : memref<1152x256xbf16, #tpu.memory_space<vmem>>, vector<128x256xbf16>
    %cst_105 = arith.constant dense<0.000000e+00> : vector<8x256xf32>
    %181 = tpu.matmul %65, %180, %cst_105 {dimension_numbers = #tpu.dot_dimension_numbers<[1], [0], [0], [1], [0, 0, 1, 1], [], []>} : vector<8x128xbf16>, vector<128x256xbf16>, vector<8x256xf32> -> vector<8x256xf32>
    %182 = arith.addf %179, %181 : vector<8x256xf32>
    %c384_106 = arith.constant 384 : index
    %c0_107 = arith.constant 0 : index
    %183 = vector.load %arg4[%c384_106, %c0_107] : memref<1152x256xbf16, #tpu.memory_space<vmem>>, vector<128x256xbf16>
    %cst_108 = arith.constant dense<0.000000e+00> : vector<8x256xf32>
    %184 = tpu.matmul %97, %183, %cst_108 {dimension_numbers = #tpu.dot_dimension_numbers<[1], [0], [0], [1], [0, 0, 1, 1], [], []>} : vector<8x128xbf16>, vector<128x256xbf16>, vector<8x256xf32> -> vector<8x256xf32>
    %185 = arith.addf %182, %184 : vector<8x256xf32>
    %c512_109 = arith.constant 512 : index
    %c0_110 = arith.constant 0 : index
    %186 = vector.load %arg4[%c512_109, %c0_110] : memref<1152x256xbf16, #tpu.memory_space<vmem>>, vector<128x256xbf16>
    %cst_111 = arith.constant dense<0.000000e+00> : vector<8x256xf32>
    %187 = tpu.matmul %129, %186, %cst_111 {dimension_numbers = #tpu.dot_dimension_numbers<[1], [0], [0], [1], [0, 0, 1, 1], [], []>} : vector<8x128xbf16>, vector<128x256xbf16>, vector<8x256xf32> -> vector<8x256xf32>
    %188 = arith.addf %185, %187 : vector<8x256xf32>
    %189 = vector.broadcast %130 : vector<1x256xf32> to vector<8x256xf32>
    %190 = arith.addf %188, %189 : vector<8x256xf32>
    %cst_112 = arith.constant 0.000000e+00 : f32
    %191 = vector.broadcast %cst_112 : f32 to vector<8x256xf32>
    %192 = arith.maximumf %190, %191 : vector<8x256xf32>
    %193 = arith.addf %177, %192 : vector<8x256xf32>
    %cst_113 = arith.constant 2.500000e-01 : f32
    %194 = vector.broadcast %cst_113 : f32 to vector<8x256xf32>
    %195 = arith.mulf %193, %194 : vector<8x256xf32>
    %cst_114 = arith.constant dense<0.000000e+00> : vector<8xf32>
    %196 = vector.multi_reduction <add>, %195, %cst_114 [1] : vector<8x256xf32> to vector<8xf32>
    %197 = vector.shape_cast %196 : vector<8xf32> to vector<8x1xf32>
    %cst_115 = arith.constant 2.560000e+02 : f32
    %198 = vector.broadcast %cst_115 : f32 to vector<8x1xf32>
    %199 = arith.divf %197, %198 : vector<8x1xf32>
    %200 = vector.broadcast %199 : vector<8x1xf32> to vector<8x256xf32>
    %201 = arith.subf %195, %200 : vector<8x256xf32>
    %202 = arith.mulf %201, %201 : vector<8x256xf32>
    %cst_116 = arith.constant dense<0.000000e+00> : vector<8xf32>
    %203 = vector.multi_reduction <add>, %202, %cst_116 [1] : vector<8x256xf32> to vector<8xf32>
    %204 = vector.shape_cast %203 : vector<8xf32> to vector<8x1xf32>
    %cst_117 = arith.constant 2.560000e+02 : f32
    %205 = vector.broadcast %cst_117 : f32 to vector<8x1xf32>
    %206 = arith.divf %204, %205 : vector<8x1xf32>
    %207 = vector.broadcast %199 : vector<8x1xf32> to vector<8x256xf32>
    %208 = arith.subf %195, %207 : vector<8x256xf32>
    %cst_118 = arith.constant 9.99999974E-6 : f32
    %209 = vector.broadcast %cst_118 : f32 to vector<8x1xf32>
    %210 = arith.addf %206, %209 : vector<8x1xf32>
    %211 = math.rsqrt %210 : vector<8x1xf32>
    %212 = vector.broadcast %211 : vector<8x1xf32> to vector<8x256xf32>
    %213 = arith.mulf %208, %212 : vector<8x256xf32>
    %c0_119 = arith.constant 0 : index
    %c0_120 = arith.constant 0 : index
    %214 = vector.load %arg6[%c0_119, %c0_120] : memref<1x256xf32, #tpu.memory_space<vmem>>, vector<1x256xf32>
    %215 = vector.broadcast %214 : vector<1x256xf32> to vector<8x256xf32>
    %216 = arith.mulf %213, %215 : vector<8x256xf32>
    %c0_121 = arith.constant 0 : index
    %c0_122 = arith.constant 0 : index
    %217 = vector.load %arg7[%c0_121, %c0_122] : memref<1x256xf32, #tpu.memory_space<vmem>>, vector<1x256xf32>
    %218 = vector.broadcast %217 : vector<1x256xf32> to vector<8x256xf32>
    %219 = arith.addf %216, %218 : vector<8x256xf32>
    %cst_123 = arith.constant -1.200000e+00 : f32
    %220 = vector.broadcast %cst_123 : f32 to vector<8x256xf32>
    %221 = arith.subf %219, %220 : vector<8x256xf32>
    %cst_124 = arith.constant 5.000000e-01 : f32
    %222 = vector.broadcast %cst_124 : f32 to vector<8x256xf32>
    %223 = arith.mulf %221, %222 : vector<8x256xf32>
    %224 = math.tanh %223 : vector<8x256xf32>
    %225 = arith.mulf %224, %224 : vector<8x256xf32>
    %cst_125 = arith.constant 1.000000e+00 : f32
    %226 = vector.broadcast %cst_125 : f32 to vector<8x256xf32>
    %227 = arith.subf %226, %225 : vector<8x256xf32>
    %228 = arith.truncf %227 : vector<8x256xf32> to vector<8x256xbf16>
    %c0_126 = arith.constant 0 : index
    %c0_127 = arith.constant 0 : index
    %229 = vector.load %arg8[%c0_126, %c0_127] : memref<2048x128xbf16, #tpu.memory_space<vmem>>, vector<256x128xbf16>
    %cst_128 = arith.constant dense<0.000000e+00> : vector<8x128xf32>
    %230 = tpu.matmul %228, %229, %cst_128 {dimension_numbers = #tpu.dot_dimension_numbers<[1], [0], [0], [1], [0, 0, 1, 1], [], []>} : vector<8x256xbf16>, vector<256x128xbf16>, vector<8x128xf32> -> vector<8x128xf32>
    %cst_129 = arith.constant -1.000000e+00 : f32
    %231 = vector.broadcast %cst_129 : f32 to vector<8x256xf32>
    %232 = arith.subf %219, %231 : vector<8x256xf32>
    %cst_130 = arith.constant 5.000000e-01 : f32
    %233 = vector.broadcast %cst_130 : f32 to vector<8x256xf32>
    %234 = arith.mulf %232, %233 : vector<8x256xf32>
    %235 = math.tanh %234 : vector<8x256xf32>
    %236 = arith.mulf %235, %235 : vector<8x256xf32>
    %cst_131 = arith.constant 1.000000e+00 : f32
    %237 = vector.broadcast %cst_131 : f32 to vector<8x256xf32>
    %238 = arith.subf %237, %236 : vector<8x256xf32>
    %239 = arith.truncf %238 : vector<8x256xf32> to vector<8x256xbf16>
    %c256_132 = arith.constant 256 : index
    %c0_133 = arith.constant 0 : index
    %240 = vector.load %arg8[%c256_132, %c0_133] : memref<2048x128xbf16, #tpu.memory_space<vmem>>, vector<256x128xbf16>
    %cst_134 = arith.constant dense<0.000000e+00> : vector<8x128xf32>
    %241 = tpu.matmul %239, %240, %cst_134 {dimension_numbers = #tpu.dot_dimension_numbers<[1], [0], [0], [1], [0, 0, 1, 1], [], []>} : vector<8x256xbf16>, vector<256x128xbf16>, vector<8x128xf32> -> vector<8x128xf32>
    %242 = arith.addf %230, %241 : vector<8x128xf32>
    %cst_135 = arith.constant -8.000000e-01 : f32
    %243 = vector.broadcast %cst_135 : f32 to vector<8x256xf32>
    %244 = arith.subf %219, %243 : vector<8x256xf32>
    %cst_136 = arith.constant 5.000000e-01 : f32
    %245 = vector.broadcast %cst_136 : f32 to vector<8x256xf32>
    %246 = arith.mulf %244, %245 : vector<8x256xf32>
    %247 = math.tanh %246 : vector<8x256xf32>
    %248 = arith.mulf %247, %247 : vector<8x256xf32>
    %cst_137 = arith.constant 1.000000e+00 : f32
    %249 = vector.broadcast %cst_137 : f32 to vector<8x256xf32>
    %250 = arith.subf %249, %248 : vector<8x256xf32>
    %251 = arith.truncf %250 : vector<8x256xf32> to vector<8x256xbf16>
    %c512_138 = arith.constant 512 : index
    %c0_139 = arith.constant 0 : index
    %252 = vector.load %arg8[%c512_138, %c0_139] : memref<2048x128xbf16, #tpu.memory_space<vmem>>, vector<256x128xbf16>
    %cst_140 = arith.constant dense<0.000000e+00> : vector<8x128xf32>
    %253 = tpu.matmul %251, %252, %cst_140 {dimension_numbers = #tpu.dot_dimension_numbers<[1], [0], [0], [1], [0, 0, 1, 1], [], []>} : vector<8x256xbf16>, vector<256x128xbf16>, vector<8x128xf32> -> vector<8x128xf32>
    %254 = arith.addf %242, %253 : vector<8x128xf32>
    %cst_141 = arith.constant -6.000000e-01 : f32
    %255 = vector.broadcast %cst_141 : f32 to vector<8x256xf32>
    %256 = arith.subf %219, %255 : vector<8x256xf32>
    %cst_142 = arith.constant 5.000000e-01 : f32
    %257 = vector.broadcast %cst_142 : f32 to vector<8x256xf32>
    %258 = arith.mulf %256, %257 : vector<8x256xf32>
    %259 = math.tanh %258 : vector<8x256xf32>
    %260 = arith.mulf %259, %259 : vector<8x256xf32>
    %cst_143 = arith.constant 1.000000e+00 : f32
    %261 = vector.broadcast %cst_143 : f32 to vector<8x256xf32>
    %262 = arith.subf %261, %260 : vector<8x256xf32>
    %263 = arith.truncf %262 : vector<8x256xf32> to vector<8x256xbf16>
    %c768_144 = arith.constant 768 : index
    %c0_145 = arith.constant 0 : index
    %264 = vector.load %arg8[%c768_144, %c0_145] : memref<2048x128xbf16, #tpu.memory_space<vmem>>, vector<256x128xbf16>
    %cst_146 = arith.constant dense<0.000000e+00> : vector<8x128xf32>
    %265 = tpu.matmul %263, %264, %cst_146 {dimension_numbers = #tpu.dot_dimension_numbers<[1], [0], [0], [1], [0, 0, 1, 1], [], []>} : vector<8x256xbf16>, vector<256x128xbf16>, vector<8x128xf32> -> vector<8x128xf32>
    %266 = arith.addf %254, %265 : vector<8x128xf32>
    %cst_147 = arith.constant -4.000000e-01 : f32
    %267 = vector.broadcast %cst_147 : f32 to vector<8x256xf32>
    %268 = arith.subf %219, %267 : vector<8x256xf32>
    %cst_148 = arith.constant 5.000000e-01 : f32
    %269 = vector.broadcast %cst_148 : f32 to vector<8x256xf32>
    %270 = arith.mulf %268, %269 : vector<8x256xf32>
    %271 = math.tanh %270 : vector<8x256xf32>
    %272 = arith.mulf %271, %271 : vector<8x256xf32>
    %cst_149 = arith.constant 1.000000e+00 : f32
    %273 = vector.broadcast %cst_149 : f32 to vector<8x256xf32>
    %274 = arith.subf %273, %272 : vector<8x256xf32>
    %275 = arith.truncf %274 : vector<8x256xf32> to vector<8x256xbf16>
    %c1024_150 = arith.constant 1024 : index
    %c0_151 = arith.constant 0 : index
    %276 = vector.load %arg8[%c1024_150, %c0_151] : memref<2048x128xbf16, #tpu.memory_space<vmem>>, vector<256x128xbf16>
    %cst_152 = arith.constant dense<0.000000e+00> : vector<8x128xf32>
    %277 = tpu.matmul %275, %276, %cst_152 {dimension_numbers = #tpu.dot_dimension_numbers<[1], [0], [0], [1], [0, 0, 1, 1], [], []>} : vector<8x256xbf16>, vector<256x128xbf16>, vector<8x128xf32> -> vector<8x128xf32>
    %278 = arith.addf %266, %277 : vector<8x128xf32>
    %cst_153 = arith.constant -2.000000e-01 : f32
    %279 = vector.broadcast %cst_153 : f32 to vector<8x256xf32>
    %280 = arith.subf %219, %279 : vector<8x256xf32>
    %cst_154 = arith.constant 5.000000e-01 : f32
    %281 = vector.broadcast %cst_154 : f32 to vector<8x256xf32>
    %282 = arith.mulf %280, %281 : vector<8x256xf32>
    %283 = math.tanh %282 : vector<8x256xf32>
    %284 = arith.mulf %283, %283 : vector<8x256xf32>
    %cst_155 = arith.constant 1.000000e+00 : f32
    %285 = vector.broadcast %cst_155 : f32 to vector<8x256xf32>
    %286 = arith.subf %285, %284 : vector<8x256xf32>
    %287 = arith.truncf %286 : vector<8x256xf32> to vector<8x256xbf16>
    %c1280 = arith.constant 1280 : index
    %c0_156 = arith.constant 0 : index
    %288 = vector.load %arg8[%c1280, %c0_156] : memref<2048x128xbf16, #tpu.memory_space<vmem>>, vector<256x128xbf16>
    %cst_157 = arith.constant dense<0.000000e+00> : vector<8x128xf32>
    %289 = tpu.matmul %287, %288, %cst_157 {dimension_numbers = #tpu.dot_dimension_numbers<[1], [0], [0], [1], [0, 0, 1, 1], [], []>} : vector<8x256xbf16>, vector<256x128xbf16>, vector<8x128xf32> -> vector<8x128xf32>
    %290 = arith.addf %278, %289 : vector<8x128xf32>
    %cst_158 = arith.constant 0.000000e+00 : f32
    %291 = vector.broadcast %cst_158 : f32 to vector<8x256xf32>
    %292 = arith.subf %219, %291 : vector<8x256xf32>
    %cst_159 = arith.constant 5.000000e-01 : f32
    %293 = vector.broadcast %cst_159 : f32 to vector<8x256xf32>
    %294 = arith.mulf %292, %293 : vector<8x256xf32>
    %295 = math.tanh %294 : vector<8x256xf32>
    %296 = arith.mulf %295, %295 : vector<8x256xf32>
    %cst_160 = arith.constant 1.000000e+00 : f32
    %297 = vector.broadcast %cst_160 : f32 to vector<8x256xf32>
    %298 = arith.subf %297, %296 : vector<8x256xf32>
    %299 = arith.truncf %298 : vector<8x256xf32> to vector<8x256xbf16>
    %c1536 = arith.constant 1536 : index
    %c0_161 = arith.constant 0 : index
    %300 = vector.load %arg8[%c1536, %c0_161] : memref<2048x128xbf16, #tpu.memory_space<vmem>>, vector<256x128xbf16>
    %cst_162 = arith.constant dense<0.000000e+00> : vector<8x128xf32>
    %301 = tpu.matmul %299, %300, %cst_162 {dimension_numbers = #tpu.dot_dimension_numbers<[1], [0], [0], [1], [0, 0, 1, 1], [], []>} : vector<8x256xbf16>, vector<256x128xbf16>, vector<8x128xf32> -> vector<8x128xf32>
    %302 = arith.addf %290, %301 : vector<8x128xf32>
    %cst_163 = arith.constant 2.000000e-01 : f32
    %303 = vector.broadcast %cst_163 : f32 to vector<8x256xf32>
    %304 = arith.subf %219, %303 : vector<8x256xf32>
    %cst_164 = arith.constant 5.000000e-01 : f32
    %305 = vector.broadcast %cst_164 : f32 to vector<8x256xf32>
    %306 = arith.mulf %304, %305 : vector<8x256xf32>
    %307 = math.tanh %306 : vector<8x256xf32>
    %308 = arith.mulf %307, %307 : vector<8x256xf32>
    %cst_165 = arith.constant 1.000000e+00 : f32
    %309 = vector.broadcast %cst_165 : f32 to vector<8x256xf32>
    %310 = arith.subf %309, %308 : vector<8x256xf32>
    %311 = arith.truncf %310 : vector<8x256xf32> to vector<8x256xbf16>
    %c1792 = arith.constant 1792 : index
    %c0_166 = arith.constant 0 : index
    %312 = vector.load %arg8[%c1792, %c0_166] : memref<2048x128xbf16, #tpu.memory_space<vmem>>, vector<256x128xbf16>
    %cst_167 = arith.constant dense<0.000000e+00> : vector<8x128xf32>
    %313 = tpu.matmul %311, %312, %cst_167 {dimension_numbers = #tpu.dot_dimension_numbers<[1], [0], [0], [1], [0, 0, 1, 1], [], []>} : vector<8x256xbf16>, vector<256x128xbf16>, vector<8x128xf32> -> vector<8x128xf32>
    %314 = arith.addf %302, %313 : vector<8x128xf32>
    %315 = vector.extract_strided_slice %314 {offsets = [0, 0], sizes = [8, 64], strides = [1, 1]} : vector<8x128xf32> to vector<8x64xf32>
    %cst_168 = arith.constant dense<0.000000e+00> : vector<8xf32>
    %316 = vector.multi_reduction <add>, %315, %cst_168 [1] : vector<8x64xf32> to vector<8xf32>
    %317 = vector.shape_cast %316 : vector<8xf32> to vector<8x1xf32>
    %cst_169 = arith.constant 6.400000e+01 : f32
    %318 = vector.broadcast %cst_169 : f32 to vector<8x1xf32>
    %319 = arith.divf %317, %318 : vector<8x1xf32>
    %320 = vector.broadcast %319 : vector<8x1xf32> to vector<8x64xf32>
    %321 = arith.subf %315, %320 : vector<8x64xf32>
    %322 = arith.mulf %321, %321 : vector<8x64xf32>
    %cst_170 = arith.constant dense<0.000000e+00> : vector<8xf32>
    %323 = vector.multi_reduction <add>, %322, %cst_170 [1] : vector<8x64xf32> to vector<8xf32>
    %324 = vector.shape_cast %323 : vector<8xf32> to vector<8x1xf32>
    %cst_171 = arith.constant 6.400000e+01 : f32
    %325 = vector.broadcast %cst_171 : f32 to vector<8x1xf32>
    %326 = arith.divf %324, %325 : vector<8x1xf32>
    %327 = vector.broadcast %319 : vector<8x1xf32> to vector<8x64xf32>
    %328 = arith.subf %315, %327 : vector<8x64xf32>
    %cst_172 = arith.constant 9.99999974E-6 : f32
    %329 = vector.broadcast %cst_172 : f32 to vector<8x1xf32>
    %330 = arith.addf %326, %329 : vector<8x1xf32>
    %331 = math.rsqrt %330 : vector<8x1xf32>
    %332 = vector.broadcast %331 : vector<8x1xf32> to vector<8x64xf32>
    %333 = arith.mulf %328, %332 : vector<8x64xf32>
    %c0_173 = arith.constant 0 : index
    %c0_174 = arith.constant 0 : index
    %334 = vector.load %arg9[%c0_173, %c0_174] : memref<1x64xf32, #tpu.memory_space<vmem>>, vector<1x64xf32>
    %335 = vector.broadcast %334 : vector<1x64xf32> to vector<8x64xf32>
    %336 = arith.mulf %333, %335 : vector<8x64xf32>
    %c0_175 = arith.constant 0 : index
    %c0_176 = arith.constant 0 : index
    %337 = vector.load %arg10[%c0_175, %c0_176] : memref<1x64xf32, #tpu.memory_space<vmem>>, vector<1x64xf32>
    %338 = vector.broadcast %337 : vector<1x64xf32> to vector<8x64xf32>
    %339 = arith.addf %336, %338 : vector<8x64xf32>
    %cst_177 = arith.constant -1.200000e+00 : f32
    %340 = vector.broadcast %cst_177 : f32 to vector<8x64xf32>
    %341 = arith.subf %339, %340 : vector<8x64xf32>
    %cst_178 = arith.constant 5.000000e-01 : f32
    %342 = vector.broadcast %cst_178 : f32 to vector<8x64xf32>
    %343 = arith.mulf %341, %342 : vector<8x64xf32>
    %344 = math.tanh %343 : vector<8x64xf32>
    %345 = arith.mulf %344, %344 : vector<8x64xf32>
    %cst_179 = arith.constant 1.000000e+00 : f32
    %346 = vector.broadcast %cst_179 : f32 to vector<8x64xf32>
    %347 = arith.subf %346, %345 : vector<8x64xf32>
    %348 = arith.truncf %347 : vector<8x64xf32> to vector<8x64xbf16>
    %c0_180 = arith.constant 0 : index
    %c0_181 = arith.constant 0 : index
    %349 = vector.load %arg11[%c0_180, %c0_181] : memref<512x128xbf16, #tpu.memory_space<vmem>>, vector<64x128xbf16>
    %cst_182 = arith.constant dense<0.000000e+00> : vector<8x128xf32>
    %350 = tpu.matmul %348, %349, %cst_182 {dimension_numbers = #tpu.dot_dimension_numbers<[1], [0], [0], [1], [0, 0, 1, 1], [], []>} : vector<8x64xbf16>, vector<64x128xbf16>, vector<8x128xf32> -> vector<8x128xf32>
    %cst_183 = arith.constant -1.000000e+00 : f32
    %351 = vector.broadcast %cst_183 : f32 to vector<8x64xf32>
    %352 = arith.subf %339, %351 : vector<8x64xf32>
    %cst_184 = arith.constant 5.000000e-01 : f32
    %353 = vector.broadcast %cst_184 : f32 to vector<8x64xf32>
    %354 = arith.mulf %352, %353 : vector<8x64xf32>
    %355 = math.tanh %354 : vector<8x64xf32>
    %356 = arith.mulf %355, %355 : vector<8x64xf32>
    %cst_185 = arith.constant 1.000000e+00 : f32
    %357 = vector.broadcast %cst_185 : f32 to vector<8x64xf32>
    %358 = arith.subf %357, %356 : vector<8x64xf32>
    %359 = arith.truncf %358 : vector<8x64xf32> to vector<8x64xbf16>
    %c64 = arith.constant 64 : index
    %c0_186 = arith.constant 0 : index
    %360 = vector.load %arg11[%c64, %c0_186] : memref<512x128xbf16, #tpu.memory_space<vmem>>, vector<64x128xbf16>
    %cst_187 = arith.constant dense<0.000000e+00> : vector<8x128xf32>
    %361 = tpu.matmul %359, %360, %cst_187 {dimension_numbers = #tpu.dot_dimension_numbers<[1], [0], [0], [1], [0, 0, 1, 1], [], []>} : vector<8x64xbf16>, vector<64x128xbf16>, vector<8x128xf32> -> vector<8x128xf32>
    %362 = arith.addf %350, %361 : vector<8x128xf32>
    %cst_188 = arith.constant -8.000000e-01 : f32
    %363 = vector.broadcast %cst_188 : f32 to vector<8x64xf32>
    %364 = arith.subf %339, %363 : vector<8x64xf32>
    %cst_189 = arith.constant 5.000000e-01 : f32
    %365 = vector.broadcast %cst_189 : f32 to vector<8x64xf32>
    %366 = arith.mulf %364, %365 : vector<8x64xf32>
    %367 = math.tanh %366 : vector<8x64xf32>
    %368 = arith.mulf %367, %367 : vector<8x64xf32>
    %cst_190 = arith.constant 1.000000e+00 : f32
    %369 = vector.broadcast %cst_190 : f32 to vector<8x64xf32>
    %370 = arith.subf %369, %368 : vector<8x64xf32>
    %371 = arith.truncf %370 : vector<8x64xf32> to vector<8x64xbf16>
    %c128_191 = arith.constant 128 : index
    %c0_192 = arith.constant 0 : index
    %372 = vector.load %arg11[%c128_191, %c0_192] : memref<512x128xbf16, #tpu.memory_space<vmem>>, vector<64x128xbf16>
    %cst_193 = arith.constant dense<0.000000e+00> : vector<8x128xf32>
    %373 = tpu.matmul %371, %372, %cst_193 {dimension_numbers = #tpu.dot_dimension_numbers<[1], [0], [0], [1], [0, 0, 1, 1], [], []>} : vector<8x64xbf16>, vector<64x128xbf16>, vector<8x128xf32> -> vector<8x128xf32>
    %374 = arith.addf %362, %373 : vector<8x128xf32>
    %cst_194 = arith.constant -6.000000e-01 : f32
    %375 = vector.broadcast %cst_194 : f32 to vector<8x64xf32>
    %376 = arith.subf %339, %375 : vector<8x64xf32>
    %cst_195 = arith.constant 5.000000e-01 : f32
    %377 = vector.broadcast %cst_195 : f32 to vector<8x64xf32>
    %378 = arith.mulf %376, %377 : vector<8x64xf32>
    %379 = math.tanh %378 : vector<8x64xf32>
    %380 = arith.mulf %379, %379 : vector<8x64xf32>
    %cst_196 = arith.constant 1.000000e+00 : f32
    %381 = vector.broadcast %cst_196 : f32 to vector<8x64xf32>
    %382 = arith.subf %381, %380 : vector<8x64xf32>
    %383 = arith.truncf %382 : vector<8x64xf32> to vector<8x64xbf16>
    %c192 = arith.constant 192 : index
    %c0_197 = arith.constant 0 : index
    %384 = vector.load %arg11[%c192, %c0_197] : memref<512x128xbf16, #tpu.memory_space<vmem>>, vector<64x128xbf16>
    %cst_198 = arith.constant dense<0.000000e+00> : vector<8x128xf32>
    %385 = tpu.matmul %383, %384, %cst_198 {dimension_numbers = #tpu.dot_dimension_numbers<[1], [0], [0], [1], [0, 0, 1, 1], [], []>} : vector<8x64xbf16>, vector<64x128xbf16>, vector<8x128xf32> -> vector<8x128xf32>
    %386 = arith.addf %374, %385 : vector<8x128xf32>
    %cst_199 = arith.constant -4.000000e-01 : f32
    %387 = vector.broadcast %cst_199 : f32 to vector<8x64xf32>
    %388 = arith.subf %339, %387 : vector<8x64xf32>
    %cst_200 = arith.constant 5.000000e-01 : f32
    %389 = vector.broadcast %cst_200 : f32 to vector<8x64xf32>
    %390 = arith.mulf %388, %389 : vector<8x64xf32>
    %391 = math.tanh %390 : vector<8x64xf32>
    %392 = arith.mulf %391, %391 : vector<8x64xf32>
    %cst_201 = arith.constant 1.000000e+00 : f32
    %393 = vector.broadcast %cst_201 : f32 to vector<8x64xf32>
    %394 = arith.subf %393, %392 : vector<8x64xf32>
    %395 = arith.truncf %394 : vector<8x64xf32> to vector<8x64xbf16>
    %c256_202 = arith.constant 256 : index
    %c0_203 = arith.constant 0 : index
    %396 = vector.load %arg11[%c256_202, %c0_203] : memref<512x128xbf16, #tpu.memory_space<vmem>>, vector<64x128xbf16>
    %cst_204 = arith.constant dense<0.000000e+00> : vector<8x128xf32>
    %397 = tpu.matmul %395, %396, %cst_204 {dimension_numbers = #tpu.dot_dimension_numbers<[1], [0], [0], [1], [0, 0, 1, 1], [], []>} : vector<8x64xbf16>, vector<64x128xbf16>, vector<8x128xf32> -> vector<8x128xf32>
    %398 = arith.addf %386, %397 : vector<8x128xf32>
    %cst_205 = arith.constant -2.000000e-01 : f32
    %399 = vector.broadcast %cst_205 : f32 to vector<8x64xf32>
    %400 = arith.subf %339, %399 : vector<8x64xf32>
    %cst_206 = arith.constant 5.000000e-01 : f32
    %401 = vector.broadcast %cst_206 : f32 to vector<8x64xf32>
    %402 = arith.mulf %400, %401 : vector<8x64xf32>
    %403 = math.tanh %402 : vector<8x64xf32>
    %404 = arith.mulf %403, %403 : vector<8x64xf32>
    %cst_207 = arith.constant 1.000000e+00 : f32
    %405 = vector.broadcast %cst_207 : f32 to vector<8x64xf32>
    %406 = arith.subf %405, %404 : vector<8x64xf32>
    %407 = arith.truncf %406 : vector<8x64xf32> to vector<8x64xbf16>
    %c320 = arith.constant 320 : index
    %c0_208 = arith.constant 0 : index
    %408 = vector.load %arg11[%c320, %c0_208] : memref<512x128xbf16, #tpu.memory_space<vmem>>, vector<64x128xbf16>
    %cst_209 = arith.constant dense<0.000000e+00> : vector<8x128xf32>
    %409 = tpu.matmul %407, %408, %cst_209 {dimension_numbers = #tpu.dot_dimension_numbers<[1], [0], [0], [1], [0, 0, 1, 1], [], []>} : vector<8x64xbf16>, vector<64x128xbf16>, vector<8x128xf32> -> vector<8x128xf32>
    %410 = arith.addf %398, %409 : vector<8x128xf32>
    %cst_210 = arith.constant 0.000000e+00 : f32
    %411 = vector.broadcast %cst_210 : f32 to vector<8x64xf32>
    %412 = arith.subf %339, %411 : vector<8x64xf32>
    %cst_211 = arith.constant 5.000000e-01 : f32
    %413 = vector.broadcast %cst_211 : f32 to vector<8x64xf32>
    %414 = arith.mulf %412, %413 : vector<8x64xf32>
    %415 = math.tanh %414 : vector<8x64xf32>
    %416 = arith.mulf %415, %415 : vector<8x64xf32>
    %cst_212 = arith.constant 1.000000e+00 : f32
    %417 = vector.broadcast %cst_212 : f32 to vector<8x64xf32>
    %418 = arith.subf %417, %416 : vector<8x64xf32>
    %419 = arith.truncf %418 : vector<8x64xf32> to vector<8x64xbf16>
    %c384_213 = arith.constant 384 : index
    %c0_214 = arith.constant 0 : index
    %420 = vector.load %arg11[%c384_213, %c0_214] : memref<512x128xbf16, #tpu.memory_space<vmem>>, vector<64x128xbf16>
    %cst_215 = arith.constant dense<0.000000e+00> : vector<8x128xf32>
    %421 = tpu.matmul %419, %420, %cst_215 {dimension_numbers = #tpu.dot_dimension_numbers<[1], [0], [0], [1], [0, 0, 1, 1], [], []>} : vector<8x64xbf16>, vector<64x128xbf16>, vector<8x128xf32> -> vector<8x128xf32>
    %422 = arith.addf %410, %421 : vector<8x128xf32>
    %cst_216 = arith.constant 2.000000e-01 : f32
    %423 = vector.broadcast %cst_216 : f32 to vector<8x64xf32>
    %424 = arith.subf %339, %423 : vector<8x64xf32>
    %cst_217 = arith.constant 5.000000e-01 : f32
    %425 = vector.broadcast %cst_217 : f32 to vector<8x64xf32>
    %426 = arith.mulf %424, %425 : vector<8x64xf32>
    %427 = math.tanh %426 : vector<8x64xf32>
    %428 = arith.mulf %427, %427 : vector<8x64xf32>
    %cst_218 = arith.constant 1.000000e+00 : f32
    %429 = vector.broadcast %cst_218 : f32 to vector<8x64xf32>
    %430 = arith.subf %429, %428 : vector<8x64xf32>
    %431 = arith.truncf %430 : vector<8x64xf32> to vector<8x64xbf16>
    %c448 = arith.constant 448 : index
    %c0_219 = arith.constant 0 : index
    %432 = vector.load %arg11[%c448, %c0_219] : memref<512x128xbf16, #tpu.memory_space<vmem>>, vector<64x128xbf16>
    %cst_220 = arith.constant dense<0.000000e+00> : vector<8x128xf32>
    %433 = tpu.matmul %431, %432, %cst_220 {dimension_numbers = #tpu.dot_dimension_numbers<[1], [0], [0], [1], [0, 0, 1, 1], [], []>} : vector<8x64xbf16>, vector<64x128xbf16>, vector<8x128xf32> -> vector<8x128xf32>
    %434 = arith.addf %422, %433 : vector<8x128xf32>
    %c0_221 = arith.constant 0 : index
    %c0_222 = arith.constant 0 : index
    %435 = vector.load %arg12[%c0_221, %c0_222] : memref<8x128xf32, #tpu.memory_space<vmem>>, vector<8x128xf32>
    tpu.vector_store %arg12[%c0_221, %c0_222], %434 {strides = array<i32>} : memref<8x128xf32, #tpu.memory_space<vmem>>, vector<8x128xf32>,
    return
  }
  func.func @transform_0(%arg0: i32) -> (i32, i32, i32) {
    %c0_i32 = arith.constant 0 : i32
    %c0_i32_0 = arith.constant 0 : i32
    %c0_i32_1 = arith.constant 0 : i32
    return %c0_i32, %arg0, %c0_i32_0 : i32, i32, i32
  }
  func.func @transform_1(%arg0: i32) -> (i32, i32) {
    %c0_i32 = arith.constant 0 : i32
    %c0_i32_0 = arith.constant 0 : i32
    %c0_i32_1 = arith.constant 0 : i32
    return %c0_i32, %c0_i32_0 : i32, i32
  }
  func.func @transform_2(%arg0: i32) -> (i32, i32) {
    %c0_i32 = arith.constant 0 : i32
    %c0_i32_0 = arith.constant 0 : i32
    %c0_i32_1 = arith.constant 0 : i32
    return %c0_i32, %c0_i32_0 : i32, i32
  }
  func.func @transform_3(%arg0: i32) -> (i32, i32) {
    %c0_i32 = arith.constant 0 : i32
    %c0_i32_0 = arith.constant 0 : i32
    %c0_i32_1 = arith.constant 0 : i32
    return %c0_i32, %c0_i32_0 : i32, i32
  }
  func.func @transform_4(%arg0: i32) -> (i32, i32) {
    %c0_i32 = arith.constant 0 : i32
    %c0_i32_0 = arith.constant 0 : i32
    %c0_i32_1 = arith.constant 0 : i32
    return %c0_i32, %c0_i32_0 : i32, i32
  }
  func.func @transform_5(%arg0: i32) -> (i32, i32) {
    %c0_i32 = arith.constant 0 : i32
    %c0_i32_0 = arith.constant 0 : i32
    %c0_i32_1 = arith.constant 0 : i32
    return %c0_i32, %c0_i32_0 : i32, i32
  }
  func.func @transform_6(%arg0: i32) -> (i32, i32) {
    %c0_i32 = arith.constant 0 : i32
    %c0_i32_0 = arith.constant 0 : i32
    %c0_i32_1 = arith.constant 0 : i32
    return %c0_i32, %c0_i32_0 : i32, i32
  }
  func.func @transform_7(%arg0: i32) -> (i32, i32) {
    %c0_i32 = arith.constant 0 : i32
    %c0_i32_0 = arith.constant 0 : i32
    %c0_i32_1 = arith.constant 0 : i32
    return %c0_i32, %c0_i32_0 : i32, i32
  }
  func.func @transform_8(%arg0: i32) -> (i32, i32) {
    %c0_i32 = arith.constant 0 : i32
    %c0_i32_0 = arith.constant 0 : i32
    %c0_i32_1 = arith.constant 0 : i32
    return %c0_i32, %c0_i32_0 : i32, i32
  }
  func.func @transform_9(%arg0: i32) -> (i32, i32) {
    %c0_i32 = arith.constant 0 : i32
    %c0_i32_0 = arith.constant 0 : i32
    %c0_i32_1 = arith.constant 0 : i32
    return %c0_i32, %c0_i32_0 : i32, i32
  }
  func.func @transform_10(%arg0: i32) -> (i32, i32) {
    %c0_i32 = arith.constant 0 : i32
    %c0_i32_0 = arith.constant 0 : i32
    %c0_i32_1 = arith.constant 0 : i32
    return %c0_i32, %c0_i32_0 : i32, i32
  }
  func.func @transform_11(%arg0: i32) -> (i32, i32) {
    %c0_i32 = arith.constant 0 : i32
    %c0_i32_0 = arith.constant 0 : i32
    return %arg0, %c0_i32 : i32, i32
  }
}

</mosaic_0001>

<llo_original>
// kernel: _lambda_.3
$region0: #{_lambda_.3}
  #allocation0 [shape = 'u32[]', space=smem, size = 0x4, offset = 0x4, fixed_abs, tag = 'smem constant byte address 0x4 - core index']
  #allocation1 [shape = 'u32[144,128]{1,0:T(1,128)}', space=vmem, size = 0x12000, scoped, tag = 'internal scratch']
  %s0 = inlined_call_operand.vmem [shape: bf16[4,128,9], index: 0, kind: input, shape index: {}]
  %s1 = inlined_call_operand.vmem [shape: bf16[9,128], index: 1, kind: input, shape index: {}]
  %s2 = inlined_call_operand.vmem [shape: f32[1,128], index: 2, kind: input, shape index: {}]
  %s3 = inlined_call_operand.vmem [shape: bf16[128,128], index: 3, kind: output, shape index: {}]
  %s4 = sld [smem:[#allocation0]]
  $region86: #{_lambda_.3} parent=0
    _
  %s6 = ssub.s32 1, %s4
  %s7 = scalar_select 0, %s6, %s4
  $region1: #{_lambda_.3} parent=0
    #allocation2 [shape = 'u8[131072]{0}', space=vmem, size = 0x20000, scoped, tag = 'input window, operand 0']
    loop: start=0, step=1, limit=4
    $region2: #{_lambda_.3} parent=1 // loop_pre_header
      _
    $region3: #{_lambda_.3} parent=1 // loop_header
      %s9 = sphi 0, %s13
      %p10 = scmp.ge.s32.totalorder %s9, 4
      %s19 = sphi 0, %s21
      %s22 = sphi 0, %s19
      %s23 = sphi 0, %s22
      %s39 = sphi 0, %s23
      %s43 = sphi 0, %s43
      %s45 = sphi 0, %s43
      %s46 = sphi 0, %s45
      %s60 = sphi 0, %s46
      %s64 = sphi 0, %s64
      %s66 = sphi 0, %s64
      %s67 = sphi 0, %s66
      %s81 = sphi 0, %s67
      %s87 = sphi 0, %s89
      %s90 = sphi 0, %s87
      %s91 = sphi 0, %s90
      %s107 = sphi 0, %s91
    $region4: #{_lambda_.3} parent=1 // loop_header_branch
      %12 = sbr.rel (%p10) target = $region8
    $region5: #{_lambda_.3} parent=1 // loop_body
      %s14 = ssub.s32 %s9, 1
      %s15 = ssub.s32 %s9, 2
      %s16 = sadd.s32 %s9, 1
      %s17 = ssub.s32 %s9, %s16
      %p18 = scmp.eq.s32.totalorder %s17, 0
      %s20 = sadd.s32 %s19, 1
      %s21 = scalar_select %p18, %s19, %s20
      %p24 = pneg %p18
      %p25 = scmp.eq.s32.totalorder %s9, 1
      %p26 = por %p24, %p25
      %p27 = scmp.ne.s32.totalorder %s19, %s22
      %p28 = scmp.eq.s32.totalorder %s9, 0
      %p29 = por %p27, %p28
      %p30 = scmp.ne.s32.totalorder %s19, %s22
      %p31 = scmp.eq.s32.totalorder %s14, 1
      %p32 = por %p30, %p31
      %p33 = scmp.ne.s32.totalorder %s22, %s23
      %p34 = scmp.eq.s32.totalorder %s14, 0
      %p35 = por %p33, %p34
      %p36 = scmp.ne.s32.totalorder %s22, %s23
      %p37 = scmp.eq.s32.totalorder %s15, 1
      %p38 = por %p36, %p37
      %p40 = scmp.ne.s32.totalorder %s23, %s39
      %p41 = scmp.eq.s32.totalorder %s15, 0
      %p42 = por %p40, %p41
      %s44 = sadd.s32 %s43, 1
      %p47 = scmp.eq.s32.totalorder %s9, 1
      %p48 = scmp.ne.s32.totalorder %s43, %s45
      %p49 = scmp.eq.s32.totalorder %s9, 0
      %p50 = por %p48, %p49
      %p51 = scmp.ne.s32.totalorder %s43, %s45
      %p52 = scmp.eq.s32.totalorder %s14, 1
      %p53 = por %p51, %p52
      %p54 = scmp.ne.s32.totalorder %s45, %s46
      %p55 = scmp.eq.s32.totalorder %s14, 0
      %p56 = por %p54, %p55
      %p57 = scmp.ne.s32.totalorder %s45, %s46
      %p58 = scmp.eq.s32.totalorder %s15, 1
      %p59 = por %p57, %p58
      %p61 = scmp.ne.s32.totalorder %s46, %s60
      %p62 = scmp.eq.s32.totalorder %s15, 0
      %p63 = por %p61, %p62
      %s65 = sadd.s32 %s64, 1
      %p68 = scmp.eq.s32.totalorder %s9, 1
      %p69 = scmp.ne.s32.totalorder %s64, %s66
      %p70 = scmp.eq.s32.totalorder %s9, 0
      %p71 = por %p69, %p70
      %p72 = scmp.ne.s32.totalorder %s64, %s66
      %p73 = scmp.eq.s32.totalorder %s14, 1
      %p74 = por %p72, %p73
      %p75 = scmp.ne.s32.totalorder %s66, %s67
      %p76 = scmp.eq.s32.totalorder %s14, 0
      %p77 = por %p75, %p76
      %p78 = scmp.ne.s32.totalorder %s66, %s67
      %p79 = scmp.eq.s32.totalorder %s15, 1
      %p80 = por %p78, %p79
      %p82 = scmp.ne.s32.totalorder %s67, %s81
      %p83 = scmp.eq.s32.totalorder %s15, 0
      %p84 = por %p82, %p83
      %s85 = ssub.s32 %s9, %s16
      %p86 = scmp.eq.s32.totalorder %s85, 0
      %s88 = sadd.s32 %s87, 1
      %s89 = scalar_select %p86, %s87, %s88
      %p92 = pneg %p86
      %p93 = scmp.eq.s32.totalorder %s9, 1
      %p94 = por %p92, %p93
      %p95 = scmp.ne.s32.totalorder %s87, %s90
      %p96 = scmp.eq.s32.totalorder %s9, 0
      %p97 = por %p95, %p96
      %p98 = scmp.ne.s32.totalorder %s87, %s90
      %p99 = scmp.eq.s32.totalorder %s14, 1
      %p100 = por %p98, %p99
      %p101 = scmp.ne.s32.totalorder %s90, %s91
      %p102 = scmp.eq.s32.totalorder %s14, 0
      %p103 = por %p101, %p102
      %p104 = scmp.ne.s32.totalorder %s90, %s91
      %p105 = scmp.eq.s32.totalorder %s15, 1
      %p106 = por %p104, %p105
      %p108 = scmp.ne.s32.totalorder %s91, %s107
      %p109 = scmp.eq.s32.totalorder %s15, 0
      %p110 = por %p108, %p109
      %p111 = scmp.le.s32.totalorder 1, %s9
      %p112 = scmp.lt.s32.totalorder %s9, 3
      %p113 = pnand %p111, %p112
      %p114 = pneg %p113
      // Predicated region
      $region9: #{_lambda_.3} parent=5 // pred_check
        _
      $region10: #{_lambda_.3} parent=5 // pred_check_branch
        %116 = sbr.rel (%p113) target = $region12
      $region11: #{_lambda_.3} parent=5 // pred_region
        %s117 = ssub.s32 %s9, 1
        // Predicated region
        $region13: #{_lambda_.3} parent=11 // pred_check
          %p118 = pneg %p56
        $region14: #{_lambda_.3} parent=11 // pred_check_branch
          %120 = sbr.rel (%p118) target = $region16
        $region15: #{_lambda_.3} parent=11 // pred_region
          _
        $region16: #{_lambda_.3} parent=11 // pred_fallthru
          _
        // Predicated region
        $region17: #{_lambda_.3} parent=11 // pred_check
          %p121 = pneg %p77
        $region18: #{_lambda_.3} parent=11 // pred_check_branch
          %123 = sbr.rel (%p121) target = $region20
        $region19: #{_lambda_.3} parent=11 // pred_region
          _
        $region20: #{_lambda_.3} parent=11 // pred_fallthru
          _
      $region12: #{_lambda_.3} parent=5 // pred_fallthru
        _
      %p124 = scmp.lt.s32.totalorder %s9, 2
      // Predicated region
      $region21: #{_lambda_.3} parent=5 // pred_check
        %p125 = pneg %p124
      $region22: #{_lambda_.3} parent=5 // pred_check_branch
        %127 = sbr.rel (%p125) target = $region24
      $region23: #{_lambda_.3} parent=5 // pred_region
        // Predicated region
        $region25: #{_lambda_.3} parent=23 // pred_check
          %p128 = pneg %p29
        $region26: #{_lambda_.3} parent=23 // pred_check_branch
          %130 = sbr.rel (%p128) target = $region28
        $region27: #{_lambda_.3} parent=23 // pred_region
          %s131 = sand.u32 %s19, 1
          %s132 = sand.u32 %s19, 1
          %s133 = smul.addr %s132, 128
          %s134 = scalar_lea.vmem [#allocation2], %s133
          %s135 = smul.u32 8, %s9
          %s136 = smul.addr %s135, 4
          %s137 = scalar_lea.vmem %s0, %s136
          // Predicated region
          $region29: #{_lambda_.3} parent=27 // pred_check
            _
          $region30: #{_lambda_.3} parent=27 // pred_check_branch
            %139 = sbr.rel (0) target = $region32
          $region31: #{_lambda_.3} parent=27 // pred_region
            // Predicated region
            $region33: #{_lambda_.3} parent=31 // pred_check
              _
            $region34: #{_lambda_.3} parent=31 // pred_check_branch
              %141 = sbr.rel target = $region36
            $region35: #{_lambda_.3} parent=31 // pred_region
              // Predicated region
              $region48: #{_lambda_.3} parent=35 // pred_check
                _
              $region49: #{_lambda_.3} parent=35 // pred_check_branch
                %218 = sbr.rel (0) target = $region51
              $region50: #{_lambda_.3} parent=35 // pred_region
                loop: start=0, step=1, limit=1
                $region52: #{_lambda_.3} parent=50 // loop_pre_header
                  _
                $region53: #{_lambda_.3} parent=50 // loop_header
                  %s220 = sphi 0, %s224
                  %p221 = scmp.ge.s32.totalorder %s220, 1
                  %s225 = sphi %s137, %s137
                  %s226 = sphi %s134, %s134
                $region54: #{_lambda_.3} parent=50 // loop_header_branch
                  %223 = sbr.rel (%p221) target = $region58
                $region55: #{_lambda_.3} parent=50 // loop_body
                  _
                $region56: #{_lambda_.3} parent=50 // loop_footer
                  %s224 = sadd.s32 1, %s220
                $region57: #{_lambda_.3} parent=50 // loop_footer_branch
                  %219 = sbr.rel target = $region53
                $region58: #{_lambda_.3} parent=50 // loop_exit
                  _
                loop: start=0, step=1, limit=1
                $region59: #{_lambda_.3} parent=50 // loop_pre_header
                  _
                $region60: #{_lambda_.3} parent=50 // loop_header
                  %s229 = sphi 0, %s233
                  %p230 = scmp.ge.s32.totalorder %s229, 1
                  %s234 = sphi %s137, %s137
                  %s235 = sphi %s134, %s134
                $region61: #{_lambda_.3} parent=50 // loop_header_branch
                  %232 = sbr.rel (%p230) target = $region65
                $region62: #{_lambda_.3} parent=50 // loop_body
                  %v236 = vld [vmem:[%s234] sm:$0xf]
                  %237 = vst [vmem:[%s235] sm:$0xf] %v236
                  %v238 = vld [vmem:[%s234 + $0x4] sm:$0xf]
                  %239 = vst [vmem:[%s235 + $0x4] sm:$0xf] %v238
                  %v240 = vld [vmem:[%s234 + $0x8] sm:$0xf]
                  %241 = vst [vmem:[%s235 + $0x8] sm:$0xf] %v240
                  %v242 = vld [vmem:[%s234 + $0xc] sm:$0xf]
                  %243 = vst [vmem:[%s235 + $0xc] sm:$0xf] %v242
                  %v244 = vld [vmem:[%s234 + $0x10] sm:$0xf]
                  %245 = vst [vmem:[%s235 + $0x10] sm:$0xf] %v244
                  %v246 = vld [vmem:[%s234 + $0x14] sm:$0xf]
                  %247 = vst [vmem:[%s235 + $0x14] sm:$0xf] %v246
                  %v248 = vld [vmem:[%s234 + $0x18] sm:$0xf]
                  %249 = vst [vmem:[%s235 + $0x18] sm:$0xf] %v248
                  %v250 = vld [vmem:[%s234 + $0x1c] sm:$0xf]
                  %251 = vst [vmem:[%s235 + $0x1c] sm:$0xf] %v250
                  %v252 = vld [vmem:[%s234 + $0x40] sm:$0xf]
                  %253 = vst [vmem:[%s235 + $0x20] sm:$0xf] %v252
                  %v254 = vld [vmem:[%s234 + $0x44] sm:$0xf]
                  %255 = vst [vmem:[%s235 + $0x24] sm:$0xf] %v254
                  %v256 = vld [vmem:[%s234 + $0x48] sm:$0xf]
                  %257 = vst [vmem:[%s235 + $0x28] sm:$0xf] %v256
                  %v258 = vld [vmem:[%s234 + $0x4c] sm:$0xf]
                  %259 = vst [vmem:[%s235 + $0x2c] sm:$0xf] %v258
                  %v260 = vld [vmem:[%s234 + $0x50] sm:$0xf]
                  %261 = vst [vmem:[%s235 + $0x30] sm:$0xf] %v260
                  %v262 = vld [vmem:[%s234 + $0x54] sm:$0xf]
                  %263 = vst [vmem:[%s235 + $0x34] sm:$0xf] %v262
                  %v264 = vld [vmem:[%s234 + $0x58] sm:$0xf]
                  %265 = vst [vmem:[%s235 + $0x38] sm:$0xf] %v264
                  %v266 = vld [vmem:[%s234 + $0x5c] sm:$0xf]
                  %267 = vst [vmem:[%s235 + $0x3c] sm:$0xf] %v266
                  %v268 = vld [vmem:[%s234 + $0x80] sm:$0xf]
                  %269 = vst [vmem:[%s235 + $0x40] sm:$0xf] %v268
                  %v270 = vld [vmem:[%s234 + $0x84] sm:$0xf]
                  %271 = vst [vmem:[%s235 + $0x44] sm:$0xf] %v270
                  %v272 = vld [vmem:[%s234 + $0x88] sm:$0xf]
                  %273 = vst [vmem:[%s235 + $0x48] sm:$0xf] %v272
                  %v274 = vld [vmem:[%s234 + $0x8c] sm:$0xf]
                  %275 = vst [vmem:[%s235 + $0x4c] sm:$0xf] %v274
                  %v276 = vld [vmem:[%s234 + $0x90] sm:$0xf]
                  %277 = vst [vmem:[%s235 + $0x50] sm:$0xf] %v276
                  %v278 = vld [vmem:[%s234 + $0x94] sm:$0xf]
                  %279 = vst [vmem:[%s235 + $0x54] sm:$0xf] %v278
                  %v280 = vld [vmem:[%s234 + $0x98] sm:$0xf]
                  %281 = vst [vmem:[%s235 + $0x58] sm:$0xf] %v280
                  %v282 = vld [vmem:[%s234 + $0x9c] sm:$0xf]
                  %283 = vst [vmem:[%s235 + $0x5c] sm:$0xf] %v282
                  %v284 = vld [vmem:[%s234 + $0xc0] sm:$0xf]
                  %285 = vst [vmem:[%s235 + $0x60] sm:$0xf] %v284
                  %v286 = vld [vmem:[%s234 + $0xc4] sm:$0xf]
                  %287 = vst [vmem:[%s235 + $0x64] sm:$0xf] %v286
                  %v288 = vld [vmem:[%s234 + $0xc8] sm:$0xf]
                  %289 = vst [vmem:[%s235 + $0x68] sm:$0xf] %v288
                  %v290 = vld [vmem:[%s234 + $0xcc] sm:$0xf]
                  %291 = vst [vmem:[%s235 + $0x6c] sm:$0xf] %v290
                  %v292 = vld [vmem:[%s234 + $0xd0] sm:$0xf]
                  %293 = vst [vmem:[%s235 + $0x70] sm:$0xf] %v292
                  %v294 = vld [vmem:[%s234 + $0xd4] sm:$0xf]
                  %295 = vst [vmem:[%s235 + $0x74] sm:$0xf] %v294
                  %v296 = vld [vmem:[%s234 + $0xd8] sm:$0xf]
                  %297 = vst [vmem:[%s235 + $0x78] sm:$0xf] %v296
                  %v298 = vld [vmem:[%s234 + $0xdc] sm:$0xf]
                  %299 = vst [vmem:[%s235 + $0x7c] sm:$0xf] %v298
                $region63: #{_lambda_.3} parent=50 // loop_footer
                  %s233 = sadd.s32 1, %s229
                $region64: #{_lambda_.3} parent=50 // loop_footer_branch
                  %228 = sbr.rel target = $region60
                $region65: #{_lambda_.3} parent=50 // loop_exit
                  _
              $region51: #{_lambda_.3} parent=35 // pred_fallthru
                _
            $region36: #{_lambda_.3} parent=31 // pred_fallthru
              _
            // Predicated region
            $region37: #{_lambda_.3} parent=31 // pred_check
              _
            $region38: #{_lambda_.3} parent=31 // pred_check_branch
              %143 = sbr.rel (0) target = $region40
            $region39: #{_lambda_.3} parent=31 // pred_region
              loop: start=0, step=1, limit=1
              $region41: #{_lambda_.3} parent=39 // loop_pre_header
                _
              $region42: #{_lambda_.3} parent=39 // loop_header
                %s146 = sphi 0, %s150
                %p147 = scmp.ge.s32.totalorder %s146, 1
                %s151 = sphi %s137, %s137
                %s152 = sphi %s134, %s134
              $region43: #{_lambda_.3} parent=39 // loop_header_branch
                %149 = sbr.rel (%p147) target = $region47
              $region44: #{_lambda_.3} parent=39 // loop_body
                %v153 = vld [vmem:[%s151] sm:$0xf]
                %154 = vst [vmem:[%s152] sm:$0xf] %v153
                %v155 = vld [vmem:[%s151 + $0x4] sm:$0xf]
                %156 = vst [vmem:[%s152 + $0x4] sm:$0xf] %v155
                %v157 = vld [vmem:[%s151 + $0x8] sm:$0xf]
                %158 = vst [vmem:[%s152 + $0x8] sm:$0xf] %v157
                %v159 = vld [vmem:[%s151 + $0xc] sm:$0xf]
                %160 = vst [vmem:[%s152 + $0xc] sm:$0xf] %v159
                %v161 = vld [vmem:[%s151 + $0x10] sm:$0xf]
                %162 = vst [vmem:[%s152 + $0x10] sm:$0xf] %v161
                %v163 = vld [vmem:[%s151 + $0x14] sm:$0xf]
                %164 = vst [vmem:[%s152 + $0x14] sm:$0xf] %v163
                %v165 = vld [vmem:[%s151 + $0x18] sm:$0xf]
                %166 = vst [vmem:[%s152 + $0x18] sm:$0xf] %v165
                %v167 = vld [vmem:[%s151 + $0x1c] sm:$0xf]
                %168 = vst [vmem:[%s152 + $0x1c] sm:$0xf] %v167
                %v169 = vld [vmem:[%s151 + $0x40] sm:$0xf]
                %170 = vst [vmem:[%s152 + $0x20] sm:$0xf] %v169
                %v171 = vld [vmem:[%s151 + $0x44] sm:$0xf]
                %172 = vst [vmem:[%s152 + $0x24] sm:$0xf] %v171
                %v173 = vld [vmem:[%s151 + $0x48] sm:$0xf]
                %174 = vst [vmem:[%s152 + $0x28] sm:$0xf] %v173
                %v175 = vld [vmem:[%s151 + $0x4c] sm:$0xf]
                %176 = vst [vmem:[%s152 + $0x2c] sm:$0xf] %v175
                %v177 = vld [vmem:[%s151 + $0x50] sm:$0xf]
                %178 = vst [vmem:[%s152 + $0x30] sm:$0xf] %v177
                %v179 = vld [vmem:[%s151 + $0x54] sm:$0xf]
                %180 = vst [vmem:[%s152 + $0x34] sm:$0xf] %v179
                %v181 = vld [vmem:[%s151 + $0x58] sm:$0xf]
                %182 = vst [vmem:[%s152 + $0x38] sm:$0xf] %v181
                %v183 = vld [vmem:[%s151 + $0x5c] sm:$0xf]
                %184 = vst [vmem:[%s152 + $0x3c] sm:$0xf] %v183
                %v185 = vld [vmem:[%s151 + $0x80] sm:$0xf]
                %186 = vst [vmem:[%s152 + $0x40] sm:$0xf] %v185
                %v187 = vld [vmem:[%s151 + $0x84] sm:$0xf]
                %188 = vst [vmem:[%s152 + $0x44] sm:$0xf] %v187
                %v189 = vld [vmem:[%s151 + $0x88] sm:$0xf]
                %190 = vst [vmem:[%s152 + $0x48] sm:$0xf] %v189
                %v191 = vld [vmem:[%s151 + $0x8c] sm:$0xf]
                %192 = vst [vmem:[%s152 + $0x4c] sm:$0xf] %v191
                %v193 = vld [vmem:[%s151 + $0x90] sm:$0xf]
                %194 = vst [vmem:[%s152 + $0x50] sm:$0xf] %v193
                %v195 = vld [vmem:[%s151 + $0x94] sm:$0xf]
                %196 = vst [vmem:[%s152 + $0x54] sm:$0xf] %v195
                %v197 = vld [vmem:[%s151 + $0x98] sm:$0xf]
                %198 = vst [vmem:[%s152 + $0x58] sm:$0xf] %v197
                %v199 = vld [vmem:[%s151 + $0x9c] sm:$0xf]
                %200 = vst [vmem:[%s152 + $0x5c] sm:$0xf] %v199
                %v201 = vld [vmem:[%s151 + $0xc0] sm:$0xf]
                %202 = vst [vmem:[%s152 + $0x60] sm:$0xf] %v201
                %v203 = vld [vmem:[%s151 + $0xc4] sm:$0xf]
                %204 = vst [vmem:[%s152 + $0x64] sm:$0xf] %v203
                %v205 = vld [vmem:[%s151 + $0xc8] sm:$0xf]
                %206 = vst [vmem:[%s152 + $0x68] sm:$0xf] %v205
                %v207 = vld [vmem:[%s151 + $0xcc] sm:$0xf]
                %208 = vst [vmem:[%s152 + $0x6c] sm:$0xf] %v207
                %v209 = vld [vmem:[%s151 + $0xd0] sm:$0xf]
                %210 = vst [vmem:[%s152 + $0x70] sm:$0xf] %v209
                %v211 = vld [vmem:[%s151 + $0xd4] sm:$0xf]
                %212 = vst [vmem:[%s152 + $0x74] sm:$0xf] %v211
                %v213 = vld [vmem:[%s151 + $0xd8] sm:$0xf]
                %214 = vst [vmem:[%s152 + $0x78] sm:$0xf] %v213
                %v215 = vld [vmem:[%s151 + $0xdc] sm:$0xf]
                %216 = vst [vmem:[%s152 + $0x7c] sm:$0xf] %v215
              $region45: #{_lambda_.3} parent=39 // loop_footer
                %s150 = sadd.s32 1, %s146
              $region46: #{_lambda_.3} parent=39 // loop_footer_branch
                %145 = sbr.rel target = $region42
              $region47: #{_lambda_.3} parent=39 // loop_exit
                _
            $region40: #{_lambda_.3} parent=31 // pred_fallthru
              _
          $region32: #{_lambda_.3} parent=27 // pred_fallthru
            _
          %300 = vnop
        $region28: #{_lambda_.3} parent=23 // pred_fallthru
          _
      $region24: #{_lambda_.3} parent=5 // pred_fallthru
        _
      %p301 = scmp.le.s32.totalorder 1, %s9
      %p302 = scmp.lt.s32.totalorder %s9, 3
      %p303 = pnand %p301, %p302
      %p304 = pneg %p303
      // Predicated region
      $region66: #{_lambda_.3} parent=5 // pred_check
        _
      $region67: #{_lambda_.3} parent=5 // pred_check_branch
        %306 = sbr.rel (%p303) target = $region69
      $region68: #{_lambda_.3} parent=5 // pred_region
        %s307 = ssub.s32 %s9, 1
        %s308 = sand.u32 %s22, 1
        %s309 = sand.u32 %s22, 1
        %s310 = smul.addr %s309, 128
        %s311 = scalar_lea.vmem [#allocation2], %s310
        // Predicated region
        $region70: #{_lambda_.3} parent=68 // pred_check
          %p312 = pneg %p35
        $region71: #{_lambda_.3} parent=68 // pred_check_branch
          %314 = sbr.rel (%p312) target = $region73
        $region72: #{_lambda_.3} parent=68 // pred_region
          _
        $region73: #{_lambda_.3} parent=68 // pred_fallthru
          _
        %s315 = sand.u32 %s22, 1
        %s316 = sand.u32 %s22, 1
        %s317 = smul.addr %s316, 128
        %s318 = scalar_lea.vmem [#allocation2], %s317
        %p319 = pneg %p35
        %p320 = pneg %p32
        %p321 = pneg %p56
        %p322 = pneg %p53
        %p323 = pneg %p77
        %p324 = pneg %p74
        %p325 = pneg %p103
        %p326 = pneg %p100
        %s327 = smul.u32 8, %s14
        %p328 = scmp.lt.s32.totalorder %s327, 15
        %s329 = scalar_select %p328, %s327, 15
        %s330 = smul.addr %s329, 4
        %s331 = scalar_lea.vmem %s3, %s330
        %s332 = smul.u32 8, %s14
        %s333 = smul.u32 8, %s14
        %p334 = scmp.lt.s32.totalorder %s333, 15
        %s335 = scalar_select %p334, %s333, 15
        %s336 = smul.addr %s335, 4
        %s337 = scalar_lea.vmem %s3, %s336
        %s338 = smul.u32 8, %s14
        %v340 = vld [vmem:[%s1] sm:$0xf]
        %v341 = vld [vmem:[%s1 + $0x4] sm:$0x1]
        %v342 = vld [vmem:[%s2] sm:$0x1]
        %v343 = vld [vmem:[%s311] sm:$0xf]
        %v344 = vld [vmem:[%s311 + $0x4] sm:$0xf]
        %v345 = vld [vmem:[%s311 + $0x8] sm:$0xf]
        %v346 = vld [vmem:[%s311 + $0xc] sm:$0xf]
        %v347 = vld [vmem:[%s311 + $0x10] sm:$0xf]
        %v348 = vld [vmem:[%s311 + $0x14] sm:$0xf]
        %v349 = vld [vmem:[%s311 + $0x18] sm:$0xf]
        %v350 = vld [vmem:[%s311 + $0x1c] sm:$0xf]
        %v352 = vlaneseq
        %v353 = vshrl.u32 %v352, 7
        %v354 = vsub.s32 0, %v353
        %v355 = vrot.slane %v342, %v354
        %v365 = vunpack.c.l.b16 %v343
        %v366 = vunpack.c.l.b16 %v344
        %v367 = vunpack.c.l.b16 %v345
        %v368 = vunpack.c.l.b16 %v346
        %v369 = vunpack.c.l.b16 %v347
        %v370 = vunpack.c.l.b16 %v348
        %v371 = vunpack.c.l.b16 %v349
        %v372 = vunpack.c.l.b16 %v350
        %v373 = vpack.c.b16 %v366, %v365
        %v374 = vpack.c.b16 %v368, %v367
        %v375 = vpack.c.b16 %v370, %v369
        %v376 = vpack.c.b16 %v372, %v371
        %v379 = vunpack.c.l.b16 %v340
        %v380 = vunpack.c.l.b16 %v341
        %v381 = vpack.c.b16 %v380, %v379
        %vm382 = vcmask 72704
        %v384 = vsel %vm382, %v373, 0
        %v387 = vsel %vm382, %v374, 0
        %v390 = vsel %vm382, %v375, 0
        %v393 = vsel %vm382, %v376, 0
        %vm395 = vcmask 1043456
        %vm396 = vcmask 1044480
        %v397 = vsel %vm395, 4294967295, 65535
        %v398 = vsel %vm396, %v397, 0
        %v400 = vand.u32 %v381, %v398
        %402 = vmatprep.subr.bf16.mxu0 0
        %403 = vmatpush1.bf16.msra.mxu0 %v400
        %404 = vmatprep.subr.bf16.mxu0 0
        %405 = vmatpush1.bf16.msra.mxu0 0
        %406 = vmatprep.subr.bf16.mxu0 0
        %407 = vmatpush1.bf16.msra.mxu0 0
        %408 = vmatprep.subr.bf16.mxu0 0
        %409 = vmatpush1.bf16.msra.mxu0 0
        %410 = vmatprep.subr.bf16.mxu0 0
        %411 = vmatpush1.bf16.msra.mxu0 0
        %412 = vmatprep.subr.bf16.mxu0 0
        %413 = vmatpush1.bf16.msra.mxu0 0
        %414 = vmatprep.subr.bf16.mxu0 0
        %415 = vmatpush1.bf16.msra.mxu0 0
        %416 = vmatprep.subr.bf16.mxu0 0
        %417 = vmatpush1.bf16.msra.mxu0 0
        %418 = vmatprep.subr.bf16.mxu0 0
        %419 = vmatpush1.bf16.msra.mxu0 0
        %420 = vmatprep.subr.bf16.mxu0 0
        %421 = vmatpush1.bf16.msra.mxu0 0
        %422 = vmatprep.subr.bf16.mxu0 0
        %423 = vmatpush1.bf16.msra.mxu0 0
        %424 = vmatprep.subr.bf16.mxu0 0
        %425 = vmatpush1.bf16.msra.mxu0 0
        %426 = vmatprep.subr.bf16.mxu0 0
        %427 = vmatpush1.bf16.msra.mxu0 0
        %428 = vmatprep.subr.bf16.mxu0 0
        %429 = vmatpush1.bf16.msra.mxu0 0
        %430 = vmatprep.subr.bf16.mxu0 0
        %431 = vmatpush1.bf16.msra.mxu0 0
        %432 = vmatprep.subr.bf16.mxu0 0
        %433 = vmatpush1.bf16.msra.mxu0 0
        %434 = vmatprep.mubr.bf16.mxu0 0
        %435 = vmatmul.mubr.bf16.gmra.mrb[0].mxu0 %v384
        %v436 = vpop.f32.mrb[0].mxu0
        %v437 = vadd.f32 %v355, %v436
        %v438 = vpop.f32.mrb[0].mxu0
        %v439 = vpop.f32.mrb[0].mxu0
        %v440 = vadd.f32 %v355, %v439
        %v441 = vpop.f32.mrb[0].mxu0
        %442 = vmatprep.mubr.bf16.mxu0 0
        %443 = vmatmul.mubr.bf16.gmra.mrb[0].mxu0 %v387
        %v444 = vpop.f32.mrb[0].mxu0
        %v445 = vadd.f32 %v355, %v444
        %v446 = vpop.f32.mrb[0].mxu0
        %v447 = vpop.f32.mrb[0].mxu0
        %v448 = vadd.f32 %v355, %v447
        %v449 = vpop.f32.mrb[0].mxu0
        %450 = vmatprep.mubr.bf16.mxu0 0
        %451 = vmatmul.mubr.bf16.gmra.mrb[0].mxu0 %v390
        %v452 = vpop.f32.mrb[0].mxu0
        %v453 = vadd.f32 %v355, %v452
        %v454 = vpop.f32.mrb[0].mxu0
        %v455 = vpop.f32.mrb[0].mxu0
        %v456 = vadd.f32 %v355, %v455
        %v457 = vpop.f32.mrb[0].mxu0
        %458 = vmatprep.mubr.bf16.mxu0 0
        %459 = vmatmul.mubr.bf16.gmra.mrb[0].mxu0 %v393
        %v460 = vpop.f32.mrb[0].mxu0
        %v461 = vadd.f32 %v355, %v460
        %v462 = vpop.f32.mrb[0].mxu0
        %v463 = vpop.f32.mrb[0].mxu0
        %v464 = vadd.f32 %v355, %v463
        %v465 = vpop.f32.mrb[0].mxu0
        %466 = vdwg.mxu0
        %v467 = vmax.f32 %v437, 0.0
        %v468 = vmax.f32 %v440, 0.0
        %v469 = vmax.f32 %v445, 0.0
        %v470 = vmax.f32 %v448, 0.0
        %v471 = vmax.f32 %v453, 0.0
        %v472 = vmax.f32 %v456, 0.0
        %v473 = vmax.f32 %v461, 0.0
        %v474 = vmax.f32 %v464, 0.0
        %s475 = scalar_lea.vmem %s311, 32 [#allocation2]
        %v476 = vld [vmem:[%s475] sm:$0xf]
        %v477 = vld [vmem:[%s475 + $0x4] sm:$0xf]
        %v478 = vld [vmem:[%s475 + $0x8] sm:$0xf]
        %v479 = vld [vmem:[%s475 + $0xc] sm:$0xf]
        %v480 = vld [vmem:[%s475 + $0x10] sm:$0xf]
        %v481 = vld [vmem:[%s475 + $0x14] sm:$0xf]
        %v482 = vld [vmem:[%s475 + $0x18] sm:$0xf]
        %v483 = vld [vmem:[%s475 + $0x1c] sm:$0xf]
        %v492 = vunpack.c.l.b16 %v476
        %v493 = vunpack.c.l.b16 %v477
        %v494 = vunpack.c.l.b16 %v478
        %v495 = vunpack.c.l.b16 %v479
        %v496 = vunpack.c.l.b16 %v480
        %v497 = vunpack.c.l.b16 %v481
        %v498 = vunpack.c.l.b16 %v482
        %v499 = vunpack.c.l.b16 %v483
        %v500 = vpack.c.b16 %v493, %v492
        %v501 = vpack.c.b16 %v495, %v494
        %v502 = vpack.c.b16 %v497, %v496
        %v503 = vpack.c.b16 %v499, %v498
        %v505 = vsel %vm382, %v500, 0
        %v508 = vsel %vm382, %v501, 0
        %v511 = vsel %vm382, %v502, 0
        %v514 = vsel %vm382, %v503, 0
        %516 = vmatprep.subr.bf16.mxu0 0
        %517 = vmatpush1.bf16.msra.mxu0 %v400
        %518 = vmatprep.subr.bf16.mxu0 0
        %519 = vmatpush1.bf16.msra.mxu0 0
        %520 = vmatprep.subr.bf16.mxu0 0
        %521 = vmatpush1.bf16.msra.mxu0 0
        %522 = vmatprep.subr.bf16.mxu0 0
        %523 = vmatpush1.bf16.msra.mxu0 0
        %524 = vmatprep.subr.bf16.mxu0 0
        %525 = vmatpush1.bf16.msra.mxu0 0
        %526 = vmatprep.subr.bf16.mxu0 0
        %527 = vmatpush1.bf16.msra.mxu0 0
        %528 = vmatprep.subr.bf16.mxu0 0
        %529 = vmatpush1.bf16.msra.mxu0 0
        %530 = vmatprep.subr.bf16.mxu0 0
        %531 = vmatpush1.bf16.msra.mxu0 0
        %532 = vmatprep.subr.bf16.mxu0 0
        %533 = vmatpush1.bf16.msra.mxu0 0
        %534 = vmatprep.subr.bf16.mxu0 0
        %535 = vmatpush1.bf16.msra.mxu0 0
        %536 = vmatprep.subr.bf16.mxu0 0
        %537 = vmatpush1.bf16.msra.mxu0 0
        %538 = vmatprep.subr.bf16.mxu0 0
        %539 = vmatpush1.bf16.msra.mxu0 0
        %540 = vmatprep.subr.bf16.mxu0 0
        %541 = vmatpush1.bf16.msra.mxu0 0
        %542 = vmatprep.subr.bf16.mxu0 0
        %543 = vmatpush1.bf16.msra.mxu0 0
        %544 = vmatprep.subr.bf16.mxu0 0
        %545 = vmatpush1.bf16.msra.mxu0 0
        %546 = vmatprep.subr.bf16.mxu0 0
        %547 = vmatpush1.bf16.msra.mxu0 0
        %548 = vmatprep.mubr.bf16.mxu0 0
        %549 = vmatmul.mubr.bf16.gmra.mrb[0].mxu0 %v505
        %v550 = vpop.f32.mrb[0].mxu0
        %v551 = vadd.f32 %v355, %v550
        %v552 = vpop.f32.mrb[0].mxu0
        %v553 = vpop.f32.mrb[0].mxu0
        %v554 = vadd.f32 %v355, %v553
        %v555 = vpop.f32.mrb[0].mxu0
        %556 = vmatprep.mubr.bf16.mxu0 0
        %557 = vmatmul.mubr.bf16.gmra.mrb[0].mxu0 %v508
        %v558 = vpop.f32.mrb[0].mxu0
        %v559 = vadd.f32 %v355, %v558
        %v560 = vpop.f32.mrb[0].mxu0
        %v561 = vpop.f32.mrb[0].mxu0
        %v562 = vadd.f32 %v355, %v561
        %v563 = vpop.f32.mrb[0].mxu0
        %564 = vmatprep.mubr.bf16.mxu0 0
        %565 = vmatmul.mubr.bf16.gmra.mrb[0].mxu0 %v511
        %v566 = vpop.f32.mrb[0].mxu0
        %v567 = vadd.f32 %v355, %v566
        %v568 = vpop.f32.mrb[0].mxu0
        %v569 = vpop.f32.mrb[0].mxu0
        %v570 = vadd.f32 %v355, %v569
        %v571 = vpop.f32.mrb[0].mxu0
        %572 = vmatprep.mubr.bf16.mxu0 0
        %573 = vmatmul.mubr.bf16.gmra.mrb[0].mxu0 %v514
        %v574 = vpop.f32.mrb[0].mxu0
        %v575 = vadd.f32 %v355, %v574
        %v576 = vpop.f32.mrb[0].mxu0
        %v577 = vpop.f32.mrb[0].mxu0
        %v578 = vadd.f32 %v355, %v577
        %v579 = vpop.f32.mrb[0].mxu0
        %580 = vdwg.mxu0
        %v581 = vmax.f32 %v551, 0.0
        %v582 = vmax.f32 %v554, 0.0
        %v583 = vmax.f32 %v559, 0.0
        %v584 = vmax.f32 %v562, 0.0
        %v585 = vmax.f32 %v567, 0.0
        %v586 = vmax.f32 %v570, 0.0
        %v587 = vmax.f32 %v575, 0.0
        %v588 = vmax.f32 %v578, 0.0
        %v589 = vmax.f32 %v467, %v581
        %v590 = vmax.f32 %v468, %v582
        %v591 = vmax.f32 %v469, %v583
        %v592 = vmax.f32 %v470, %v584
        %v593 = vmax.f32 %v471, %v585
        %v594 = vmax.f32 %v472, %v586
        %v595 = vmax.f32 %v473, %v587
        %v596 = vmax.f32 %v474, %v588
        %s597 = scalar_lea.vmem %s311, 64 [#allocation2]
        %v598 = vld [vmem:[%s597] sm:$0xf]
        %v599 = vld [vmem:[%s597 + $0x4] sm:$0xf]
        %v600 = vld [vmem:[%s597 + $0x8] sm:$0xf]
        %v601 = vld [vmem:[%s597 + $0xc] sm:$0xf]
        %v602 = vld [vmem:[%s597 + $0x10] sm:$0xf]
        %v603 = vld [vmem:[%s597 + $0x14] sm:$0xf]
        %v604 = vld [vmem:[%s597 + $0x18] sm:$0xf]
        %v605 = vld [vmem:[%s597 + $0x1c] sm:$0xf]
        %v614 = vunpack.c.l.b16 %v598
        %v615 = vunpack.c.l.b16 %v599
        %v616 = vunpack.c.l.b16 %v600
        %v617 = vunpack.c.l.b16 %v601
        %v618 = vunpack.c.l.b16 %v602
        %v619 = vunpack.c.l.b16 %v603
        %v620 = vunpack.c.l.b16 %v604
        %v621 = vunpack.c.l.b16 %v605
        %v622 = vpack.c.b16 %v615, %v614
        %v623 = vpack.c.b16 %v617, %v616
        %v624 = vpack.c.b16 %v619, %v618
        %v625 = vpack.c.b16 %v621, %v620
        %v627 = vsel %vm382, %v622, 0
        %v630 = vsel %vm382, %v623, 0
        %v633 = vsel %vm382, %v624, 0
        %v636 = vsel %vm382, %v625, 0
        %638 = vmatprep.subr.bf16.mxu0 0
        %639 = vmatpush1.bf16.msra.mxu0 %v400
        %640 = vmatprep.subr.bf16.mxu0 0
        %641 = vmatpush1.bf16.msra.mxu0 0
        %642 = vmatprep.subr.bf16.mxu0 0
        %643 = vmatpush1.bf16.msra.mxu0 0
        %644 = vmatprep.subr.bf16.mxu0 0
        %645 = vmatpush1.bf16.msra.mxu0 0
        %646 = vmatprep.subr.bf16.mxu0 0
        %647 = vmatpush1.bf16.msra.mxu0 0
        %648 = vmatprep.subr.bf16.mxu0 0
        %649 = vmatpush1.bf16.msra.mxu0 0
        %650 = vmatprep.subr.bf16.mxu0 0
        %651 = vmatpush1.bf16.msra.mxu0 0
        %652 = vmatprep.subr.bf16.mxu0 0
        %653 = vmatpush1.bf16.msra.mxu0 0
        %654 = vmatprep.subr.bf16.mxu0 0
        %655 = vmatpush1.bf16.msra.mxu0 0
        %656 = vmatprep.subr.bf16.mxu0 0
        %657 = vmatpush1.bf16.msra.mxu0 0
        %658 = vmatprep.subr.bf16.mxu0 0
        %659 = vmatpush1.bf16.msra.mxu0 0
        %660 = vmatprep.subr.bf16.mxu0 0
        %661 = vmatpush1.bf16.msra.mxu0 0
        %662 = vmatprep.subr.bf16.mxu0 0
        %663 = vmatpush1.bf16.msra.mxu0 0
        %664 = vmatprep.subr.bf16.mxu0 0
        %665 = vmatpush1.bf16.msra.mxu0 0
        %666 = vmatprep.subr.bf16.mxu0 0
        %667 = vmatpush1.bf16.msra.mxu0 0
        %668 = vmatprep.subr.bf16.mxu0 0
        %669 = vmatpush1.bf16.msra.mxu0 0
        %670 = vmatprep.mubr.bf16.mxu0 0
        %671 = vmatmul.mubr.bf16.gmra.mrb[0].mxu0 %v627
        %v672 = vpop.f32.mrb[0].mxu0
        %v673 = vadd.f32 %v355, %v672
        %v674 = vpop.f32.mrb[0].mxu0
        %v675 = vpop.f32.mrb[0].mxu0
        %v676 = vadd.f32 %v355, %v675
        %v677 = vpop.f32.mrb[0].mxu0
        %678 = vmatprep.mubr.bf16.mxu0 0
        %679 = vmatmul.mubr.bf16.gmra.mrb[0].mxu0 %v630
        %v680 = vpop.f32.mrb[0].mxu0
        %v681 = vadd.f32 %v355, %v680
        %v682 = vpop.f32.mrb[0].mxu0
        %v683 = vpop.f32.mrb[0].mxu0
        %v684 = vadd.f32 %v355, %v683
        %v685 = vpop.f32.mrb[0].mxu0
        %686 = vmatprep.mubr.bf16.mxu0 0
        %687 = vmatmul.mubr.bf16.gmra.mrb[0].mxu0 %v633
        %v688 = vpop.f32.mrb[0].mxu0
        %v689 = vadd.f32 %v355, %v688
        %v690 = vpop.f32.mrb[0].mxu0
        %v691 = vpop.f32.mrb[0].mxu0
        %v692 = vadd.f32 %v355, %v691
        %v693 = vpop.f32.mrb[0].mxu0
        %694 = vmatprep.mubr.bf16.mxu0 0
        %695 = vmatmul.mubr.bf16.gmra.mrb[0].mxu0 %v636
        %v696 = vpop.f32.mrb[0].mxu0
        %v697 = vadd.f32 %v355, %v696
        %v698 = vpop.f32.mrb[0].mxu0
        %v699 = vpop.f32.mrb[0].mxu0
        %v700 = vadd.f32 %v355, %v699
        %v701 = vpop.f32.mrb[0].mxu0
        %702 = vdwg.mxu0
        %v703 = vmax.f32 %v673, 0.0
        %v704 = vmax.f32 %v676, 0.0
        %v705 = vmax.f32 %v681, 0.0
        %v706 = vmax.f32 %v684, 0.0
        %v707 = vmax.f32 %v689, 0.0
        %v708 = vmax.f32 %v692, 0.0
        %v709 = vmax.f32 %v697, 0.0
        %v710 = vmax.f32 %v700, 0.0
        %v711 = vmax.f32 %v589, %v703
        %v712 = vmax.f32 %v590, %v704
        %v713 = vmax.f32 %v591, %v705
        %v714 = vmax.f32 %v592, %v706
        %v715 = vmax.f32 %v593, %v707
        %v716 = vmax.f32 %v594, %v708
        %v717 = vmax.f32 %v595, %v709
        %v718 = vmax.f32 %v596, %v710
        %s719 = scalar_lea.vmem %s311, 96 [#allocation2]
        %v720 = vld [vmem:[%s719] sm:$0xf]
        %v721 = vld [vmem:[%s719 + $0x4] sm:$0xf]
        %v722 = vld [vmem:[%s719 + $0x8] sm:$0xf]
        %v723 = vld [vmem:[%s719 + $0xc] sm:$0xf]
        %v724 = vld [vmem:[%s719 + $0x10] sm:$0xf]
        %v725 = vld [vmem:[%s719 + $0x14] sm:$0xf]
        %v726 = vld [vmem:[%s719 + $0x18] sm:$0xf]
        %v727 = vld [vmem:[%s719 + $0x1c] sm:$0xf]
        %v736 = vunpack.c.l.b16 %v720
        %v737 = vunpack.c.l.b16 %v721
        %v738 = vunpack.c.l.b16 %v722
        %v739 = vunpack.c.l.b16 %v723
        %v740 = vunpack.c.l.b16 %v724
        %v741 = vunpack.c.l.b16 %v725
        %v742 = vunpack.c.l.b16 %v726
        %v743 = vunpack.c.l.b16 %v727
        %v744 = vpack.c.b16 %v737, %v736
        %v745 = vpack.c.b16 %v739, %v738
        %v746 = vpack.c.b16 %v741, %v740
        %v747 = vpack.c.b16 %v743, %v742
        %v749 = vsel %vm382, %v744, 0
        %v752 = vsel %vm382, %v745, 0
        %v755 = vsel %vm382, %v746, 0
        %v758 = vsel %vm382, %v747, 0
        %760 = vmatprep.subr.bf16.mxu0 0
        %761 = vmatpush1.bf16.msra.mxu0 %v400
        %762 = vmatprep.subr.bf16.mxu0 0
        %763 = vmatpush1.bf16.msra.mxu0 0
        %764 = vmatprep.subr.bf16.mxu0 0
        %765 = vmatpush1.bf16.msra.mxu0 0
        %766 = vmatprep.subr.bf16.mxu0 0
        %767 = vmatpush1.bf16.msra.mxu0 0
        %768 = vmatprep.subr.bf16.mxu0 0
        %769 = vmatpush1.bf16.msra.mxu0 0
        %770 = vmatprep.subr.bf16.mxu0 0
        %771 = vmatpush1.bf16.msra.mxu0 0
        %772 = vmatprep.subr.bf16.mxu0 0
        %773 = vmatpush1.bf16.msra.mxu0 0
        %774 = vmatprep.subr.bf16.mxu0 0
        %775 = vmatpush1.bf16.msra.mxu0 0
        %776 = vmatprep.subr.bf16.mxu0 0
        %777 = vmatpush1.bf16.msra.mxu0 0
        %778 = vmatprep.subr.bf16.mxu0 0
        %779 = vmatpush1.bf16.msra.mxu0 0
        %780 = vmatprep.subr.bf16.mxu0 0
        %781 = vmatpush1.bf16.msra.mxu0 0
        %782 = vmatprep.subr.bf16.mxu0 0
        %783 = vmatpush1.bf16.msra.mxu0 0
        %784 = vmatprep.subr.bf16.mxu0 0
        %785 = vmatpush1.bf16.msra.mxu0 0
        %786 = vmatprep.subr.bf16.mxu0 0
        %787 = vmatpush1.bf16.msra.mxu0 0
        %788 = vmatprep.subr.bf16.mxu0 0
        %789 = vmatpush1.bf16.msra.mxu0 0
        %790 = vmatprep.subr.bf16.mxu0 0
        %791 = vmatpush1.bf16.msra.mxu0 0
        %792 = vmatprep.mubr.bf16.mxu0 0
        %793 = vmatmul.mubr.bf16.gmra.mrb[0].mxu0 %v749
        %v794 = vpop.f32.mrb[0].mxu0
        %v795 = vadd.f32 %v355, %v794
        %v796 = vpop.f32.mrb[0].mxu0
        %v797 = vpop.f32.mrb[0].mxu0
        %v798 = vadd.f32 %v355, %v797
        %v799 = vpop.f32.mrb[0].mxu0
        %800 = vmatprep.mubr.bf16.mxu0 0
        %801 = vmatmul.mubr.bf16.gmra.mrb[0].mxu0 %v752
        %v802 = vpop.f32.mrb[0].mxu0
        %v803 = vadd.f32 %v355, %v802
        %v804 = vpop.f32.mrb[0].mxu0
        %v805 = vpop.f32.mrb[0].mxu0
        %v806 = vadd.f32 %v355, %v805
        %v807 = vpop.f32.mrb[0].mxu0
        %808 = vmatprep.mubr.bf16.mxu0 0
        %809 = vmatmul.mubr.bf16.gmra.mrb[0].mxu0 %v755
        %v810 = vpop.f32.mrb[0].mxu0
        %v811 = vadd.f32 %v355, %v810
        %v812 = vpop.f32.mrb[0].mxu0
        %v813 = vpop.f32.mrb[0].mxu0
        %v814 = vadd.f32 %v355, %v813
        %v815 = vpop.f32.mrb[0].mxu0
        %816 = vmatprep.mubr.bf16.mxu0 0
        %817 = vmatmul.mubr.bf16.gmra.mrb[0].mxu0 %v758
        %v818 = vpop.f32.mrb[0].mxu0
        %v819 = vadd.f32 %v355, %v818
        %v820 = vpop.f32.mrb[0].mxu0
        %v821 = vpop.f32.mrb[0].mxu0
        %v822 = vadd.f32 %v355, %v821
        %v823 = vpop.f32.mrb[0].mxu0
        %824 = vdwg.mxu0
        %v825 = vmax.f32 %v795, 0.0
        %v826 = vmax.f32 %v798, 0.0
        %v827 = vmax.f32 %v803, 0.0
        %v828 = vmax.f32 %v806, 0.0
        %v829 = vmax.f32 %v811, 0.0
        %v830 = vmax.f32 %v814, 0.0
        %v831 = vmax.f32 %v819, 0.0
        %v832 = vmax.f32 %v822, 0.0
        %v833 = vmax.f32 %v711, %v825
        %v834 = vmax.f32 %v712, %v826
        %v835 = vmax.f32 %v713, %v827
        %v836 = vmax.f32 %v714, %v828
        %v837 = vmax.f32 %v715, %v829
        %v838 = vmax.f32 %v716, %v830
        %v839 = vmax.f32 %v717, %v831
        %v840 = vmax.f32 %v718, %v832
        %v841 = vpack.c.bf16 %v834, %v833
        %v842 = vpack.c.bf16 %v836, %v835
        %v843 = vpack.c.bf16 %v838, %v837
        %v844 = vpack.c.bf16 %v840, %v839
        %v849 = vunpack.c.l.b16 %v841
        %v850 = vunpack.c.h.b16 %v841
        %v851 = vunpack.c.l.b16 %v842
        %v852 = vunpack.c.h.b16 %v842
        %v853 = vunpack.c.l.b16 %v843
        %v854 = vunpack.c.h.b16 %v843
        %v855 = vunpack.c.l.b16 %v844
        %v856 = vunpack.c.h.b16 %v844
        %v857 = vpack.c.b16 %v849, %v849
        %v858 = vpack.c.b16 %v850, %v850
        %v859 = vpack.c.b16 %v851, %v851
        %v860 = vpack.c.b16 %v852, %v852
        %v861 = vpack.c.b16 %v853, %v853
        %v862 = vpack.c.b16 %v854, %v854
        %v863 = vpack.c.b16 %v855, %v855
        %v864 = vpack.c.b16 %v856, %v856
        %873 = vst [vmem:[%s337] sm:$0xf] %v857
        %874 = vst [vmem:[%s337 + $0x4] sm:$0xf] %v858
        %875 = vst [vmem:[%s337 + $0x8] sm:$0xf] %v859
        %876 = vst [vmem:[%s337 + $0xc] sm:$0xf] %v860
        %877 = vst [vmem:[%s337 + $0x10] sm:$0xf] %v861
        %878 = vst [vmem:[%s337 + $0x14] sm:$0xf] %v862
        %879 = vst [vmem:[%s337 + $0x18] sm:$0xf] %v863
        %880 = vst [vmem:[%s337 + $0x1c] sm:$0xf] %v864
        %s881 = smul.u32 8, %s14
        %p882 = scmp.lt.s32.totalorder %s881, 15
        %s883 = scalar_select %p882, %s881, 15
        %s884 = smul.addr %s883, 4
        %s885 = scalar_lea.vmem %s3, %s884
        // Predicated region
        $region74: #{_lambda_.3} parent=68 // pred_check
          %p886 = pneg %p100
        $region75: #{_lambda_.3} parent=68 // pred_check_branch
          %888 = sbr.rel (%p886) target = $region77
        $region76: #{_lambda_.3} parent=68 // pred_region
          %s889 = smul.u32 8, %s14
        $region77: #{_lambda_.3} parent=68 // pred_fallthru
          _
      $region69: #{_lambda_.3} parent=5 // pred_fallthru
        _
      %p890 = scmp.le.s32.totalorder 2, %s9
      // Predicated region
      $region78: #{_lambda_.3} parent=5 // pred_check
        %p891 = pneg %p890
      $region79: #{_lambda_.3} parent=5 // pred_check_branch
        %893 = sbr.rel (%p891) target = $region81
      $region80: #{_lambda_.3} parent=5 // pred_region
        %s894 = ssub.s32 %s9, 2
        // Predicated region
        $region82: #{_lambda_.3} parent=80 // pred_check
          %p895 = pneg %p106
        $region83: #{_lambda_.3} parent=80 // pred_check_branch
          %897 = sbr.rel (%p895) target = $region85
        $region84: #{_lambda_.3} parent=80 // pred_region
          %s898 = smul.u32 8, %s15
          %p899 = scmp.lt.s32.totalorder %s898, 15
          %s900 = scalar_select %p899, %s898, 15
          %s901 = smul.addr %s900, 4
          %s902 = scalar_lea.vmem %s3, %s901
        $region85: #{_lambda_.3} parent=80 // pred_fallthru
          _
      $region81: #{_lambda_.3} parent=5 // pred_fallthru
        _
    $region6: #{_lambda_.3} parent=1 // loop_footer
      %s13 = sadd.s32 1, %s9
    $region7: #{_lambda_.3} parent=1 // loop_footer_branch
      %8 = sbr.rel target = $region3
    $region8: #{_lambda_.3} parent=1 // loop_exit
      _

// kernel: _lambda_.4
$region0: #{_lambda_.4}
  #allocation0 [shape = 'u32[]', space=smem, size = 0x4, offset = 0x4, fixed_abs, tag = 'smem constant byte address 0x4 - core index']
  #allocation1 [shape = 'u32[144,128]{1,0:T(1,128)}', space=vmem, size = 0x12000, scoped, tag = 'internal scratch']
  %s0 = inlined_call_operand.vmem [shape: bf16[4,32,384], index: 0, kind: input, shape index: {}]
  %s1 = inlined_call_operand.vmem [shape: bf16[384,128], index: 1, kind: input, shape index: {}]
  %s2 = inlined_call_operand.vmem [shape: f32[1,128], index: 2, kind: input, shape index: {}]
  %s3 = inlined_call_operand.vmem [shape: bf16[32,128], index: 3, kind: output, shape index: {}]
  %s4 = sld [smem:[#allocation0]]
  $region22: #{_lambda_.4} parent=0
    _
  %s6 = ssub.s32 1, %s4
  %s7 = scalar_select 0, %s6, %s4
  // Predicated region
  $region2: #{_lambda_.4} parent=0 // pred_check
    _
  $region3: #{_lambda_.4} parent=0 // pred_check_branch
    %9 = sbr.rel (0) target = $region5
  $region4: #{_lambda_.4} parent=0 // pred_region
    _
  $region5: #{_lambda_.4} parent=0 // pred_fallthru
    _
  // Predicated region
  $region6: #{_lambda_.4} parent=0 // pred_check
    _
  $region7: #{_lambda_.4} parent=0 // pred_check_branch
    %11 = sbr.rel (0) target = $region9
  $region8: #{_lambda_.4} parent=0 // pred_region
    _
  $region9: #{_lambda_.4} parent=0 // pred_fallthru
    _
  // Predicated region
  $region10: #{_lambda_.4} parent=0 // pred_check
    _
  $region11: #{_lambda_.4} parent=0 // pred_check_branch
    %13 = sbr.rel (0) target = $region13
  $region12: #{_lambda_.4} parent=0 // pred_region
    _
  $region13: #{_lambda_.4} parent=0 // pred_fallthru
    _
  %v15 = vld [vmem:[%s1] sm:$0xf]
  %v16 = vld [vmem:[%s1 + $0x4] sm:$0xf]
  %v17 = vld [vmem:[%s1 + $0x8] sm:$0xf]
  %v18 = vld [vmem:[%s1 + $0xc] sm:$0xf]
  %v19 = vld [vmem:[%s1 + $0x10] sm:$0xf]
  %v20 = vld [vmem:[%s1 + $0x14] sm:$0xf]
  %v21 = vld [vmem:[%s1 + $0x18] sm:$0xf]
  %v22 = vld [vmem:[%s1 + $0x1c] sm:$0xf]
  %v23 = vld [vmem:[%s1 + $0x20] sm:$0xf]
  %v24 = vld [vmem:[%s1 + $0x24] sm:$0xf]
  %v25 = vld [vmem:[%s1 + $0x28] sm:$0xf]
  %v26 = vld [vmem:[%s1 + $0x2c] sm:$0xf]
  %v27 = vld [vmem:[%s1 + $0x30] sm:$0xf]
  %v28 = vld [vmem:[%s1 + $0x34] sm:$0xf]
  %v29 = vld [vmem:[%s1 + $0x38] sm:$0xf]
  %v30 = vld [vmem:[%s1 + $0x3c] sm:$0xf]
  %v31 = vld [vmem:[%s1 + $0x40] sm:$0xf]
  %v32 = vld [vmem:[%s1 + $0x44] sm:$0xf]
  %v33 = vld [vmem:[%s1 + $0x48] sm:$0xf]
  %v34 = vld [vmem:[%s1 + $0x4c] sm:$0xf]
  %v35 = vld [vmem:[%s1 + $0x50] sm:$0xf]
  %v36 = vld [vmem:[%s1 + $0x54] sm:$0xf]
  %v37 = vld [vmem:[%s1 + $0x58] sm:$0xf]
  %v38 = vld [vmem:[%s1 + $0x5c] sm:$0xf]
  %v39 = vld [vmem:[%s1 + $0x60] sm:$0xf]
  %v40 = vld [vmem:[%s1 + $0x64] sm:$0xf]
  %v41 = vld [vmem:[%s1 + $0x68] sm:$0xf]
  %v42 = vld [vmem:[%s1 + $0x6c] sm:$0xf]
  %v43 = vld [vmem:[%s1 + $0x70] sm:$0xf]
  %v44 = vld [vmem:[%s1 + $0x74] sm:$0xf]
  %v45 = vld [vmem:[%s1 + $0x78] sm:$0xf]
  %v46 = vld [vmem:[%s1 + $0x7c] sm:$0xf]
  %v47 = vld [vmem:[%s1 + $0x80] sm:$0xf]
  %v48 = vld [vmem:[%s1 + $0x84] sm:$0xf]
  %v49 = vld [vmem:[%s1 + $0x88] sm:$0xf]
  %v50 = vld [vmem:[%s1 + $0x8c] sm:$0xf]
  %v51 = vld [vmem:[%s1 + $0x90] sm:$0xf]
  %v52 = vld [vmem:[%s1 + $0x94] sm:$0xf]
  %v53 = vld [vmem:[%s1 + $0x98] sm:$0xf]
  %v54 = vld [vmem:[%s1 + $0x9c] sm:$0xf]
  %v55 = vld [vmem:[%s1 + $0xa0] sm:$0xf]
  %v56 = vld [vmem:[%s1 + $0xa4] sm:$0xf]
  %v57 = vld [vmem:[%s1 + $0xa8] sm:$0xf]
  %v58 = vld [vmem:[%s1 + $0xac] sm:$0xf]
  %v59 = vld [vmem:[%s1 + $0xb0] sm:$0xf]
  %v60 = vld [vmem:[%s1 + $0xb4] sm:$0xf]
  %v61 = vld [vmem:[%s1 + $0xb8] sm:$0xf]
  %v62 = vld [vmem:[%s1 + $0xbc] sm:$0xf]
  %v63 = vld [vmem:[%s2] sm:$0x1]
  %v64 = vld [vmem:[%s0] sm:$0xff]
  %v65 = vld [vmem:[%s0 + $0x8] sm:$0xf]
  %v66 = vld [vmem:[%s0 + $0xc] sm:$0xff]
  %v67 = vld [vmem:[%s0 + $0x14] sm:$0xf]
  %v68 = vld [vmem:[%s0 + $0x18] sm:$0xff]
  %v69 = vld [vmem:[%s0 + $0x20] sm:$0xf]
  %v70 = vld [vmem:[%s0 + $0x24] sm:$0xff]
  %v71 = vld [vmem:[%s0 + $0x2c] sm:$0xf]
  %v73 = vlaneseq
  %v74 = vshrl.u32 %v73, 7
  %v75 = vsub.s32 0, %v74
  %v76 = vrot.slane %v63, %v75
  %v86 = vunpack.c.l.b16 %v64
  %v87 = vunpack.c.h.b16 %v64
  %v88 = vunpack.c.l.b16 %v65
  %v89 = vunpack.c.l.b16 %v66
  %v90 = vunpack.c.h.b16 %v66
  %v91 = vunpack.c.l.b16 %v67
  %v92 = vunpack.c.l.b16 %v68
  %v93 = vunpack.c.h.b16 %v68
  %v94 = vunpack.c.l.b16 %v69
  %v95 = vunpack.c.l.b16 %v70
  %v96 = vunpack.c.h.b16 %v70
  %v97 = vunpack.c.l.b16 %v71
  %v98 = vpack.c.b16 %v89, %v86
  %v99 = vpack.c.b16 %v90, %v87
  %v100 = vpack.c.b16 %v91, %v88
  %v101 = vpack.c.b16 %v95, %v92
  %v102 = vpack.c.b16 %v96, %v93
  %v103 = vpack.c.b16 %v97, %v94
  %v158 = vunpack.c.l.b16 %v15
  %v159 = vunpack.c.l.b16 %v16
  %v160 = vunpack.c.l.b16 %v17
  %v161 = vunpack.c.l.b16 %v18
  %v162 = vunpack.c.l.b16 %v19
  %v163 = vunpack.c.l.b16 %v20
  %v164 = vunpack.c.l.b16 %v21
  %v165 = vunpack.c.l.b16 %v22
  %v166 = vunpack.c.l.b16 %v23
  %v167 = vunpack.c.l.b16 %v24
  %v168 = vunpack.c.l.b16 %v25
  %v169 = vunpack.c.l.b16 %v26
  %v170 = vunpack.c.l.b16 %v27
  %v171 = vunpack.c.l.b16 %v28
  %v172 = vunpack.c.l.b16 %v29
  %v173 = vunpack.c.l.b16 %v30
  %v174 = vunpack.c.l.b16 %v31
  %v175 = vunpack.c.l.b16 %v32
  %v176 = vunpack.c.l.b16 %v33
  %v177 = vunpack.c.l.b16 %v34
  %v178 = vunpack.c.l.b16 %v35
  %v179 = vunpack.c.l.b16 %v36
  %v180 = vunpack.c.l.b16 %v37
  %v181 = vunpack.c.l.b16 %v38
  %v182 = vunpack.c.l.b16 %v39
  %v183 = vunpack.c.l.b16 %v40
  %v184 = vunpack.c.l.b16 %v41
  %v185 = vunpack.c.l.b16 %v42
  %v186 = vunpack.c.l.b16 %v43
  %v187 = vunpack.c.l.b16 %v44
  %v188 = vunpack.c.l.b16 %v45
  %v189 = vunpack.c.l.b16 %v46
  %v190 = vunpack.c.l.b16 %v47
  %v191 = vunpack.c.l.b16 %v48
  %v192 = vunpack.c.l.b16 %v49
  %v193 = vunpack.c.l.b16 %v50
  %v194 = vunpack.c.l.b16 %v51
  %v195 = vunpack.c.l.b16 %v52
  %v196 = vunpack.c.l.b16 %v53
  %v197 = vunpack.c.l.b16 %v54
  %v198 = vunpack.c.l.b16 %v55
  %v199 = vunpack.c.l.b16 %v56
  %v200 = vunpack.c.l.b16 %v57
  %v201 = vunpack.c.l.b16 %v58
  %v202 = vunpack.c.l.b16 %v59
  %v203 = vunpack.c.l.b16 %v60
  %v204 = vunpack.c.l.b16 %v61
  %v205 = vunpack.c.l.b16 %v62
  %v206 = vpack.c.b16 %v159, %v158
  %v207 = vpack.c.b16 %v161, %v160
  %v208 = vpack.c.b16 %v163, %v162
  %v209 = vpack.c.b16 %v165, %v164
  %v210 = vpack.c.b16 %v167, %v166
  %v211 = vpack.c.b16 %v169, %v168
  %v212 = vpack.c.b16 %v171, %v170
  %v213 = vpack.c.b16 %v173, %v172
  %v214 = vpack.c.b16 %v175, %v174
  %v215 = vpack.c.b16 %v177, %v176
  %v216 = vpack.c.b16 %v179, %v178
  %v217 = vpack.c.b16 %v181, %v180
  %v218 = vpack.c.b16 %v183, %v182
  %v219 = vpack.c.b16 %v185, %v184
  %v220 = vpack.c.b16 %v187, %v186
  %v221 = vpack.c.b16 %v189, %v188
  %v222 = vpack.c.b16 %v191, %v190
  %v223 = vpack.c.b16 %v193, %v192
  %v224 = vpack.c.b16 %v195, %v194
  %v225 = vpack.c.b16 %v197, %v196
  %v226 = vpack.c.b16 %v199, %v198
  %v227 = vpack.c.b16 %v201, %v200
  %v228 = vpack.c.b16 %v203, %v202
  %v229 = vpack.c.b16 %v205, %v204
  %254 = vmatprep.subr.bf16.mxu0 0
  %255 = vmatpush1.bf16.msra.mxu0 %v206
  %256 = vmatprep.subr.bf16.mxu0 0
  %257 = vmatpush1.bf16.msra.mxu0 %v207
  %258 = vmatprep.subr.bf16.mxu0 0
  %259 = vmatpush1.bf16.msra.mxu0 %v208
  %260 = vmatprep.subr.bf16.mxu0 0
  %261 = vmatpush1.bf16.msra.mxu0 %v209
  %262 = vmatprep.subr.bf16.mxu0 0
  %263 = vmatpush1.bf16.msra.mxu0 %v210
  %264 = vmatprep.subr.bf16.mxu0 0
  %265 = vmatpush1.bf16.msra.mxu0 %v211
  %266 = vmatprep.subr.bf16.mxu0 0
  %267 = vmatpush1.bf16.msra.mxu0 %v212
  %268 = vmatprep.subr.bf16.mxu0 0
  %269 = vmatpush1.bf16.msra.mxu0 %v213
  %270 = vmatprep.subr.bf16.mxu0 0
  %271 = vmatpush1.bf16.msra.mxu0 %v214
  %272 = vmatprep.subr.bf16.mxu0 0
  %273 = vmatpush1.bf16.msra.mxu0 %v215
  %274 = vmatprep.subr.bf16.mxu0 0
  %275 = vmatpush1.bf16.msra.mxu0 %v216
  %276 = vmatprep.subr.bf16.mxu0 0
  %277 = vmatpush1.bf16.msra.mxu0 %v217
  %278 = vmatprep.subr.bf16.mxu0 0
  %279 = vmatpush1.bf16.msra.mxu0 %v218
  %280 = vmatprep.subr.bf16.mxu0 0
  %281 = vmatpush1.bf16.msra.mxu0 %v219
  %282 = vmatprep.subr.bf16.mxu0 0
  %283 = vmatpush1.bf16.msra.mxu0 %v220
  %284 = vmatprep.subr.bf16.mxu0 0
  %285 = vmatpush1.bf16.msra.mxu0 %v221
  %286 = vmatprep.mubr.bf16.mxu0 %v99
  %287 = vmatmul.mubr.bf16.gmra.mrb[0].mxu0 %v98
  %v288 = vpop.f32.mrb[0].mxu0
  %v289 = vadd.f32 %v76, %v288
  %v290 = vpop.f32.mrb[0].mxu0
  %v291 = vpop.f32.mrb[0].mxu0
  %v292 = vadd.f32 %v76, %v291
  %v293 = vpop.f32.mrb[0].mxu0
  %294 = vmatprep.mubr.bf16.mxu0 %v102
  %295 = vmatmul.mubr.bf16.gmra.mrb[0].mxu0 %v101
  %v296 = vpop.f32.mrb[0].mxu0
  %v297 = vadd.f32 %v76, %v296
  %v298 = vpop.f32.mrb[0].mxu0
  %v299 = vpop.f32.mrb[0].mxu0
  %v300 = vadd.f32 %v76, %v299
  %v301 = vpop.f32.mrb[0].mxu0
  %302 = vdwg.mxu0
  %303 = vmatprep.subr.bf16.mxu0 0
  %304 = vmatpush1.bf16.msra.mxu0 %v222
  %305 = vmatprep.subr.bf16.mxu0 0
  %306 = vmatpush1.bf16.msra.mxu0 %v223
  %307 = vmatprep.subr.bf16.mxu0 0
  %308 = vmatpush1.bf16.msra.mxu0 %v224
  %309 = vmatprep.subr.bf16.mxu0 0
  %310 = vmatpush1.bf16.msra.mxu0 %v225
  %311 = vmatprep.subr.bf16.mxu0 0
  %312 = vmatpush1.bf16.msra.mxu0 %v226
  %313 = vmatprep.subr.bf16.mxu0 0
  %314 = vmatpush1.bf16.msra.mxu0 %v227
  %315 = vmatprep.subr.bf16.mxu0 0
  %316 = vmatpush1.bf16.msra.mxu0 %v228
  %317 = vmatprep.subr.bf16.mxu0 0
  %318 = vmatpush1.bf16.msra.mxu0 %v229
  %319 = vmatprep.subr.bf16.mxu0 0
  %320 = vmatpush1.bf16.msra.mxu0 0
  %321 = vmatprep.subr.bf16.mxu0 0
  %322 = vmatpush1.bf16.msra.mxu0 0
  %323 = vmatprep.subr.bf16.mxu0 0
  %324 = vmatpush1.bf16.msra.mxu0 0
  %325 = vmatprep.subr.bf16.mxu0 0
  %326 = vmatpush1.bf16.msra.mxu0 0
  %327 = vmatprep.subr.bf16.mxu0 0
  %328 = vmatpush1.bf16.msra.mxu0 0
  %329 = vmatprep.subr.bf16.mxu0 0
  %330 = vmatpush1.bf16.msra.mxu0 0
  %331 = vmatprep.subr.bf16.mxu0 0
  %332 = vmatpush1.bf16.msra.mxu0 0
  %333 = vmatprep.subr.bf16.mxu0 0
  %334 = vmatpush1.bf16.msra.mxu0 0
  %335 = vmatprep.mubr.bf16.mxu0 0
  %336 = vmatmul.mubr.bf16.gmra.mrb[0].mxu0 %v100
  %v337 = vpop.f32.mrb[0].mxu0
  %v338 = vadd.f32 %v289, %v337
  %v339 = vpop.f32.mrb[0].mxu0
  %v340 = vpop.f32.mrb[0].mxu0
  %v341 = vadd.f32 %v292, %v340
  %v342 = vpop.f32.mrb[0].mxu0
  %343 = vmatprep.mubr.bf16.mxu0 0
  %344 = vmatmul.mubr.bf16.gmra.mrb[0].mxu0 %v103
  %v345 = vpop.f32.mrb[0].mxu0
  %v346 = vadd.f32 %v297, %v345
  %v347 = vpop.f32.mrb[0].mxu0
  %v348 = vpop.f32.mrb[0].mxu0
  %v349 = vadd.f32 %v300, %v348
  %v350 = vpop.f32.mrb[0].mxu0
  %351 = vdwg.mxu0
  %v352 = vmax.f32 %v338, 0.0
  %v353 = vmax.f32 %v341, 0.0
  %v354 = vmax.f32 %v346, 0.0
  %v355 = vmax.f32 %v349, 0.0
  %s356 = scalar_lea.vmem %s0, 48
  %v357 = vld [vmem:[%s356] sm:$0xff]
  %v358 = vld [vmem:[%s356 + $0x8] sm:$0xf]
  %v359 = vld [vmem:[%s356 + $0xc] sm:$0xff]
  %v360 = vld [vmem:[%s356 + $0x14] sm:$0xf]
  %v361 = vld [vmem:[%s356 + $0x18] sm:$0xff]
  %v362 = vld [vmem:[%s356 + $0x20] sm:$0xf]
  %v363 = vld [vmem:[%s356 + $0x24] sm:$0xff]
  %v364 = vld [vmem:[%s356 + $0x2c] sm:$0xf]
  %v373 = vunpack.c.l.b16 %v357
  %v374 = vunpack.c.h.b16 %v357
  %v375 = vunpack.c.l.b16 %v358
  %v376 = vunpack.c.l.b16 %v359
  %v377 = vunpack.c.h.b16 %v359
  %v378 = vunpack.c.l.b16 %v360
  %v379 = vunpack.c.l.b16 %v361
  %v380 = vunpack.c.h.b16 %v361
  %v381 = vunpack.c.l.b16 %v362
  %v382 = vunpack.c.l.b16 %v363
  %v383 = vunpack.c.h.b16 %v363
  %v384 = vunpack.c.l.b16 %v364
  %v385 = vpack.c.b16 %v376, %v373
  %v386 = vpack.c.b16 %v377, %v374
  %v387 = vpack.c.b16 %v378, %v375
  %v388 = vpack.c.b16 %v382, %v379
  %v389 = vpack.c.b16 %v383, %v380
  %v390 = vpack.c.b16 %v384, %v381
  %397 = vmatprep.subr.bf16.mxu0 0
  %398 = vmatpush1.bf16.msra.mxu0 %v206
  %399 = vmatprep.subr.bf16.mxu0 0
  %400 = vmatpush1.bf16.msra.mxu0 %v207
  %401 = vmatprep.subr.bf16.mxu0 0
  %402 = vmatpush1.bf16.msra.mxu0 %v208
  %403 = vmatprep.subr.bf16.mxu0 0
  %404 = vmatpush1.bf16.msra.mxu0 %v209
  %405 = vmatprep.subr.bf16.mxu0 0
  %406 = vmatpush1.bf16.msra.mxu0 %v210
  %407 = vmatprep.subr.bf16.mxu0 0
  %408 = vmatpush1.bf16.msra.mxu0 %v211
  %409 = vmatprep.subr.bf16.mxu0 0
  %410 = vmatpush1.bf16.msra.mxu0 %v212
  %411 = vmatprep.subr.bf16.mxu0 0
  %412 = vmatpush1.bf16.msra.mxu0 %v213
  %413 = vmatprep.subr.bf16.mxu0 0
  %414 = vmatpush1.bf16.msra.mxu0 %v214
  %415 = vmatprep.subr.bf16.mxu0 0
  %416 = vmatpush1.bf16.msra.mxu0 %v215
  %417 = vmatprep.subr.bf16.mxu0 0
  %418 = vmatpush1.bf16.msra.mxu0 %v216
  %419 = vmatprep.subr.bf16.mxu0 0
  %420 = vmatpush1.bf16.msra.mxu0 %v217
  %421 = vmatprep.subr.bf16.mxu0 0
  %422 = vmatpush1.bf16.msra.mxu0 %v218
  %423 = vmatprep.subr.bf16.mxu0 0
  %424 = vmatpush1.bf16.msra.mxu0 %v219
  %425 = vmatprep.subr.bf16.mxu0 0
  %426 = vmatpush1.bf16.msra.mxu0 %v220
  %427 = vmatprep.subr.bf16.mxu0 0
  %428 = vmatpush1.bf16.msra.mxu0 %v221
  %429 = vmatprep.mubr.bf16.mxu0 %v386
  %430 = vmatmul.mubr.bf16.gmra.mrb[0].mxu0 %v385
  %v431 = vpop.f32.mrb[0].mxu0
  %v432 = vadd.f32 %v76, %v431
  %v433 = vpop.f32.mrb[0].mxu0
  %v434 = vpop.f32.mrb[0].mxu0
  %v435 = vadd.f32 %v76, %v434
  %v436 = vpop.f32.mrb[0].mxu0
  %437 = vmatprep.mubr.bf16.mxu0 %v389
  %438 = vmatmul.mubr.bf16.gmra.mrb[0].mxu0 %v388
  %v439 = vpop.f32.mrb[0].mxu0
  %v440 = vadd.f32 %v76, %v439
  %v441 = vpop.f32.mrb[0].mxu0
  %v442 = vpop.f32.mrb[0].mxu0
  %v443 = vadd.f32 %v76, %v442
  %v444 = vpop.f32.mrb[0].mxu0
  %445 = vdwg.mxu0
  %446 = vmatprep.subr.bf16.mxu0 0
  %447 = vmatpush1.bf16.msra.mxu0 %v222
  %448 = vmatprep.subr.bf16.mxu0 0
  %449 = vmatpush1.bf16.msra.mxu0 %v223
  %450 = vmatprep.subr.bf16.mxu0 0
  %451 = vmatpush1.bf16.msra.mxu0 %v224
  %452 = vmatprep.subr.bf16.mxu0 0
  %453 = vmatpush1.bf16.msra.mxu0 %v225
  %454 = vmatprep.subr.bf16.mxu0 0
  %455 = vmatpush1.bf16.msra.mxu0 %v226
  %456 = vmatprep.subr.bf16.mxu0 0
  %457 = vmatpush1.bf16.msra.mxu0 %v227
  %458 = vmatprep.subr.bf16.mxu0 0
  %459 = vmatpush1.bf16.msra.mxu0 %v228
  %460 = vmatprep.subr.bf16.mxu0 0
  %461 = vmatpush1.bf16.msra.mxu0 %v229
  %462 = vmatprep.subr.bf16.mxu0 0
  %463 = vmatpush1.bf16.msra.mxu0 0
  %464 = vmatprep.subr.bf16.mxu0 0
  %465 = vmatpush1.bf16.msra.mxu0 0
  %466 = vmatprep.subr.bf16.mxu0 0
  %467 = vmatpush1.bf16.msra.mxu0 0
  %468 = vmatprep.subr.bf16.mxu0 0
  %469 = vmatpush1.bf16.msra.mxu0 0
  %470 = vmatprep.subr.bf16.mxu0 0
  %471 = vmatpush1.bf16.msra.mxu0 0
  %472 = vmatprep.subr.bf16.mxu0 0
  %473 = vmatpush1.bf16.msra.mxu0 0
  %474 = vmatprep.subr.bf16.mxu0 0
  %475 = vmatpush1.bf16.msra.mxu0 0
  %476 = vmatprep.subr.bf16.mxu0 0
  %477 = vmatpush1.bf16.msra.mxu0 0
  %478 = vmatprep.mubr.bf16.mxu0 0
  %479 = vmatmul.mubr.bf16.gmra.mrb[0].mxu0 %v387
  %v480 = vpop.f32.mrb[0].mxu0
  %v481 = vadd.f32 %v432, %v480
  %v482 = vpop.f32.mrb[0].mxu0
  %v483 = vpop.f32.mrb[0].mxu0
  %v484 = vadd.f32 %v435, %v483
  %v485 = vpop.f32.mrb[0].mxu0
  %486 = vmatprep.mubr.bf16.mxu0 0
  %487 = vmatmul.mubr.bf16.gmra.mrb[0].mxu0 %v390
  %v488 = vpop.f32.mrb[0].mxu0
  %v489 = vadd.f32 %v440, %v488
  %v490 = vpop.f32.mrb[0].mxu0
  %v491 = vpop.f32.mrb[0].mxu0
  %v492 = vadd.f32 %v443, %v491
  %v493 = vpop.f32.mrb[0].mxu0
  %494 = vdwg.mxu0
  %v495 = vmax.f32 %v481, 0.0
  %v496 = vmax.f32 %v484, 0.0
  %v497 = vmax.f32 %v489, 0.0
  %v498 = vmax.f32 %v492, 0.0
  %v499 = vmax.f32 %v352, %v495
  %v500 = vmax.f32 %v353, %v496
  %v501 = vmax.f32 %v354, %v497
  %v502 = vmax.f32 %v355, %v498
  %s503 = scalar_lea.vmem %s0, 96
  %v504 = vld [vmem:[%s503] sm:$0xff]
  %v505 = vld [vmem:[%s503 + $0x8] sm:$0xf]
  %v506 = vld [vmem:[%s503 + $0xc] sm:$0xff]
  %v507 = vld [vmem:[%s503 + $0x14] sm:$0xf]
  %v508 = vld [vmem:[%s503 + $0x18] sm:$0xff]
  %v509 = vld [vmem:[%s503 + $0x20] sm:$0xf]
  %v510 = vld [vmem:[%s503 + $0x24] sm:$0xff]
  %v511 = vld [vmem:[%s503 + $0x2c] sm:$0xf]
  %v520 = vunpack.c.l.b16 %v504
  %v521 = vunpack.c.h.b16 %v504
  %v522 = vunpack.c.l.b16 %v505
  %v523 = vunpack.c.l.b16 %v506
  %v524 = vunpack.c.h.b16 %v506
  %v525 = vunpack.c.l.b16 %v507
  %v526 = vunpack.c.l.b16 %v508
  %v527 = vunpack.c.h.b16 %v508
  %v528 = vunpack.c.l.b16 %v509
  %v529 = vunpack.c.l.b16 %v510
  %v530 = vunpack.c.h.b16 %v510
  %v531 = vunpack.c.l.b16 %v511
  %v532 = vpack.c.b16 %v523, %v520
  %v533 = vpack.c.b16 %v524, %v521
  %v534 = vpack.c.b16 %v525, %v522
  %v535 = vpack.c.b16 %v529, %v526
  %v536 = vpack.c.b16 %v530, %v527
  %v537 = vpack.c.b16 %v531, %v528
  %544 = vmatprep.subr.bf16.mxu0 0
  %545 = vmatpush1.bf16.msra.mxu0 %v206
  %546 = vmatprep.subr.bf16.mxu0 0
  %547 = vmatpush1.bf16.msra.mxu0 %v207
  %548 = vmatprep.subr.bf16.mxu0 0
  %549 = vmatpush1.bf16.msra.mxu0 %v208
  %550 = vmatprep.subr.bf16.mxu0 0
  %551 = vmatpush1.bf16.msra.mxu0 %v209
  %552 = vmatprep.subr.bf16.mxu0 0
  %553 = vmatpush1.bf16.msra.mxu0 %v210
  %554 = vmatprep.subr.bf16.mxu0 0
  %555 = vmatpush1.bf16.msra.mxu0 %v211
  %556 = vmatprep.subr.bf16.mxu0 0
  %557 = vmatpush1.bf16.msra.mxu0 %v212
  %558 = vmatprep.subr.bf16.mxu0 0
  %559 = vmatpush1.bf16.msra.mxu0 %v213
  %560 = vmatprep.subr.bf16.mxu0 0
  %561 = vmatpush1.bf16.msra.mxu0 %v214
  %562 = vmatprep.subr.bf16.mxu0 0
  %563 = vmatpush1.bf16.msra.mxu0 %v215
  %564 = vmatprep.subr.bf16.mxu0 0
  %565 = vmatpush1.bf16.msra.mxu0 %v216
  %566 = vmatprep.subr.bf16.mxu0 0
  %567 = vmatpush1.bf16.msra.mxu0 %v217
  %568 = vmatprep.subr.bf16.mxu0 0
  %569 = vmatpush1.bf16.msra.mxu0 %v218
  %570 = vmatprep.subr.bf16.mxu0 0
  %571 = vmatpush1.bf16.msra.mxu0 %v219
  %572 = vmatprep.subr.bf16.mxu0 0
  %573 = vmatpush1.bf16.msra.mxu0 %v220
  %574 = vmatprep.subr.bf16.mxu0 0
  %575 = vmatpush1.bf16.msra.mxu0 %v221
  %576 = vmatprep.mubr.bf16.mxu0 %v533
  %577 = vmatmul.mubr.bf16.gmra.mrb[0].mxu0 %v532
  %v578 = vpop.f32.mrb[0].mxu0
  %v579 = vadd.f32 %v76, %v578
  %v580 = vpop.f32.mrb[0].mxu0
  %v581 = vpop.f32.mrb[0].mxu0
  %v582 = vadd.f32 %v76, %v581
  %v583 = vpop.f32.mrb[0].mxu0
  %584 = vmatprep.mubr.bf16.mxu0 %v536
  %585 = vmatmul.mubr.bf16.gmra.mrb[0].mxu0 %v535
  %v586 = vpop.f32.mrb[0].mxu0
  %v587 = vadd.f32 %v76, %v586
  %v588 = vpop.f32.mrb[0].mxu0
  %v589 = vpop.f32.mrb[0].mxu0
  %v590 = vadd.f32 %v76, %v589
  %v591 = vpop.f32.mrb[0].mxu0
  %592 = vdwg.mxu0
  %593 = vmatprep.subr.bf16.mxu0 0
  %594 = vmatpush1.bf16.msra.mxu0 %v222
  %595 = vmatprep.subr.bf16.mxu0 0
  %596 = vmatpush1.bf16.msra.mxu0 %v223
  %597 = vmatprep.subr.bf16.mxu0 0
  %598 = vmatpush1.bf16.msra.mxu0 %v224
  %599 = vmatprep.subr.bf16.mxu0 0
  %600 = vmatpush1.bf16.msra.mxu0 %v225
  %601 = vmatprep.subr.bf16.mxu0 0
  %602 = vmatpush1.bf16.msra.mxu0 %v226
  %603 = vmatprep.subr.bf16.mxu0 0
  %604 = vmatpush1.bf16.msra.mxu0 %v227
  %605 = vmatprep.subr.bf16.mxu0 0
  %606 = vmatpush1.bf16.msra.mxu0 %v228
  %607 = vmatprep.subr.bf16.mxu0 0
  %608 = vmatpush1.bf16.msra.mxu0 %v229
  %609 = vmatprep.subr.bf16.mxu0 0
  %610 = vmatpush1.bf16.msra.mxu0 0
  %611 = vmatprep.subr.bf16.mxu0 0
  %612 = vmatpush1.bf16.msra.mxu0 0
  %613 = vmatprep.subr.bf16.mxu0 0
  %614 = vmatpush1.bf16.msra.mxu0 0
  %615 = vmatprep.subr.bf16.mxu0 0
  %616 = vmatpush1.bf16.msra.mxu0 0
  %617 = vmatprep.subr.bf16.mxu0 0
  %618 = vmatpush1.bf16.msra.mxu0 0
  %619 = vmatprep.subr.bf16.mxu0 0
  %620 = vmatpush1.bf16.msra.mxu0 0
  %621 = vmatprep.subr.bf16.mxu0 0
  %622 = vmatpush1.bf16.msra.mxu0 0
  %623 = vmatprep.subr.bf16.mxu0 0
  %624 = vmatpush1.bf16.msra.mxu0 0
  %625 = vmatprep.mubr.bf16.mxu0 0
  %626 = vmatmul.mubr.bf16.gmra.mrb[0].mxu0 %v534
  %v627 = vpop.f32.mrb[0].mxu0
  %v628 = vadd.f32 %v579, %v627
  %v629 = vpop.f32.mrb[0].mxu0
  %v630 = vpop.f32.mrb[0].mxu0
  %v631 = vadd.f32 %v582, %v630
  %v632 = vpop.f32.mrb[0].mxu0
  %633 = vmatprep.mubr.bf16.mxu0 0
  %634 = vmatmul.mubr.bf16.gmra.mrb[0].mxu0 %v537
  %v635 = vpop.f32.mrb[0].mxu0
  %v636 = vadd.f32 %v587, %v635
  %v637 = vpop.f32.mrb[0].mxu0
  %v638 = vpop.f32.mrb[0].mxu0
  %v639 = vadd.f32 %v590, %v638
  %v640 = vpop.f32.mrb[0].mxu0
  %641 = vdwg.mxu0
  %v642 = vmax.f32 %v628, 0.0
  %v643 = vmax.f32 %v631, 0.0
  %v644 = vmax.f32 %v636, 0.0
  %v645 = vmax.f32 %v639, 0.0
  %v646 = vmax.f32 %v499, %v642
  %v647 = vmax.f32 %v500, %v643
  %v648 = vmax.f32 %v501, %v644
  %v649 = vmax.f32 %v502, %v645
  %s650 = scalar_lea.vmem %s0, 144
  %v651 = vld [vmem:[%s650] sm:$0xff]
  %v652 = vld [vmem:[%s650 + $0x8] sm:$0xf]
  %v653 = vld [vmem:[%s650 + $0xc] sm:$0xff]
  %v654 = vld [vmem:[%s650 + $0x14] sm:$0xf]
  %v655 = vld [vmem:[%s650 + $0x18] sm:$0xff]
  %v656 = vld [vmem:[%s650 + $0x20] sm:$0xf]
  %v657 = vld [vmem:[%s650 + $0x24] sm:$0xff]
  %v658 = vld [vmem:[%s650 + $0x2c] sm:$0xf]
  %v667 = vunpack.c.l.b16 %v651
  %v668 = vunpack.c.h.b16 %v651
  %v669 = vunpack.c.l.b16 %v652
  %v670 = vunpack.c.l.b16 %v653
  %v671 = vunpack.c.h.b16 %v653
  %v672 = vunpack.c.l.b16 %v654
  %v673 = vunpack.c.l.b16 %v655
  %v674 = vunpack.c.h.b16 %v655
  %v675 = vunpack.c.l.b16 %v656
  %v676 = vunpack.c.l.b16 %v657
  %v677 = vunpack.c.h.b16 %v657
  %v678 = vunpack.c.l.b16 %v658
  %v679 = vpack.c.b16 %v670, %v667
  %v680 = vpack.c.b16 %v671, %v668
  %v681 = vpack.c.b16 %v672, %v669
  %v682 = vpack.c.b16 %v676, %v673
  %v683 = vpack.c.b16 %v677, %v674
  %v684 = vpack.c.b16 %v678, %v675
  %691 = vmatprep.subr.bf16.mxu0 0
  %692 = vmatpush1.bf16.msra.mxu0 %v206
  %693 = vmatprep.subr.bf16.mxu0 0
  %694 = vmatpush1.bf16.msra.mxu0 %v207
  %695 = vmatprep.subr.bf16.mxu0 0
  %696 = vmatpush1.bf16.msra.mxu0 %v208
  %697 = vmatprep.subr.bf16.mxu0 0
  %698 = vmatpush1.bf16.msra.mxu0 %v209
  %699 = vmatprep.subr.bf16.mxu0 0
  %700 = vmatpush1.bf16.msra.mxu0 %v210
  %701 = vmatprep.subr.bf16.mxu0 0
  %702 = vmatpush1.bf16.msra.mxu0 %v211
  %703 = vmatprep.subr.bf16.mxu0 0
  %704 = vmatpush1.bf16.msra.mxu0 %v212
  %705 = vmatprep.subr.bf16.mxu0 0
  %706 = vmatpush1.bf16.msra.mxu0 %v213
  %707 = vmatprep.subr.bf16.mxu0 0
  %708 = vmatpush1.bf16.msra.mxu0 %v214
  %709 = vmatprep.subr.bf16.mxu0 0
  %710 = vmatpush1.bf16.msra.mxu0 %v215
  %711 = vmatprep.subr.bf16.mxu0 0
  %712 = vmatpush1.bf16.msra.mxu0 %v216
  %713 = vmatprep.subr.bf16.mxu0 0
  %714 = vmatpush1.bf16.msra.mxu0 %v217
  %715 = vmatprep.subr.bf16.mxu0 0
  %716 = vmatpush1.bf16.msra.mxu0 %v218
  %717 = vmatprep.subr.bf16.mxu0 0
  %718 = vmatpush1.bf16.msra.mxu0 %v219
  %719 = vmatprep.subr.bf16.mxu0 0
  %720 = vmatpush1.bf16.msra.mxu0 %v220
  %721 = vmatprep.subr.bf16.mxu0 0
  %722 = vmatpush1.bf16.msra.mxu0 %v221
  %723 = vmatprep.mubr.bf16.mxu0 %v680
  %724 = vmatmul.mubr.bf16.gmra.mrb[0].mxu0 %v679
  %v725 = vpop.f32.mrb[0].mxu0
  %v726 = vadd.f32 %v76, %v725
  %v727 = vpop.f32.mrb[0].mxu0
  %v728 = vpop.f32.mrb[0].mxu0
  %v729 = vadd.f32 %v76, %v728
  %v730 = vpop.f32.mrb[0].mxu0
  %731 = vmatprep.mubr.bf16.mxu0 %v683
  %732 = vmatmul.mubr.bf16.gmra.mrb[0].mxu0 %v682
  %v733 = vpop.f32.mrb[0].mxu0
  %v734 = vadd.f32 %v76, %v733
  %v735 = vpop.f32.mrb[0].mxu0
  %v736 = vpop.f32.mrb[0].mxu0
  %v737 = vadd.f32 %v76, %v736
  %v738 = vpop.f32.mrb[0].mxu0
  %739 = vdwg.mxu0
  %740 = vmatprep.subr.bf16.mxu0 0
  %741 = vmatpush1.bf16.msra.mxu0 %v222
  %742 = vmatprep.subr.bf16.mxu0 0
  %743 = vmatpush1.bf16.msra.mxu0 %v223
  %744 = vmatprep.subr.bf16.mxu0 0
  %745 = vmatpush1.bf16.msra.mxu0 %v224
  %746 = vmatprep.subr.bf16.mxu0 0
  %747 = vmatpush1.bf16.msra.mxu0 %v225
  %748 = vmatprep.subr.bf16.mxu0 0
  %749 = vmatpush1.bf16.msra.mxu0 %v226
  %750 = vmatprep.subr.bf16.mxu0 0
  %751 = vmatpush1.bf16.msra.mxu0 %v227
  %752 = vmatprep.subr.bf16.mxu0 0
  %753 = vmatpush1.bf16.msra.mxu0 %v228
  %754 = vmatprep.subr.bf16.mxu0 0
  %755 = vmatpush1.bf16.msra.mxu0 %v229
  %756 = vmatprep.subr.bf16.mxu0 0
  %757 = vmatpush1.bf16.msra.mxu0 0
  %758 = vmatprep.subr.bf16.mxu0 0
  %759 = vmatpush1.bf16.msra.mxu0 0
  %760 = vmatprep.subr.bf16.mxu0 0
  %761 = vmatpush1.bf16.msra.mxu0 0
  %762 = vmatprep.subr.bf16.mxu0 0
  %763 = vmatpush1.bf16.msra.mxu0 0
  %764 = vmatprep.subr.bf16.mxu0 0
  %765 = vmatpush1.bf16.msra.mxu0 0
  %766 = vmatprep.subr.bf16.mxu0 0
  %767 = vmatpush1.bf16.msra.mxu0 0
  %768 = vmatprep.subr.bf16.mxu0 0
  %769 = vmatpush1.bf16.msra.mxu0 0
  %770 = vmatprep.subr.bf16.mxu0 0
  %771 = vmatpush1.bf16.msra.mxu0 0
  %772 = vmatprep.mubr.bf16.mxu0 0
  %773 = vmatmul.mubr.bf16.gmra.mrb[0].mxu0 %v681
  %v774 = vpop.f32.mrb[0].mxu0
  %v775 = vadd.f32 %v726, %v774
  %v776 = vpop.f32.mrb[0].mxu0
  %v777 = vpop.f32.mrb[0].mxu0
  %v778 = vadd.f32 %v729, %v777
  %v779 = vpop.f32.mrb[0].mxu0
  %780 = vmatprep.mubr.bf16.mxu0 0
  %781 = vmatmul.mubr.bf16.gmra.mrb[0].mxu0 %v684
  %v782 = vpop.f32.mrb[0].mxu0
  %v783 = vadd.f32 %v734, %v782
  %v784 = vpop.f32.mrb[0].mxu0
  %v785 = vpop.f32.mrb[0].mxu0
  %v786 = vadd.f32 %v737, %v785
  %v787 = vpop.f32.mrb[0].mxu0
  %788 = vdwg.mxu0
  %v789 = vmax.f32 %v775, 0.0
  %v790 = vmax.f32 %v778, 0.0
  %v791 = vmax.f32 %v783, 0.0
  %v792 = vmax.f32 %v786, 0.0
  %v793 = vmax.f32 %v646, %v789
  %v794 = vmax.f32 %v647, %v790
  %v795 = vmax.f32 %v648, %v791
  %v796 = vmax.f32 %v649, %v792
  %v797 = vpack.c.bf16 %v794, %v793
  %v798 = vpack.c.bf16 %v796, %v795
  %v801 = vunpack.c.l.b16 %v797
  %v802 = vunpack.c.h.b16 %v797
  %v803 = vunpack.c.l.b16 %v798
  %v804 = vunpack.c.h.b16 %v798
  %v805 = vpack.c.b16 %v801, %v801
  %v806 = vpack.c.b16 %v802, %v802
  %v807 = vpack.c.b16 %v803, %v803
  %v808 = vpack.c.b16 %v804, %v804
  %813 = vst [vmem:[%s3] sm:$0xf] %v805
  %814 = vst [vmem:[%s3 + $0x4] sm:$0xf] %v806
  %815 = vst [vmem:[%s3 + $0x8] sm:$0xf] %v807
  %816 = vst [vmem:[%s3 + $0xc] sm:$0xf] %v808
  // Predicated region
  $region14: #{_lambda_.4} parent=0 // pred_check
    _
  $region15: #{_lambda_.4} parent=0 // pred_check_branch
    %818 = sbr.rel (0) target = $region17
  $region16: #{_lambda_.4} parent=0 // pred_region
    _
  $region17: #{_lambda_.4} parent=0 // pred_fallthru
    _
  // Predicated region
  $region18: #{_lambda_.4} parent=0 // pred_check
    _
  $region19: #{_lambda_.4} parent=0 // pred_check_branch
    %820 = sbr.rel (0) target = $region21
  $region20: #{_lambda_.4} parent=0 // pred_region
    _
  $region21: #{_lambda_.4} parent=0 // pred_fallthru
    _

// kernel: _lambda_.5
$region0: #{_lambda_.5}
  #allocation0 [shape = 'u32[]', space=smem, size = 0x4, offset = 0x4, fixed_abs, tag = 'smem constant byte address 0x4 - core index']
  #allocation1 [shape = 'u32[144,128]{1,0:T(1,128)}', space=vmem, size = 0x12000, scoped, tag = 'internal scratch']
  %s0 = inlined_call_operand.vmem [shape: bf16[16,8,640], index: 0, kind: input, shape index: {}]
  %s1 = inlined_call_operand.vmem [shape: bf16[640,128], index: 1, kind: input, shape index: {}]
  %s2 = inlined_call_operand.vmem [shape: f32[1,128], index: 2, kind: input, shape index: {}]
  %s3 = inlined_call_operand.vmem [shape: bf16[1152,256], index: 3, kind: input, shape index: {}]
  %s4 = inlined_call_operand.vmem [shape: f32[1,256], index: 4, kind: input, shape index: {}]
  %s5 = inlined_call_operand.vmem [shape: f32[1,256], index: 5, kind: input, shape index: {}]
  %s6 = inlined_call_operand.vmem [shape: f32[1,256], index: 6, kind: input, shape index: {}]
  %s7 = inlined_call_operand.vmem [shape: bf16[2048,128], index: 7, kind: input, shape index: {}]
  %s8 = inlined_call_operand.vmem [shape: f32[1,64], index: 8, kind: input, shape index: {}]
  %s9 = inlined_call_operand.vmem [shape: f32[1,64], index: 9, kind: input, shape index: {}]
  %s10 = inlined_call_operand.vmem [shape: bf16[512,128], index: 10, kind: input, shape index: {}]
  %s11 = inlined_call_operand.vmem [shape: f32[8,128], index: 11, kind: output, shape index: {}]
  %s12 = sld [smem:[#allocation0]]
  $region54: #{_lambda_.5} parent=0
    _
  %s14 = ssub.s32 1, %s12
  %s15 = scalar_select 0, %s14, %s12
  // Predicated region
  $region2: #{_lambda_.5} parent=0 // pred_check
    _
  $region3: #{_lambda_.5} parent=0 // pred_check_branch
    %17 = sbr.rel (0) target = $region5
  $region4: #{_lambda_.5} parent=0 // pred_region
    _
  $region5: #{_lambda_.5} parent=0 // pred_fallthru
    _
  // Predicated region
  $region6: #{_lambda_.5} parent=0 // pred_check
    _
  $region7: #{_lambda_.5} parent=0 // pred_check_branch
    %19 = sbr.rel (0) target = $region9
  $region8: #{_lambda_.5} parent=0 // pred_region
    _
  $region9: #{_lambda_.5} parent=0 // pred_fallthru
    _
  // Predicated region
  $region10: #{_lambda_.5} parent=0 // pred_check
    _
  $region11: #{_lambda_.5} parent=0 // pred_check_branch
    %21 = sbr.rel (0) target = $region13
  $region12: #{_lambda_.5} parent=0 // pred_region
    _
  $region13: #{_lambda_.5} parent=0 // pred_fallthru
    _
  // Predicated region
  $region14: #{_lambda_.5} parent=0 // pred_check
    _
  $region15: #{_lambda_.5} parent=0 // pred_check_branch
    %23 = sbr.rel (0) target = $region17
  $region16: #{_lambda_.5} parent=0 // pred_region
    _
  $region17: #{_lambda_.5} parent=0 // pred_fallthru
    _
  // Predicated region
  $region18: #{_lambda_.5} parent=0 // pred_check
    _
  $region19: #{_lambda_.5} parent=0 // pred_check_branch
    %25 = sbr.rel (0) target = $region21
  $region20: #{_lambda_.5} parent=0 // pred_region
    _
  $region21: #{_lambda_.5} parent=0 // pred_fallthru
    _
  // Predicated region
  $region22: #{_lambda_.5} parent=0 // pred_check
    _
  $region23: #{_lambda_.5} parent=0 // pred_check_branch
    %27 = sbr.rel (0) target = $region25
  $region24: #{_lambda_.5} parent=0 // pred_region
    _
  $region25: #{_lambda_.5} parent=0 // pred_fallthru
    _
  // Predicated region
  $region26: #{_lambda_.5} parent=0 // pred_check
    _
  $region27: #{_lambda_.5} parent=0 // pred_check_branch
    %29 = sbr.rel (0) target = $region29
  $region28: #{_lambda_.5} parent=0 // pred_region
    _
  $region29: #{_lambda_.5} parent=0 // pred_fallthru
    _
  // Predicated region
  $region30: #{_lambda_.5} parent=0 // pred_check
    _
  $region31: #{_lambda_.5} parent=0 // pred_check_branch
    %31 = sbr.rel (0) target = $region33
  $region32: #{_lambda_.5} parent=0 // pred_region
    _
  $region33: #{_lambda_.5} parent=0 // pred_fallthru
    _
  // Predicated region
  $region34: #{_lambda_.5} parent=0 // pred_check
    _
  $region35: #{_lambda_.5} parent=0 // pred_check_branch
    %33 = sbr.rel (0) target = $region37
  $region36: #{_lambda_.5} parent=0 // pred_region
    _
  $region37: #{_lambda_.5} parent=0 // pred_fallthru
    _
  // Predicated region
  $region38: #{_lambda_.5} parent=0 // pred_check
    _
  $region39: #{_lambda_.5} parent=0 // pred_check_branch
    %35 = sbr.rel (0) target = $region41
  $region40: #{_lambda_.5} parent=0 // pred_region
    _
  $region41: #{_lambda_.5} parent=0 // pred_fallthru
    _
  // Predicated region
  $region42: #{_lambda_.5} parent=0 // pred_check
    _
  $region43: #{_lambda_.5} parent=0 // pred_check_branch
    %37 = sbr.rel (0) target = $region45
  $region44: #{_lambda_.5} parent=0 // pred_region
    _
  $region45: #{_lambda_.5} parent=0 // pred_fallthru
    _
  %v39 = vld [vmem:[%s1] sm:$0xf]
  %v40 = vld [vmem:[%s1 + $0x4] sm:$0xf]
  %v41 = vld [vmem:[%s1 + $0x8] sm:$0xf]
  %v42 = vld [vmem:[%s1 + $0xc] sm:$0xf]
  %v43 = vld [vmem:[%s1 + $0x10] sm:$0xf]
  %v44 = vld [vmem:[%s1 + $0x14] sm:$0xf]
  %v45 = vld [vmem:[%s1 + $0x18] sm:$0xf]
  %v46 = vld [vmem:[%s1 + $0x1c] sm:$0xf]
  %v47 = vld [vmem:[%s1 + $0x20] sm:$0xf]
  %v48 = vld [vmem:[%s1 + $0x24] sm:$0xf]
  %v49 = vld [vmem:[%s1 + $0x28] sm:$0xf]
  %v50 = vld [vmem:[%s1 + $0x2c] sm:$0xf]
  %v51 = vld [vmem:[%s1 + $0x30] sm:$0xf]
  %v52 = vld [vmem:[%s1 + $0x34] sm:$0xf]
  %v53 = vld [vmem:[%s1 + $0x38] sm:$0xf]
  %v54 = vld [vmem:[%s1 + $0x3c] sm:$0xf]
  %v55 = vld [vmem:[%s1 + $0x40] sm:$0xf]
  %v56 = vld [vmem:[%s1 + $0x44] sm:$0xf]
  %v57 = vld [vmem:[%s1 + $0x48] sm:$0xf]
  %v58 = vld [vmem:[%s1 + $0x4c] sm:$0xf]
  %v59 = vld [vmem:[%s1 + $0x50] sm:$0xf]
  %v60 = vld [vmem:[%s1 + $0x54] sm:$0xf]
  %v61 = vld [vmem:[%s1 + $0x58] sm:$0xf]
  %v62 = vld [vmem:[%s1 + $0x5c] sm:$0xf]
  %v63 = vld [vmem:[%s1 + $0x60] sm:$0xf]
  %v64 = vld [vmem:[%s1 + $0x64] sm:$0xf]
  %v65 = vld [vmem:[%s1 + $0x68] sm:$0xf]
  %v66 = vld [vmem:[%s1 + $0x6c] sm:$0xf]
  %v67 = vld [vmem:[%s1 + $0x70] sm:$0xf]
  %v68 = vld [vmem:[%s1 + $0x74] sm:$0xf]
  %v69 = vld [vmem:[%s1 + $0x78] sm:$0xf]
  %v70 = vld [vmem:[%s1 + $0x7c] sm:$0xf]
  %v71 = vld [vmem:[%s1 + $0x80] sm:$0xf]
  %v72 = vld [vmem:[%s1 + $0x84] sm:$0xf]
  %v73 = vld [vmem:[%s1 + $0x88] sm:$0xf]
  %v74 = vld [vmem:[%s1 + $0x8c] sm:$0xf]
  %v75 = vld [vmem:[%s1 + $0x90] sm:$0xf]
  %v76 = vld [vmem:[%s1 + $0x94] sm:$0xf]
  %v77 = vld [vmem:[%s1 + $0x98] sm:$0xf]
  %v78 = vld [vmem:[%s1 + $0x9c] sm:$0xf]
  %v79 = vld [vmem:[%s1 + $0xa0] sm:$0xf]
  %v80 = vld [vmem:[%s1 + $0xa4] sm:$0xf]
  %v81 = vld [vmem:[%s1 + $0xa8] sm:$0xf]
  %v82 = vld [vmem:[%s1 + $0xac] sm:$0xf]
  %v83 = vld [vmem:[%s1 + $0xb0] sm:$0xf]
  %v84 = vld [vmem:[%s1 + $0xb4] sm:$0xf]
  %v85 = vld [vmem:[%s1 + $0xb8] sm:$0xf]
  %v86 = vld [vmem:[%s1 + $0xbc] sm:$0xf]
  %v87 = vld [vmem:[%s1 + $0xc0] sm:$0xf]
  %v88 = vld [vmem:[%s1 + $0xc4] sm:$0xf]
  %v89 = vld [vmem:[%s1 + $0xc8] sm:$0xf]
  %v90 = vld [vmem:[%s1 + $0xcc] sm:$0xf]
  %v91 = vld [vmem:[%s1 + $0xd0] sm:$0xf]
  %v92 = vld [vmem:[%s1 + $0xd4] sm:$0xf]
  %v93 = vld [vmem:[%s1 + $0xd8] sm:$0xf]
  %v94 = vld [vmem:[%s1 + $0xdc] sm:$0xf]
  %v95 = vld [vmem:[%s1 + $0xe0] sm:$0xf]
  %v96 = vld [vmem:[%s1 + $0xe4] sm:$0xf]
  %v97 = vld [vmem:[%s1 + $0xe8] sm:$0xf]
  %v98 = vld [vmem:[%s1 + $0xec] sm:$0xf]
  %v99 = vld [vmem:[%s1 + $0xf0] sm:$0xf]
  %v100 = vld [vmem:[%s1 + $0xf4] sm:$0xf]
  %v101 = vld [vmem:[%s1 + $0xf8] sm:$0xf]
  %v102 = vld [vmem:[%s1 + $0xfc] sm:$0xf]
  %v103 = vld [vmem:[%s1 + $0x100] sm:$0xf]
  %v104 = vld [vmem:[%s1 + $0x104] sm:$0xf]
  %v105 = vld [vmem:[%s1 + $0x108] sm:$0xf]
  %v106 = vld [vmem:[%s1 + $0x10c] sm:$0xf]
  %v107 = vld [vmem:[%s1 + $0x110] sm:$0xf]
  %v108 = vld [vmem:[%s1 + $0x114] sm:$0xf]
  %v109 = vld [vmem:[%s1 + $0x118] sm:$0xf]
  %v110 = vld [vmem:[%s1 + $0x11c] sm:$0xf]
  %v111 = vld [vmem:[%s1 + $0x120] sm:$0xf]
  %v112 = vld [vmem:[%s1 + $0x124] sm:$0xf]
  %v113 = vld [vmem:[%s1 + $0x128] sm:$0xf]
  %v114 = vld [vmem:[%s1 + $0x12c] sm:$0xf]
  %v115 = vld [vmem:[%s1 + $0x130] sm:$0xf]
  %v116 = vld [vmem:[%s1 + $0x134] sm:$0xf]
  %v117 = vld [vmem:[%s1 + $0x138] sm:$0xf]
  %v118 = vld [vmem:[%s1 + $0x13c] sm:$0xf]
  %v119 = vld [vmem:[%s2] sm:$0x1]
  %v120 = vld [vmem:[%s0] sm:$0xff]
  %v121 = vld [vmem:[%s0 + $0x8] sm:$0xff]
  %v122 = vld [vmem:[%s0 + $0x10] sm:$0xf]
  %v124 = vlaneseq
  %v125 = vshrl.u32 %v124, 7
  %v126 = vsub.s32 0, %v125
  %v127 = vrot.slane %v119, %v126
  %v132 = vunpack.c.l.b16 %v120
  %v133 = vunpack.c.h.b16 %v120
  %v134 = vunpack.c.l.b16 %v121
  %v135 = vunpack.c.h.b16 %v121
  %v136 = vunpack.c.l.b16 %v122
  %v137 = vpack.c.b16 %v132, %v132
  %v138 = vpack.c.b16 %v133, %v133
  %v139 = vpack.c.b16 %v134, %v134
  %v140 = vpack.c.b16 %v135, %v135
  %v141 = vpack.c.b16 %v136, %v136
  %v227 = vunpack.c.l.b16 %v39
  %v228 = vunpack.c.l.b16 %v40
  %v229 = vunpack.c.l.b16 %v41
  %v230 = vunpack.c.l.b16 %v42
  %v231 = vunpack.c.l.b16 %v43
  %v232 = vunpack.c.l.b16 %v44
  %v233 = vunpack.c.l.b16 %v45
  %v234 = vunpack.c.l.b16 %v46
  %v235 = vunpack.c.l.b16 %v47
  %v236 = vunpack.c.l.b16 %v48
  %v237 = vunpack.c.l.b16 %v49
  %v238 = vunpack.c.l.b16 %v50
  %v239 = vunpack.c.l.b16 %v51
  %v240 = vunpack.c.l.b16 %v52
  %v241 = vunpack.c.l.b16 %v53
  %v242 = vunpack.c.l.b16 %v54
  %v243 = vunpack.c.l.b16 %v55
  %v244 = vunpack.c.l.b16 %v56
  %v245 = vunpack.c.l.b16 %v57
  %v246 = vunpack.c.l.b16 %v58
  %v247 = vunpack.c.l.b16 %v59
  %v248 = vunpack.c.l.b16 %v60
  %v249 = vunpack.c.l.b16 %v61
  %v250 = vunpack.c.l.b16 %v62
  %v251 = vunpack.c.l.b16 %v63
  %v252 = vunpack.c.l.b16 %v64
  %v253 = vunpack.c.l.b16 %v65
  %v254 = vunpack.c.l.b16 %v66
  %v255 = vunpack.c.l.b16 %v67
  %v256 = vunpack.c.l.b16 %v68
  %v257 = vunpack.c.l.b16 %v69
  %v258 = vunpack.c.l.b16 %v70
  %v259 = vunpack.c.l.b16 %v71
  %v260 = vunpack.c.l.b16 %v72
  %v261 = vunpack.c.l.b16 %v73
  %v262 = vunpack.c.l.b16 %v74
  %v263 = vunpack.c.l.b16 %v75
  %v264 = vunpack.c.l.b16 %v76
  %v265 = vunpack.c.l.b16 %v77
  %v266 = vunpack.c.l.b16 %v78
  %v267 = vunpack.c.l.b16 %v79
  %v268 = vunpack.c.l.b16 %v80
  %v269 = vunpack.c.l.b16 %v81
  %v270 = vunpack.c.l.b16 %v82
  %v271 = vunpack.c.l.b16 %v83
  %v272 = vunpack.c.l.b16 %v84
  %v273 = vunpack.c.l.b16 %v85
  %v274 = vunpack.c.l.b16 %v86
  %v275 = vunpack.c.l.b16 %v87
  %v276 = vunpack.c.l.b16 %v88
  %v277 = vunpack.c.l.b16 %v89
  %v278 = vunpack.c.l.b16 %v90
  %v279 = vunpack.c.l.b16 %v91
  %v280 = vunpack.c.l.b16 %v92
  %v281 = vunpack.c.l.b16 %v93
  %v282 = vunpack.c.l.b16 %v94
  %v283 = vunpack.c.l.b16 %v95
  %v284 = vunpack.c.l.b16 %v96
  %v285 = vunpack.c.l.b16 %v97
  %v286 = vunpack.c.l.b16 %v98
  %v287 = vunpack.c.l.b16 %v99
  %v288 = vunpack.c.l.b16 %v100
  %v289 = vunpack.c.l.b16 %v101
  %v290 = vunpack.c.l.b16 %v102
  %v291 = vunpack.c.l.b16 %v103
  %v292 = vunpack.c.l.b16 %v104
  %v293 = vunpack.c.l.b16 %v105
  %v294 = vunpack.c.l.b16 %v106
  %v295 = vunpack.c.l.b16 %v107
  %v296 = vunpack.c.l.b16 %v108
  %v297 = vunpack.c.l.b16 %v109
  %v298 = vunpack.c.l.b16 %v110
  %v299 = vunpack.c.l.b16 %v111
  %v300 = vunpack.c.l.b16 %v112
  %v301 = vunpack.c.l.b16 %v113
  %v302 = vunpack.c.l.b16 %v114
  %v303 = vunpack.c.l.b16 %v115
  %v304 = vunpack.c.l.b16 %v116
  %v305 = vunpack.c.l.b16 %v117
  %v306 = vunpack.c.l.b16 %v118
  %v307 = vpack.c.b16 %v228, %v227
  %v308 = vpack.c.b16 %v230, %v229
  %v309 = vpack.c.b16 %v232, %v231
  %v310 = vpack.c.b16 %v234, %v233
  %v311 = vpack.c.b16 %v236, %v235
  %v312 = vpack.c.b16 %v238, %v237
  %v313 = vpack.c.b16 %v240, %v239
  %v314 = vpack.c.b16 %v242, %v241
  %v315 = vpack.c.b16 %v244, %v243
  %v316 = vpack.c.b16 %v246, %v245
  %v317 = vpack.c.b16 %v248, %v247
  %v318 = vpack.c.b16 %v250, %v249
  %v319 = vpack.c.b16 %v252, %v251
  %v320 = vpack.c.b16 %v254, %v253
  %v321 = vpack.c.b16 %v256, %v255
  %v322 = vpack.c.b16 %v258, %v257
  %v323 = vpack.c.b16 %v260, %v259
  %v324 = vpack.c.b16 %v262, %v261
  %v325 = vpack.c.b16 %v264, %v263
  %v326 = vpack.c.b16 %v266, %v265
  %v327 = vpack.c.b16 %v268, %v267
  %v328 = vpack.c.b16 %v270, %v269
  %v329 = vpack.c.b16 %v272, %v271
  %v330 = vpack.c.b16 %v274, %v273
  %v331 = vpack.c.b16 %v276, %v275
  %v332 = vpack.c.b16 %v278, %v277
  %v333 = vpack.c.b16 %v280, %v279
  %v334 = vpack.c.b16 %v282, %v281
  %v335 = vpack.c.b16 %v284, %v283
  %v336 = vpack.c.b16 %v286, %v285
  %v337 = vpack.c.b16 %v288, %v287
  %v338 = vpack.c.b16 %v290, %v289
  %v339 = vpack.c.b16 %v292, %v291
  %v340 = vpack.c.b16 %v294, %v293
  %v341 = vpack.c.b16 %v296, %v295
  %v342 = vpack.c.b16 %v298, %v297
  %v343 = vpack.c.b16 %v300, %v299
  %v344 = vpack.c.b16 %v302, %v301
  %v345 = vpack.c.b16 %v304, %v303
  %v346 = vpack.c.b16 %v306, %v305
  %387 = vmatprep.subr.bf16.mxu0 0
  %388 = vmatpush1.bf16.msra.mxu0 %v307
  %389 = vmatprep.subr.bf16.mxu0 0
  %390 = vmatpush1.bf16.msra.mxu0 %v308
  %391 = vmatprep.subr.bf16.mxu0 0
  %392 = vmatpush1.bf16.msra.mxu0 %v309
  %393 = vmatprep.subr.bf16.mxu0 0
  %394 = vmatpush1.bf16.msra.mxu0 %v310
  %395 = vmatprep.subr.bf16.mxu0 0
  %396 = vmatpush1.bf16.msra.mxu0 %v311
  %397 = vmatprep.subr.bf16.mxu0 0
  %398 = vmatpush1.bf16.msra.mxu0 %v312
  %399 = vmatprep.subr.bf16.mxu0 0
  %400 = vmatpush1.bf16.msra.mxu0 %v313
  %401 = vmatprep.subr.bf16.mxu0 0
  %402 = vmatpush1.bf16.msra.mxu0 %v314
  %403 = vmatprep.subr.bf16.mxu0 0
  %404 = vmatpush1.bf16.msra.mxu0 %v315
  %405 = vmatprep.subr.bf16.mxu0 0
  %406 = vmatpush1.bf16.msra.mxu0 %v316
  %407 = vmatprep.subr.bf16.mxu0 0
  %408 = vmatpush1.bf16.msra.mxu0 %v317
  %409 = vmatprep.subr.bf16.mxu0 0
  %410 = vmatpush1.bf16.msra.mxu0 %v318
  %411 = vmatprep.subr.bf16.mxu0 0
  %412 = vmatpush1.bf16.msra.mxu0 %v319
  %413 = vmatprep.subr.bf16.mxu0 0
  %414 = vmatpush1.bf16.msra.mxu0 %v320
  %415 = vmatprep.subr.bf16.mxu0 0
  %416 = vmatpush1.bf16.msra.mxu0 %v321
  %417 = vmatprep.subr.bf16.mxu0 0
  %418 = vmatpush1.bf16.msra.mxu0 %v322
  %419 = vmatprep.mubr.bf16.mxu0 %v138
  %420 = vmatmul.mubr.bf16.gmra.mrb[0].mxu0 %v137
  %v421 = vpop.f32.mrb[0].mxu0
  %v422 = vadd.f32 %v127, %v421
  %v423 = vpop.f32.mrb[0].mxu0
  %v424 = vpop.f32.mrb[0].mxu0
  %v425 = vpop.f32.mrb[0].mxu0
  %426 = vdwg.mxu0
  %427 = vmatprep.subr.bf16.mxu0 0
  %428 = vmatpush1.bf16.msra.mxu0 %v323
  %429 = vmatprep.subr.bf16.mxu0 0
  %430 = vmatpush1.bf16.msra.mxu0 %v324
  %431 = vmatprep.subr.bf16.mxu0 0
  %432 = vmatpush1.bf16.msra.mxu0 %v325
  %433 = vmatprep.subr.bf16.mxu0 0
  %434 = vmatpush1.bf16.msra.mxu0 %v326
  %435 = vmatprep.subr.bf16.mxu0 0
  %436 = vmatpush1.bf16.msra.mxu0 %v327
  %437 = vmatprep.subr.bf16.mxu0 0
  %438 = vmatpush1.bf16.msra.mxu0 %v328
  %439 = vmatprep.subr.bf16.mxu0 0
  %440 = vmatpush1.bf16.msra.mxu0 %v329
  %441 = vmatprep.subr.bf16.mxu0 0
  %442 = vmatpush1.bf16.msra.mxu0 %v330
  %443 = vmatprep.subr.bf16.mxu0 0
  %444 = vmatpush1.bf16.msra.mxu0 %v331
  %445 = vmatprep.subr.bf16.mxu0 0
  %446 = vmatpush1.bf16.msra.mxu0 %v332
  %447 = vmatprep.subr.bf16.mxu0 0
  %448 = vmatpush1.bf16.msra.mxu0 %v333
  %449 = vmatprep.subr.bf16.mxu0 0
  %450 = vmatpush1.bf16.msra.mxu0 %v334
  %451 = vmatprep.subr.bf16.mxu0 0
  %452 = vmatpush1.bf16.msra.mxu0 %v335
  %453 = vmatprep.subr.bf16.mxu0 0
  %454 = vmatpush1.bf16.msra.mxu0 %v336
  %455 = vmatprep.subr.bf16.mxu0 0
  %456 = vmatpush1.bf16.msra.mxu0 %v337
  %457 = vmatprep.subr.bf16.mxu0 0
  %458 = vmatpush1.bf16.msra.mxu0 %v338
  %459 = vmatprep.mubr.bf16.mxu0 %v140
  %460 = vmatmul.mubr.bf16.gmra.mrb[0].mxu0 %v139
  %v461 = vpop.f32.mrb[0].mxu0
  %v462 = vadd.f32 %v422, %v461
  %v463 = vpop.f32.mrb[0].mxu0
  %v464 = vpop.f32.mrb[0].mxu0
  %v465 = vpop.f32.mrb[0].mxu0
  %466 = vdwg.mxu0
  %467 = vmatprep.subr.bf16.mxu0 0
  %468 = vmatpush1.bf16.msra.mxu0 %v339
  %469 = vmatprep.subr.bf16.mxu0 0
  %470 = vmatpush1.bf16.msra.mxu0 %v340
  %471 = vmatprep.subr.bf16.mxu0 0
  %472 = vmatpush1.bf16.msra.mxu0 %v341
  %473 = vmatprep.subr.bf16.mxu0 0
  %474 = vmatpush1.bf16.msra.mxu0 %v342
  %475 = vmatprep.subr.bf16.mxu0 0
  %476 = vmatpush1.bf16.msra.mxu0 %v343
  %477 = vmatprep.subr.bf16.mxu0 0
  %478 = vmatpush1.bf16.msra.mxu0 %v344
  %479 = vmatprep.subr.bf16.mxu0 0
  %480 = vmatpush1.bf16.msra.mxu0 %v345
  %481 = vmatprep.subr.bf16.mxu0 0
  %482 = vmatpush1.bf16.msra.mxu0 %v346
  %483 = vmatprep.subr.bf16.mxu0 0
  %484 = vmatpush1.bf16.msra.mxu0 0
  %485 = vmatprep.subr.bf16.mxu0 0
  %486 = vmatpush1.bf16.msra.mxu0 0
  %487 = vmatprep.subr.bf16.mxu0 0
  %488 = vmatpush1.bf16.msra.mxu0 0
  %489 = vmatprep.subr.bf16.mxu0 0
  %490 = vmatpush1.bf16.msra.mxu0 0
  %491 = vmatprep.subr.bf16.mxu0 0
  %492 = vmatpush1.bf16.msra.mxu0 0
  %493 = vmatprep.subr.bf16.mxu0 0
  %494 = vmatpush1.bf16.msra.mxu0 0
  %495 = vmatprep.subr.bf16.mxu0 0
  %496 = vmatpush1.bf16.msra.mxu0 0
  %497 = vmatprep.subr.bf16.mxu0 0
  %498 = vmatpush1.bf16.msra.mxu0 0
  %499 = vmatprep.mubr.bf16.mxu0 0
  %500 = vmatmul.mubr.bf16.gmra.mrb[0].mxu0 %v141
  %v501 = vpop.f32.mrb[0].mxu0
  %v502 = vadd.f32 %v462, %v501
  %v503 = vpop.f32.mrb[0].mxu0
  %v504 = vpop.f32.mrb[0].mxu0
  %v505 = vpop.f32.mrb[0].mxu0
  %506 = vdwg.mxu0
  %v507 = vmax.f32 %v502, 0.0
  %s508 = scalar_lea.vmem %s0, 20
  %v509 = vld [vmem:[%s508] sm:$0xff]
  %v510 = vld [vmem:[%s508 + $0x8] sm:$0xff]
  %v511 = vld [vmem:[%s508 + $0x10] sm:$0xf]
  %v515 = vunpack.c.l.b16 %v509
  %v516 = vunpack.c.h.b16 %v509
  %v517 = vunpack.c.l.b16 %v510
  %v518 = vunpack.c.h.b16 %v510
  %v519 = vunpack.c.l.b16 %v511
  %v520 = vpack.c.b16 %v515, %v515
  %v521 = vpack.c.b16 %v516, %v516
  %v522 = vpack.c.b16 %v517, %v517
  %v523 = vpack.c.b16 %v518, %v518
  %v524 = vpack.c.b16 %v519, %v519
  %530 = vmatprep.subr.bf16.mxu0 0
  %531 = vmatpush1.bf16.msra.mxu0 %v307
  %532 = vmatprep.subr.bf16.mxu0 0
  %533 = vmatpush1.bf16.msra.mxu0 %v308
  %534 = vmatprep.subr.bf16.mxu0 0
  %535 = vmatpush1.bf16.msra.mxu0 %v309
  %536 = vmatprep.subr.bf16.mxu0 0
  %537 = vmatpush1.bf16.msra.mxu0 %v310
  %538 = vmatprep.subr.bf16.mxu0 0
  %539 = vmatpush1.bf16.msra.mxu0 %v311
  %540 = vmatprep.subr.bf16.mxu0 0
  %541 = vmatpush1.bf16.msra.mxu0 %v312
  %542 = vmatprep.subr.bf16.mxu0 0
  %543 = vmatpush1.bf16.msra.mxu0 %v313
  %544 = vmatprep.subr.bf16.mxu0 0
  %545 = vmatpush1.bf16.msra.mxu0 %v314
  %546 = vmatprep.subr.bf16.mxu0 0
  %547 = vmatpush1.bf16.msra.mxu0 %v315
  %548 = vmatprep.subr.bf16.mxu0 0
  %549 = vmatpush1.bf16.msra.mxu0 %v316
  %550 = vmatprep.subr.bf16.mxu0 0
  %551 = vmatpush1.bf16.msra.mxu0 %v317
  %552 = vmatprep.subr.bf16.mxu0 0
  %553 = vmatpush1.bf16.msra.mxu0 %v318
  %554 = vmatprep.subr.bf16.mxu0 0
  %555 = vmatpush1.bf16.msra.mxu0 %v319
  %556 = vmatprep.subr.bf16.mxu0 0
  %557 = vmatpush1.bf16.msra.mxu0 %v320
  %558 = vmatprep.subr.bf16.mxu0 0
  %559 = vmatpush1.bf16.msra.mxu0 %v321
  %560 = vmatprep.subr.bf16.mxu0 0
  %561 = vmatpush1.bf16.msra.mxu0 %v322
  %562 = vmatprep.mubr.bf16.mxu0 %v521
  %563 = vmatmul.mubr.bf16.gmra.mrb[0].mxu0 %v520
  %v564 = vpop.f32.mrb[0].mxu0
  %v565 = vadd.f32 %v127, %v564
  %v566 = vpop.f32.mrb[0].mxu0
  %v567 = vpop.f32.mrb[0].mxu0
  %v568 = vpop.f32.mrb[0].mxu0
  %569 = vdwg.mxu0
  %570 = vmatprep.subr.bf16.mxu0 0
  %571 = vmatpush1.bf16.msra.mxu0 %v323
  %572 = vmatprep.subr.bf16.mxu0 0
  %573 = vmatpush1.bf16.msra.mxu0 %v324
  %574 = vmatprep.subr.bf16.mxu0 0
  %575 = vmatpush1.bf16.msra.mxu0 %v325
  %576 = vmatprep.subr.bf16.mxu0 0
  %577 = vmatpush1.bf16.msra.mxu0 %v326
  %578 = vmatprep.subr.bf16.mxu0 0
  %579 = vmatpush1.bf16.msra.mxu0 %v327
  %580 = vmatprep.subr.bf16.mxu0 0
  %581 = vmatpush1.bf16.msra.mxu0 %v328
  %582 = vmatprep.subr.bf16.mxu0 0
  %583 = vmatpush1.bf16.msra.mxu0 %v329
  %584 = vmatprep.subr.bf16.mxu0 0
  %585 = vmatpush1.bf16.msra.mxu0 %v330
  %586 = vmatprep.subr.bf16.mxu0 0
  %587 = vmatpush1.bf16.msra.mxu0 %v331
  %588 = vmatprep.subr.bf16.mxu0 0
  %589 = vmatpush1.bf16.msra.mxu0 %v332
  %590 = vmatprep.subr.bf16.mxu0 0
  %591 = vmatpush1.bf16.msra.mxu0 %v333
  %592 = vmatprep.subr.bf16.mxu0 0
  %593 = vmatpush1.bf16.msra.mxu0 %v334
  %594 = vmatprep.subr.bf16.mxu0 0
  %595 = vmatpush1.bf16.msra.mxu0 %v335
  %596 = vmatprep.subr.bf16.mxu0 0
  %597 = vmatpush1.bf16.msra.mxu0 %v336
  %598 = vmatprep.subr.bf16.mxu0 0
  %599 = vmatpush1.bf16.msra.mxu0 %v337
  %600 = vmatprep.subr.bf16.mxu0 0
  %601 = vmatpush1.bf16.msra.mxu0 %v338
  %602 = vmatprep.mubr.bf16.mxu0 %v523
  %603 = vmatmul.mubr.bf16.gmra.mrb[0].mxu0 %v522
  %v604 = vpop.f32.mrb[0].mxu0
  %v605 = vadd.f32 %v565, %v604
  %v606 = vpop.f32.mrb[0].mxu0
  %v607 = vpop.f32.mrb[0].mxu0
  %v608 = vpop.f32.mrb[0].mxu0
  %609 = vdwg.mxu0
  %610 = vmatprep.subr.bf16.mxu0 0
  %611 = vmatpush1.bf16.msra.mxu0 %v339
  %612 = vmatprep.subr.bf16.mxu0 0
  %613 = vmatpush1.bf16.msra.mxu0 %v340
  %614 = vmatprep.subr.bf16.mxu0 0
  %615 = vmatpush1.bf16.msra.mxu0 %v341
  %616 = vmatprep.subr.bf16.mxu0 0
  %617 = vmatpush1.bf16.msra.mxu0 %v342
  %618 = vmatprep.subr.bf16.mxu0 0
  %619 = vmatpush1.bf16.msra.mxu0 %v343
  %620 = vmatprep.subr.bf16.mxu0 0
  %621 = vmatpush1.bf16.msra.mxu0 %v344
  %622 = vmatprep.subr.bf16.mxu0 0
  %623 = vmatpush1.bf16.msra.mxu0 %v345
  %624 = vmatprep.subr.bf16.mxu0 0
  %625 = vmatpush1.bf16.msra.mxu0 %v346
  %626 = vmatprep.subr.bf16.mxu0 0
  %627 = vmatpush1.bf16.msra.mxu0 0
  %628 = vmatprep.subr.bf16.mxu0 0
  %629 = vmatpush1.bf16.msra.mxu0 0
  %630 = vmatprep.subr.bf16.mxu0 0
  %631 = vmatpush1.bf16.msra.mxu0 0
  %632 = vmatprep.subr.bf16.mxu0 0
  %633 = vmatpush1.bf16.msra.mxu0 0
  %634 = vmatprep.subr.bf16.mxu0 0
  %635 = vmatpush1.bf16.msra.mxu0 0
  %636 = vmatprep.subr.bf16.mxu0 0
  %637 = vmatpush1.bf16.msra.mxu0 0
  %638 = vmatprep.subr.bf16.mxu0 0
  %639 = vmatpush1.bf16.msra.mxu0 0
  %640 = vmatprep.subr.bf16.mxu0 0
  %641 = vmatpush1.bf16.msra.mxu0 0
  %642 = vmatprep.mubr.bf16.mxu0 0
  %643 = vmatmul.mubr.bf16.gmra.mrb[0].mxu0 %v524
  %v644 = vpop.f32.mrb[0].mxu0
  %v645 = vadd.f32 %v605, %v644
  %v646 = vpop.f32.mrb[0].mxu0
  %v647 = vpop.f32.mrb[0].mxu0
  %v648 = vpop.f32.mrb[0].mxu0
  %649 = vdwg.mxu0
  %v650 = vmax.f32 %v645, 0.0
  %v651 = vmax.f32 %v507, %v650
  %s652 = scalar_lea.vmem %s0, 80
  %v653 = vld [vmem:[%s652] sm:$0xff]
  %v654 = vld [vmem:[%s652 + $0x8] sm:$0xff]
  %v655 = vld [vmem:[%s652 + $0x10] sm:$0xf]
  %v659 = vunpack.c.l.b16 %v653
  %v660 = vunpack.c.h.b16 %v653
  %v661 = vunpack.c.l.b16 %v654
  %v662 = vunpack.c.h.b16 %v654
  %v663 = vunpack.c.l.b16 %v655
  %v664 = vpack.c.b16 %v659, %v659
  %v665 = vpack.c.b16 %v660, %v660
  %v666 = vpack.c.b16 %v661, %v661
  %v667 = vpack.c.b16 %v662, %v662
  %v668 = vpack.c.b16 %v663, %v663
  %674 = vmatprep.subr.bf16.mxu0 0
  %675 = vmatpush1.bf16.msra.mxu0 %v307
  %676 = vmatprep.subr.bf16.mxu0 0
  %677 = vmatpush1.bf16.msra.mxu0 %v308
  %678 = vmatprep.subr.bf16.mxu0 0
  %679 = vmatpush1.bf16.msra.mxu0 %v309
  %680 = vmatprep.subr.bf16.mxu0 0
  %681 = vmatpush1.bf16.msra.mxu0 %v310
  %682 = vmatprep.subr.bf16.mxu0 0
  %683 = vmatpush1.bf16.msra.mxu0 %v311
  %684 = vmatprep.subr.bf16.mxu0 0
  %685 = vmatpush1.bf16.msra.mxu0 %v312
  %686 = vmatprep.subr.bf16.mxu0 0
  %687 = vmatpush1.bf16.msra.mxu0 %v313
  %688 = vmatprep.subr.bf16.mxu0 0
  %689 = vmatpush1.bf16.msra.mxu0 %v314
  %690 = vmatprep.subr.bf16.mxu0 0
  %691 = vmatpush1.bf16.msra.mxu0 %v315
  %692 = vmatprep.subr.bf16.mxu0 0
  %693 = vmatpush1.bf16.msra.mxu0 %v316
  %694 = vmatprep.subr.bf16.mxu0 0
  %695 = vmatpush1.bf16.msra.mxu0 %v317
  %696 = vmatprep.subr.bf16.mxu0 0
  %697 = vmatpush1.bf16.msra.mxu0 %v318
  %698 = vmatprep.subr.bf16.mxu0 0
  %699 = vmatpush1.bf16.msra.mxu0 %v319
  %700 = vmatprep.subr.bf16.mxu0 0
  %701 = vmatpush1.bf16.msra.mxu0 %v320
  %702 = vmatprep.subr.bf16.mxu0 0
  %703 = vmatpush1.bf16.msra.mxu0 %v321
  %704 = vmatprep.subr.bf16.mxu0 0
  %705 = vmatpush1.bf16.msra.mxu0 %v322
  %706 = vmatprep.mubr.bf16.mxu0 %v665
  %707 = vmatmul.mubr.bf16.gmra.mrb[0].mxu0 %v664
  %v708 = vpop.f32.mrb[0].mxu0
  %v709 = vadd.f32 %v127, %v708
  %v710 = vpop.f32.mrb[0].mxu0
  %v711 = vpop.f32.mrb[0].mxu0
  %v712 = vpop.f32.mrb[0].mxu0
  %713 = vdwg.mxu0
  %714 = vmatprep.subr.bf16.mxu0 0
  %715 = vmatpush1.bf16.msra.mxu0 %v323
  %716 = vmatprep.subr.bf16.mxu0 0
  %717 = vmatpush1.bf16.msra.mxu0 %v324
  %718 = vmatprep.subr.bf16.mxu0 0
  %719 = vmatpush1.bf16.msra.mxu0 %v325
  %720 = vmatprep.subr.bf16.mxu0 0
  %721 = vmatpush1.bf16.msra.mxu0 %v326
  %722 = vmatprep.subr.bf16.mxu0 0
  %723 = vmatpush1.bf16.msra.mxu0 %v327
  %724 = vmatprep.subr.bf16.mxu0 0
  %725 = vmatpush1.bf16.msra.mxu0 %v328
  %726 = vmatprep.subr.bf16.mxu0 0
  %727 = vmatpush1.bf16.msra.mxu0 %v329
  %728 = vmatprep.subr.bf16.mxu0 0
  %729 = vmatpush1.bf16.msra.mxu0 %v330
  %730 = vmatprep.subr.bf16.mxu0 0
  %731 = vmatpush1.bf16.msra.mxu0 %v331
  %732 = vmatprep.subr.bf16.mxu0 0
  %733 = vmatpush1.bf16.msra.mxu0 %v332
  %734 = vmatprep.subr.bf16.mxu0 0
  %735 = vmatpush1.bf16.msra.mxu0 %v333
  %736 = vmatprep.subr.bf16.mxu0 0
  %737 = vmatpush1.bf16.msra.mxu0 %v334
  %738 = vmatprep.subr.bf16.mxu0 0
  %739 = vmatpush1.bf16.msra.mxu0 %v335
  %740 = vmatprep.subr.bf16.mxu0 0
  %741 = vmatpush1.bf16.msra.mxu0 %v336
  %742 = vmatprep.subr.bf16.mxu0 0
  %743 = vmatpush1.bf16.msra.mxu0 %v337
  %744 = vmatprep.subr.bf16.mxu0 0
  %745 = vmatpush1.bf16.msra.mxu0 %v338
  %746 = vmatprep.mubr.bf16.mxu0 %v667
  %747 = vmatmul.mubr.bf16.gmra.mrb[0].mxu0 %v666
  %v748 = vpop.f32.mrb[0].mxu0
  %v749 = vadd.f32 %v709, %v748
  %v750 = vpop.f32.mrb[0].mxu0
  %v751 = vpop.f32.mrb[0].mxu0
  %v752 = vpop.f32.mrb[0].mxu0
  %753 = vdwg.mxu0
  %754 = vmatprep.subr.bf16.mxu0 0
  %755 = vmatpush1.bf16.msra.mxu0 %v339
  %756 = vmatprep.subr.bf16.mxu0 0
  %757 = vmatpush1.bf16.msra.mxu0 %v340
  %758 = vmatprep.subr.bf16.mxu0 0
  %759 = vmatpush1.bf16.msra.mxu0 %v341
  %760 = vmatprep.subr.bf16.mxu0 0
  %761 = vmatpush1.bf16.msra.mxu0 %v342
  %762 = vmatprep.subr.bf16.mxu0 0
  %763 = vmatpush1.bf16.msra.mxu0 %v343
  %764 = vmatprep.subr.bf16.mxu0 0
  %765 = vmatpush1.bf16.msra.mxu0 %v344
  %766 = vmatprep.subr.bf16.mxu0 0
  %767 = vmatpush1.bf16.msra.mxu0 %v345
  %768 = vmatprep.subr.bf16.mxu0 0
  %769 = vmatpush1.bf16.msra.mxu0 %v346
  %770 = vmatprep.subr.bf16.mxu0 0
  %771 = vmatpush1.bf16.msra.mxu0 0
  %772 = vmatprep.subr.bf16.mxu0 0
  %773 = vmatpush1.bf16.msra.mxu0 0
  %774 = vmatprep.subr.bf16.mxu0 0
  %775 = vmatpush1.bf16.msra.mxu0 0
  %776 = vmatprep.subr.bf16.mxu0 0
  %777 = vmatpush1.bf16.msra.mxu0 0
  %778 = vmatprep.subr.bf16.mxu0 0
  %779 = vmatpush1.bf16.msra.mxu0 0
  %780 = vmatprep.subr.bf16.mxu0 0
  %781 = vmatpush1.bf16.msra.mxu0 0
  %782 = vmatprep.subr.bf16.mxu0 0
  %783 = vmatpush1.bf16.msra.mxu0 0
  %784 = vmatprep.subr.bf16.mxu0 0
  %785 = vmatpush1.bf16.msra.mxu0 0
  %786 = vmatprep.mubr.bf16.mxu0 0
  %787 = vmatmul.mubr.bf16.gmra.mrb[0].mxu0 %v668
  %v788 = vpop.f32.mrb[0].mxu0
  %v789 = vadd.f32 %v749, %v788
  %v790 = vpop.f32.mrb[0].mxu0
  %v791 = vpop.f32.mrb[0].mxu0
  %v792 = vpop.f32.mrb[0].mxu0
  %793 = vdwg.mxu0
  %v794 = vmax.f32 %v789, 0.0
  %v795 = vmax.f32 %v651, %v794
  %s796 = scalar_lea.vmem %s0, 100
  %v797 = vld [vmem:[%s796] sm:$0xff]
  %v798 = vld [vmem:[%s796 + $0x8] sm:$0xff]
  %v799 = vld [vmem:[%s796 + $0x10] sm:$0xf]
  %v803 = vunpack.c.l.b16 %v797
  %v804 = vunpack.c.h.b16 %v797
  %v805 = vunpack.c.l.b16 %v798
  %v806 = vunpack.c.h.b16 %v798
  %v807 = vunpack.c.l.b16 %v799
  %v808 = vpack.c.b16 %v803, %v803
  %v809 = vpack.c.b16 %v804, %v804
  %v810 = vpack.c.b16 %v805, %v805
  %v811 = vpack.c.b16 %v806, %v806
  %v812 = vpack.c.b16 %v807, %v807
  %818 = vmatprep.subr.bf16.mxu0 0
  %819 = vmatpush1.bf16.msra.mxu0 %v307
  %820 = vmatprep.subr.bf16.mxu0 0
  %821 = vmatpush1.bf16.msra.mxu0 %v308
  %822 = vmatprep.subr.bf16.mxu0 0
  %823 = vmatpush1.bf16.msra.mxu0 %v309
  %824 = vmatprep.subr.bf16.mxu0 0
  %825 = vmatpush1.bf16.msra.mxu0 %v310
  %826 = vmatprep.subr.bf16.mxu0 0
  %827 = vmatpush1.bf16.msra.mxu0 %v311
  %828 = vmatprep.subr.bf16.mxu0 0
  %829 = vmatpush1.bf16.msra.mxu0 %v312
  %830 = vmatprep.subr.bf16.mxu0 0
  %831 = vmatpush1.bf16.msra.mxu0 %v313
  %832 = vmatprep.subr.bf16.mxu0 0
  %833 = vmatpush1.bf16.msra.mxu0 %v314
  %834 = vmatprep.subr.bf16.mxu0 0
  %835 = vmatpush1.bf16.msra.mxu0 %v315
  %836 = vmatprep.subr.bf16.mxu0 0
  %837 = vmatpush1.bf16.msra.mxu0 %v316
  %838 = vmatprep.subr.bf16.mxu0 0
  %839 = vmatpush1.bf16.msra.mxu0 %v317
  %840 = vmatprep.subr.bf16.mxu0 0
  %841 = vmatpush1.bf16.msra.mxu0 %v318
  %842 = vmatprep.subr.bf16.mxu0 0
  %843 = vmatpush1.bf16.msra.mxu0 %v319
  %844 = vmatprep.subr.bf16.mxu0 0
  %845 = vmatpush1.bf16.msra.mxu0 %v320
  %846 = vmatprep.subr.bf16.mxu0 0
  %847 = vmatpush1.bf16.msra.mxu0 %v321
  %848 = vmatprep.subr.bf16.mxu0 0
  %849 = vmatpush1.bf16.msra.mxu0 %v322
  %850 = vmatprep.mubr.bf16.mxu0 %v809
  %851 = vmatmul.mubr.bf16.gmra.mrb[0].mxu0 %v808
  %v852 = vpop.f32.mrb[0].mxu0
  %v853 = vadd.f32 %v127, %v852
  %v854 = vpop.f32.mrb[0].mxu0
  %v855 = vpop.f32.mrb[0].mxu0
  %v856 = vpop.f32.mrb[0].mxu0
  %857 = vdwg.mxu0
  %858 = vmatprep.subr.bf16.mxu0 0
  %859 = vmatpush1.bf16.msra.mxu0 %v323
  %860 = vmatprep.subr.bf16.mxu0 0
  %861 = vmatpush1.bf16.msra.mxu0 %v324
  %862 = vmatprep.subr.bf16.mxu0 0
  %863 = vmatpush1.bf16.msra.mxu0 %v325
  %864 = vmatprep.subr.bf16.mxu0 0
  %865 = vmatpush1.bf16.msra.mxu0 %v326
  %866 = vmatprep.subr.bf16.mxu0 0
  %867 = vmatpush1.bf16.msra.mxu0 %v327
  %868 = vmatprep.subr.bf16.mxu0 0
  %869 = vmatpush1.bf16.msra.mxu0 %v328
  %870 = vmatprep.subr.bf16.mxu0 0
  %871 = vmatpush1.bf16.msra.mxu0 %v329
  %872 = vmatprep.subr.bf16.mxu0 0
  %873 = vmatpush1.bf16.msra.mxu0 %v330
  %874 = vmatprep.subr.bf16.mxu0 0
  %875 = vmatpush1.bf16.msra.mxu0 %v331
  %876 = vmatprep.subr.bf16.mxu0 0
  %877 = vmatpush1.bf16.msra.mxu0 %v332
  %878 = vmatprep.subr.bf16.mxu0 0
  %879 = vmatpush1.bf16.msra.mxu0 %v333
  %880 = vmatprep.subr.bf16.mxu0 0
  %881 = vmatpush1.bf16.msra.mxu0 %v334
  %882 = vmatprep.subr.bf16.mxu0 0
  %883 = vmatpush1.bf16.msra.mxu0 %v335
  %884 = vmatprep.subr.bf16.mxu0 0
  %885 = vmatpush1.bf16.msra.mxu0 %v336
  %886 = vmatprep.subr.bf16.mxu0 0
  %887 = vmatpush1.bf16.msra.mxu0 %v337
  %888 = vmatprep.subr.bf16.mxu0 0
  %889 = vmatpush1.bf16.msra.mxu0 %v338
  %890 = vmatprep.mubr.bf16.mxu0 %v811
  %891 = vmatmul.mubr.bf16.gmra.mrb[0].mxu0 %v810
  %v892 = vpop.f32.mrb[0].mxu0
  %v893 = vadd.f32 %v853, %v892
  %v894 = vpop.f32.mrb[0].mxu0
  %v895 = vpop.f32.mrb[0].mxu0
  %v896 = vpop.f32.mrb[0].mxu0
  %897 = vdwg.mxu0
  %898 = vmatprep.subr.bf16.mxu0 0
  %899 = vmatpush1.bf16.msra.mxu0 %v339
  %900 = vmatprep.subr.bf16.mxu0 0
  %901 = vmatpush1.bf16.msra.mxu0 %v340
  %902 = vmatprep.subr.bf16.mxu0 0
  %903 = vmatpush1.bf16.msra.mxu0 %v341
  %904 = vmatprep.subr.bf16.mxu0 0
  %905 = vmatpush1.bf16.msra.mxu0 %v342
  %906 = vmatprep.subr.bf16.mxu0 0
  %907 = vmatpush1.bf16.msra.mxu0 %v343
  %908 = vmatprep.subr.bf16.mxu0 0
  %909 = vmatpush1.bf16.msra.mxu0 %v344
  %910 = vmatprep.subr.bf16.mxu0 0
  %911 = vmatpush1.bf16.msra.mxu0 %v345
  %912 = vmatprep.subr.bf16.mxu0 0
  %913 = vmatpush1.bf16.msra.mxu0 %v346
  %914 = vmatprep.subr.bf16.mxu0 0
  %915 = vmatpush1.bf16.msra.mxu0 0
  %916 = vmatprep.subr.bf16.mxu0 0
  %917 = vmatpush1.bf16.msra.mxu0 0
  %918 = vmatprep.subr.bf16.mxu0 0
  %919 = vmatpush1.bf16.msra.mxu0 0
  %920 = vmatprep.subr.bf16.mxu0 0
  %921 = vmatpush1.bf16.msra.mxu0 0
  %922 = vmatprep.subr.bf16.mxu0 0
  %923 = vmatpush1.bf16.msra.mxu0 0
  %924 = vmatprep.subr.bf16.mxu0 0
  %925 = vmatpush1.bf16.msra.mxu0 0
  %926 = vmatprep.subr.bf16.mxu0 0
  %927 = vmatpush1.bf16.msra.mxu0 0
  %928 = vmatprep.subr.bf16.mxu0 0
  %929 = vmatpush1.bf16.msra.mxu0 0
  %930 = vmatprep.mubr.bf16.mxu0 0
  %931 = vmatmul.mubr.bf16.gmra.mrb[0].mxu0 %v812
  %v932 = vpop.f32.mrb[0].mxu0
  %v933 = vadd.f32 %v893, %v932
  %v934 = vpop.f32.mrb[0].mxu0
  %v935 = vpop.f32.mrb[0].mxu0
  %v936 = vpop.f32.mrb[0].mxu0
  %937 = vdwg.mxu0
  %v938 = vmax.f32 %v933, 0.0
  %v939 = vmax.f32 %v795, %v938
  %v940 = vpack.c.bf16 %v939, %v939
  %s941 = scalar_lea.vmem %s0, 40
  %v942 = vld [vmem:[%s941] sm:$0xff]
  %v943 = vld [vmem:[%s941 + $0x8] sm:$0xff]
  %v944 = vld [vmem:[%s941 + $0x10] sm:$0xf]
  %v948 = vunpack.c.l.b16 %v942
  %v949 = vunpack.c.h.b16 %v942
  %v950 = vunpack.c.l.b16 %v943
  %v951 = vunpack.c.h.b16 %v943
  %v952 = vunpack.c.l.b16 %v944
  %v953 = vpack.c.b16 %v948, %v948
  %v954 = vpack.c.b16 %v949, %v949
  %v955 = vpack.c.b16 %v950, %v950
  %v956 = vpack.c.b16 %v951, %v951
  %v957 = vpack.c.b16 %v952, %v952
  %963 = vmatprep.subr.bf16.mxu0 0
  %964 = vmatpush1.bf16.msra.mxu0 %v307
  %965 = vmatprep.subr.bf16.mxu0 0
  %966 = vmatpush1.bf16.msra.mxu0 %v308
  %967 = vmatprep.subr.bf16.mxu0 0
  %968 = vmatpush1.bf16.msra.mxu0 %v309
  %969 = vmatprep.subr.bf16.mxu0 0
  %970 = vmatpush1.bf16.msra.mxu0 %v310
  %971 = vmatprep.subr.bf16.mxu0 0
  %972 = vmatpush1.bf16.msra.mxu0 %v311
  %973 = vmatprep.subr.bf16.mxu0 0
  %974 = vmatpush1.bf16.msra.mxu0 %v312
  %975 = vmatprep.subr.bf16.mxu0 0
  %976 = vmatpush1.bf16.msra.mxu0 %v313
  %977 = vmatprep.subr.bf16.mxu0 0
  %978 = vmatpush1.bf16.msra.mxu0 %v314
  %979 = vmatprep.subr.bf16.mxu0 0
  %980 = vmatpush1.bf16.msra.mxu0 %v315
  %981 = vmatprep.subr.bf16.mxu0 0
  %982 = vmatpush1.bf16.msra.mxu0 %v316
  %983 = vmatprep.subr.bf16.mxu0 0
  %984 = vmatpush1.bf16.msra.mxu0 %v317
  %985 = vmatprep.subr.bf16.mxu0 0
  %986 = vmatpush1.bf16.msra.mxu0 %v318
  %987 = vmatprep.subr.bf16.mxu0 0
  %988 = vmatpush1.bf16.msra.mxu0 %v319
  %989 = vmatprep.subr.bf16.mxu0 0
  %990 = vmatpush1.bf16.msra.mxu0 %v320
  %991 = vmatprep.subr.bf16.mxu0 0
  %992 = vmatpush1.bf16.msra.mxu0 %v321
  %993 = vmatprep.subr.bf16.mxu0 0
  %994 = vmatpush1.bf16.msra.mxu0 %v322
  %995 = vmatprep.mubr.bf16.mxu0 %v954
  %996 = vmatmul.mubr.bf16.gmra.mrb[0].mxu0 %v953
  %v997 = vpop.f32.mrb[0].mxu0
  %v998 = vadd.f32 %v127, %v997
  %v999 = vpop.f32.mrb[0].mxu0
  %v1000 = vpop.f32.mrb[0].mxu0
  %v1001 = vpop.f32.mrb[0].mxu0
  %1002 = vdwg.mxu0
  %1003 = vmatprep.subr.bf16.mxu0 0
  %1004 = vmatpush1.bf16.msra.mxu0 %v323
  %1005 = vmatprep.subr.bf16.mxu0 0
  %1006 = vmatpush1.bf16.msra.mxu0 %v324
  %1007 = vmatprep.subr.bf16.mxu0 0
  %1008 = vmatpush1.bf16.msra.mxu0 %v325
  %1009 = vmatprep.subr.bf16.mxu0 0
  %1010 = vmatpush1.bf16.msra.mxu0 %v326
  %1011 = vmatprep.subr.bf16.mxu0 0
  %1012 = vmatpush1.bf16.msra.mxu0 %v327
  %1013 = vmatprep.subr.bf16.mxu0 0
  %1014 = vmatpush1.bf16.msra.mxu0 %v328
  %1015 = vmatprep.subr.bf16.mxu0 0
  %1016 = vmatpush1.bf16.msra.mxu0 %v329
  %1017 = vmatprep.subr.bf16.mxu0 0
  %1018 = vmatpush1.bf16.msra.mxu0 %v330
  %1019 = vmatprep.subr.bf16.mxu0 0
  %1020 = vmatpush1.bf16.msra.mxu0 %v331
  %1021 = vmatprep.subr.bf16.mxu0 0
  %1022 = vmatpush1.bf16.msra.mxu0 %v332
  %1023 = vmatprep.subr.bf16.mxu0 0
  %1024 = vmatpush1.bf16.msra.mxu0 %v333
  %1025 = vmatprep.subr.bf16.mxu0 0
  %1026 = vmatpush1.bf16.msra.mxu0 %v334
  %1027 = vmatprep.subr.bf16.mxu0 0
  %1028 = vmatpush1.bf16.msra.mxu0 %v335
  %1029 = vmatprep.subr.bf16.mxu0 0
  %1030 = vmatpush1.bf16.msra.mxu0 %v336
  %1031 = vmatprep.subr.bf16.mxu0 0
  %1032 = vmatpush1.bf16.msra.mxu0 %v337
  %1033 = vmatprep.subr.bf16.mxu0 0
  %1034 = vmatpush1.bf16.msra.mxu0 %v338
  %1035 = vmatprep.mubr.bf16.mxu0 %v956
  %1036 = vmatmul.mubr.bf16.gmra.mrb[0].mxu0 %v955
  %v1037 = vpop.f32.mrb[0].mxu0
  %v1038 = vadd.f32 %v998, %v1037
  %v1039 = vpop.f32.mrb[0].mxu0
  %v1040 = vpop.f32.mrb[0].mxu0
  %v1041 = vpop.f32.mrb[0].mxu0
  %1042 = vdwg.mxu0
  %1043 = vmatprep.subr.bf16.mxu0 0
  %1044 = vmatpush1.bf16.msra.mxu0 %v339
  %1045 = vmatprep.subr.bf16.mxu0 0
  %1046 = vmatpush1.bf16.msra.mxu0 %v340
  %1047 = vmatprep.subr.bf16.mxu0 0
  %1048 = vmatpush1.bf16.msra.mxu0 %v341
  %1049 = vmatprep.subr.bf16.mxu0 0
  %1050 = vmatpush1.bf16.msra.mxu0 %v342
  %1051 = vmatprep.subr.bf16.mxu0 0
  %1052 = vmatpush1.bf16.msra.mxu0 %v343
  %1053 = vmatprep.subr.bf16.mxu0 0
  %1054 = vmatpush1.bf16.msra.mxu0 %v344
  %1055 = vmatprep.subr.bf16.mxu0 0
  %1056 = vmatpush1.bf16.msra.mxu0 %v345
  %1057 = vmatprep.subr.bf16.mxu0 0
  %1058 = vmatpush1.bf16.msra.mxu0 %v346
  %1059 = vmatprep.subr.bf16.mxu0 0
  %1060 = vmatpush1.bf16.msra.mxu0 0
  %1061 = vmatprep.subr.bf16.mxu0 0
  %1062 = vmatpush1.bf16.msra.mxu0 0
  %1063 = vmatprep.subr.bf16.mxu0 0
  %1064 = vmatpush1.bf16.msra.mxu0 0
  %1065 = vmatprep.subr.bf16.mxu0 0
  %1066 = vmatpush1.bf16.msra.mxu0 0
  %1067 = vmatprep.subr.bf16.mxu0 0
  %1068 = vmatpush1.bf16.msra.mxu0 0
  %1069 = vmatprep.subr.bf16.mxu0 0
  %1070 = vmatpush1.bf16.msra.mxu0 0
  %1071 = vmatprep.subr.bf16.mxu0 0
  %1072 = vmatpush1.bf16.msra.mxu0 0
  %1073 = vmatprep.subr.bf16.mxu0 0
  %1074 = vmatpush1.bf16.msra.mxu0 0
  %1075 = vmatprep.mubr.bf16.mxu0 0
  %1076 = vmatmul.mubr.bf16.gmra.mrb[0].mxu0 %v957
  %v1077 = vpop.f32.mrb[0].mxu0
  %v1078 = vadd.f32 %v1038, %v1077
  %v1079 = vpop.f32.mrb[0].mxu0
  %v1080 = vpop.f32.mrb[0].mxu0
  %v1081 = vpop.f32.mrb[0].mxu0
  %1082 = vdwg.mxu0
  %v1083 = vmax.f32 %v1078, 0.0
  %s1084 = scalar_lea.vmem %s0, 60
  %v1085 = vld [vmem:[%s1084] sm:$0xff]
  %v1086 = vld [vmem:[%s1084 + $0x8] sm:$0xff]
  %v1087 = vld [vmem:[%s1084 + $0x10] sm:$0xf]
  %v1091 = vunpack.c.l.b16 %v1085
  %v1092 = vunpack.c.h.b16 %v1085
  %v1093 = vunpack.c.l.b16 %v1086
  %v1094 = vunpack.c.h.b16 %v1086
  %v1095 = vunpack.c.l.b16 %v1087
  %v1096 = vpack.c.b16 %v1091, %v1091
  %v1097 = vpack.c.b16 %v1092, %v1092
  %v1098 = vpack.c.b16 %v1093, %v1093
  %v1099 = vpack.c.b16 %v1094, %v1094
  %v1100 = vpack.c.b16 %v1095, %v1095
  %1106 = vmatprep.subr.bf16.mxu0 0
  %1107 = vmatpush1.bf16.msra.mxu0 %v307
  %1108 = vmatprep.subr.bf16.mxu0 0
  %1109 = vmatpush1.bf16.msra.mxu0 %v308
  %1110 = vmatprep.subr.bf16.mxu0 0
  %1111 = vmatpush1.bf16.msra.mxu0 %v309
  %1112 = vmatprep.subr.bf16.mxu0 0
  %1113 = vmatpush1.bf16.msra.mxu0 %v310
  %1114 = vmatprep.subr.bf16.mxu0 0
  %1115 = vmatpush1.bf16.msra.mxu0 %v311
  %1116 = vmatprep.subr.bf16.mxu0 0
  %1117 = vmatpush1.bf16.msra.mxu0 %v312
  %1118 = vmatprep.subr.bf16.mxu0 0
  %1119 = vmatpush1.bf16.msra.mxu0 %v313
  %1120 = vmatprep.subr.bf16.mxu0 0
  %1121 = vmatpush1.bf16.msra.mxu0 %v314
  %1122 = vmatprep.subr.bf16.mxu0 0
  %1123 = vmatpush1.bf16.msra.mxu0 %v315
  %1124 = vmatprep.subr.bf16.mxu0 0
  %1125 = vmatpush1.bf16.msra.mxu0 %v316
  %1126 = vmatprep.subr.bf16.mxu0 0
  %1127 = vmatpush1.bf16.msra.mxu0 %v317
  %1128 = vmatprep.subr.bf16.mxu0 0
  %1129 = vmatpush1.bf16.msra.mxu0 %v318
  %1130 = vmatprep.subr.bf16.mxu0 0
  %1131 = vmatpush1.bf16.msra.mxu0 %v319
  %1132 = vmatprep.subr.bf16.mxu0 0
  %1133 = vmatpush1.bf16.msra.mxu0 %v320
  %1134 = vmatprep.subr.bf16.mxu0 0
  %1135 = vmatpush1.bf16.msra.mxu0 %v321
  %1136 = vmatprep.subr.bf16.mxu0 0
  %1137 = vmatpush1.bf16.msra.mxu0 %v322
  %1138 = vmatprep.mubr.bf16.mxu0 %v1097
  %1139 = vmatmul.mubr.bf16.gmra.mrb[0].mxu0 %v1096
  %v1140 = vpop.f32.mrb[0].mxu0
  %v1141 = vadd.f32 %v127, %v1140
  %v1142 = vpop.f32.mrb[0].mxu0
  %v1143 = vpop.f32.mrb[0].mxu0
  %v1144 = vpop.f32.mrb[0].mxu0
  %1145 = vdwg.mxu0
  %1146 = vmatprep.subr.bf16.mxu0 0
  %1147 = vmatpush1.bf16.msra.mxu0 %v323
  %1148 = vmatprep.subr.bf16.mxu0 0
  %1149 = vmatpush1.bf16.msra.mxu0 %v324
  %1150 = vmatprep.subr.bf16.mxu0 0
  %1151 = vmatpush1.bf16.msra.mxu0 %v325
  %1152 = vmatprep.subr.bf16.mxu0 0
  %1153 = vmatpush1.bf16.msra.mxu0 %v326
  %1154 = vmatprep.subr.bf16.mxu0 0
  %1155 = vmatpush1.bf16.msra.mxu0 %v327
  %1156 = vmatprep.subr.bf16.mxu0 0
  %1157 = vmatpush1.bf16.msra.mxu0 %v328
  %1158 = vmatprep.subr.bf16.mxu0 0
  %1159 = vmatpush1.bf16.msra.mxu0 %v329
  %1160 = vmatprep.subr.bf16.mxu0 0
  %1161 = vmatpush1.bf16.msra.mxu0 %v330
  %1162 = vmatprep.subr.bf16.mxu0 0
  %1163 = vmatpush1.bf16.msra.mxu0 %v331
  %1164 = vmatprep.subr.bf16.mxu0 0
  %1165 = vmatpush1.bf16.msra.mxu0 %v332
  %1166 = vmatprep.subr.bf16.mxu0 0
  %1167 = vmatpush1.bf16.msra.mxu0 %v333
  %1168 = vmatprep.subr.bf16.mxu0 0
  %1169 = vmatpush1.bf16.msra.mxu0 %v334
  %1170 = vmatprep.subr.bf16.mxu0 0
  %1171 = vmatpush1.bf16.msra.mxu0 %v335
  %1172 = vmatprep.subr.bf16.mxu0 0
  %1173 = vmatpush1.bf16.msra.mxu0 %v336
  %1174 = vmatprep.subr.bf16.mxu0 0
  %1175 = vmatpush1.bf16.msra.mxu0 %v337
  %1176 = vmatprep.subr.bf16.mxu0 0
  %1177 = vmatpush1.bf16.msra.mxu0 %v338
  %1178 = vmatprep.mubr.bf16.mxu0 %v1099
  %1179 = vmatmul.mubr.bf16.gmra.mrb[0].mxu0 %v1098
  %v1180 = vpop.f32.mrb[0].mxu0
  %v1181 = vadd.f32 %v1141, %v1180
  %v1182 = vpop.f32.mrb[0].mxu0
  %v1183 = vpop.f32.mrb[0].mxu0
  %v1184 = vpop.f32.mrb[0].mxu0
  %1185 = vdwg.mxu0
  %1186 = vmatprep.subr.bf16.mxu0 0
  %1187 = vmatpush1.bf16.msra.mxu0 %v339
  %1188 = vmatprep.subr.bf16.mxu0 0
  %1189 = vmatpush1.bf16.msra.mxu0 %v340
  %1190 = vmatprep.subr.bf16.mxu0 0
  %1191 = vmatpush1.bf16.msra.mxu0 %v341
  %1192 = vmatprep.subr.bf16.mxu0 0
  %1193 = vmatpush1.bf16.msra.mxu0 %v342
  %1194 = vmatprep.subr.bf16.mxu0 0
  %1195 = vmatpush1.bf16.msra.mxu0 %v343
  %1196 = vmatprep.subr.bf16.mxu0 0
  %1197 = vmatpush1.bf16.msra.mxu0 %v344
  %1198 = vmatprep.subr.bf16.mxu0 0
  %1199 = vmatpush1.bf16.msra.mxu0 %v345
  %1200 = vmatprep.subr.bf16.mxu0 0
  %1201 = vmatpush1.bf16.msra.mxu0 %v346
  %1202 = vmatprep.subr.bf16.mxu0 0
  %1203 = vmatpush1.bf16.msra.mxu0 0
  %1204 = vmatprep.subr.bf16.mxu0 0
  %1205 = vmatpush1.bf16.msra.mxu0 0
  %1206 = vmatprep.subr.bf16.mxu0 0
  %1207 = vmatpush1.bf16.msra.mxu0 0
  %1208 = vmatprep.subr.bf16.mxu0 0
  %1209 = vmatpush1.bf16.msra.mxu0 0
  %1210 = vmatprep.subr.bf16.mxu0 0
  %1211 = vmatpush1.bf16.msra.mxu0 0
  %1212 = vmatprep.subr.bf16.mxu0 0
  %1213 = vmatpush1.bf16.msra.mxu0 0
  %1214 = vmatprep.subr.bf16.mxu0 0
  %1215 = vmatpush1.bf16.msra.mxu0 0
  %1216 = vmatprep.subr.bf16.mxu0 0
  %1217 = vmatpush1.bf16.msra.mxu0 0
  %1218 = vmatprep.mubr.bf16.mxu0 0
  %1219 = vmatmul.mubr.bf16.gmra.mrb[0].mxu0 %v1100
  %v1220 = vpop.f32.mrb[0].mxu0
  %v1221 = vadd.f32 %v1181, %v1220
  %v1222 = vpop.f32.mrb[0].mxu0
  %v1223 = vpop.f32.mrb[0].mxu0
  %v1224 = vpop.f32.mrb[0].mxu0
  %1225 = vdwg.mxu0
  %v1226 = vmax.f32 %v1221, 0.0
  %v1227 = vmax.f32 %v1083, %v1226
  %s1228 = scalar_lea.vmem %s0, 120
  %v1229 = vld [vmem:[%s1228] sm:$0xff]
  %v1230 = vld [vmem:[%s1228 + $0x8] sm:$0xff]
  %v1231 = vld [vmem:[%s1228 + $0x10] sm:$0xf]
  %v1235 = vunpack.c.l.b16 %v1229
  %v1236 = vunpack.c.h.b16 %v1229
  %v1237 = vunpack.c.l.b16 %v1230
  %v1238 = vunpack.c.h.b16 %v1230
  %v1239 = vunpack.c.l.b16 %v1231
  %v1240 = vpack.c.b16 %v1235, %v1235
  %v1241 = vpack.c.b16 %v1236, %v1236
  %v1242 = vpack.c.b16 %v1237, %v1237
  %v1243 = vpack.c.b16 %v1238, %v1238
  %v1244 = vpack.c.b16 %v1239, %v1239
  %1250 = vmatprep.subr.bf16.mxu0 0
  %1251 = vmatpush1.bf16.msra.mxu0 %v307
  %1252 = vmatprep.subr.bf16.mxu0 0
  %1253 = vmatpush1.bf16.msra.mxu0 %v308
  %1254 = vmatprep.subr.bf16.mxu0 0
  %1255 = vmatpush1.bf16.msra.mxu0 %v309
  %1256 = vmatprep.subr.bf16.mxu0 0
  %1257 = vmatpush1.bf16.msra.mxu0 %v310
  %1258 = vmatprep.subr.bf16.mxu0 0
  %1259 = vmatpush1.bf16.msra.mxu0 %v311
  %1260 = vmatprep.subr.bf16.mxu0 0
  %1261 = vmatpush1.bf16.msra.mxu0 %v312
  %1262 = vmatprep.subr.bf16.mxu0 0
  %1263 = vmatpush1.bf16.msra.mxu0 %v313
  %1264 = vmatprep.subr.bf16.mxu0 0
  %1265 = vmatpush1.bf16.msra.mxu0 %v314
  %1266 = vmatprep.subr.bf16.mxu0 0
  %1267 = vmatpush1.bf16.msra.mxu0 %v315
  %1268 = vmatprep.subr.bf16.mxu0 0
  %1269 = vmatpush1.bf16.msra.mxu0 %v316
  %1270 = vmatprep.subr.bf16.mxu0 0
  %1271 = vmatpush1.bf16.msra.mxu0 %v317
  %1272 = vmatprep.subr.bf16.mxu0 0
  %1273 = vmatpush1.bf16.msra.mxu0 %v318
  %1274 = vmatprep.subr.bf16.mxu0 0
  %1275 = vmatpush1.bf16.msra.mxu0 %v319
  %1276 = vmatprep.subr.bf16.mxu0 0
  %1277 = vmatpush1.bf16.msra.mxu0 %v320
  %1278 = vmatprep.subr.bf16.mxu0 0
  %1279 = vmatpush1.bf16.msra.mxu0 %v321
  %1280 = vmatprep.subr.bf16.mxu0 0
  %1281 = vmatpush1.bf16.msra.mxu0 %v322
  %1282 = vmatprep.mubr.bf16.mxu0 %v1241
  %1283 = vmatmul.mubr.bf16.gmra.mrb[0].mxu0 %v1240
  %v1284 = vpop.f32.mrb[0].mxu0
  %v1285 = vadd.f32 %v127, %v1284
  %v1286 = vpop.f32.mrb[0].mxu0
  %v1287 = vpop.f32.mrb[0].mxu0
  %v1288 = vpop.f32.mrb[0].mxu0
  %1289 = vdwg.mxu0
  %1290 = vmatprep.subr.bf16.mxu0 0
  %1291 = vmatpush1.bf16.msra.mxu0 %v323
  %1292 = vmatprep.subr.bf16.mxu0 0
  %1293 = vmatpush1.bf16.msra.mxu0 %v324
  %1294 = vmatprep.subr.bf16.mxu0 0
  %1295 = vmatpush1.bf16.msra.mxu0 %v325
  %1296 = vmatprep.subr.bf16.mxu0 0
  %1297 = vmatpush1.bf16.msra.mxu0 %v326
  %1298 = vmatprep.subr.bf16.mxu0 0
  %1299 = vmatpush1.bf16.msra.mxu0 %v327
  %1300 = vmatprep.subr.bf16.mxu0 0
  %1301 = vmatpush1.bf16.msra.mxu0 %v328
  %1302 = vmatprep.subr.bf16.mxu0 0
  %1303 = vmatpush1.bf16.msra.mxu0 %v329
  %1304 = vmatprep.subr.bf16.mxu0 0
  %1305 = vmatpush1.bf16.msra.mxu0 %v330
  %1306 = vmatprep.subr.bf16.mxu0 0
  %1307 = vmatpush1.bf16.msra.mxu0 %v331
  %1308 = vmatprep.subr.bf16.mxu0 0
  %1309 = vmatpush1.bf16.msra.mxu0 %v332
  %1310 = vmatprep.subr.bf16.mxu0 0
  %1311 = vmatpush1.bf16.msra.mxu0 %v333
  %1312 = vmatprep.subr.bf16.mxu0 0
  %1313 = vmatpush1.bf16.msra.mxu0 %v334
  %1314 = vmatprep.subr.bf16.mxu0 0
  %1315 = vmatpush1.bf16.msra.mxu0 %v335
  %1316 = vmatprep.subr.bf16.mxu0 0
  %1317 = vmatpush1.bf16.msra.mxu0 %v336
  %1318 = vmatprep.subr.bf16.mxu0 0
  %1319 = vmatpush1.bf16.msra.mxu0 %v337
  %1320 = vmatprep.subr.bf16.mxu0 0
  %1321 = vmatpush1.bf16.msra.mxu0 %v338
  %1322 = vmatprep.mubr.bf16.mxu0 %v1243
  %1323 = vmatmul.mubr.bf16.gmra.mrb[0].mxu0 %v1242
  %v1324 = vpop.f32.mrb[0].mxu0
  %v1325 = vadd.f32 %v1285, %v1324
  %v1326 = vpop.f32.mrb[0].mxu0
  %v1327 = vpop.f32.mrb[0].mxu0
  %v1328 = vpop.f32.mrb[0].mxu0
  %1329 = vdwg.mxu0
  %1330 = vmatprep.subr.bf16.mxu0 0
  %1331 = vmatpush1.bf16.msra.mxu0 %v339
  %1332 = vmatprep.subr.bf16.mxu0 0
  %1333 = vmatpush1.bf16.msra.mxu0 %v340
  %1334 = vmatprep.subr.bf16.mxu0 0
  %1335 = vmatpush1.bf16.msra.mxu0 %v341
  %1336 = vmatprep.subr.bf16.mxu0 0
  %1337 = vmatpush1.bf16.msra.mxu0 %v342
  %1338 = vmatprep.subr.bf16.mxu0 0
  %1339 = vmatpush1.bf16.msra.mxu0 %v343
  %1340 = vmatprep.subr.bf16.mxu0 0
  %1341 = vmatpush1.bf16.msra.mxu0 %v344
  %1342 = vmatprep.subr.bf16.mxu0 0
  %1343 = vmatpush1.bf16.msra.mxu0 %v345
  %1344 = vmatprep.subr.bf16.mxu0 0
  %1345 = vmatpush1.bf16.msra.mxu0 %v346
  %1346 = vmatprep.subr.bf16.mxu0 0
  %1347 = vmatpush1.bf16.msra.mxu0 0
  %1348 = vmatprep.subr.bf16.mxu0 0
  %1349 = vmatpush1.bf16.msra.mxu0 0
  %1350 = vmatprep.subr.bf16.mxu0 0
  %1351 = vmatpush1.bf16.msra.mxu0 0
  %1352 = vmatprep.subr.bf16.mxu0 0
  %1353 = vmatpush1.bf16.msra.mxu0 0
  %1354 = vmatprep.subr.bf16.mxu0 0
  %1355 = vmatpush1.bf16.msra.mxu0 0
  %1356 = vmatprep.subr.bf16.mxu0 0
  %1357 = vmatpush1.bf16.msra.mxu0 0
  %1358 = vmatprep.subr.bf16.mxu0 0
  %1359 = vmatpush1.bf16.msra.mxu0 0
  %1360 = vmatprep.subr.bf16.mxu0 0
  %1361 = vmatpush1.bf16.msra.mxu0 0
  %1362 = vmatprep.mubr.bf16.mxu0 0
  %1363 = vmatmul.mubr.bf16.gmra.mrb[0].mxu0 %v1244
  %v1364 = vpop.f32.mrb[0].mxu0
  %v1365 = vadd.f32 %v1325, %v1364
  %v1366 = vpop.f32.mrb[0].mxu0
  %v1367 = vpop.f32.mrb[0].mxu0
  %v1368 = vpop.f32.mrb[0].mxu0
  %1369 = vdwg.mxu0
  %v1370 = vmax.f32 %v1365, 0.0
  %v1371 = vmax.f32 %v1227, %v1370
  %s1372 = scalar_lea.vmem %s0, 140
  %v1373 = vld [vmem:[%s1372] sm:$0xff]
  %v1374 = vld [vmem:[%s1372 + $0x8] sm:$0xff]
  %v1375 = vld [vmem:[%s1372 + $0x10] sm:$0xf]
  %v1379 = vunpack.c.l.b16 %v1373
  %v1380 = vunpack.c.h.b16 %v1373
  %v1381 = vunpack.c.l.b16 %v1374
  %v1382 = vunpack.c.h.b16 %v1374
  %v1383 = vunpack.c.l.b16 %v1375
  %v1384 = vpack.c.b16 %v1379, %v1379
  %v1385 = vpack.c.b16 %v1380, %v1380
  %v1386 = vpack.c.b16 %v1381, %v1381
  %v1387 = vpack.c.b16 %v1382, %v1382
  %v1388 = vpack.c.b16 %v1383, %v1383
  %1394 = vmatprep.subr.bf16.mxu0 0
  %1395 = vmatpush1.bf16.msra.mxu0 %v307
  %1396 = vmatprep.subr.bf16.mxu0 0
  %1397 = vmatpush1.bf16.msra.mxu0 %v308
  %1398 = vmatprep.subr.bf16.mxu0 0
  %1399 = vmatpush1.bf16.msra.mxu0 %v309
  %1400 = vmatprep.subr.bf16.mxu0 0
  %1401 = vmatpush1.bf16.msra.mxu0 %v310
  %1402 = vmatprep.subr.bf16.mxu0 0
  %1403 = vmatpush1.bf16.msra.mxu0 %v311
  %1404 = vmatprep.subr.bf16.mxu0 0
  %1405 = vmatpush1.bf16.msra.mxu0 %v312
  %1406 = vmatprep.subr.bf16.mxu0 0
  %1407 = vmatpush1.bf16.msra.mxu0 %v313
  %1408 = vmatprep.subr.bf16.mxu0 0
  %1409 = vmatpush1.bf16.msra.mxu0 %v314
  %1410 = vmatprep.subr.bf16.mxu0 0
  %1411 = vmatpush1.bf16.msra.mxu0 %v315
  %1412 = vmatprep.subr.bf16.mxu0 0
  %1413 = vmatpush1.bf16.msra.mxu0 %v316
  %1414 = vmatprep.subr.bf16.mxu0 0
  %1415 = vmatpush1.bf16.msra.mxu0 %v317
  %1416 = vmatprep.subr.bf16.mxu0 0
  %1417 = vmatpush1.bf16.msra.mxu0 %v318
  %1418 = vmatprep.subr.bf16.mxu0 0
  %1419 = vmatpush1.bf16.msra.mxu0 %v319
  %1420 = vmatprep.subr.bf16.mxu0 0
  %1421 = vmatpush1.bf16.msra.mxu0 %v320
  %1422 = vmatprep.subr.bf16.mxu0 0
  %1423 = vmatpush1.bf16.msra.mxu0 %v321
  %1424 = vmatprep.subr.bf16.mxu0 0
  %1425 = vmatpush1.bf16.msra.mxu0 %v322
  %1426 = vmatprep.mubr.bf16.mxu0 %v1385
  %1427 = vmatmul.mubr.bf16.gmra.mrb[0].mxu0 %v1384
  %v1428 = vpop.f32.mrb[0].mxu0
  %v1429 = vadd.f32 %v127, %v1428
  %v1430 = vpop.f32.mrb[0].mxu0
  %v1431 = vpop.f32.mrb[0].mxu0
  %v1432 = vpop.f32.mrb[0].mxu0
  %1433 = vdwg.mxu0
  %1434 = vmatprep.subr.bf16.mxu0 0
  %1435 = vmatpush1.bf16.msra.mxu0 %v323
  %1436 = vmatprep.subr.bf16.mxu0 0
  %1437 = vmatpush1.bf16.msra.mxu0 %v324
  %1438 = vmatprep.subr.bf16.mxu0 0
  %1439 = vmatpush1.bf16.msra.mxu0 %v325
  %1440 = vmatprep.subr.bf16.mxu0 0
  %1441 = vmatpush1.bf16.msra.mxu0 %v326
  %1442 = vmatprep.subr.bf16.mxu0 0
  %1443 = vmatpush1.bf16.msra.mxu0 %v327
  %1444 = vmatprep.subr.bf16.mxu0 0
  %1445 = vmatpush1.bf16.msra.mxu0 %v328
  %1446 = vmatprep.subr.bf16.mxu0 0
  %1447 = vmatpush1.bf16.msra.mxu0 %v329
  %1448 = vmatprep.subr.bf16.mxu0 0
  %1449 = vmatpush1.bf16.msra.mxu0 %v330
  %1450 = vmatprep.subr.bf16.mxu0 0
  %1451 = vmatpush1.bf16.msra.mxu0 %v331
  %1452 = vmatprep.subr.bf16.mxu0 0
  %1453 = vmatpush1.bf16.msra.mxu0 %v332
  %1454 = vmatprep.subr.bf16.mxu0 0
  %1455 = vmatpush1.bf16.msra.mxu0 %v333
  %1456 = vmatprep.subr.bf16.mxu0 0
  %1457 = vmatpush1.bf16.msra.mxu0 %v334
  %1458 = vmatprep.subr.bf16.mxu0 0
  %1459 = vmatpush1.bf16.msra.mxu0 %v335
  %1460 = vmatprep.subr.bf16.mxu0 0
  %1461 = vmatpush1.bf16.msra.mxu0 %v336
  %1462 = vmatprep.subr.bf16.mxu0 0
  %1463 = vmatpush1.bf16.msra.mxu0 %v337
  %1464 = vmatprep.subr.bf16.mxu0 0
  %1465 = vmatpush1.bf16.msra.mxu0 %v338
  %1466 = vmatprep.mubr.bf16.mxu0 %v1387
  %1467 = vmatmul.mubr.bf16.gmra.mrb[0].mxu0 %v1386
  %v1468 = vpop.f32.mrb[0].mxu0
  %v1469 = vadd.f32 %v1429, %v1468
  %v1470 = vpop.f32.mrb[0].mxu0
  %v1471 = vpop.f32.mrb[0].mxu0
  %v1472 = vpop.f32.mrb[0].mxu0
  %1473 = vdwg.mxu0
  %1474 = vmatprep.subr.bf16.mxu0 0
  %1475 = vmatpush1.bf16.msra.mxu0 %v339
  %1476 = vmatprep.subr.bf16.mxu0 0
  %1477 = vmatpush1.bf16.msra.mxu0 %v340
  %1478 = vmatprep.subr.bf16.mxu0 0
  %1479 = vmatpush1.bf16.msra.mxu0 %v341
  %1480 = vmatprep.subr.bf16.mxu0 0
  %1481 = vmatpush1.bf16.msra.mxu0 %v342
  %1482 = vmatprep.subr.bf16.mxu0 0
  %1483 = vmatpush1.bf16.msra.mxu0 %v343
  %1484 = vmatprep.subr.bf16.mxu0 0
  %1485 = vmatpush1.bf16.msra.mxu0 %v344
  %1486 = vmatprep.subr.bf16.mxu0 0
  %1487 = vmatpush1.bf16.msra.mxu0 %v345
  %1488 = vmatprep.subr.bf16.mxu0 0
  %1489 = vmatpush1.bf16.msra.mxu0 %v346
  %1490 = vmatprep.subr.bf16.mxu0 0
  %1491 = vmatpush1.bf16.msra.mxu0 0
  %1492 = vmatprep.subr.bf16.mxu0 0
  %1493 = vmatpush1.bf16.msra.mxu0 0
  %1494 = vmatprep.subr.bf16.mxu0 0
  %1495 = vmatpush1.bf16.msra.mxu0 0
  %1496 = vmatprep.subr.bf16.mxu0 0
  %1497 = vmatpush1.bf16.msra.mxu0 0
  %1498 = vmatprep.subr.bf16.mxu0 0
  %1499 = vmatpush1.bf16.msra.mxu0 0
  %1500 = vmatprep.subr.bf16.mxu0 0
  %1501 = vmatpush1.bf16.msra.mxu0 0
  %1502 = vmatprep.subr.bf16.mxu0 0
  %1503 = vmatpush1.bf16.msra.mxu0 0
  %1504 = vmatprep.subr.bf16.mxu0 0
  %1505 = vmatpush1.bf16.msra.mxu0 0
  %1506 = vmatprep.mubr.bf16.mxu0 0
  %1507 = vmatmul.mubr.bf16.gmra.mrb[0].mxu0 %v1388
  %v1508 = vpop.f32.mrb[0].mxu0
  %v1509 = vadd.f32 %v1469, %v1508
  %v1510 = vpop.f32.mrb[0].mxu0
  %v1511 = vpop.f32.mrb[0].mxu0
  %v1512 = vpop.f32.mrb[0].mxu0
  %1513 = vdwg.mxu0
  %v1514 = vmax.f32 %v1509, 0.0
  %v1515 = vmax.f32 %v1371, %v1514
  %v1516 = vpack.c.bf16 %v1515, %v1515
  %s1517 = scalar_lea.vmem %s0, 160
  %v1518 = vld [vmem:[%s1517] sm:$0xff]
  %v1519 = vld [vmem:[%s1517 + $0x8] sm:$0xff]
  %v1520 = vld [vmem:[%s1517 + $0x10] sm:$0xf]
  %v1524 = vunpack.c.l.b16 %v1518
  %v1525 = vunpack.c.h.b16 %v1518
  %v1526 = vunpack.c.l.b16 %v1519
  %v1527 = vunpack.c.h.b16 %v1519
  %v1528 = vunpack.c.l.b16 %v1520
  %v1529 = vpack.c.b16 %v1524, %v1524
  %v1530 = vpack.c.b16 %v1525, %v1525
  %v1531 = vpack.c.b16 %v1526, %v1526
  %v1532 = vpack.c.b16 %v1527, %v1527
  %v1533 = vpack.c.b16 %v1528, %v1528
  %1539 = vmatprep.subr.bf16.mxu0 0
  %1540 = vmatpush1.bf16.msra.mxu0 %v307
  %1541 = vmatprep.subr.bf16.mxu0 0
  %1542 = vmatpush1.bf16.msra.mxu0 %v308
  %1543 = vmatprep.subr.bf16.mxu0 0
  %1544 = vmatpush1.bf16.msra.mxu0 %v309
  %1545 = vmatprep.subr.bf16.mxu0 0
  %1546 = vmatpush1.bf16.msra.mxu0 %v310
  %1547 = vmatprep.subr.bf16.mxu0 0
  %1548 = vmatpush1.bf16.msra.mxu0 %v311
  %1549 = vmatprep.subr.bf16.mxu0 0
  %1550 = vmatpush1.bf16.msra.mxu0 %v312
  %1551 = vmatprep.subr.bf16.mxu0 0
  %1552 = vmatpush1.bf16.msra.mxu0 %v313
  %1553 = vmatprep.subr.bf16.mxu0 0
  %1554 = vmatpush1.bf16.msra.mxu0 %v314
  %1555 = vmatprep.subr.bf16.mxu0 0
  %1556 = vmatpush1.bf16.msra.mxu0 %v315
  %1557 = vmatprep.subr.bf16.mxu0 0
  %1558 = vmatpush1.bf16.msra.mxu0 %v316
  %1559 = vmatprep.subr.bf16.mxu0 0
  %1560 = vmatpush1.bf16.msra.mxu0 %v317
  %1561 = vmatprep.subr.bf16.mxu0 0
  %1562 = vmatpush1.bf16.msra.mxu0 %v318
  %1563 = vmatprep.subr.bf16.mxu0 0
  %1564 = vmatpush1.bf16.msra.mxu0 %v319
  %1565 = vmatprep.subr.bf16.mxu0 0
  %1566 = vmatpush1.bf16.msra.mxu0 %v320
  %1567 = vmatprep.subr.bf16.mxu0 0
  %1568 = vmatpush1.bf16.msra.mxu0 %v321
  %1569 = vmatprep.subr.bf16.mxu0 0
  %1570 = vmatpush1.bf16.msra.mxu0 %v322
  %1571 = vmatprep.mubr.bf16.mxu0 %v1530
  %1572 = vmatmul.mubr.bf16.gmra.mrb[0].mxu0 %v1529
  %v1573 = vpop.f32.mrb[0].mxu0
  %v1574 = vadd.f32 %v127, %v1573
  %v1575 = vpop.f32.mrb[0].mxu0
  %v1576 = vpop.f32.mrb[0].mxu0
  %v1577 = vpop.f32.mrb[0].mxu0
  %1578 = vdwg.mxu0
  %1579 = vmatprep.subr.bf16.mxu0 0
  %1580 = vmatpush1.bf16.msra.mxu0 %v323
  %1581 = vmatprep.subr.bf16.mxu0 0
  %1582 = vmatpush1.bf16.msra.mxu0 %v324
  %1583 = vmatprep.subr.bf16.mxu0 0
  %1584 = vmatpush1.bf16.msra.mxu0 %v325
  %1585 = vmatprep.subr.bf16.mxu0 0
  %1586 = vmatpush1.bf16.msra.mxu0 %v326
  %1587 = vmatprep.subr.bf16.mxu0 0
  %1588 = vmatpush1.bf16.msra.mxu0 %v327
  %1589 = vmatprep.subr.bf16.mxu0 0
  %1590 = vmatpush1.bf16.msra.mxu0 %v328
  %1591 = vmatprep.subr.bf16.mxu0 0
  %1592 = vmatpush1.bf16.msra.mxu0 %v329
  %1593 = vmatprep.subr.bf16.mxu0 0
  %1594 = vmatpush1.bf16.msra.mxu0 %v330
  %1595 = vmatprep.subr.bf16.mxu0 0
  %1596 = vmatpush1.bf16.msra.mxu0 %v331
  %1597 = vmatprep.subr.bf16.mxu0 0
  %1598 = vmatpush1.bf16.msra.mxu0 %v332
  %1599 = vmatprep.subr.bf16.mxu0 0
  %1600 = vmatpush1.bf16.msra.mxu0 %v333
  %1601 = vmatprep.subr.bf16.mxu0 0
  %1602 = vmatpush1.bf16.msra.mxu0 %v334
  %1603 = vmatprep.subr.bf16.mxu0 0
  %1604 = vmatpush1.bf16.msra.mxu0 %v335
  %1605 = vmatprep.subr.bf16.mxu0 0
  %1606 = vmatpush1.bf16.msra.mxu0 %v336
  %1607 = vmatprep.subr.bf16.mxu0 0
  %1608 = vmatpush1.bf16.msra.mxu0 %v337
  %1609 = vmatprep.subr.bf16.mxu0 0
  %1610 = vmatpush1.bf16.msra.mxu0 %v338
  %1611 = vmatprep.mubr.bf16.mxu0 %v1532
  %1612 = vmatmul.mubr.bf16.gmra.mrb[0].mxu0 %v1531
  %v1613 = vpop.f32.mrb[0].mxu0
  %v1614 = vadd.f32 %v1574, %v1613
  %v1615 = vpop.f32.mrb[0].mxu0
  %v1616 = vpop.f32.mrb[0].mxu0
  %v1617 = vpop.f32.mrb[0].mxu0
  %1618 = vdwg.mxu0
  %1619 = vmatprep.subr.bf16.mxu0 0
  %1620 = vmatpush1.bf16.msra.mxu0 %v339
  %1621 = vmatprep.subr.bf16.mxu0 0
  %1622 = vmatpush1.bf16.msra.mxu0 %v340
  %1623 = vmatprep.subr.bf16.mxu0 0
  %1624 = vmatpush1.bf16.msra.mxu0 %v341
  %1625 = vmatprep.subr.bf16.mxu0 0
  %1626 = vmatpush1.bf16.msra.mxu0 %v342
  %1627 = vmatprep.subr.bf16.mxu0 0
  %1628 = vmatpush1.bf16.msra.mxu0 %v343
  %1629 = vmatprep.subr.bf16.mxu0 0
  %1630 = vmatpush1.bf16.msra.mxu0 %v344
  %1631 = vmatprep.subr.bf16.mxu0 0
  %1632 = vmatpush1.bf16.msra.mxu0 %v345
  %1633 = vmatprep.subr.bf16.mxu0 0
  %1634 = vmatpush1.bf16.msra.mxu0 %v346
  %1635 = vmatprep.subr.bf16.mxu0 0
  %1636 = vmatpush1.bf16.msra.mxu0 0
  %1637 = vmatprep.subr.bf16.mxu0 0
  %1638 = vmatpush1.bf16.msra.mxu0 0
  %1639 = vmatprep.subr.bf16.mxu0 0
  %1640 = vmatpush1.bf16.msra.mxu0 0
  %1641 = vmatprep.subr.bf16.mxu0 0
  %1642 = vmatpush1.bf16.msra.mxu0 0
  %1643 = vmatprep.subr.bf16.mxu0 0
  %1644 = vmatpush1.bf16.msra.mxu0 0
  %1645 = vmatprep.subr.bf16.mxu0 0
  %1646 = vmatpush1.bf16.msra.mxu0 0
  %1647 = vmatprep.subr.bf16.mxu0 0
  %1648 = vmatpush1.bf16.msra.mxu0 0
  %1649 = vmatprep.subr.bf16.mxu0 0
  %1650 = vmatpush1.bf16.msra.mxu0 0
  %1651 = vmatprep.mubr.bf16.mxu0 0
  %1652 = vmatmul.mubr.bf16.gmra.mrb[0].mxu0 %v1533
  %v1653 = vpop.f32.mrb[0].mxu0
  %v1654 = vadd.f32 %v1614, %v1653
  %v1655 = vpop.f32.mrb[0].mxu0
  %v1656 = vpop.f32.mrb[0].mxu0
  %v1657 = vpop.f32.mrb[0].mxu0
  %1658 = vdwg.mxu0
  %v1659 = vmax.f32 %v1654, 0.0
  %s1660 = scalar_lea.vmem %s0, 180
  %v1661 = vld [vmem:[%s1660] sm:$0xff]
  %v1662 = vld [vmem:[%s1660 + $0x8] sm:$0xff]
  %v1663 = vld [vmem:[%s1660 + $0x10] sm:$0xf]
  %v1667 = vunpack.c.l.b16 %v1661
  %v1668 = vunpack.c.h.b16 %v1661
  %v1669 = vunpack.c.l.b16 %v1662
  %v1670 = vunpack.c.h.b16 %v1662
  %v1671 = vunpack.c.l.b16 %v1663
  %v1672 = vpack.c.b16 %v1667, %v1667
  %v1673 = vpack.c.b16 %v1668, %v1668
  %v1674 = vpack.c.b16 %v1669, %v1669
  %v1675 = vpack.c.b16 %v1670, %v1670
  %v1676 = vpack.c.b16 %v1671, %v1671
  %1682 = vmatprep.subr.bf16.mxu0 0
  %1683 = vmatpush1.bf16.msra.mxu0 %v307
  %1684 = vmatprep.subr.bf16.mxu0 0
  %1685 = vmatpush1.bf16.msra.mxu0 %v308
  %1686 = vmatprep.subr.bf16.mxu0 0
  %1687 = vmatpush1.bf16.msra.mxu0 %v309
  %1688 = vmatprep.subr.bf16.mxu0 0
  %1689 = vmatpush1.bf16.msra.mxu0 %v310
  %1690 = vmatprep.subr.bf16.mxu0 0
  %1691 = vmatpush1.bf16.msra.mxu0 %v311
  %1692 = vmatprep.subr.bf16.mxu0 0
  %1693 = vmatpush1.bf16.msra.mxu0 %v312
  %1694 = vmatprep.subr.bf16.mxu0 0
  %1695 = vmatpush1.bf16.msra.mxu0 %v313
  %1696 = vmatprep.subr.bf16.mxu0 0
  %1697 = vmatpush1.bf16.msra.mxu0 %v314
  %1698 = vmatprep.subr.bf16.mxu0 0
  %1699 = vmatpush1.bf16.msra.mxu0 %v315
  %1700 = vmatprep.subr.bf16.mxu0 0
  %1701 = vmatpush1.bf16.msra.mxu0 %v316
  %1702 = vmatprep.subr.bf16.mxu0 0
  %1703 = vmatpush1.bf16.msra.mxu0 %v317
  %1704 = vmatprep.subr.bf16.mxu0 0
  %1705 = vmatpush1.bf16.msra.mxu0 %v318
  %1706 = vmatprep.subr.bf16.mxu0 0
  %1707 = vmatpush1.bf16.msra.mxu0 %v319
  %1708 = vmatprep.subr.bf16.mxu0 0
  %1709 = vmatpush1.bf16.msra.mxu0 %v320
  %1710 = vmatprep.subr.bf16.mxu0 0
  %1711 = vmatpush1.bf16.msra.mxu0 %v321
  %1712 = vmatprep.subr.bf16.mxu0 0
  %1713 = vmatpush1.bf16.msra.mxu0 %v322
  %1714 = vmatprep.mubr.bf16.mxu0 %v1673
  %1715 = vmatmul.mubr.bf16.gmra.mrb[0].mxu0 %v1672
  %v1716 = vpop.f32.mrb[0].mxu0
  %v1717 = vadd.f32 %v127, %v1716
  %v1718 = vpop.f32.mrb[0].mxu0
  %v1719 = vpop.f32.mrb[0].mxu0
  %v1720 = vpop.f32.mrb[0].mxu0
  %1721 = vdwg.mxu0
  %1722 = vmatprep.subr.bf16.mxu0 0
  %1723 = vmatpush1.bf16.msra.mxu0 %v323
  %1724 = vmatprep.subr.bf16.mxu0 0
  %1725 = vmatpush1.bf16.msra.mxu0 %v324
  %1726 = vmatprep.subr.bf16.mxu0 0
  %1727 = vmatpush1.bf16.msra.mxu0 %v325
  %1728 = vmatprep.subr.bf16.mxu0 0
  %1729 = vmatpush1.bf16.msra.mxu0 %v326
  %1730 = vmatprep.subr.bf16.mxu0 0
  %1731 = vmatpush1.bf16.msra.mxu0 %v327
  %1732 = vmatprep.subr.bf16.mxu0 0
  %1733 = vmatpush1.bf16.msra.mxu0 %v328
  %1734 = vmatprep.subr.bf16.mxu0 0
  %1735 = vmatpush1.bf16.msra.mxu0 %v329
  %1736 = vmatprep.subr.bf16.mxu0 0
  %1737 = vmatpush1.bf16.msra.mxu0 %v330
  %1738 = vmatprep.subr.bf16.mxu0 0
  %1739 = vmatpush1.bf16.msra.mxu0 %v331
  %1740 = vmatprep.subr.bf16.mxu0 0
  %1741 = vmatpush1.bf16.msra.mxu0 %v332
  %1742 = vmatprep.subr.bf16.mxu0 0
  %1743 = vmatpush1.bf16.msra.mxu0 %v333
  %1744 = vmatprep.subr.bf16.mxu0 0
  %1745 = vmatpush1.bf16.msra.mxu0 %v334
  %1746 = vmatprep.subr.bf16.mxu0 0
  %1747 = vmatpush1.bf16.msra.mxu0 %v335
  %1748 = vmatprep.subr.bf16.mxu0 0
  %1749 = vmatpush1.bf16.msra.mxu0 %v336
  %1750 = vmatprep.subr.bf16.mxu0 0
  %1751 = vmatpush1.bf16.msra.mxu0 %v337
  %1752 = vmatprep.subr.bf16.mxu0 0
  %1753 = vmatpush1.bf16.msra.mxu0 %v338
  %1754 = vmatprep.mubr.bf16.mxu0 %v1675
  %1755 = vmatmul.mubr.bf16.gmra.mrb[0].mxu0 %v1674
  %v1756 = vpop.f32.mrb[0].mxu0
  %v1757 = vadd.f32 %v1717, %v1756
  %v1758 = vpop.f32.mrb[0].mxu0
  %v1759 = vpop.f32.mrb[0].mxu0
  %v1760 = vpop.f32.mrb[0].mxu0
  %1761 = vdwg.mxu0
  %1762 = vmatprep.subr.bf16.mxu0 0
  %1763 = vmatpush1.bf16.msra.mxu0 %v339
  %1764 = vmatprep.subr.bf16.mxu0 0
  %1765 = vmatpush1.bf16.msra.mxu0 %v340
  %1766 = vmatprep.subr.bf16.mxu0 0
  %1767 = vmatpush1.bf16.msra.mxu0 %v341
  %1768 = vmatprep.subr.bf16.mxu0 0
  %1769 = vmatpush1.bf16.msra.mxu0 %v342
  %1770 = vmatprep.subr.bf16.mxu0 0
  %1771 = vmatpush1.bf16.msra.mxu0 %v343
  %1772 = vmatprep.subr.bf16.mxu0 0
  %1773 = vmatpush1.bf16.msra.mxu0 %v344
  %1774 = vmatprep.subr.bf16.mxu0 0
  %1775 = vmatpush1.bf16.msra.mxu0 %v345
  %1776 = vmatprep.subr.bf16.mxu0 0
  %1777 = vmatpush1.bf16.msra.mxu0 %v346
  %1778 = vmatprep.subr.bf16.mxu0 0
  %1779 = vmatpush1.bf16.msra.mxu0 0
  %1780 = vmatprep.subr.bf16.mxu0 0
  %1781 = vmatpush1.bf16.msra.mxu0 0
  %1782 = vmatprep.subr.bf16.mxu0 0
  %1783 = vmatpush1.bf16.msra.mxu0 0
  %1784 = vmatprep.subr.bf16.mxu0 0
  %1785 = vmatpush1.bf16.msra.mxu0 0
  %1786 = vmatprep.subr.bf16.mxu0 0
  %1787 = vmatpush1.bf16.msra.mxu0 0
  %1788 = vmatprep.subr.bf16.mxu0 0
  %1789 = vmatpush1.bf16.msra.mxu0 0
  %1790 = vmatprep.subr.bf16.mxu0 0
  %1791 = vmatpush1.bf16.msra.mxu0 0
  %1792 = vmatprep.subr.bf16.mxu0 0
  %1793 = vmatpush1.bf16.msra.mxu0 0
  %1794 = vmatprep.mubr.bf16.mxu0 0
  %1795 = vmatmul.mubr.bf16.gmra.mrb[0].mxu0 %v1676
  %v1796 = vpop.f32.mrb[0].mxu0
  %v1797 = vadd.f32 %v1757, %v1796
  %v1798 = vpop.f32.mrb[0].mxu0
  %v1799 = vpop.f32.mrb[0].mxu0
  %v1800 = vpop.f32.mrb[0].mxu0
  %1801 = vdwg.mxu0
  %v1802 = vmax.f32 %v1797, 0.0
  %v1803 = vmax.f32 %v1659, %v1802
  %s1804 = scalar_lea.vmem %s0, 240
  %v1805 = vld [vmem:[%s1804] sm:$0xff]
  %v1806 = vld [vmem:[%s1804 + $0x8] sm:$0xff]
  %v1807 = vld [vmem:[%s1804 + $0x10] sm:$0xf]
  %v1811 = vunpack.c.l.b16 %v1805
  %v1812 = vunpack.c.h.b16 %v1805
  %v1813 = vunpack.c.l.b16 %v1806
  %v1814 = vunpack.c.h.b16 %v1806
  %v1815 = vunpack.c.l.b16 %v1807
  %v1816 = vpack.c.b16 %v1811, %v1811
  %v1817 = vpack.c.b16 %v1812, %v1812
  %v1818 = vpack.c.b16 %v1813, %v1813
  %v1819 = vpack.c.b16 %v1814, %v1814
  %v1820 = vpack.c.b16 %v1815, %v1815
  %1826 = vmatprep.subr.bf16.mxu0 0
  %1827 = vmatpush1.bf16.msra.mxu0 %v307
  %1828 = vmatprep.subr.bf16.mxu0 0
  %1829 = vmatpush1.bf16.msra.mxu0 %v308
  %1830 = vmatprep.subr.bf16.mxu0 0
  %1831 = vmatpush1.bf16.msra.mxu0 %v309
  %1832 = vmatprep.subr.bf16.mxu0 0
  %1833 = vmatpush1.bf16.msra.mxu0 %v310
  %1834 = vmatprep.subr.bf16.mxu0 0
  %1835 = vmatpush1.bf16.msra.mxu0 %v311
  %1836 = vmatprep.subr.bf16.mxu0 0
  %1837 = vmatpush1.bf16.msra.mxu0 %v312
  %1838 = vmatprep.subr.bf16.mxu0 0
  %1839 = vmatpush1.bf16.msra.mxu0 %v313
  %1840 = vmatprep.subr.bf16.mxu0 0
  %1841 = vmatpush1.bf16.msra.mxu0 %v314
  %1842 = vmatprep.subr.bf16.mxu0 0
  %1843 = vmatpush1.bf16.msra.mxu0 %v315
  %1844 = vmatprep.subr.bf16.mxu0 0
  %1845 = vmatpush1.bf16.msra.mxu0 %v316
  %1846 = vmatprep.subr.bf16.mxu0 0
  %1847 = vmatpush1.bf16.msra.mxu0 %v317
  %1848 = vmatprep.subr.bf16.mxu0 0
  %1849 = vmatpush1.bf16.msra.mxu0 %v318
  %1850 = vmatprep.subr.bf16.mxu0 0
  %1851 = vmatpush1.bf16.msra.mxu0 %v319
  %1852 = vmatprep.subr.bf16.mxu0 0
  %1853 = vmatpush1.bf16.msra.mxu0 %v320
  %1854 = vmatprep.subr.bf16.mxu0 0
  %1855 = vmatpush1.bf16.msra.mxu0 %v321
  %1856 = vmatprep.subr.bf16.mxu0 0
  %1857 = vmatpush1.bf16.msra.mxu0 %v322
  %1858 = vmatprep.mubr.bf16.mxu0 %v1817
  %1859 = vmatmul.mubr.bf16.gmra.mrb[0].mxu0 %v1816
  %v1860 = vpop.f32.mrb[0].mxu0
  %v1861 = vadd.f32 %v127, %v1860
  %v1862 = vpop.f32.mrb[0].mxu0
  %v1863 = vpop.f32.mrb[0].mxu0
  %v1864 = vpop.f32.mrb[0].mxu0
  %1865 = vdwg.mxu0
  %1866 = vmatprep.subr.bf16.mxu0 0
  %1867 = vmatpush1.bf16.msra.mxu0 %v323
  %1868 = vmatprep.subr.bf16.mxu0 0
  %1869 = vmatpush1.bf16.msra.mxu0 %v324
  %1870 = vmatprep.subr.bf16.mxu0 0
  %1871 = vmatpush1.bf16.msra.mxu0 %v325
  %1872 = vmatprep.subr.bf16.mxu0 0
  %1873 = vmatpush1.bf16.msra.mxu0 %v326
  %1874 = vmatprep.subr.bf16.mxu0 0
  %1875 = vmatpush1.bf16.msra.mxu0 %v327
  %1876 = vmatprep.subr.bf16.mxu0 0
  %1877 = vmatpush1.bf16.msra.mxu0 %v328
  %1878 = vmatprep.subr.bf16.mxu0 0
  %1879 = vmatpush1.bf16.msra.mxu0 %v329
  %1880 = vmatprep.subr.bf16.mxu0 0
  %1881 = vmatpush1.bf16.msra.mxu0 %v330
  %1882 = vmatprep.subr.bf16.mxu0 0
  %1883 = vmatpush1.bf16.msra.mxu0 %v331
  %1884 = vmatprep.subr.bf16.mxu0 0
  %1885 = vmatpush1.bf16.msra.mxu0 %v332
  %1886 = vmatprep.subr.bf16.mxu0 0
  %1887 = vmatpush1.bf16.msra.mxu0 %v333
  %1888 = vmatprep.subr.bf16.mxu0 0
  %1889 = vmatpush1.bf16.msra.mxu0 %v334
  %1890 = vmatprep.subr.bf16.mxu0 0
  %1891 = vmatpush1.bf16.msra.mxu0 %v335
  %1892 = vmatprep.subr.bf16.mxu0 0
  %1893 = vmatpush1.bf16.msra.mxu0 %v336
  %1894 = vmatprep.subr.bf16.mxu0 0
  %1895 = vmatpush1.bf16.msra.mxu0 %v337
  %1896 = vmatprep.subr.bf16.mxu0 0
  %1897 = vmatpush1.bf16.msra.mxu0 %v338
  %1898 = vmatprep.mubr.bf16.mxu0 %v1819
  %1899 = vmatmul.mubr.bf16.gmra.mrb[0].mxu0 %v1818
  %v1900 = vpop.f32.mrb[0].mxu0
  %v1901 = vadd.f32 %v1861, %v1900
  %v1902 = vpop.f32.mrb[0].mxu0
  %v1903 = vpop.f32.mrb[0].mxu0
  %v1904 = vpop.f32.mrb[0].mxu0
  %1905 = vdwg.mxu0
  %1906 = vmatprep.subr.bf16.mxu0 0
  %1907 = vmatpush1.bf16.msra.mxu0 %v339
  %1908 = vmatprep.subr.bf16.mxu0 0
  %1909 = vmatpush1.bf16.msra.mxu0 %v340
  %1910 = vmatprep.subr.bf16.mxu0 0
  %1911 = vmatpush1.bf16.msra.mxu0 %v341
  %1912 = vmatprep.subr.bf16.mxu0 0
  %1913 = vmatpush1.bf16.msra.mxu0 %v342
  %1914 = vmatprep.subr.bf16.mxu0 0
  %1915 = vmatpush1.bf16.msra.mxu0 %v343
  %1916 = vmatprep.subr.bf16.mxu0 0
  %1917 = vmatpush1.bf16.msra.mxu0 %v344
  %1918 = vmatprep.subr.bf16.mxu0 0
  %1919 = vmatpush1.bf16.msra.mxu0 %v345
  %1920 = vmatprep.subr.bf16.mxu0 0
  %1921 = vmatpush1.bf16.msra.mxu0 %v346
  %1922 = vmatprep.subr.bf16.mxu0 0
  %1923 = vmatpush1.bf16.msra.mxu0 0
  %1924 = vmatprep.subr.bf16.mxu0 0
  %1925 = vmatpush1.bf16.msra.mxu0 0
  %1926 = vmatprep.subr.bf16.mxu0 0
  %1927 = vmatpush1.bf16.msra.mxu0 0
  %1928 = vmatprep.subr.bf16.mxu0 0
  %1929 = vmatpush1.bf16.msra.mxu0 0
  %1930 = vmatprep.subr.bf16.mxu0 0
  %1931 = vmatpush1.bf16.msra.mxu0 0
  %1932 = vmatprep.subr.bf16.mxu0 0
  %1933 = vmatpush1.bf16.msra.mxu0 0
  %1934 = vmatprep.subr.bf16.mxu0 0
  %1935 = vmatpush1.bf16.msra.mxu0 0
  %1936 = vmatprep.subr.bf16.mxu0 0
  %1937 = vmatpush1.bf16.msra.mxu0 0
  %1938 = vmatprep.mubr.bf16.mxu0 0
  %1939 = vmatmul.mubr.bf16.gmra.mrb[0].mxu0 %v1820
  %v1940 = vpop.f32.mrb[0].mxu0
  %v1941 = vadd.f32 %v1901, %v1940
  %v1942 = vpop.f32.mrb[0].mxu0
  %v1943 = vpop.f32.mrb[0].mxu0
  %v1944 = vpop.f32.mrb[0].mxu0
  %1945 = vdwg.mxu0
  %v1946 = vmax.f32 %v1941, 0.0
  %v1947 = vmax.f32 %v1803, %v1946
  %s1948 = scalar_lea.vmem %s0, 260
  %v1949 = vld [vmem:[%s1948] sm:$0xff]
  %v1950 = vld [vmem:[%s1948 + $0x8] sm:$0xff]
  %v1951 = vld [vmem:[%s1948 + $0x10] sm:$0xf]
  %v1955 = vunpack.c.l.b16 %v1949
  %v1956 = vunpack.c.h.b16 %v1949
  %v1957 = vunpack.c.l.b16 %v1950
  %v1958 = vunpack.c.h.b16 %v1950
  %v1959 = vunpack.c.l.b16 %v1951
  %v1960 = vpack.c.b16 %v1955, %v1955
  %v1961 = vpack.c.b16 %v1956, %v1956
  %v1962 = vpack.c.b16 %v1957, %v1957
  %v1963 = vpack.c.b16 %v1958, %v1958
  %v1964 = vpack.c.b16 %v1959, %v1959
  %1970 = vmatprep.subr.bf16.mxu0 0
  %1971 = vmatpush1.bf16.msra.mxu0 %v307
  %1972 = vmatprep.subr.bf16.mxu0 0
  %1973 = vmatpush1.bf16.msra.mxu0 %v308
  %1974 = vmatprep.subr.bf16.mxu0 0
  %1975 = vmatpush1.bf16.msra.mxu0 %v309
  %1976 = vmatprep.subr.bf16.mxu0 0
  %1977 = vmatpush1.bf16.msra.mxu0 %v310
  %1978 = vmatprep.subr.bf16.mxu0 0
  %1979 = vmatpush1.bf16.msra.mxu0 %v311
  %1980 = vmatprep.subr.bf16.mxu0 0
  %1981 = vmatpush1.bf16.msra.mxu0 %v312
  %1982 = vmatprep.subr.bf16.mxu0 0
  %1983 = vmatpush1.bf16.msra.mxu0 %v313
  %1984 = vmatprep.subr.bf16.mxu0 0
  %1985 = vmatpush1.bf16.msra.mxu0 %v314
  %1986 = vmatprep.subr.bf16.mxu0 0
  %1987 = vmatpush1.bf16.msra.mxu0 %v315
  %1988 = vmatprep.subr.bf16.mxu0 0
  %1989 = vmatpush1.bf16.msra.mxu0 %v316
  %1990 = vmatprep.subr.bf16.mxu0 0
  %1991 = vmatpush1.bf16.msra.mxu0 %v317
  %1992 = vmatprep.subr.bf16.mxu0 0
  %1993 = vmatpush1.bf16.msra.mxu0 %v318
  %1994 = vmatprep.subr.bf16.mxu0 0
  %1995 = vmatpush1.bf16.msra.mxu0 %v319
  %1996 = vmatprep.subr.bf16.mxu0 0
  %1997 = vmatpush1.bf16.msra.mxu0 %v320
  %1998 = vmatprep.subr.bf16.mxu0 0
  %1999 = vmatpush1.bf16.msra.mxu0 %v321
  %2000 = vmatprep.subr.bf16.mxu0 0
  %2001 = vmatpush1.bf16.msra.mxu0 %v322
  %2002 = vmatprep.mubr.bf16.mxu0 %v1961
  %2003 = vmatmul.mubr.bf16.gmra.mrb[0].mxu0 %v1960
  %v2004 = vpop.f32.mrb[0].mxu0
  %v2005 = vadd.f32 %v127, %v2004
  %v2006 = vpop.f32.mrb[0].mxu0
  %v2007 = vpop.f32.mrb[0].mxu0
  %v2008 = vpop.f32.mrb[0].mxu0
  %2009 = vdwg.mxu0
  %2010 = vmatprep.subr.bf16.mxu0 0
  %2011 = vmatpush1.bf16.msra.mxu0 %v323
  %2012 = vmatprep.subr.bf16.mxu0 0
  %2013 = vmatpush1.bf16.msra.mxu0 %v324
  %2014 = vmatprep.subr.bf16.mxu0 0
  %2015 = vmatpush1.bf16.msra.mxu0 %v325
  %2016 = vmatprep.subr.bf16.mxu0 0
  %2017 = vmatpush1.bf16.msra.mxu0 %v326
  %2018 = vmatprep.subr.bf16.mxu0 0
  %2019 = vmatpush1.bf16.msra.mxu0 %v327
  %2020 = vmatprep.subr.bf16.mxu0 0
  %2021 = vmatpush1.bf16.msra.mxu0 %v328
  %2022 = vmatprep.subr.bf16.mxu0 0
  %2023 = vmatpush1.bf16.msra.mxu0 %v329
  %2024 = vmatprep.subr.bf16.mxu0 0
  %2025 = vmatpush1.bf16.msra.mxu0 %v330
  %2026 = vmatprep.subr.bf16.mxu0 0
  %2027 = vmatpush1.bf16.msra.mxu0 %v331
  %2028 = vmatprep.subr.bf16.mxu0 0
  %2029 = vmatpush1.bf16.msra.mxu0 %v332
  %2030 = vmatprep.subr.bf16.mxu0 0
  %2031 = vmatpush1.bf16.msra.mxu0 %v333
  %2032 = vmatprep.subr.bf16.mxu0 0
  %2033 = vmatpush1.bf16.msra.mxu0 %v334
  %2034 = vmatprep.subr.bf16.mxu0 0
  %2035 = vmatpush1.bf16.msra.mxu0 %v335
  %2036 = vmatprep.subr.bf16.mxu0 0
  %2037 = vmatpush1.bf16.msra.mxu0 %v336
  %2038 = vmatprep.subr.bf16.mxu0 0
  %2039 = vmatpush1.bf16.msra.mxu0 %v337
  %2040 = vmatprep.subr.bf16.mxu0 0
  %2041 = vmatpush1.bf16.msra.mxu0 %v338
  %2042 = vmatprep.mubr.bf16.mxu0 %v1963
  %2043 = vmatmul.mubr.bf16.gmra.mrb[0].mxu0 %v1962
  %v2044 = vpop.f32.mrb[0].mxu0
  %v2045 = vadd.f32 %v2005, %v2044
  %v2046 = vpop.f32.mrb[0].mxu0
  %v2047 = vpop.f32.mrb[0].mxu0
  %v2048 = vpop.f32.mrb[0].mxu0
  %2049 = vdwg.mxu0
  %2050 = vmatprep.subr.bf16.mxu0 0
  %2051 = vmatpush1.bf16.msra.mxu0 %v339
  %2052 = vmatprep.subr.bf16.mxu0 0
  %2053 = vmatpush1.bf16.msra.mxu0 %v340
  %2054 = vmatprep.subr.bf16.mxu0 0
  %2055 = vmatpush1.bf16.msra.mxu0 %v341
  %2056 = vmatprep.subr.bf16.mxu0 0
  %2057 = vmatpush1.bf16.msra.mxu0 %v342
  %2058 = vmatprep.subr.bf16.mxu0 0
  %2059 = vmatpush1.bf16.msra.mxu0 %v343
  %2060 = vmatprep.subr.bf16.mxu0 0
  %2061 = vmatpush1.bf16.msra.mxu0 %v344
  %2062 = vmatprep.subr.bf16.mxu0 0
  %2063 = vmatpush1.bf16.msra.mxu0 %v345
  %2064 = vmatprep.subr.bf16.mxu0 0
  %2065 = vmatpush1.bf16.msra.mxu0 %v346
  %2066 = vmatprep.subr.bf16.mxu0 0
  %2067 = vmatpush1.bf16.msra.mxu0 0
  %2068 = vmatprep.subr.bf16.mxu0 0
  %2069 = vmatpush1.bf16.msra.mxu0 0
  %2070 = vmatprep.subr.bf16.mxu0 0
  %2071 = vmatpush1.bf16.msra.mxu0 0
  %2072 = vmatprep.subr.bf16.mxu0 0
  %2073 = vmatpush1.bf16.msra.mxu0 0
  %2074 = vmatprep.subr.bf16.mxu0 0
  %2075 = vmatpush1.bf16.msra.mxu0 0
  %2076 = vmatprep.subr.bf16.mxu0 0
  %2077 = vmatpush1.bf16.msra.mxu0 0
  %2078 = vmatprep.subr.bf16.mxu0 0
  %2079 = vmatpush1.bf16.msra.mxu0 0
  %2080 = vmatprep.subr.bf16.mxu0 0
  %2081 = vmatpush1.bf16.msra.mxu0 0
  %2082 = vmatprep.mubr.bf16.mxu0 0
  %2083 = vmatmul.mubr.bf16.gmra.mrb[0].mxu0 %v1964
  %v2084 = vpop.f32.mrb[0].mxu0
  %v2085 = vadd.f32 %v2045, %v2084
  %v2086 = vpop.f32.mrb[0].mxu0
  %v2087 = vpop.f32.mrb[0].mxu0
  %v2088 = vpop.f32.mrb[0].mxu0
  %2089 = vdwg.mxu0
  %v2090 = vmax.f32 %v2085, 0.0
  %v2091 = vmax.f32 %v1947, %v2090
  %v2092 = vpack.c.bf16 %v2091, %v2091
  %s2093 = scalar_lea.vmem %s0, 200
  %v2094 = vld [vmem:[%s2093] sm:$0xff]
  %v2095 = vld [vmem:[%s2093 + $0x8] sm:$0xff]
  %v2096 = vld [vmem:[%s2093 + $0x10] sm:$0xf]
  %v2100 = vunpack.c.l.b16 %v2094
  %v2101 = vunpack.c.h.b16 %v2094
  %v2102 = vunpack.c.l.b16 %v2095
  %v2103 = vunpack.c.h.b16 %v2095
  %v2104 = vunpack.c.l.b16 %v2096
  %v2105 = vpack.c.b16 %v2100, %v2100
  %v2106 = vpack.c.b16 %v2101, %v2101
  %v2107 = vpack.c.b16 %v2102, %v2102
  %v2108 = vpack.c.b16 %v2103, %v2103
  %v2109 = vpack.c.b16 %v2104, %v2104
  %2115 = vmatprep.subr.bf16.mxu0 0
  %2116 = vmatpush1.bf16.msra.mxu0 %v307
  %2117 = vmatprep.subr.bf16.mxu0 0
  %2118 = vmatpush1.bf16.msra.mxu0 %v308
  %2119 = vmatprep.subr.bf16.mxu0 0
  %2120 = vmatpush1.bf16.msra.mxu0 %v309
  %2121 = vmatprep.subr.bf16.mxu0 0
  %2122 = vmatpush1.bf16.msra.mxu0 %v310
  %2123 = vmatprep.subr.bf16.mxu0 0
  %2124 = vmatpush1.bf16.msra.mxu0 %v311
  %2125 = vmatprep.subr.bf16.mxu0 0
  %2126 = vmatpush1.bf16.msra.mxu0 %v312
  %2127 = vmatprep.subr.bf16.mxu0 0
  %2128 = vmatpush1.bf16.msra.mxu0 %v313
  %2129 = vmatprep.subr.bf16.mxu0 0
  %2130 = vmatpush1.bf16.msra.mxu0 %v314
  %2131 = vmatprep.subr.bf16.mxu0 0
  %2132 = vmatpush1.bf16.msra.mxu0 %v315
  %2133 = vmatprep.subr.bf16.mxu0 0
  %2134 = vmatpush1.bf16.msra.mxu0 %v316
  %2135 = vmatprep.subr.bf16.mxu0 0
  %2136 = vmatpush1.bf16.msra.mxu0 %v317
  %2137 = vmatprep.subr.bf16.mxu0 0
  %2138 = vmatpush1.bf16.msra.mxu0 %v318
  %2139 = vmatprep.subr.bf16.mxu0 0
  %2140 = vmatpush1.bf16.msra.mxu0 %v319
  %2141 = vmatprep.subr.bf16.mxu0 0
  %2142 = vmatpush1.bf16.msra.mxu0 %v320
  %2143 = vmatprep.subr.bf16.mxu0 0
  %2144 = vmatpush1.bf16.msra.mxu0 %v321
  %2145 = vmatprep.subr.bf16.mxu0 0
  %2146 = vmatpush1.bf16.msra.mxu0 %v322
  %2147 = vmatprep.mubr.bf16.mxu0 %v2106
  %2148 = vmatmul.mubr.bf16.gmra.mrb[0].mxu0 %v2105
  %v2149 = vpop.f32.mrb[0].mxu0
  %v2150 = vadd.f32 %v127, %v2149
  %v2151 = vpop.f32.mrb[0].mxu0
  %v2152 = vpop.f32.mrb[0].mxu0
  %v2153 = vpop.f32.mrb[0].mxu0
  %2154 = vdwg.mxu0
  %2155 = vmatprep.subr.bf16.mxu0 0
  %2156 = vmatpush1.bf16.msra.mxu0 %v323
  %2157 = vmatprep.subr.bf16.mxu0 0
  %2158 = vmatpush1.bf16.msra.mxu0 %v324
  %2159 = vmatprep.subr.bf16.mxu0 0
  %2160 = vmatpush1.bf16.msra.mxu0 %v325
  %2161 = vmatprep.subr.bf16.mxu0 0
  %2162 = vmatpush1.bf16.msra.mxu0 %v326
  %2163 = vmatprep.subr.bf16.mxu0 0
  %2164 = vmatpush1.bf16.msra.mxu0 %v327
  %2165 = vmatprep.subr.bf16.mxu0 0
  %2166 = vmatpush1.bf16.msra.mxu0 %v328
  %2167 = vmatprep.subr.bf16.mxu0 0
  %2168 = vmatpush1.bf16.msra.mxu0 %v329
  %2169 = vmatprep.subr.bf16.mxu0 0
  %2170 = vmatpush1.bf16.msra.mxu0 %v330
  %2171 = vmatprep.subr.bf16.mxu0 0
  %2172 = vmatpush1.bf16.msra.mxu0 %v331
  %2173 = vmatprep.subr.bf16.mxu0 0
  %2174 = vmatpush1.bf16.msra.mxu0 %v332
  %2175 = vmatprep.subr.bf16.mxu0 0
  %2176 = vmatpush1.bf16.msra.mxu0 %v333
  %2177 = vmatprep.subr.bf16.mxu0 0
  %2178 = vmatpush1.bf16.msra.mxu0 %v334
  %2179 = vmatprep.subr.bf16.mxu0 0
  %2180 = vmatpush1.bf16.msra.mxu0 %v335
  %2181 = vmatprep.subr.bf16.mxu0 0
  %2182 = vmatpush1.bf16.msra.mxu0 %v336
  %2183 = vmatprep.subr.bf16.mxu0 0
  %2184 = vmatpush1.bf16.msra.mxu0 %v337
  %2185 = vmatprep.subr.bf16.mxu0 0
  %2186 = vmatpush1.bf16.msra.mxu0 %v338
  %2187 = vmatprep.mubr.bf16.mxu0 %v2108
  %2188 = vmatmul.mubr.bf16.gmra.mrb[0].mxu0 %v2107
  %v2189 = vpop.f32.mrb[0].mxu0
  %v2190 = vadd.f32 %v2150, %v2189
  %v2191 = vpop.f32.mrb[0].mxu0
  %v2192 = vpop.f32.mrb[0].mxu0
  %v2193 = vpop.f32.mrb[0].mxu0
  %2194 = vdwg.mxu0
  %2195 = vmatprep.subr.bf16.mxu0 0
  %2196 = vmatpush1.bf16.msra.mxu0 %v339
  %2197 = vmatprep.subr.bf16.mxu0 0
  %2198 = vmatpush1.bf16.msra.mxu0 %v340
  %2199 = vmatprep.subr.bf16.mxu0 0
  %2200 = vmatpush1.bf16.msra.mxu0 %v341
  %2201 = vmatprep.subr.bf16.mxu0 0
  %2202 = vmatpush1.bf16.msra.mxu0 %v342
  %2203 = vmatprep.subr.bf16.mxu0 0
  %2204 = vmatpush1.bf16.msra.mxu0 %v343
  %2205 = vmatprep.subr.bf16.mxu0 0
  %2206 = vmatpush1.bf16.msra.mxu0 %v344
  %2207 = vmatprep.subr.bf16.mxu0 0
  %2208 = vmatpush1.bf16.msra.mxu0 %v345
  %2209 = vmatprep.subr.bf16.mxu0 0
  %2210 = vmatpush1.bf16.msra.mxu0 %v346
  %2211 = vmatprep.subr.bf16.mxu0 0
  %2212 = vmatpush1.bf16.msra.mxu0 0
  %2213 = vmatprep.subr.bf16.mxu0 0
  %2214 = vmatpush1.bf16.msra.mxu0 0
  %2215 = vmatprep.subr.bf16.mxu0 0
  %2216 = vmatpush1.bf16.msra.mxu0 0
  %2217 = vmatprep.subr.bf16.mxu0 0
  %2218 = vmatpush1.bf16.msra.mxu0 0
  %2219 = vmatprep.subr.bf16.mxu0 0
  %2220 = vmatpush1.bf16.msra.mxu0 0
  %2221 = vmatprep.subr.bf16.mxu0 0
  %2222 = vmatpush1.bf16.msra.mxu0 0
  %2223 = vmatprep.subr.bf16.mxu0 0
  %2224 = vmatpush1.bf16.msra.mxu0 0
  %2225 = vmatprep.subr.bf16.mxu0 0
  %2226 = vmatpush1.bf16.msra.mxu0 0
  %2227 = vmatprep.mubr.bf16.mxu0 0
  %2228 = vmatmul.mubr.bf16.gmra.mrb[0].mxu0 %v2109
  %v2229 = vpop.f32.mrb[0].mxu0
  %v2230 = vadd.f32 %v2190, %v2229
  %v2231 = vpop.f32.mrb[0].mxu0
  %v2232 = vpop.f32.mrb[0].mxu0
  %v2233 = vpop.f32.mrb[0].mxu0
  %2234 = vdwg.mxu0
  %v2235 = vmax.f32 %v2230, 0.0
  %s2236 = scalar_lea.vmem %s0, 220
  %v2237 = vld [vmem:[%s2236] sm:$0xff]
  %v2238 = vld [vmem:[%s2236 + $0x8] sm:$0xff]
  %v2239 = vld [vmem:[%s2236 + $0x10] sm:$0xf]
  %v2243 = vunpack.c.l.b16 %v2237
  %v2244 = vunpack.c.h.b16 %v2237
  %v2245 = vunpack.c.l.b16 %v2238
  %v2246 = vunpack.c.h.b16 %v2238
  %v2247 = vunpack.c.l.b16 %v2239
  %v2248 = vpack.c.b16 %v2243, %v2243
  %v2249 = vpack.c.b16 %v2244, %v2244
  %v2250 = vpack.c.b16 %v2245, %v2245
  %v2251 = vpack.c.b16 %v2246, %v2246
  %v2252 = vpack.c.b16 %v2247, %v2247
  %2258 = vmatprep.subr.bf16.mxu0 0
  %2259 = vmatpush1.bf16.msra.mxu0 %v307
  %2260 = vmatprep.subr.bf16.mxu0 0
  %2261 = vmatpush1.bf16.msra.mxu0 %v308
  %2262 = vmatprep.subr.bf16.mxu0 0
  %2263 = vmatpush1.bf16.msra.mxu0 %v309
  %2264 = vmatprep.subr.bf16.mxu0 0
  %2265 = vmatpush1.bf16.msra.mxu0 %v310
  %2266 = vmatprep.subr.bf16.mxu0 0
  %2267 = vmatpush1.bf16.msra.mxu0 %v311
  %2268 = vmatprep.subr.bf16.mxu0 0
  %2269 = vmatpush1.bf16.msra.mxu0 %v312
  %2270 = vmatprep.subr.bf16.mxu0 0
  %2271 = vmatpush1.bf16.msra.mxu0 %v313
  %2272 = vmatprep.subr.bf16.mxu0 0
  %2273 = vmatpush1.bf16.msra.mxu0 %v314
  %2274 = vmatprep.subr.bf16.mxu0 0
  %2275 = vmatpush1.bf16.msra.mxu0 %v315
  %2276 = vmatprep.subr.bf16.mxu0 0
  %2277 = vmatpush1.bf16.msra.mxu0 %v316
  %2278 = vmatprep.subr.bf16.mxu0 0
  %2279 = vmatpush1.bf16.msra.mxu0 %v317
  %2280 = vmatprep.subr.bf16.mxu0 0
  %2281 = vmatpush1.bf16.msra.mxu0 %v318
  %2282 = vmatprep.subr.bf16.mxu0 0
  %2283 = vmatpush1.bf16.msra.mxu0 %v319
  %2284 = vmatprep.subr.bf16.mxu0 0
  %2285 = vmatpush1.bf16.msra.mxu0 %v320
  %2286 = vmatprep.subr.bf16.mxu0 0
  %2287 = vmatpush1.bf16.msra.mxu0 %v321
  %2288 = vmatprep.subr.bf16.mxu0 0
  %2289 = vmatpush1.bf16.msra.mxu0 %v322
  %2290 = vmatprep.mubr.bf16.mxu0 %v2249
  %2291 = vmatmul.mubr.bf16.gmra.mrb[0].mxu0 %v2248
  %v2292 = vpop.f32.mrb[0].mxu0
  %v2293 = vadd.f32 %v127, %v2292
  %v2294 = vpop.f32.mrb[0].mxu0
  %v2295 = vpop.f32.mrb[0].mxu0
  %v2296 = vpop.f32.mrb[0].mxu0
  %2297 = vdwg.mxu0
  %2298 = vmatprep.subr.bf16.mxu0 0
  %2299 = vmatpush1.bf16.msra.mxu0 %v323
  %2300 = vmatprep.subr.bf16.mxu0 0
  %2301 = vmatpush1.bf16.msra.mxu0 %v324
  %2302 = vmatprep.subr.bf16.mxu0 0
  %2303 = vmatpush1.bf16.msra.mxu0 %v325
  %2304 = vmatprep.subr.bf16.mxu0 0
  %2305 = vmatpush1.bf16.msra.mxu0 %v326
  %2306 = vmatprep.subr.bf16.mxu0 0
  %2307 = vmatpush1.bf16.msra.mxu0 %v327
  %2308 = vmatprep.subr.bf16.mxu0 0
  %2309 = vmatpush1.bf16.msra.mxu0 %v328
  %2310 = vmatprep.subr.bf16.mxu0 0
  %2311 = vmatpush1.bf16.msra.mxu0 %v329
  %2312 = vmatprep.subr.bf16.mxu0 0
  %2313 = vmatpush1.bf16.msra.mxu0 %v330
  %2314 = vmatprep.subr.bf16.mxu0 0
  %2315 = vmatpush1.bf16.msra.mxu0 %v331
  %2316 = vmatprep.subr.bf16.mxu0 0
  %2317 = vmatpush1.bf16.msra.mxu0 %v332
  %2318 = vmatprep.subr.bf16.mxu0 0
  %2319 = vmatpush1.bf16.msra.mxu0 %v333
  %2320 = vmatprep.subr.bf16.mxu0 0
  %2321 = vmatpush1.bf16.msra.mxu0 %v334
  %2322 = vmatprep.subr.bf16.mxu0 0
  %2323 = vmatpush1.bf16.msra.mxu0 %v335
  %2324 = vmatprep.subr.bf16.mxu0 0
  %2325 = vmatpush1.bf16.msra.mxu0 %v336
  %2326 = vmatprep.subr.bf16.mxu0 0
  %2327 = vmatpush1.bf16.msra.mxu0 %v337
  %2328 = vmatprep.subr.bf16.mxu0 0
  %2329 = vmatpush1.bf16.msra.mxu0 %v338
  %2330 = vmatprep.mubr.bf16.mxu0 %v2251
  %2331 = vmatmul.mubr.bf16.gmra.mrb[0].mxu0 %v2250
  %v2332 = vpop.f32.mrb[0].mxu0
  %v2333 = vadd.f32 %v2293, %v2332
  %v2334 = vpop.f32.mrb[0].mxu0
  %v2335 = vpop.f32.mrb[0].mxu0
  %v2336 = vpop.f32.mrb[0].mxu0
  %2337 = vdwg.mxu0
  %2338 = vmatprep.subr.bf16.mxu0 0
  %2339 = vmatpush1.bf16.msra.mxu0 %v339
  %2340 = vmatprep.subr.bf16.mxu0 0
  %2341 = vmatpush1.bf16.msra.mxu0 %v340
  %2342 = vmatprep.subr.bf16.mxu0 0
  %2343 = vmatpush1.bf16.msra.mxu0 %v341
  %2344 = vmatprep.subr.bf16.mxu0 0
  %2345 = vmatpush1.bf16.msra.mxu0 %v342
  %2346 = vmatprep.subr.bf16.mxu0 0
  %2347 = vmatpush1.bf16.msra.mxu0 %v343
  %2348 = vmatprep.subr.bf16.mxu0 0
  %2349 = vmatpush1.bf16.msra.mxu0 %v344
  %2350 = vmatprep.subr.bf16.mxu0 0
  %2351 = vmatpush1.bf16.msra.mxu0 %v345
  %2352 = vmatprep.subr.bf16.mxu0 0
  %2353 = vmatpush1.bf16.msra.mxu0 %v346
  %2354 = vmatprep.subr.bf16.mxu0 0
  %2355 = vmatpush1.bf16.msra.mxu0 0
  %2356 = vmatprep.subr.bf16.mxu0 0
  %2357 = vmatpush1.bf16.msra.mxu0 0
  %2358 = vmatprep.subr.bf16.mxu0 0
  %2359 = vmatpush1.bf16.msra.mxu0 0
  %2360 = vmatprep.subr.bf16.mxu0 0
  %2361 = vmatpush1.bf16.msra.mxu0 0
  %2362 = vmatprep.subr.bf16.mxu0 0
  %2363 = vmatpush1.bf16.msra.mxu0 0
  %2364 = vmatprep.subr.bf16.mxu0 0
  %2365 = vmatpush1.bf16.msra.mxu0 0
  %2366 = vmatprep.subr.bf16.mxu0 0
  %2367 = vmatpush1.bf16.msra.mxu0 0
  %2368 = vmatprep.subr.bf16.mxu0 0
  %2369 = vmatpush1.bf16.msra.mxu0 0
  %2370 = vmatprep.mubr.bf16.mxu0 0
  %2371 = vmatmul.mubr.bf16.gmra.mrb[0].mxu0 %v2252
  %v2372 = vpop.f32.mrb[0].mxu0
  %v2373 = vadd.f32 %v2333, %v2372
  %v2374 = vpop.f32.mrb[0].mxu0
  %v2375 = vpop.f32.mrb[0].mxu0
  %v2376 = vpop.f32.mrb[0].mxu0
  %2377 = vdwg.mxu0
  %v2378 = vmax.f32 %v2373, 0.0
  %v2379 = vmax.f32 %v2235, %v2378
  %s2380 = scalar_lea.vmem %s0, 280
  %v2381 = vld [vmem:[%s2380] sm:$0xff]
  %v2382 = vld [vmem:[%s2380 + $0x8] sm:$0xff]
  %v2383 = vld [vmem:[%s2380 + $0x10] sm:$0xf]
  %v2387 = vunpack.c.l.b16 %v2381
  %v2388 = vunpack.c.h.b16 %v2381
  %v2389 = vunpack.c.l.b16 %v2382
  %v2390 = vunpack.c.h.b16 %v2382
  %v2391 = vunpack.c.l.b16 %v2383
  %v2392 = vpack.c.b16 %v2387, %v2387
  %v2393 = vpack.c.b16 %v2388, %v2388
  %v2394 = vpack.c.b16 %v2389, %v2389
  %v2395 = vpack.c.b16 %v2390, %v2390
  %v2396 = vpack.c.b16 %v2391, %v2391
  %2402 = vmatprep.subr.bf16.mxu0 0
  %2403 = vmatpush1.bf16.msra.mxu0 %v307
  %2404 = vmatprep.subr.bf16.mxu0 0
  %2405 = vmatpush1.bf16.msra.mxu0 %v308
  %2406 = vmatprep.subr.bf16.mxu0 0
  %2407 = vmatpush1.bf16.msra.mxu0 %v309
  %2408 = vmatprep.subr.bf16.mxu0 0
  %2409 = vmatpush1.bf16.msra.mxu0 %v310
  %2410 = vmatprep.subr.bf16.mxu0 0
  %2411 = vmatpush1.bf16.msra.mxu0 %v311
  %2412 = vmatprep.subr.bf16.mxu0 0
  %2413 = vmatpush1.bf16.msra.mxu0 %v312
  %2414 = vmatprep.subr.bf16.mxu0 0
  %2415 = vmatpush1.bf16.msra.mxu0 %v313
  %2416 = vmatprep.subr.bf16.mxu0 0
  %2417 = vmatpush1.bf16.msra.mxu0 %v314
  %2418 = vmatprep.subr.bf16.mxu0 0
  %2419 = vmatpush1.bf16.msra.mxu0 %v315
  %2420 = vmatprep.subr.bf16.mxu0 0
  %2421 = vmatpush1.bf16.msra.mxu0 %v316
  %2422 = vmatprep.subr.bf16.mxu0 0
  %2423 = vmatpush1.bf16.msra.mxu0 %v317
  %2424 = vmatprep.subr.bf16.mxu0 0
  %2425 = vmatpush1.bf16.msra.mxu0 %v318
  %2426 = vmatprep.subr.bf16.mxu0 0
  %2427 = vmatpush1.bf16.msra.mxu0 %v319
  %2428 = vmatprep.subr.bf16.mxu0 0
  %2429 = vmatpush1.bf16.msra.mxu0 %v320
  %2430 = vmatprep.subr.bf16.mxu0 0
  %2431 = vmatpush1.bf16.msra.mxu0 %v321
  %2432 = vmatprep.subr.bf16.mxu0 0
  %2433 = vmatpush1.bf16.msra.mxu0 %v322
  %2434 = vmatprep.mubr.bf16.mxu0 %v2393
  %2435 = vmatmul.mubr.bf16.gmra.mrb[0].mxu0 %v2392
  %v2436 = vpop.f32.mrb[0].mxu0
  %v2437 = vadd.f32 %v127, %v2436
  %v2438 = vpop.f32.mrb[0].mxu0
  %v2439 = vpop.f32.mrb[0].mxu0
  %v2440 = vpop.f32.mrb[0].mxu0
  %2441 = vdwg.mxu0
  %2442 = vmatprep.subr.bf16.mxu0 0
  %2443 = vmatpush1.bf16.msra.mxu0 %v323
  %2444 = vmatprep.subr.bf16.mxu0 0
  %2445 = vmatpush1.bf16.msra.mxu0 %v324
  %2446 = vmatprep.subr.bf16.mxu0 0
  %2447 = vmatpush1.bf16.msra.mxu0 %v325
  %2448 = vmatprep.subr.bf16.mxu0 0
  %2449 = vmatpush1.bf16.msra.mxu0 %v326
  %2450 = vmatprep.subr.bf16.mxu0 0
  %2451 = vmatpush1.bf16.msra.mxu0 %v327
  %2452 = vmatprep.subr.bf16.mxu0 0
  %2453 = vmatpush1.bf16.msra.mxu0 %v328
  %2454 = vmatprep.subr.bf16.mxu0 0
  %2455 = vmatpush1.bf16.msra.mxu0 %v329
  %2456 = vmatprep.subr.bf16.mxu0 0
  %2457 = vmatpush1.bf16.msra.mxu0 %v330
  %2458 = vmatprep.subr.bf16.mxu0 0
  %2459 = vmatpush1.bf16.msra.mxu0 %v331
  %2460 = vmatprep.subr.bf16.mxu0 0
  %2461 = vmatpush1.bf16.msra.mxu0 %v332
  %2462 = vmatprep.subr.bf16.mxu0 0
  %2463 = vmatpush1.bf16.msra.mxu0 %v333
  %2464 = vmatprep.subr.bf16.mxu0 0
  %2465 = vmatpush1.bf16.msra.mxu0 %v334
  %2466 = vmatprep.subr.bf16.mxu0 0
  %2467 = vmatpush1.bf16.msra.mxu0 %v335
  %2468 = vmatprep.subr.bf16.mxu0 0
  %2469 = vmatpush1.bf16.msra.mxu0 %v336
  %2470 = vmatprep.subr.bf16.mxu0 0
  %2471 = vmatpush1.bf16.msra.mxu0 %v337
  %2472 = vmatprep.subr.bf16.mxu0 0
  %2473 = vmatpush1.bf16.msra.mxu0 %v338
  %2474 = vmatprep.mubr.bf16.mxu0 %v2395
  %2475 = vmatmul.mubr.bf16.gmra.mrb[0].mxu0 %v2394
  %v2476 = vpop.f32.mrb[0].mxu0
  %v2477 = vadd.f32 %v2437, %v2476
  %v2478 = vpop.f32.mrb[0].mxu0
  %v2479 = vpop.f32.mrb[0].mxu0
  %v2480 = vpop.f32.mrb[0].mxu0
  %2481 = vdwg.mxu0
  %2482 = vmatprep.subr.bf16.mxu0 0
  %2483 = vmatpush1.bf16.msra.mxu0 %v339
  %2484 = vmatprep.subr.bf16.mxu0 0
  %2485 = vmatpush1.bf16.msra.mxu0 %v340
  %2486 = vmatprep.subr.bf16.mxu0 0
  %2487 = vmatpush1.bf16.msra.mxu0 %v341
  %2488 = vmatprep.subr.bf16.mxu0 0
  %2489 = vmatpush1.bf16.msra.mxu0 %v342
  %2490 = vmatprep.subr.bf16.mxu0 0
  %2491 = vmatpush1.bf16.msra.mxu0 %v343
  %2492 = vmatprep.subr.bf16.mxu0 0
  %2493 = vmatpush1.bf16.msra.mxu0 %v344
  %2494 = vmatprep.subr.bf16.mxu0 0
  %2495 = vmatpush1.bf16.msra.mxu0 %v345
  %2496 = vmatprep.subr.bf16.mxu0 0
  %2497 = vmatpush1.bf16.msra.mxu0 %v346
  %2498 = vmatprep.subr.bf16.mxu0 0
  %2499 = vmatpush1.bf16.msra.mxu0 0
  %2500 = vmatprep.subr.bf16.mxu0 0
  %2501 = vmatpush1.bf16.msra.mxu0 0
  %2502 = vmatprep.subr.bf16.mxu0 0
  %2503 = vmatpush1.bf16.msra.mxu0 0
  %2504 = vmatprep.subr.bf16.mxu0 0
  %2505 = vmatpush1.bf16.msra.mxu0 0
  %2506 = vmatprep.subr.bf16.mxu0 0
  %2507 = vmatpush1.bf16.msra.mxu0 0
  %2508 = vmatprep.subr.bf16.mxu0 0
  %2509 = vmatpush1.bf16.msra.mxu0 0
  %2510 = vmatprep.subr.bf16.mxu0 0
  %2511 = vmatpush1.bf16.msra.mxu0 0
  %2512 = vmatprep.subr.bf16.mxu0 0
  %2513 = vmatpush1.bf16.msra.mxu0 0
  %2514 = vmatprep.mubr.bf16.mxu0 0
  %2515 = vmatmul.mubr.bf16.gmra.mrb[0].mxu0 %v2396
  %v2516 = vpop.f32.mrb[0].mxu0
  %v2517 = vadd.f32 %v2477, %v2516
  %v2518 = vpop.f32.mrb[0].mxu0
  %v2519 = vpop.f32.mrb[0].mxu0
  %v2520 = vpop.f32.mrb[0].mxu0
  %2521 = vdwg.mxu0
  %v2522 = vmax.f32 %v2517, 0.0
  %v2523 = vmax.f32 %v2379, %v2522
  %s2524 = scalar_lea.vmem %s0, 300
  %v2525 = vld [vmem:[%s2524] sm:$0xff]
  %v2526 = vld [vmem:[%s2524 + $0x8] sm:$0xff]
  %v2527 = vld [vmem:[%s2524 + $0x10] sm:$0xf]
  %v2531 = vunpack.c.l.b16 %v2525
  %v2532 = vunpack.c.h.b16 %v2525
  %v2533 = vunpack.c.l.b16 %v2526
  %v2534 = vunpack.c.h.b16 %v2526
  %v2535 = vunpack.c.l.b16 %v2527
  %v2536 = vpack.c.b16 %v2531, %v2531
  %v2537 = vpack.c.b16 %v2532, %v2532
  %v2538 = vpack.c.b16 %v2533, %v2533
  %v2539 = vpack.c.b16 %v2534, %v2534
  %v2540 = vpack.c.b16 %v2535, %v2535
  %2546 = vmatprep.subr.bf16.mxu0 0
  %2547 = vmatpush1.bf16.msra.mxu0 %v307
  %2548 = vmatprep.subr.bf16.mxu0 0
  %2549 = vmatpush1.bf16.msra.mxu0 %v308
  %2550 = vmatprep.subr.bf16.mxu0 0
  %2551 = vmatpush1.bf16.msra.mxu0 %v309
  %2552 = vmatprep.subr.bf16.mxu0 0
  %2553 = vmatpush1.bf16.msra.mxu0 %v310
  %2554 = vmatprep.subr.bf16.mxu0 0
  %2555 = vmatpush1.bf16.msra.mxu0 %v311
  %2556 = vmatprep.subr.bf16.mxu0 0
  %2557 = vmatpush1.bf16.msra.mxu0 %v312
  %2558 = vmatprep.subr.bf16.mxu0 0
  %2559 = vmatpush1.bf16.msra.mxu0 %v313
  %2560 = vmatprep.subr.bf16.mxu0 0
  %2561 = vmatpush1.bf16.msra.mxu0 %v314
  %2562 = vmatprep.subr.bf16.mxu0 0
  %2563 = vmatpush1.bf16.msra.mxu0 %v315
  %2564 = vmatprep.subr.bf16.mxu0 0
  %2565 = vmatpush1.bf16.msra.mxu0 %v316
  %2566 = vmatprep.subr.bf16.mxu0 0
  %2567 = vmatpush1.bf16.msra.mxu0 %v317
  %2568 = vmatprep.subr.bf16.mxu0 0
  %2569 = vmatpush1.bf16.msra.mxu0 %v318
  %2570 = vmatprep.subr.bf16.mxu0 0
  %2571 = vmatpush1.bf16.msra.mxu0 %v319
  %2572 = vmatprep.subr.bf16.mxu0 0
  %2573 = vmatpush1.bf16.msra.mxu0 %v320
  %2574 = vmatprep.subr.bf16.mxu0 0
  %2575 = vmatpush1.bf16.msra.mxu0 %v321
  %2576 = vmatprep.subr.bf16.mxu0 0
  %2577 = vmatpush1.bf16.msra.mxu0 %v322
  %2578 = vmatprep.mubr.bf16.mxu0 %v2537
  %2579 = vmatmul.mubr.bf16.gmra.mrb[0].mxu0 %v2536
  %v2580 = vpop.f32.mrb[0].mxu0
  %v2581 = vadd.f32 %v127, %v2580
  %v2582 = vpop.f32.mrb[0].mxu0
  %v2583 = vpop.f32.mrb[0].mxu0
  %v2584 = vpop.f32.mrb[0].mxu0
  %2585 = vdwg.mxu0
  %2586 = vmatprep.subr.bf16.mxu0 0
  %2587 = vmatpush1.bf16.msra.mxu0 %v323
  %2588 = vmatprep.subr.bf16.mxu0 0
  %2589 = vmatpush1.bf16.msra.mxu0 %v324
  %2590 = vmatprep.subr.bf16.mxu0 0
  %2591 = vmatpush1.bf16.msra.mxu0 %v325
  %2592 = vmatprep.subr.bf16.mxu0 0
  %2593 = vmatpush1.bf16.msra.mxu0 %v326
  %2594 = vmatprep.subr.bf16.mxu0 0
  %2595 = vmatpush1.bf16.msra.mxu0 %v327
  %2596 = vmatprep.subr.bf16.mxu0 0
  %2597 = vmatpush1.bf16.msra.mxu0 %v328
  %2598 = vmatprep.subr.bf16.mxu0 0
  %2599 = vmatpush1.bf16.msra.mxu0 %v329
  %2600 = vmatprep.subr.bf16.mxu0 0
  %2601 = vmatpush1.bf16.msra.mxu0 %v330
  %2602 = vmatprep.subr.bf16.mxu0 0
  %2603 = vmatpush1.bf16.msra.mxu0 %v331
  %2604 = vmatprep.subr.bf16.mxu0 0
  %2605 = vmatpush1.bf16.msra.mxu0 %v332
  %2606 = vmatprep.subr.bf16.mxu0 0
  %2607 = vmatpush1.bf16.msra.mxu0 %v333
  %2608 = vmatprep.subr.bf16.mxu0 0
  %2609 = vmatpush1.bf16.msra.mxu0 %v334
  %2610 = vmatprep.subr.bf16.mxu0 0
  %2611 = vmatpush1.bf16.msra.mxu0 %v335
  %2612 = vmatprep.subr.bf16.mxu0 0
  %2613 = vmatpush1.bf16.msra.mxu0 %v336
  %2614 = vmatprep.subr.bf16.mxu0 0
  %2615 = vmatpush1.bf16.msra.mxu0 %v337
  %2616 = vmatprep.subr.bf16.mxu0 0
  %2617 = vmatpush1.bf16.msra.mxu0 %v338
  %2618 = vmatprep.mubr.bf16.mxu0 %v2539
  %2619 = vmatmul.mubr.bf16.gmra.mrb[0].mxu0 %v2538
  %v2620 = vpop.f32.mrb[0].mxu0
  %v2621 = vadd.f32 %v2581, %v2620
  %v2622 = vpop.f32.mrb[0].mxu0
  %v2623 = vpop.f32.mrb[0].mxu0
  %v2624 = vpop.f32.mrb[0].mxu0
  %2625 = vdwg.mxu0
  %2626 = vmatprep.subr.bf16.mxu0 0
  %2627 = vmatpush1.bf16.msra.mxu0 %v339
  %2628 = vmatprep.subr.bf16.mxu0 0
  %2629 = vmatpush1.bf16.msra.mxu0 %v340
  %2630 = vmatprep.subr.bf16.mxu0 0
  %2631 = vmatpush1.bf16.msra.mxu0 %v341
  %2632 = vmatprep.subr.bf16.mxu0 0
  %2633 = vmatpush1.bf16.msra.mxu0 %v342
  %2634 = vmatprep.subr.bf16.mxu0 0
  %2635 = vmatpush1.bf16.msra.mxu0 %v343
  %2636 = vmatprep.subr.bf16.mxu0 0
  %2637 = vmatpush1.bf16.msra.mxu0 %v344
  %2638 = vmatprep.subr.bf16.mxu0 0
  %2639 = vmatpush1.bf16.msra.mxu0 %v345
  %2640 = vmatprep.subr.bf16.mxu0 0
  %2641 = vmatpush1.bf16.msra.mxu0 %v346
  %2642 = vmatprep.subr.bf16.mxu0 0
  %2643 = vmatpush1.bf16.msra.mxu0 0
  %2644 = vmatprep.subr.bf16.mxu0 0
  %2645 = vmatpush1.bf16.msra.mxu0 0
  %2646 = vmatprep.subr.bf16.mxu0 0
  %2647 = vmatpush1.bf16.msra.mxu0 0
  %2648 = vmatprep.subr.bf16.mxu0 0
  %2649 = vmatpush1.bf16.msra.mxu0 0
  %2650 = vmatprep.subr.bf16.mxu0 0
  %2651 = vmatpush1.bf16.msra.mxu0 0
  %2652 = vmatprep.subr.bf16.mxu0 0
  %2653 = vmatpush1.bf16.msra.mxu0 0
  %2654 = vmatprep.subr.bf16.mxu0 0
  %2655 = vmatpush1.bf16.msra.mxu0 0
  %2656 = vmatprep.subr.bf16.mxu0 0
  %2657 = vmatpush1.bf16.msra.mxu0 0
  %2658 = vmatprep.mubr.bf16.mxu0 0
  %2659 = vmatmul.mubr.bf16.gmra.mrb[0].mxu0 %v2540
  %v2660 = vpop.f32.mrb[0].mxu0
  %v2661 = vadd.f32 %v2621, %v2660
  %v2662 = vpop.f32.mrb[0].mxu0
  %v2663 = vpop.f32.mrb[0].mxu0
  %v2664 = vpop.f32.mrb[0].mxu0
  %2665 = vdwg.mxu0
  %v2666 = vmax.f32 %v2661, 0.0
  %v2667 = vmax.f32 %v2523, %v2666
  %v2668 = vpack.c.bf16 %v2667, %v2667
  %v2669 = vld [vmem:[%s4] sm:$0x3]
  %v2670 = vld [vmem:[%s3 + $0x200] sm:$0xff]
  %v2671 = vld [vmem:[%s3 + $0x208] sm:$0xff]
  %v2672 = vld [vmem:[%s3 + $0x210] sm:$0xff]
  %v2673 = vld [vmem:[%s3 + $0x218] sm:$0xff]
  %v2674 = vld [vmem:[%s3 + $0x220] sm:$0xff]
  %v2675 = vld [vmem:[%s3 + $0x228] sm:$0xff]
  %v2676 = vld [vmem:[%s3 + $0x230] sm:$0xff]
  %v2677 = vld [vmem:[%s3 + $0x238] sm:$0xff]
  %v2678 = vld [vmem:[%s3 + $0x240] sm:$0xff]
  %v2679 = vld [vmem:[%s3 + $0x248] sm:$0xff]
  %v2680 = vld [vmem:[%s3 + $0x250] sm:$0xff]
  %v2681 = vld [vmem:[%s3 + $0x258] sm:$0xff]
  %v2682 = vld [vmem:[%s3 + $0x260] sm:$0xff]
  %v2683 = vld [vmem:[%s3 + $0x268] sm:$0xff]
  %v2684 = vld [vmem:[%s3 + $0x270] sm:$0xff]
  %v2685 = vld [vmem:[%s3 + $0x278] sm:$0xff]
  %v2686 = vld [vmem:[%s3 + $0x280] sm:$0xff]
  %v2687 = vld [vmem:[%s3 + $0x288] sm:$0xff]
  %v2688 = vld [vmem:[%s3 + $0x290] sm:$0xff]
  %v2689 = vld [vmem:[%s3 + $0x298] sm:$0xff]
  %v2690 = vld [vmem:[%s3 + $0x2a0] sm:$0xff]
  %v2691 = vld [vmem:[%s3 + $0x2a8] sm:$0xff]
  %v2692 = vld [vmem:[%s3 + $0x2b0] sm:$0xff]
  %v2693 = vld [vmem:[%s3 + $0x2b8] sm:$0xff]
  %v2694 = vld [vmem:[%s3 + $0x2c0] sm:$0xff]
  %v2695 = vld [vmem:[%s3 + $0x2c8] sm:$0xff]
  %v2696 = vld [vmem:[%s3 + $0x2d0] sm:$0xff]
  %v2697 = vld [vmem:[%s3 + $0x2d8] sm:$0xff]
  %v2698 = vld [vmem:[%s3 + $0x2e0] sm:$0xff]
  %v2699 = vld [vmem:[%s3 + $0x2e8] sm:$0xff]
  %v2700 = vld [vmem:[%s3 + $0x2f0] sm:$0xff]
  %v2701 = vld [vmem:[%s3 + $0x2f8] sm:$0xff]
  %v2718 = vunpack.c.l.b16 %v2686
  %v2719 = vunpack.c.h.b16 %v2686
  %v2720 = vunpack.c.l.b16 %v2687
  %v2721 = vunpack.c.h.b16 %v2687
  %v2722 = vunpack.c.l.b16 %v2688
  %v2723 = vunpack.c.h.b16 %v2688
  %v2724 = vunpack.c.l.b16 %v2689
  %v2725 = vunpack.c.h.b16 %v2689
  %v2726 = vunpack.c.l.b16 %v2690
  %v2727 = vunpack.c.h.b16 %v2690
  %v2728 = vunpack.c.l.b16 %v2691
  %v2729 = vunpack.c.h.b16 %v2691
  %v2730 = vunpack.c.l.b16 %v2692
  %v2731 = vunpack.c.h.b16 %v2692
  %v2732 = vunpack.c.l.b16 %v2693
  %v2733 = vunpack.c.h.b16 %v2693
  %v2734 = vunpack.c.l.b16 %v2694
  %v2735 = vunpack.c.h.b16 %v2694
  %v2736 = vunpack.c.l.b16 %v2695
  %v2737 = vunpack.c.h.b16 %v2695
  %v2738 = vunpack.c.l.b16 %v2696
  %v2739 = vunpack.c.h.b16 %v2696
  %v2740 = vunpack.c.l.b16 %v2697
  %v2741 = vunpack.c.h.b16 %v2697
  %v2742 = vunpack.c.l.b16 %v2698
  %v2743 = vunpack.c.h.b16 %v2698
  %v2744 = vunpack.c.l.b16 %v2699
  %v2745 = vunpack.c.h.b16 %v2699
  %v2746 = vunpack.c.l.b16 %v2700
  %v2747 = vunpack.c.h.b16 %v2700
  %v2748 = vunpack.c.l.b16 %v2701
  %v2749 = vunpack.c.h.b16 %v2701
  %v2750 = vpack.c.b16 %v2720, %v2718
  %v2751 = vpack.c.b16 %v2721, %v2719
  %v2752 = vpack.c.b16 %v2724, %v2722
  %v2753 = vpack.c.b16 %v2725, %v2723
  %v2754 = vpack.c.b16 %v2728, %v2726
  %v2755 = vpack.c.b16 %v2729, %v2727
  %v2756 = vpack.c.b16 %v2732, %v2730
  %v2757 = vpack.c.b16 %v2733, %v2731
  %v2758 = vpack.c.b16 %v2736, %v2734
  %v2759 = vpack.c.b16 %v2737, %v2735
  %v2760 = vpack.c.b16 %v2740, %v2738
  %v2761 = vpack.c.b16 %v2741, %v2739
  %v2762 = vpack.c.b16 %v2744, %v2742
  %v2763 = vpack.c.b16 %v2745, %v2743
  %v2764 = vpack.c.b16 %v2748, %v2746
  %v2765 = vpack.c.b16 %v2749, %v2747
  %2782 = vmatprep.subr.bf16.mxu0 %v2751
  %2783 = vmatpush1.bf16.msra.mxu0 %v2750
  %2784 = vmatprep.subr.bf16.mxu0 %v2753
  %2785 = vmatpush1.bf16.msra.mxu0 %v2752
  %2786 = vmatprep.subr.bf16.mxu0 %v2755
  %2787 = vmatpush1.bf16.msra.mxu0 %v2754
  %2788 = vmatprep.subr.bf16.mxu0 %v2757
  %2789 = vmatpush1.bf16.msra.mxu0 %v2756
  %2790 = vmatprep.subr.bf16.mxu0 %v2759
  %2791 = vmatpush1.bf16.msra.mxu0 %v2758
  %2792 = vmatprep.subr.bf16.mxu0 %v2761
  %2793 = vmatpush1.bf16.msra.mxu0 %v2760
  %2794 = vmatprep.subr.bf16.mxu0 %v2763
  %2795 = vmatpush1.bf16.msra.mxu0 %v2762
  %2796 = vmatprep.subr.bf16.mxu0 %v2765
  %2797 = vmatpush1.bf16.msra.mxu0 %v2764
  %2798 = vmatprep.subr.bf16.mxu0 0
  %2799 = vmatpush1.bf16.msra.mxu0 0
  %2800 = vmatprep.subr.bf16.mxu0 0
  %2801 = vmatpush1.bf16.msra.mxu0 0
  %2802 = vmatprep.subr.bf16.mxu0 0
  %2803 = vmatpush1.bf16.msra.mxu0 0
  %2804 = vmatprep.subr.bf16.mxu0 0
  %2805 = vmatpush1.bf16.msra.mxu0 0
  %2806 = vmatprep.subr.bf16.mxu0 0
  %2807 = vmatpush1.bf16.msra.mxu0 0
  %2808 = vmatprep.subr.bf16.mxu0 0
  %2809 = vmatpush1.bf16.msra.mxu0 0
  %2810 = vmatprep.subr.bf16.mxu0 0
  %2811 = vmatpush1.bf16.msra.mxu0 0
  %2812 = vmatprep.subr.bf16.mxu0 0
  %2813 = vmatpush1.bf16.msra.mxu0 0
  %2814 = vmatprep.mubr.bf16.mxu0 0
  %2815 = vmatmul.mubr.bf16.gmra.mrb[0].mxu0 %v1516
  %v2816 = vpop.f32.mrb[0].mxu0
  %v2817 = vadd.f32 0.0, %v2816
  %v2818 = vpop.f32.mrb[0].mxu0
  %v2819 = vadd.f32 0.0, %v2818
  %v2820 = vpop.f32.mrb[0].mxu0
  %v2821 = vpop.f32.mrb[0].mxu0
  %2822 = vdwg.mxu0
  %v2839 = vunpack.c.l.b16 %v2670
  %v2840 = vunpack.c.h.b16 %v2670
  %v2841 = vunpack.c.l.b16 %v2671
  %v2842 = vunpack.c.h.b16 %v2671
  %v2843 = vunpack.c.l.b16 %v2672
  %v2844 = vunpack.c.h.b16 %v2672
  %v2845 = vunpack.c.l.b16 %v2673
  %v2846 = vunpack.c.h.b16 %v2673
  %v2847 = vunpack.c.l.b16 %v2674
  %v2848 = vunpack.c.h.b16 %v2674
  %v2849 = vunpack.c.l.b16 %v2675
  %v2850 = vunpack.c.h.b16 %v2675
  %v2851 = vunpack.c.l.b16 %v2676
  %v2852 = vunpack.c.h.b16 %v2676
  %v2853 = vunpack.c.l.b16 %v2677
  %v2854 = vunpack.c.h.b16 %v2677
  %v2855 = vunpack.c.l.b16 %v2678
  %v2856 = vunpack.c.h.b16 %v2678
  %v2857 = vunpack.c.l.b16 %v2679
  %v2858 = vunpack.c.h.b16 %v2679
  %v2859 = vunpack.c.l.b16 %v2680
  %v2860 = vunpack.c.h.b16 %v2680
  %v2861 = vunpack.c.l.b16 %v2681
  %v2862 = vunpack.c.h.b16 %v2681
  %v2863 = vunpack.c.l.b16 %v2682
  %v2864 = vunpack.c.h.b16 %v2682
  %v2865 = vunpack.c.l.b16 %v2683
  %v2866 = vunpack.c.h.b16 %v2683
  %v2867 = vunpack.c.l.b16 %v2684
  %v2868 = vunpack.c.h.b16 %v2684
  %v2869 = vunpack.c.l.b16 %v2685
  %v2870 = vunpack.c.h.b16 %v2685
  %v2871 = vpack.c.b16 %v2841, %v2839
  %v2872 = vpack.c.b16 %v2842, %v2840
  %v2873 = vpack.c.b16 %v2845, %v2843
  %v2874 = vpack.c.b16 %v2846, %v2844
  %v2875 = vpack.c.b16 %v2849, %v2847
  %v2876 = vpack.c.b16 %v2850, %v2848
  %v2877 = vpack.c.b16 %v2853, %v2851
  %v2878 = vpack.c.b16 %v2854, %v2852
  %v2879 = vpack.c.b16 %v2857, %v2855
  %v2880 = vpack.c.b16 %v2858, %v2856
  %v2881 = vpack.c.b16 %v2861, %v2859
  %v2882 = vpack.c.b16 %v2862, %v2860
  %v2883 = vpack.c.b16 %v2865, %v2863
  %v2884 = vpack.c.b16 %v2866, %v2864
  %v2885 = vpack.c.b16 %v2869, %v2867
  %v2886 = vpack.c.b16 %v2870, %v2868
  %2903 = vmatprep.subr.bf16.mxu0 %v2872
  %2904 = vmatpush1.bf16.msra.mxu0 %v2871
  %2905 = vmatprep.subr.bf16.mxu0 %v2874
  %2906 = vmatpush1.bf16.msra.mxu0 %v2873
  %2907 = vmatprep.subr.bf16.mxu0 %v2876
  %2908 = vmatpush1.bf16.msra.mxu0 %v2875
  %2909 = vmatprep.subr.bf16.mxu0 %v2878
  %2910 = vmatpush1.bf16.msra.mxu0 %v2877
  %2911 = vmatprep.subr.bf16.mxu0 %v2880
  %2912 = vmatpush1.bf16.msra.mxu0 %v2879
  %2913 = vmatprep.subr.bf16.mxu0 %v2882
  %2914 = vmatpush1.bf16.msra.mxu0 %v2881
  %2915 = vmatprep.subr.bf16.mxu0 %v2884
  %2916 = vmatpush1.bf16.msra.mxu0 %v2883
  %2917 = vmatprep.subr.bf16.mxu0 %v2886
  %2918 = vmatpush1.bf16.msra.mxu0 %v2885
  %2919 = vmatprep.subr.bf16.mxu0 0
  %2920 = vmatpush1.bf16.msra.mxu0 0
  %2921 = vmatprep.subr.bf16.mxu0 0
  %2922 = vmatpush1.bf16.msra.mxu0 0
  %2923 = vmatprep.subr.bf16.mxu0 0
  %2924 = vmatpush1.bf16.msra.mxu0 0
  %2925 = vmatprep.subr.bf16.mxu0 0
  %2926 = vmatpush1.bf16.msra.mxu0 0
  %2927 = vmatprep.subr.bf16.mxu0 0
  %2928 = vmatpush1.bf16.msra.mxu0 0
  %2929 = vmatprep.subr.bf16.mxu0 0
  %2930 = vmatpush1.bf16.msra.mxu0 0
  %2931 = vmatprep.subr.bf16.mxu0 0
  %2932 = vmatpush1.bf16.msra.mxu0 0
  %2933 = vmatprep.subr.bf16.mxu0 0
  %2934 = vmatpush1.bf16.msra.mxu0 0
  %2935 = vmatprep.mubr.bf16.mxu0 0
  %2936 = vmatmul.mubr.bf16.gmra.mrb[0].mxu0 %v940
  %v2937 = vpop.f32.mrb[0].mxu0
  %v2938 = vadd.f32 %v2817, %v2937
  %v2939 = vpop.f32.mrb[0].mxu0
  %v2940 = vadd.f32 %v2819, %v2939
  %v2941 = vpop.f32.mrb[0].mxu0
  %v2942 = vpop.f32.mrb[0].mxu0
  %2943 = vdwg.mxu0
  %v2944 = vld [vmem:[%s3 + $0x380] sm:$0xff]
  %v2945 = vld [vmem:[%s3 + $0x388] sm:$0xff]
  %v2946 = vld [vmem:[%s3 + $0x390] sm:$0xff]
  %v2947 = vld [vmem:[%s3 + $0x398] sm:$0xff]
  %v2948 = vld [vmem:[%s3 + $0x3a0] sm:$0xff]
  %v2949 = vld [vmem:[%s3 + $0x3a8] sm:$0xff]
  %v2950 = vld [vmem:[%s3 + $0x3b0] sm:$0xff]
  %v2951 = vld [vmem:[%s3 + $0x3b8] sm:$0xff]
  %v2952 = vld [vmem:[%s3 + $0x3c0] sm:$0xff]
  %v2953 = vld [vmem:[%s3 + $0x3c8] sm:$0xff]
  %v2954 = vld [vmem:[%s3 + $0x3d0] sm:$0xff]
  %v2955 = vld [vmem:[%s3 + $0x3d8] sm:$0xff]
  %v2956 = vld [vmem:[%s3 + $0x3e0] sm:$0xff]
  %v2957 = vld [vmem:[%s3 + $0x3e8] sm:$0xff]
  %v2958 = vld [vmem:[%s3 + $0x3f0] sm:$0xff]
  %v2959 = vld [vmem:[%s3 + $0x3f8] sm:$0xff]
  %v2976 = vunpack.c.l.b16 %v2944
  %v2977 = vunpack.c.h.b16 %v2944
  %v2978 = vunpack.c.l.b16 %v2945
  %v2979 = vunpack.c.h.b16 %v2945
  %v2980 = vunpack.c.l.b16 %v2946
  %v2981 = vunpack.c.h.b16 %v2946
  %v2982 = vunpack.c.l.b16 %v2947
  %v2983 = vunpack.c.h.b16 %v2947
  %v2984 = vunpack.c.l.b16 %v2948
  %v2985 = vunpack.c.h.b16 %v2948
  %v2986 = vunpack.c.l.b16 %v2949
  %v2987 = vunpack.c.h.b16 %v2949
  %v2988 = vunpack.c.l.b16 %v2950
  %v2989 = vunpack.c.h.b16 %v2950
  %v2990 = vunpack.c.l.b16 %v2951
  %v2991 = vunpack.c.h.b16 %v2951
  %v2992 = vunpack.c.l.b16 %v2952
  %v2993 = vunpack.c.h.b16 %v2952
  %v2994 = vunpack.c.l.b16 %v2953
  %v2995 = vunpack.c.h.b16 %v2953
  %v2996 = vunpack.c.l.b16 %v2954
  %v2997 = vunpack.c.h.b16 %v2954
  %v2998 = vunpack.c.l.b16 %v2955
  %v2999 = vunpack.c.h.b16 %v2955
  %v3000 = vunpack.c.l.b16 %v2956
  %v3001 = vunpack.c.h.b16 %v2956
  %v3002 = vunpack.c.l.b16 %v2957
  %v3003 = vunpack.c.h.b16 %v2957
  %v3004 = vunpack.c.l.b16 %v2958
  %v3005 = vunpack.c.h.b16 %v2958
  %v3006 = vunpack.c.l.b16 %v2959
  %v3007 = vunpack.c.h.b16 %v2959
  %v3008 = vpack.c.b16 %v2978, %v2976
  %v3009 = vpack.c.b16 %v2979, %v2977
  %v3010 = vpack.c.b16 %v2982, %v2980
  %v3011 = vpack.c.b16 %v2983, %v2981
  %v3012 = vpack.c.b16 %v2986, %v2984
  %v3013 = vpack.c.b16 %v2987, %v2985
  %v3014 = vpack.c.b16 %v2990, %v2988
  %v3015 = vpack.c.b16 %v2991, %v2989
  %v3016 = vpack.c.b16 %v2994, %v2992
  %v3017 = vpack.c.b16 %v2995, %v2993
  %v3018 = vpack.c.b16 %v2998, %v2996
  %v3019 = vpack.c.b16 %v2999, %v2997
  %v3020 = vpack.c.b16 %v3002, %v3000
  %v3021 = vpack.c.b16 %v3003, %v3001
  %v3022 = vpack.c.b16 %v3006, %v3004
  %v3023 = vpack.c.b16 %v3007, %v3005
  %3040 = vmatprep.subr.bf16.mxu0 %v3009
  %3041 = vmatpush1.bf16.msra.mxu0 %v3008
  %3042 = vmatprep.subr.bf16.mxu0 %v3011
  %3043 = vmatpush1.bf16.msra.mxu0 %v3010
  %3044 = vmatprep.subr.bf16.mxu0 %v3013
  %3045 = vmatpush1.bf16.msra.mxu0 %v3012
  %3046 = vmatprep.subr.bf16.mxu0 %v3015
  %3047 = vmatpush1.bf16.msra.mxu0 %v3014
  %3048 = vmatprep.subr.bf16.mxu0 %v3017
  %3049 = vmatpush1.bf16.msra.mxu0 %v3016
  %3050 = vmatprep.subr.bf16.mxu0 %v3019
  %3051 = vmatpush1.bf16.msra.mxu0 %v3018
  %3052 = vmatprep.subr.bf16.mxu0 %v3021
  %3053 = vmatpush1.bf16.msra.mxu0 %v3020
  %3054 = vmatprep.subr.bf16.mxu0 %v3023
  %3055 = vmatpush1.bf16.msra.mxu0 %v3022
  %3056 = vmatprep.subr.bf16.mxu0 0
  %3057 = vmatpush1.bf16.msra.mxu0 0
  %3058 = vmatprep.subr.bf16.mxu0 0
  %3059 = vmatpush1.bf16.msra.mxu0 0
  %3060 = vmatprep.subr.bf16.mxu0 0
  %3061 = vmatpush1.bf16.msra.mxu0 0
  %3062 = vmatprep.subr.bf16.mxu0 0
  %3063 = vmatpush1.bf16.msra.mxu0 0
  %3064 = vmatprep.subr.bf16.mxu0 0
  %3065 = vmatpush1.bf16.msra.mxu0 0
  %3066 = vmatprep.subr.bf16.mxu0 0
  %3067 = vmatpush1.bf16.msra.mxu0 0
  %3068 = vmatprep.subr.bf16.mxu0 0
  %3069 = vmatpush1.bf16.msra.mxu0 0
  %3070 = vmatprep.subr.bf16.mxu0 0
  %3071 = vmatpush1.bf16.msra.mxu0 0
  %3072 = vmatprep.mubr.bf16.mxu0 0
  %3073 = vmatmul.mubr.bf16.gmra.mrb[0].mxu0 %v2092
  %v3074 = vpop.f32.mrb[0].mxu0
  %v3075 = vadd.f32 0.0, %v3074
  %v3076 = vpop.f32.mrb[0].mxu0
  %v3077 = vadd.f32 0.0, %v3076
  %v3078 = vpop.f32.mrb[0].mxu0
  %v3079 = vpop.f32.mrb[0].mxu0
  %3080 = vdwg.mxu0
  %v3081 = vadd.f32 %v2938, %v3075
  %v3082 = vadd.f32 %v2940, %v3077
  %v3083 = vld [vmem:[%s3 + $0x400] sm:$0xff]
  %v3084 = vld [vmem:[%s3 + $0x408] sm:$0xff]
  %v3085 = vld [vmem:[%s3 + $0x410] sm:$0xff]
  %v3086 = vld [vmem:[%s3 + $0x418] sm:$0xff]
  %v3087 = vld [vmem:[%s3 + $0x420] sm:$0xff]
  %v3088 = vld [vmem:[%s3 + $0x428] sm:$0xff]
  %v3089 = vld [vmem:[%s3 + $0x430] sm:$0xff]
  %v3090 = vld [vmem:[%s3 + $0x438] sm:$0xff]
  %v3091 = vld [vmem:[%s3 + $0x440] sm:$0xff]
  %v3092 = vld [vmem:[%s3 + $0x448] sm:$0xff]
  %v3093 = vld [vmem:[%s3 + $0x450] sm:$0xff]
  %v3094 = vld [vmem:[%s3 + $0x458] sm:$0xff]
  %v3095 = vld [vmem:[%s3 + $0x460] sm:$0xff]
  %v3096 = vld [vmem:[%s3 + $0x468] sm:$0xff]
  %v3097 = vld [vmem:[%s3 + $0x470] sm:$0xff]
  %v3098 = vld [vmem:[%s3 + $0x478] sm:$0xff]
  %v3115 = vunpack.c.l.b16 %v3083
  %v3116 = vunpack.c.h.b16 %v3083
  %v3117 = vunpack.c.l.b16 %v3084
  %v3118 = vunpack.c.h.b16 %v3084
  %v3119 = vunpack.c.l.b16 %v3085
  %v3120 = vunpack.c.h.b16 %v3085
  %v3121 = vunpack.c.l.b16 %v3086
  %v3122 = vunpack.c.h.b16 %v3086
  %v3123 = vunpack.c.l.b16 %v3087
  %v3124 = vunpack.c.h.b16 %v3087
  %v3125 = vunpack.c.l.b16 %v3088
  %v3126 = vunpack.c.h.b16 %v3088
  %v3127 = vunpack.c.l.b16 %v3089
  %v3128 = vunpack.c.h.b16 %v3089
  %v3129 = vunpack.c.l.b16 %v3090
  %v3130 = vunpack.c.h.b16 %v3090
  %v3131 = vunpack.c.l.b16 %v3091
  %v3132 = vunpack.c.h.b16 %v3091
  %v3133 = vunpack.c.l.b16 %v3092
  %v3134 = vunpack.c.h.b16 %v3092
  %v3135 = vunpack.c.l.b16 %v3093
  %v3136 = vunpack.c.h.b16 %v3093
  %v3137 = vunpack.c.l.b16 %v3094
  %v3138 = vunpack.c.h.b16 %v3094
  %v3139 = vunpack.c.l.b16 %v3095
  %v3140 = vunpack.c.h.b16 %v3095
  %v3141 = vunpack.c.l.b16 %v3096
  %v3142 = vunpack.c.h.b16 %v3096
  %v3143 = vunpack.c.l.b16 %v3097
  %v3144 = vunpack.c.h.b16 %v3097
  %v3145 = vunpack.c.l.b16 %v3098
  %v3146 = vunpack.c.h.b16 %v3098
  %v3147 = vpack.c.b16 %v3117, %v3115
  %v3148 = vpack.c.b16 %v3118, %v3116
  %v3149 = vpack.c.b16 %v3121, %v3119
  %v3150 = vpack.c.b16 %v3122, %v3120
  %v3151 = vpack.c.b16 %v3125, %v3123
  %v3152 = vpack.c.b16 %v3126, %v3124
  %v3153 = vpack.c.b16 %v3129, %v3127
  %v3154 = vpack.c.b16 %v3130, %v3128
  %v3155 = vpack.c.b16 %v3133, %v3131
  %v3156 = vpack.c.b16 %v3134, %v3132
  %v3157 = vpack.c.b16 %v3137, %v3135
  %v3158 = vpack.c.b16 %v3138, %v3136
  %v3159 = vpack.c.b16 %v3141, %v3139
  %v3160 = vpack.c.b16 %v3142, %v3140
  %v3161 = vpack.c.b16 %v3145, %v3143
  %v3162 = vpack.c.b16 %v3146, %v3144
  %3179 = vmatprep.subr.bf16.mxu0 %v3148
  %3180 = vmatpush1.bf16.msra.mxu0 %v3147
  %3181 = vmatprep.subr.bf16.mxu0 %v3150
  %3182 = vmatpush1.bf16.msra.mxu0 %v3149
  %3183 = vmatprep.subr.bf16.mxu0 %v3152
  %3184 = vmatpush1.bf16.msra.mxu0 %v3151
  %3185 = vmatprep.subr.bf16.mxu0 %v3154
  %3186 = vmatpush1.bf16.msra.mxu0 %v3153
  %3187 = vmatprep.subr.bf16.mxu0 %v3156
  %3188 = vmatpush1.bf16.msra.mxu0 %v3155
  %3189 = vmatprep.subr.bf16.mxu0 %v3158
  %3190 = vmatpush1.bf16.msra.mxu0 %v3157
  %3191 = vmatprep.subr.bf16.mxu0 %v3160
  %3192 = vmatpush1.bf16.msra.mxu0 %v3159
  %3193 = vmatprep.subr.bf16.mxu0 %v3162
  %3194 = vmatpush1.bf16.msra.mxu0 %v3161
  %3195 = vmatprep.subr.bf16.mxu0 0
  %3196 = vmatpush1.bf16.msra.mxu0 0
  %3197 = vmatprep.subr.bf16.mxu0 0
  %3198 = vmatpush1.bf16.msra.mxu0 0
  %3199 = vmatprep.subr.bf16.mxu0 0
  %3200 = vmatpush1.bf16.msra.mxu0 0
  %3201 = vmatprep.subr.bf16.mxu0 0
  %3202 = vmatpush1.bf16.msra.mxu0 0
  %3203 = vmatprep.subr.bf16.mxu0 0
  %3204 = vmatpush1.bf16.msra.mxu0 0
  %3205 = vmatprep.subr.bf16.mxu0 0
  %3206 = vmatpush1.bf16.msra.mxu0 0
  %3207 = vmatprep.subr.bf16.mxu0 0
  %3208 = vmatpush1.bf16.msra.mxu0 0
  %3209 = vmatprep.subr.bf16.mxu0 0
  %3210 = vmatpush1.bf16.msra.mxu0 0
  %3211 = vmatprep.mubr.bf16.mxu0 0
  %3212 = vmatmul.mubr.bf16.gmra.mrb[0].mxu0 %v2668
  %v3213 = vpop.f32.mrb[0].mxu0
  %v3214 = vadd.f32 0.0, %v3213
  %v3215 = vpop.f32.mrb[0].mxu0
  %v3216 = vadd.f32 0.0, %v3215
  %v3217 = vpop.f32.mrb[0].mxu0
  %v3218 = vpop.f32.mrb[0].mxu0
  %3219 = vdwg.mxu0
  %v3220 = vadd.f32 %v3081, %v3214
  %v3221 = vadd.f32 %v3082, %v3216
  %v3223 = vlaneseq
  %v3224 = vshrl.u32 %v3223, 7
  %v3225 = vsub.s32 0, %v3224
  %v3226 = vrot.slane %v2669, %v3225
  %v3227 = vlaneseq
  %v3228 = vshrl.u32 %v3227, 7
  %v3229 = vsub.s32 1, %v3228
  %v3230 = vrot.slane %v2669, %v3229
  %v3233 = vadd.f32 %v3220, %v3226
  %v3234 = vadd.f32 %v3221, %v3230
  %v3235 = vmax.f32 %v3233, 0.0
  %v3236 = vmax.f32 %v3234, 0.0
  %v3237 = vld [vmem:[%s3 + $0x180] sm:$0xff]
  %v3238 = vld [vmem:[%s3 + $0x188] sm:$0xff]
  %v3239 = vld [vmem:[%s3 + $0x190] sm:$0xff]
  %v3240 = vld [vmem:[%s3 + $0x198] sm:$0xff]
  %v3241 = vld [vmem:[%s3 + $0x1a0] sm:$0xff]
  %v3242 = vld [vmem:[%s3 + $0x1a8] sm:$0xff]
  %v3243 = vld [vmem:[%s3 + $0x1b0] sm:$0xff]
  %v3244 = vld [vmem:[%s3 + $0x1b8] sm:$0xff]
  %v3245 = vld [vmem:[%s3 + $0x1c0] sm:$0xff]
  %v3246 = vld [vmem:[%s3 + $0x1c8] sm:$0xff]
  %v3247 = vld [vmem:[%s3 + $0x1d0] sm:$0xff]
  %v3248 = vld [vmem:[%s3 + $0x1d8] sm:$0xff]
  %v3249 = vld [vmem:[%s3 + $0x1e0] sm:$0xff]
  %v3250 = vld [vmem:[%s3 + $0x1e8] sm:$0xff]
  %v3251 = vld [vmem:[%s3 + $0x1f0] sm:$0xff]
  %v3252 = vld [vmem:[%s3 + $0x1f8] sm:$0xff]
  %3253 = vmatprep.subr.bf16.mxu0 %v2872
  %3254 = vmatpush1.bf16.msra.mxu0 %v2871
  %3255 = vmatprep.subr.bf16.mxu0 %v2874
  %3256 = vmatpush1.bf16.msra.mxu0 %v2873
  %3257 = vmatprep.subr.bf16.mxu0 %v2876
  %3258 = vmatpush1.bf16.msra.mxu0 %v2875
  %3259 = vmatprep.subr.bf16.mxu0 %v2878
  %3260 = vmatpush1.bf16.msra.mxu0 %v2877
  %3261 = vmatprep.subr.bf16.mxu0 %v2880
  %3262 = vmatpush1.bf16.msra.mxu0 %v2879
  %3263 = vmatprep.subr.bf16.mxu0 %v2882
  %3264 = vmatpush1.bf16.msra.mxu0 %v2881
  %3265 = vmatprep.subr.bf16.mxu0 %v2884
  %3266 = vmatpush1.bf16.msra.mxu0 %v2883
  %3267 = vmatprep.subr.bf16.mxu0 %v2886
  %3268 = vmatpush1.bf16.msra.mxu0 %v2885
  %3269 = vmatprep.subr.bf16.mxu0 0
  %3270 = vmatpush1.bf16.msra.mxu0 0
  %3271 = vmatprep.subr.bf16.mxu0 0
  %3272 = vmatpush1.bf16.msra.mxu0 0
  %3273 = vmatprep.subr.bf16.mxu0 0
  %3274 = vmatpush1.bf16.msra.mxu0 0
  %3275 = vmatprep.subr.bf16.mxu0 0
  %3276 = vmatpush1.bf16.msra.mxu0 0
  %3277 = vmatprep.subr.bf16.mxu0 0
  %3278 = vmatpush1.bf16.msra.mxu0 0
  %3279 = vmatprep.subr.bf16.mxu0 0
  %3280 = vmatpush1.bf16.msra.mxu0 0
  %3281 = vmatprep.subr.bf16.mxu0 0
  %3282 = vmatpush1.bf16.msra.mxu0 0
  %3283 = vmatprep.subr.bf16.mxu0 0
  %3284 = vmatpush1.bf16.msra.mxu0 0
  %3285 = vmatprep.mubr.bf16.mxu0 0
  %3286 = vmatmul.mubr.bf16.gmra.mrb[0].mxu0 %v1516
  %v3287 = vpop.f32.mrb[0].mxu0
  %v3288 = vadd.f32 0.0, %v3287
  %v3289 = vpop.f32.mrb[0].mxu0
  %v3290 = vadd.f32 0.0, %v3289
  %v3291 = vpop.f32.mrb[0].mxu0
  %v3292 = vpop.f32.mrb[0].mxu0
  %3293 = vdwg.mxu0
  %v3310 = vunpack.c.l.b16 %v3237
  %v3311 = vunpack.c.h.b16 %v3237
  %v3312 = vunpack.c.l.b16 %v3238
  %v3313 = vunpack.c.h.b16 %v3238
  %v3314 = vunpack.c.l.b16 %v3239
  %v3315 = vunpack.c.h.b16 %v3239
  %v3316 = vunpack.c.l.b16 %v3240
  %v3317 = vunpack.c.h.b16 %v3240
  %v3318 = vunpack.c.l.b16 %v3241
  %v3319 = vunpack.c.h.b16 %v3241
  %v3320 = vunpack.c.l.b16 %v3242
  %v3321 = vunpack.c.h.b16 %v3242
  %v3322 = vunpack.c.l.b16 %v3243
  %v3323 = vunpack.c.h.b16 %v3243
  %v3324 = vunpack.c.l.b16 %v3244
  %v3325 = vunpack.c.h.b16 %v3244
  %v3326 = vunpack.c.l.b16 %v3245
  %v3327 = vunpack.c.h.b16 %v3245
  %v3328 = vunpack.c.l.b16 %v3246
  %v3329 = vunpack.c.h.b16 %v3246
  %v3330 = vunpack.c.l.b16 %v3247
  %v3331 = vunpack.c.h.b16 %v3247
  %v3332 = vunpack.c.l.b16 %v3248
  %v3333 = vunpack.c.h.b16 %v3248
  %v3334 = vunpack.c.l.b16 %v3249
  %v3335 = vunpack.c.h.b16 %v3249
  %v3336 = vunpack.c.l.b16 %v3250
  %v3337 = vunpack.c.h.b16 %v3250
  %v3338 = vunpack.c.l.b16 %v3251
  %v3339 = vunpack.c.h.b16 %v3251
  %v3340 = vunpack.c.l.b16 %v3252
  %v3341 = vunpack.c.h.b16 %v3252
  %v3342 = vpack.c.b16 %v3312, %v3310
  %v3343 = vpack.c.b16 %v3313, %v3311
  %v3344 = vpack.c.b16 %v3316, %v3314
  %v3345 = vpack.c.b16 %v3317, %v3315
  %v3346 = vpack.c.b16 %v3320, %v3318
  %v3347 = vpack.c.b16 %v3321, %v3319
  %v3348 = vpack.c.b16 %v3324, %v3322
  %v3349 = vpack.c.b16 %v3325, %v3323
  %v3350 = vpack.c.b16 %v3328, %v3326
  %v3351 = vpack.c.b16 %v3329, %v3327
  %v3352 = vpack.c.b16 %v3332, %v3330
  %v3353 = vpack.c.b16 %v3333, %v3331
  %v3354 = vpack.c.b16 %v3336, %v3334
  %v3355 = vpack.c.b16 %v3337, %v3335
  %v3356 = vpack.c.b16 %v3340, %v3338
  %v3357 = vpack.c.b16 %v3341, %v3339
  %3374 = vmatprep.subr.bf16.mxu0 %v3343
  %3375 = vmatpush1.bf16.msra.mxu0 %v3342
  %3376 = vmatprep.subr.bf16.mxu0 %v3345
  %3377 = vmatpush1.bf16.msra.mxu0 %v3344
  %3378 = vmatprep.subr.bf16.mxu0 %v3347
  %3379 = vmatpush1.bf16.msra.mxu0 %v3346
  %3380 = vmatprep.subr.bf16.mxu0 %v3349
  %3381 = vmatpush1.bf16.msra.mxu0 %v3348
  %3382 = vmatprep.subr.bf16.mxu0 %v3351
  %3383 = vmatpush1.bf16.msra.mxu0 %v3350
  %3384 = vmatprep.subr.bf16.mxu0 %v3353
  %3385 = vmatpush1.bf16.msra.mxu0 %v3352
  %3386 = vmatprep.subr.bf16.mxu0 %v3355
  %3387 = vmatpush1.bf16.msra.mxu0 %v3354
  %3388 = vmatprep.subr.bf16.mxu0 %v3357
  %3389 = vmatpush1.bf16.msra.mxu0 %v3356
  %3390 = vmatprep.subr.bf16.mxu0 0
  %3391 = vmatpush1.bf16.msra.mxu0 0
  %3392 = vmatprep.subr.bf16.mxu0 0
  %3393 = vmatpush1.bf16.msra.mxu0 0
  %3394 = vmatprep.subr.bf16.mxu0 0
  %3395 = vmatpush1.bf16.msra.mxu0 0
  %3396 = vmatprep.subr.bf16.mxu0 0
  %3397 = vmatpush1.bf16.msra.mxu0 0
  %3398 = vmatprep.subr.bf16.mxu0 0
  %3399 = vmatpush1.bf16.msra.mxu0 0
  %3400 = vmatprep.subr.bf16.mxu0 0
  %3401 = vmatpush1.bf16.msra.mxu0 0
  %3402 = vmatprep.subr.bf16.mxu0 0
  %3403 = vmatpush1.bf16.msra.mxu0 0
  %3404 = vmatprep.subr.bf16.mxu0 0
  %3405 = vmatpush1.bf16.msra.mxu0 0
  %3406 = vmatprep.mubr.bf16.mxu0 0
  %3407 = vmatmul.mubr.bf16.gmra.mrb[0].mxu0 %v940
  %v3408 = vpop.f32.mrb[0].mxu0
  %v3409 = vadd.f32 %v3288, %v3408
  %v3410 = vpop.f32.mrb[0].mxu0
  %v3411 = vadd.f32 %v3290, %v3410
  %v3412 = vpop.f32.mrb[0].mxu0
  %v3413 = vpop.f32.mrb[0].mxu0
  %3414 = vdwg.mxu0
  %v3415 = vld [vmem:[%s3 + $0x300] sm:$0xff]
  %v3416 = vld [vmem:[%s3 + $0x308] sm:$0xff]
  %v3417 = vld [vmem:[%s3 + $0x310] sm:$0xff]
  %v3418 = vld [vmem:[%s3 + $0x318] sm:$0xff]
  %v3419 = vld [vmem:[%s3 + $0x320] sm:$0xff]
  %v3420 = vld [vmem:[%s3 + $0x328] sm:$0xff]
  %v3421 = vld [vmem:[%s3 + $0x330] sm:$0xff]
  %v3422 = vld [vmem:[%s3 + $0x338] sm:$0xff]
  %v3423 = vld [vmem:[%s3 + $0x340] sm:$0xff]
  %v3424 = vld [vmem:[%s3 + $0x348] sm:$0xff]
  %v3425 = vld [vmem:[%s3 + $0x350] sm:$0xff]
  %v3426 = vld [vmem:[%s3 + $0x358] sm:$0xff]
  %v3427 = vld [vmem:[%s3 + $0x360] sm:$0xff]
  %v3428 = vld [vmem:[%s3 + $0x368] sm:$0xff]
  %v3429 = vld [vmem:[%s3 + $0x370] sm:$0xff]
  %v3430 = vld [vmem:[%s3 + $0x378] sm:$0xff]
  %v3447 = vunpack.c.l.b16 %v3415
  %v3448 = vunpack.c.h.b16 %v3415
  %v3449 = vunpack.c.l.b16 %v3416
  %v3450 = vunpack.c.h.b16 %v3416
  %v3451 = vunpack.c.l.b16 %v3417
  %v3452 = vunpack.c.h.b16 %v3417
  %v3453 = vunpack.c.l.b16 %v3418
  %v3454 = vunpack.c.h.b16 %v3418
  %v3455 = vunpack.c.l.b16 %v3419
  %v3456 = vunpack.c.h.b16 %v3419
  %v3457 = vunpack.c.l.b16 %v3420
  %v3458 = vunpack.c.h.b16 %v3420
  %v3459 = vunpack.c.l.b16 %v3421
  %v3460 = vunpack.c.h.b16 %v3421
  %v3461 = vunpack.c.l.b16 %v3422
  %v3462 = vunpack.c.h.b16 %v3422
  %v3463 = vunpack.c.l.b16 %v3423
  %v3464 = vunpack.c.h.b16 %v3423
  %v3465 = vunpack.c.l.b16 %v3424
  %v3466 = vunpack.c.h.b16 %v3424
  %v3467 = vunpack.c.l.b16 %v3425
  %v3468 = vunpack.c.h.b16 %v3425
  %v3469 = vunpack.c.l.b16 %v3426
  %v3470 = vunpack.c.h.b16 %v3426
  %v3471 = vunpack.c.l.b16 %v3427
  %v3472 = vunpack.c.h.b16 %v3427
  %v3473 = vunpack.c.l.b16 %v3428
  %v3474 = vunpack.c.h.b16 %v3428
  %v3475 = vunpack.c.l.b16 %v3429
  %v3476 = vunpack.c.h.b16 %v3429
  %v3477 = vunpack.c.l.b16 %v3430
  %v3478 = vunpack.c.h.b16 %v3430
  %v3479 = vpack.c.b16 %v3449, %v3447
  %v3480 = vpack.c.b16 %v3450, %v3448
  %v3481 = vpack.c.b16 %v3453, %v3451
  %v3482 = vpack.c.b16 %v3454, %v3452
  %v3483 = vpack.c.b16 %v3457, %v3455
  %v3484 = vpack.c.b16 %v3458, %v3456
  %v3485 = vpack.c.b16 %v3461, %v3459
  %v3486 = vpack.c.b16 %v3462, %v3460
  %v3487 = vpack.c.b16 %v3465, %v3463
  %v3488 = vpack.c.b16 %v3466, %v3464
  %v3489 = vpack.c.b16 %v3469, %v3467
  %v3490 = vpack.c.b16 %v3470, %v3468
  %v3491 = vpack.c.b16 %v3473, %v3471
  %v3492 = vpack.c.b16 %v3474, %v3472
  %v3493 = vpack.c.b16 %v3477, %v3475
  %v3494 = vpack.c.b16 %v3478, %v3476
  %3511 = vmatprep.subr.bf16.mxu0 %v3480
  %3512 = vmatpush1.bf16.msra.mxu0 %v3479
  %3513 = vmatprep.subr.bf16.mxu0 %v3482
  %3514 = vmatpush1.bf16.msra.mxu0 %v3481
  %3515 = vmatprep.subr.bf16.mxu0 %v3484
  %3516 = vmatpush1.bf16.msra.mxu0 %v3483
  %3517 = vmatprep.subr.bf16.mxu0 %v3486
  %3518 = vmatpush1.bf16.msra.mxu0 %v3485
  %3519 = vmatprep.subr.bf16.mxu0 %v3488
  %3520 = vmatpush1.bf16.msra.mxu0 %v3487
  %3521 = vmatprep.subr.bf16.mxu0 %v3490
  %3522 = vmatpush1.bf16.msra.mxu0 %v3489
  %3523 = vmatprep.subr.bf16.mxu0 %v3492
  %3524 = vmatpush1.bf16.msra.mxu0 %v3491
  %3525 = vmatprep.subr.bf16.mxu0 %v3494
  %3526 = vmatpush1.bf16.msra.mxu0 %v3493
  %3527 = vmatprep.subr.bf16.mxu0 0
  %3528 = vmatpush1.bf16.msra.mxu0 0
  %3529 = vmatprep.subr.bf16.mxu0 0
  %3530 = vmatpush1.bf16.msra.mxu0 0
  %3531 = vmatprep.subr.bf16.mxu0 0
  %3532 = vmatpush1.bf16.msra.mxu0 0
  %3533 = vmatprep.subr.bf16.mxu0 0
  %3534 = vmatpush1.bf16.msra.mxu0 0
  %3535 = vmatprep.subr.bf16.mxu0 0
  %3536 = vmatpush1.bf16.msra.mxu0 0
  %3537 = vmatprep.subr.bf16.mxu0 0
  %3538 = vmatpush1.bf16.msra.mxu0 0
  %3539 = vmatprep.subr.bf16.mxu0 0
  %3540 = vmatpush1.bf16.msra.mxu0 0
  %3541 = vmatprep.subr.bf16.mxu0 0
  %3542 = vmatpush1.bf16.msra.mxu0 0
  %3543 = vmatprep.mubr.bf16.mxu0 0
  %3544 = vmatmul.mubr.bf16.gmra.mrb[0].mxu0 %v2092
  %v3545 = vpop.f32.mrb[0].mxu0
  %v3546 = vadd.f32 0.0, %v3545
  %v3547 = vpop.f32.mrb[0].mxu0
  %v3548 = vadd.f32 0.0, %v3547
  %v3549 = vpop.f32.mrb[0].mxu0
  %v3550 = vpop.f32.mrb[0].mxu0
  %3551 = vdwg.mxu0
  %v3552 = vadd.f32 %v3409, %v3546
  %v3553 = vadd.f32 %v3411, %v3548
  %3554 = vmatprep.subr.bf16.mxu0 %v3009
  %3555 = vmatpush1.bf16.msra.mxu0 %v3008
  %3556 = vmatprep.subr.bf16.mxu0 %v3011
  %3557 = vmatpush1.bf16.msra.mxu0 %v3010
  %3558 = vmatprep.subr.bf16.mxu0 %v3013
  %3559 = vmatpush1.bf16.msra.mxu0 %v3012
  %3560 = vmatprep.subr.bf16.mxu0 %v3015
  %3561 = vmatpush1.bf16.msra.mxu0 %v3014
  %3562 = vmatprep.subr.bf16.mxu0 %v3017
  %3563 = vmatpush1.bf16.msra.mxu0 %v3016
  %3564 = vmatprep.subr.bf16.mxu0 %v3019
  %3565 = vmatpush1.bf16.msra.mxu0 %v3018
  %3566 = vmatprep.subr.bf16.mxu0 %v3021
  %3567 = vmatpush1.bf16.msra.mxu0 %v3020
  %3568 = vmatprep.subr.bf16.mxu0 %v3023
  %3569 = vmatpush1.bf16.msra.mxu0 %v3022
  %3570 = vmatprep.subr.bf16.mxu0 0
  %3571 = vmatpush1.bf16.msra.mxu0 0
  %3572 = vmatprep.subr.bf16.mxu0 0
  %3573 = vmatpush1.bf16.msra.mxu0 0
  %3574 = vmatprep.subr.bf16.mxu0 0
  %3575 = vmatpush1.bf16.msra.mxu0 0
  %3576 = vmatprep.subr.bf16.mxu0 0
  %3577 = vmatpush1.bf16.msra.mxu0 0
  %3578 = vmatprep.subr.bf16.mxu0 0
  %3579 = vmatpush1.bf16.msra.mxu0 0
  %3580 = vmatprep.subr.bf16.mxu0 0
  %3581 = vmatpush1.bf16.msra.mxu0 0
  %3582 = vmatprep.subr.bf16.mxu0 0
  %3583 = vmatpush1.bf16.msra.mxu0 0
  %3584 = vmatprep.subr.bf16.mxu0 0
  %3585 = vmatpush1.bf16.msra.mxu0 0
  %3586 = vmatprep.mubr.bf16.mxu0 0
  %3587 = vmatmul.mubr.bf16.gmra.mrb[0].mxu0 %v2668
  %v3588 = vpop.f32.mrb[0].mxu0
  %v3589 = vadd.f32 0.0, %v3588
  %v3590 = vpop.f32.mrb[0].mxu0
  %v3591 = vadd.f32 0.0, %v3590
  %v3592 = vpop.f32.mrb[0].mxu0
  %v3593 = vpop.f32.mrb[0].mxu0
  %3594 = vdwg.mxu0
  %v3595 = vadd.f32 %v3552, %v3589
  %v3596 = vadd.f32 %v3553, %v3591
  %v3597 = vadd.f32 %v3595, %v3226
  %v3598 = vadd.f32 %v3596, %v3230
  %v3599 = vmax.f32 %v3597, 0.0
  %v3600 = vmax.f32 %v3598, 0.0
  %v3601 = vadd.f32 %v3235, %v3599
  %v3602 = vadd.f32 %v3236, %v3600
  %v3603 = vld [vmem:[%s3 + $0x80] sm:$0xff]
  %v3604 = vld [vmem:[%s3 + $0x88] sm:$0xff]
  %v3605 = vld [vmem:[%s3 + $0x90] sm:$0xff]
  %v3606 = vld [vmem:[%s3 + $0x98] sm:$0xff]
  %v3607 = vld [vmem:[%s3 + $0xa0] sm:$0xff]
  %v3608 = vld [vmem:[%s3 + $0xa8] sm:$0xff]
  %v3609 = vld [vmem:[%s3 + $0xb0] sm:$0xff]
  %v3610 = vld [vmem:[%s3 + $0xb8] sm:$0xff]
  %v3611 = vld [vmem:[%s3 + $0xc0] sm:$0xff]
  %v3612 = vld [vmem:[%s3 + $0xc8] sm:$0xff]
  %v3613 = vld [vmem:[%s3 + $0xd0] sm:$0xff]
  %v3614 = vld [vmem:[%s3 + $0xd8] sm:$0xff]
  %v3615 = vld [vmem:[%s3 + $0xe0] sm:$0xff]
  %v3616 = vld [vmem:[%s3 + $0xe8] sm:$0xff]
  %v3617 = vld [vmem:[%s3 + $0xf0] sm:$0xff]
  %v3618 = vld [vmem:[%s3 + $0xf8] sm:$0xff]
  %v3619 = vld [vmem:[%s3 + $0x100] sm:$0xff]
  %v3620 = vld [vmem:[%s3 + $0x108] sm:$0xff]
  %v3621 = vld [vmem:[%s3 + $0x110] sm:$0xff]
  %v3622 = vld [vmem:[%s3 + $0x118] sm:$0xff]
  %v3623 = vld [vmem:[%s3 + $0x120] sm:$0xff]
  %v3624 = vld [vmem:[%s3 + $0x128] sm:$0xff]
  %v3625 = vld [vmem:[%s3 + $0x130] sm:$0xff]
  %v3626 = vld [vmem:[%s3 + $0x138] sm:$0xff]
  %v3627 = vld [vmem:[%s3 + $0x140] sm:$0xff]
  %v3628 = vld [vmem:[%s3 + $0x148] sm:$0xff]
  %v3629 = vld [vmem:[%s3 + $0x150] sm:$0xff]
  %v3630 = vld [vmem:[%s3 + $0x158] sm:$0xff]
  %v3631 = vld [vmem:[%s3 + $0x160] sm:$0xff]
  %v3632 = vld [vmem:[%s3 + $0x168] sm:$0xff]
  %v3633 = vld [vmem:[%s3 + $0x170] sm:$0xff]
  %v3634 = vld [vmem:[%s3 + $0x178] sm:$0xff]
  %v3651 = vunpack.c.l.b16 %v3619
  %v3652 = vunpack.c.h.b16 %v3619
  %v3653 = vunpack.c.l.b16 %v3620
  %v3654 = vunpack.c.h.b16 %v3620
  %v3655 = vunpack.c.l.b16 %v3621
  %v3656 = vunpack.c.h.b16 %v3621
  %v3657 = vunpack.c.l.b16 %v3622
  %v3658 = vunpack.c.h.b16 %v3622
  %v3659 = vunpack.c.l.b16 %v3623
  %v3660 = vunpack.c.h.b16 %v3623
  %v3661 = vunpack.c.l.b16 %v3624
  %v3662 = vunpack.c.h.b16 %v3624
  %v3663 = vunpack.c.l.b16 %v3625
  %v3664 = vunpack.c.h.b16 %v3625
  %v3665 = vunpack.c.l.b16 %v3626
  %v3666 = vunpack.c.h.b16 %v3626
  %v3667 = vunpack.c.l.b16 %v3627
  %v3668 = vunpack.c.h.b16 %v3627
  %v3669 = vunpack.c.l.b16 %v3628
  %v3670 = vunpack.c.h.b16 %v3628
  %v3671 = vunpack.c.l.b16 %v3629
  %v3672 = vunpack.c.h.b16 %v3629
  %v3673 = vunpack.c.l.b16 %v3630
  %v3674 = vunpack.c.h.b16 %v3630
  %v3675 = vunpack.c.l.b16 %v3631
  %v3676 = vunpack.c.h.b16 %v3631
  %v3677 = vunpack.c.l.b16 %v3632
  %v3678 = vunpack.c.h.b16 %v3632
  %v3679 = vunpack.c.l.b16 %v3633
  %v3680 = vunpack.c.h.b16 %v3633
  %v3681 = vunpack.c.l.b16 %v3634
  %v3682 = vunpack.c.h.b16 %v3634
  %v3683 = vpack.c.b16 %v3653, %v3651
  %v3684 = vpack.c.b16 %v3654, %v3652
  %v3685 = vpack.c.b16 %v3657, %v3655
  %v3686 = vpack.c.b16 %v3658, %v3656
  %v3687 = vpack.c.b16 %v3661, %v3659
  %v3688 = vpack.c.b16 %v3662, %v3660
  %v3689 = vpack.c.b16 %v3665, %v3663
  %v3690 = vpack.c.b16 %v3666, %v3664
  %v3691 = vpack.c.b16 %v3669, %v3667
  %v3692 = vpack.c.b16 %v3670, %v3668
  %v3693 = vpack.c.b16 %v3673, %v3671
  %v3694 = vpack.c.b16 %v3674, %v3672
  %v3695 = vpack.c.b16 %v3677, %v3675
  %v3696 = vpack.c.b16 %v3678, %v3676
  %v3697 = vpack.c.b16 %v3681, %v3679
  %v3698 = vpack.c.b16 %v3682, %v3680
  %3715 = vmatprep.subr.bf16.mxu0 %v3684
  %3716 = vmatpush1.bf16.msra.mxu0 %v3683
  %3717 = vmatprep.subr.bf16.mxu0 %v3686
  %3718 = vmatpush1.bf16.msra.mxu0 %v3685
  %3719 = vmatprep.subr.bf16.mxu0 %v3688
  %3720 = vmatpush1.bf16.msra.mxu0 %v3687
  %3721 = vmatprep.subr.bf16.mxu0 %v3690
  %3722 = vmatpush1.bf16.msra.mxu0 %v3689
  %3723 = vmatprep.subr.bf16.mxu0 %v3692
  %3724 = vmatpush1.bf16.msra.mxu0 %v3691
  %3725 = vmatprep.subr.bf16.mxu0 %v3694
  %3726 = vmatpush1.bf16.msra.mxu0 %v3693
  %3727 = vmatprep.subr.bf16.mxu0 %v3696
  %3728 = vmatpush1.bf16.msra.mxu0 %v3695
  %3729 = vmatprep.subr.bf16.mxu0 %v3698
  %3730 = vmatpush1.bf16.msra.mxu0 %v3697
  %3731 = vmatprep.subr.bf16.mxu0 0
  %3732 = vmatpush1.bf16.msra.mxu0 0
  %3733 = vmatprep.subr.bf16.mxu0 0
  %3734 = vmatpush1.bf16.msra.mxu0 0
  %3735 = vmatprep.subr.bf16.mxu0 0
  %3736 = vmatpush1.bf16.msra.mxu0 0
  %3737 = vmatprep.subr.bf16.mxu0 0
  %3738 = vmatpush1.bf16.msra.mxu0 0
  %3739 = vmatprep.subr.bf16.mxu0 0
  %3740 = vmatpush1.bf16.msra.mxu0 0
  %3741 = vmatprep.subr.bf16.mxu0 0
  %3742 = vmatpush1.bf16.msra.mxu0 0
  %3743 = vmatprep.subr.bf16.mxu0 0
  %3744 = vmatpush1.bf16.msra.mxu0 0
  %3745 = vmatprep.subr.bf16.mxu0 0
  %3746 = vmatpush1.bf16.msra.mxu0 0
  %3747 = vmatprep.mubr.bf16.mxu0 0
  %3748 = vmatmul.mubr.bf16.gmra.mrb[0].mxu0 %v1516
  %v3749 = vpop.f32.mrb[0].mxu0
  %v3750 = vadd.f32 0.0, %v3749
  %v3751 = vpop.f32.mrb[0].mxu0
  %v3752 = vadd.f32 0.0, %v3751
  %v3753 = vpop.f32.mrb[0].mxu0
  %v3754 = vpop.f32.mrb[0].mxu0
  %3755 = vdwg.mxu0
  %v3772 = vunpack.c.l.b16 %v3603
  %v3773 = vunpack.c.h.b16 %v3603
  %v3774 = vunpack.c.l.b16 %v3604
  %v3775 = vunpack.c.h.b16 %v3604
  %v3776 = vunpack.c.l.b16 %v3605
  %v3777 = vunpack.c.h.b16 %v3605
  %v3778 = vunpack.c.l.b16 %v3606
  %v3779 = vunpack.c.h.b16 %v3606
  %v3780 = vunpack.c.l.b16 %v3607
  %v3781 = vunpack.c.h.b16 %v3607
  %v3782 = vunpack.c.l.b16 %v3608
  %v3783 = vunpack.c.h.b16 %v3608
  %v3784 = vunpack.c.l.b16 %v3609
  %v3785 = vunpack.c.h.b16 %v3609
  %v3786 = vunpack.c.l.b16 %v3610
  %v3787 = vunpack.c.h.b16 %v3610
  %v3788 = vunpack.c.l.b16 %v3611
  %v3789 = vunpack.c.h.b16 %v3611
  %v3790 = vunpack.c.l.b16 %v3612
  %v3791 = vunpack.c.h.b16 %v3612
  %v3792 = vunpack.c.l.b16 %v3613
  %v3793 = vunpack.c.h.b16 %v3613
  %v3794 = vunpack.c.l.b16 %v3614
  %v3795 = vunpack.c.h.b16 %v3614
  %v3796 = vunpack.c.l.b16 %v3615
  %v3797 = vunpack.c.h.b16 %v3615
  %v3798 = vunpack.c.l.b16 %v3616
  %v3799 = vunpack.c.h.b16 %v3616
  %v3800 = vunpack.c.l.b16 %v3617
  %v3801 = vunpack.c.h.b16 %v3617
  %v3802 = vunpack.c.l.b16 %v3618
  %v3803 = vunpack.c.h.b16 %v3618
  %v3804 = vpack.c.b16 %v3774, %v3772
  %v3805 = vpack.c.b16 %v3775, %v3773
  %v3806 = vpack.c.b16 %v3778, %v3776
  %v3807 = vpack.c.b16 %v3779, %v3777
  %v3808 = vpack.c.b16 %v3782, %v3780
  %v3809 = vpack.c.b16 %v3783, %v3781
  %v3810 = vpack.c.b16 %v3786, %v3784
  %v3811 = vpack.c.b16 %v3787, %v3785
  %v3812 = vpack.c.b16 %v3790, %v3788
  %v3813 = vpack.c.b16 %v3791, %v3789
  %v3814 = vpack.c.b16 %v3794, %v3792
  %v3815 = vpack.c.b16 %v3795, %v3793
  %v3816 = vpack.c.b16 %v3798, %v3796
  %v3817 = vpack.c.b16 %v3799, %v3797
  %v3818 = vpack.c.b16 %v3802, %v3800
  %v3819 = vpack.c.b16 %v3803, %v3801
  %3836 = vmatprep.subr.bf16.mxu0 %v3805
  %3837 = vmatpush1.bf16.msra.mxu0 %v3804
  %3838 = vmatprep.subr.bf16.mxu0 %v3807
  %3839 = vmatpush1.bf16.msra.mxu0 %v3806
  %3840 = vmatprep.subr.bf16.mxu0 %v3809
  %3841 = vmatpush1.bf16.msra.mxu0 %v3808
  %3842 = vmatprep.subr.bf16.mxu0 %v3811
  %3843 = vmatpush1.bf16.msra.mxu0 %v3810
  %3844 = vmatprep.subr.bf16.mxu0 %v3813
  %3845 = vmatpush1.bf16.msra.mxu0 %v3812
  %3846 = vmatprep.subr.bf16.mxu0 %v3815
  %3847 = vmatpush1.bf16.msra.mxu0 %v3814
  %3848 = vmatprep.subr.bf16.mxu0 %v3817
  %3849 = vmatpush1.bf16.msra.mxu0 %v3816
  %3850 = vmatprep.subr.bf16.mxu0 %v3819
  %3851 = vmatpush1.bf16.msra.mxu0 %v3818
  %3852 = vmatprep.subr.bf16.mxu0 0
  %3853 = vmatpush1.bf16.msra.mxu0 0
  %3854 = vmatprep.subr.bf16.mxu0 0
  %3855 = vmatpush1.bf16.msra.mxu0 0
  %3856 = vmatprep.subr.bf16.mxu0 0
  %3857 = vmatpush1.bf16.msra.mxu0 0
  %3858 = vmatprep.subr.bf16.mxu0 0
  %3859 = vmatpush1.bf16.msra.mxu0 0
  %3860 = vmatprep.subr.bf16.mxu0 0
  %3861 = vmatpush1.bf16.msra.mxu0 0
  %3862 = vmatprep.subr.bf16.mxu0 0
  %3863 = vmatpush1.bf16.msra.mxu0 0
  %3864 = vmatprep.subr.bf16.mxu0 0
  %3865 = vmatpush1.bf16.msra.mxu0 0
  %3866 = vmatprep.subr.bf16.mxu0 0
  %3867 = vmatpush1.bf16.msra.mxu0 0
  %3868 = vmatprep.mubr.bf16.mxu0 0
  %3869 = vmatmul.mubr.bf16.gmra.mrb[0].mxu0 %v940
  %v3870 = vpop.f32.mrb[0].mxu0
  %v3871 = vadd.f32 %v3750, %v3870
  %v3872 = vpop.f32.mrb[0].mxu0
  %v3873 = vadd.f32 %v3752, %v3872
  %v3874 = vpop.f32.mrb[0].mxu0
  %v3875 = vpop.f32.mrb[0].mxu0
  %3876 = vdwg.mxu0
  %3877 = vmatprep.subr.bf16.mxu0 %v2872
  %3878 = vmatpush1.bf16.msra.mxu0 %v2871
  %3879 = vmatprep.subr.bf16.mxu0 %v2874
  %3880 = vmatpush1.bf16.msra.mxu0 %v2873
  %3881 = vmatprep.subr.bf16.mxu0 %v2876
  %3882 = vmatpush1.bf16.msra.mxu0 %v2875
  %3883 = vmatprep.subr.bf16.mxu0 %v2878
  %3884 = vmatpush1.bf16.msra.mxu0 %v2877
  %3885 = vmatprep.subr.bf16.mxu0 %v2880
  %3886 = vmatpush1.bf16.msra.mxu0 %v2879
  %3887 = vmatprep.subr.bf16.mxu0 %v2882
  %3888 = vmatpush1.bf16.msra.mxu0 %v2881
  %3889 = vmatprep.subr.bf16.mxu0 %v2884
  %3890 = vmatpush1.bf16.msra.mxu0 %v2883
  %3891 = vmatprep.subr.bf16.mxu0 %v2886
  %3892 = vmatpush1.bf16.msra.mxu0 %v2885
  %3893 = vmatprep.subr.bf16.mxu0 0
  %3894 = vmatpush1.bf16.msra.mxu0 0
  %3895 = vmatprep.subr.bf16.mxu0 0
  %3896 = vmatpush1.bf16.msra.mxu0 0
  %3897 = vmatprep.subr.bf16.mxu0 0
  %3898 = vmatpush1.bf16.msra.mxu0 0
  %3899 = vmatprep.subr.bf16.mxu0 0
  %3900 = vmatpush1.bf16.msra.mxu0 0
  %3901 = vmatprep.subr.bf16.mxu0 0
  %3902 = vmatpush1.bf16.msra.mxu0 0
  %3903 = vmatprep.subr.bf16.mxu0 0
  %3904 = vmatpush1.bf16.msra.mxu0 0
  %3905 = vmatprep.subr.bf16.mxu0 0
  %3906 = vmatpush1.bf16.msra.mxu0 0
  %3907 = vmatprep.subr.bf16.mxu0 0
  %3908 = vmatpush1.bf16.msra.mxu0 0
  %3909 = vmatprep.mubr.bf16.mxu0 0
  %3910 = vmatmul.mubr.bf16.gmra.mrb[0].mxu0 %v2092
  %v3911 = vpop.f32.mrb[0].mxu0
  %v3912 = vadd.f32 0.0, %v3911
  %v3913 = vpop.f32.mrb[0].mxu0
  %v3914 = vadd.f32 0.0, %v3913
  %v3915 = vpop.f32.mrb[0].mxu0
  %v3916 = vpop.f32.mrb[0].mxu0
  %3917 = vdwg.mxu0
  %v3918 = vadd.f32 %v3871, %v3912
  %v3919 = vadd.f32 %v3873, %v3914
  %3920 = vmatprep.subr.bf16.mxu0 %v2751
  %3921 = vmatpush1.bf16.msra.mxu0 %v2750
  %3922 = vmatprep.subr.bf16.mxu0 %v2753
  %3923 = vmatpush1.bf16.msra.mxu0 %v2752
  %3924 = vmatprep.subr.bf16.mxu0 %v2755
  %3925 = vmatpush1.bf16.msra.mxu0 %v2754
  %3926 = vmatprep.subr.bf16.mxu0 %v2757
  %3927 = vmatpush1.bf16.msra.mxu0 %v2756
  %3928 = vmatprep.subr.bf16.mxu0 %v2759
  %3929 = vmatpush1.bf16.msra.mxu0 %v2758
  %3930 = vmatprep.subr.bf16.mxu0 %v2761
  %3931 = vmatpush1.bf16.msra.mxu0 %v2760
  %3932 = vmatprep.subr.bf16.mxu0 %v2763
  %3933 = vmatpush1.bf16.msra.mxu0 %v2762
  %3934 = vmatprep.subr.bf16.mxu0 %v2765
  %3935 = vmatpush1.bf16.msra.mxu0 %v2764
  %3936 = vmatprep.subr.bf16.mxu0 0
  %3937 = vmatpush1.bf16.msra.mxu0 0
  %3938 = vmatprep.subr.bf16.mxu0 0
  %3939 = vmatpush1.bf16.msra.mxu0 0
  %3940 = vmatprep.subr.bf16.mxu0 0
  %3941 = vmatpush1.bf16.msra.mxu0 0
  %3942 = vmatprep.subr.bf16.mxu0 0
  %3943 = vmatpush1.bf16.msra.mxu0 0
  %3944 = vmatprep.subr.bf16.mxu0 0
  %3945 = vmatpush1.bf16.msra.mxu0 0
  %3946 = vmatprep.subr.bf16.mxu0 0
  %3947 = vmatpush1.bf16.msra.mxu0 0
  %3948 = vmatprep.subr.bf16.mxu0 0
  %3949 = vmatpush1.bf16.msra.mxu0 0
  %3950 = vmatprep.subr.bf16.mxu0 0
  %3951 = vmatpush1.bf16.msra.mxu0 0
  %3952 = vmatprep.mubr.bf16.mxu0 0
  %3953 = vmatmul.mubr.bf16.gmra.mrb[0].mxu0 %v2668
  %v3954 = vpop.f32.mrb[0].mxu0
  %v3955 = vadd.f32 0.0, %v3954
  %v3956 = vpop.f32.mrb[0].mxu0
  %v3957 = vadd.f32 0.0, %v3956
  %v3958 = vpop.f32.mrb[0].mxu0
  %v3959 = vpop.f32.mrb[0].mxu0
  %3960 = vdwg.mxu0
  %v3961 = vadd.f32 %v3918, %v3955
  %v3962 = vadd.f32 %v3919, %v3957
  %v3963 = vadd.f32 %v3961, %v3226
  %v3964 = vadd.f32 %v3962, %v3230
  %v3965 = vmax.f32 %v3963, 0.0
  %v3966 = vmax.f32 %v3964, 0.0
  %v3967 = vadd.f32 %v3601, %v3965
  %v3968 = vadd.f32 %v3602, %v3966
  %v3969 = vld [vmem:[%s3] sm:$0xff]
  %v3970 = vld [vmem:[%s3 + $0x8] sm:$0xff]
  %v3971 = vld [vmem:[%s3 + $0x10] sm:$0xff]
  %v3972 = vld [vmem:[%s3 + $0x18] sm:$0xff]
  %v3973 = vld [vmem:[%s3 + $0x20] sm:$0xff]
  %v3974 = vld [vmem:[%s3 + $0x28] sm:$0xff]
  %v3975 = vld [vmem:[%s3 + $0x30] sm:$0xff]
  %v3976 = vld [vmem:[%s3 + $0x38] sm:$0xff]
  %v3977 = vld [vmem:[%s3 + $0x40] sm:$0xff]
  %v3978 = vld [vmem:[%s3 + $0x48] sm:$0xff]
  %v3979 = vld [vmem:[%s3 + $0x50] sm:$0xff]
  %v3980 = vld [vmem:[%s3 + $0x58] sm:$0xff]
  %v3981 = vld [vmem:[%s3 + $0x60] sm:$0xff]
  %v3982 = vld [vmem:[%s3 + $0x68] sm:$0xff]
  %v3983 = vld [vmem:[%s3 + $0x70] sm:$0xff]
  %v3984 = vld [vmem:[%s3 + $0x78] sm:$0xff]
  %3985 = vmatprep.subr.bf16.mxu0 %v3805
  %3986 = vmatpush1.bf16.msra.mxu0 %v3804
  %3987 = vmatprep.subr.bf16.mxu0 %v3807
  %3988 = vmatpush1.bf16.msra.mxu0 %v3806
  %3989 = vmatprep.subr.bf16.mxu0 %v3809
  %3990 = vmatpush1.bf16.msra.mxu0 %v3808
  %3991 = vmatprep.subr.bf16.mxu0 %v3811
  %3992 = vmatpush1.bf16.msra.mxu0 %v3810
  %3993 = vmatprep.subr.bf16.mxu0 %v3813
  %3994 = vmatpush1.bf16.msra.mxu0 %v3812
  %3995 = vmatprep.subr.bf16.mxu0 %v3815
  %3996 = vmatpush1.bf16.msra.mxu0 %v3814
  %3997 = vmatprep.subr.bf16.mxu0 %v3817
  %3998 = vmatpush1.bf16.msra.mxu0 %v3816
  %3999 = vmatprep.subr.bf16.mxu0 %v3819
  %4000 = vmatpush1.bf16.msra.mxu0 %v3818
  %4001 = vmatprep.subr.bf16.mxu0 0
  %4002 = vmatpush1.bf16.msra.mxu0 0
  %4003 = vmatprep.subr.bf16.mxu0 0
  %4004 = vmatpush1.bf16.msra.mxu0 0
  %4005 = vmatprep.subr.bf16.mxu0 0
  %4006 = vmatpush1.bf16.msra.mxu0 0
  %4007 = vmatprep.subr.bf16.mxu0 0
  %4008 = vmatpush1.bf16.msra.mxu0 0
  %4009 = vmatprep.subr.bf16.mxu0 0
  %4010 = vmatpush1.bf16.msra.mxu0 0
  %4011 = vmatprep.subr.bf16.mxu0 0
  %4012 = vmatpush1.bf16.msra.mxu0 0
  %4013 = vmatprep.subr.bf16.mxu0 0
  %4014 = vmatpush1.bf16.msra.mxu0 0
  %4015 = vmatprep.subr.bf16.mxu0 0
  %4016 = vmatpush1.bf16.msra.mxu0 0
  %4017 = vmatprep.mubr.bf16.mxu0 0
  %4018 = vmatmul.mubr.bf16.gmra.mrb[0].mxu0 %v1516
  %v4019 = vpop.f32.mrb[0].mxu0
  %v4020 = vadd.f32 0.0, %v4019
  %v4021 = vpop.f32.mrb[0].mxu0
  %v4022 = vadd.f32 0.0, %v4021
  %v4023 = vpop.f32.mrb[0].mxu0
  %v4024 = vpop.f32.mrb[0].mxu0
  %4025 = vdwg.mxu0
  %v4042 = vunpack.c.l.b16 %v3969
  %v4043 = vunpack.c.h.b16 %v3969
  %v4044 = vunpack.c.l.b16 %v3970
  %v4045 = vunpack.c.h.b16 %v3970
  %v4046 = vunpack.c.l.b16 %v3971
  %v4047 = vunpack.c.h.b16 %v3971
  %v4048 = vunpack.c.l.b16 %v3972
  %v4049 = vunpack.c.h.b16 %v3972
  %v4050 = vunpack.c.l.b16 %v3973
  %v4051 = vunpack.c.h.b16 %v3973
  %v4052 = vunpack.c.l.b16 %v3974
  %v4053 = vunpack.c.h.b16 %v3974
  %v4054 = vunpack.c.l.b16 %v3975
  %v4055 = vunpack.c.h.b16 %v3975
  %v4056 = vunpack.c.l.b16 %v3976
  %v4057 = vunpack.c.h.b16 %v3976
  %v4058 = vunpack.c.l.b16 %v3977
  %v4059 = vunpack.c.h.b16 %v3977
  %v4060 = vunpack.c.l.b16 %v3978
  %v4061 = vunpack.c.h.b16 %v3978
  %v4062 = vunpack.c.l.b16 %v3979
  %v4063 = vunpack.c.h.b16 %v3979
  %v4064 = vunpack.c.l.b16 %v3980
  %v4065 = vunpack.c.h.b16 %v3980
  %v4066 = vunpack.c.l.b16 %v3981
  %v4067 = vunpack.c.h.b16 %v3981
  %v4068 = vunpack.c.l.b16 %v3982
  %v4069 = vunpack.c.h.b16 %v3982
  %v4070 = vunpack.c.l.b16 %v3983
  %v4071 = vunpack.c.h.b16 %v3983
  %v4072 = vunpack.c.l.b16 %v3984
  %v4073 = vunpack.c.h.b16 %v3984
  %v4074 = vpack.c.b16 %v4044, %v4042
  %v4075 = vpack.c.b16 %v4045, %v4043
  %v4076 = vpack.c.b16 %v4048, %v4046
  %v4077 = vpack.c.b16 %v4049, %v4047
  %v4078 = vpack.c.b16 %v4052, %v4050
  %v4079 = vpack.c.b16 %v4053, %v4051
  %v4080 = vpack.c.b16 %v4056, %v4054
  %v4081 = vpack.c.b16 %v4057, %v4055
  %v4082 = vpack.c.b16 %v4060, %v4058
  %v4083 = vpack.c.b16 %v4061, %v4059
  %v4084 = vpack.c.b16 %v4064, %v4062
  %v4085 = vpack.c.b16 %v4065, %v4063
  %v4086 = vpack.c.b16 %v4068, %v4066
  %v4087 = vpack.c.b16 %v4069, %v4067
  %v4088 = vpack.c.b16 %v4072, %v4070
  %v4089 = vpack.c.b16 %v4073, %v4071
  %4106 = vmatprep.subr.bf16.mxu0 %v4075
  %4107 = vmatpush1.bf16.msra.mxu0 %v4074
  %4108 = vmatprep.subr.bf16.mxu0 %v4077
  %4109 = vmatpush1.bf16.msra.mxu0 %v4076
  %4110 = vmatprep.subr.bf16.mxu0 %v4079
  %4111 = vmatpush1.bf16.msra.mxu0 %v4078
  %4112 = vmatprep.subr.bf16.mxu0 %v4081
  %4113 = vmatpush1.bf16.msra.mxu0 %v4080
  %4114 = vmatprep.subr.bf16.mxu0 %v4083
  %4115 = vmatpush1.bf16.msra.mxu0 %v4082
  %4116 = vmatprep.subr.bf16.mxu0 %v4085
  %4117 = vmatpush1.bf16.msra.mxu0 %v4084
  %4118 = vmatprep.subr.bf16.mxu0 %v4087
  %4119 = vmatpush1.bf16.msra.mxu0 %v4086
  %4120 = vmatprep.subr.bf16.mxu0 %v4089
  %4121 = vmatpush1.bf16.msra.mxu0 %v4088
  %4122 = vmatprep.subr.bf16.mxu0 0
  %4123 = vmatpush1.bf16.msra.mxu0 0
  %4124 = vmatprep.subr.bf16.mxu0 0
  %4125 = vmatpush1.bf16.msra.mxu0 0
  %4126 = vmatprep.subr.bf16.mxu0 0
  %4127 = vmatpush1.bf16.msra.mxu0 0
  %4128 = vmatprep.subr.bf16.mxu0 0
  %4129 = vmatpush1.bf16.msra.mxu0 0
  %4130 = vmatprep.subr.bf16.mxu0 0
  %4131 = vmatpush1.bf16.msra.mxu0 0
  %4132 = vmatprep.subr.bf16.mxu0 0
  %4133 = vmatpush1.bf16.msra.mxu0 0
  %4134 = vmatprep.subr.bf16.mxu0 0
  %4135 = vmatpush1.bf16.msra.mxu0 0
  %4136 = vmatprep.subr.bf16.mxu0 0
  %4137 = vmatpush1.bf16.msra.mxu0 0
  %4138 = vmatprep.mubr.bf16.mxu0 0
  %4139 = vmatmul.mubr.bf16.gmra.mrb[0].mxu0 %v940
  %v4140 = vpop.f32.mrb[0].mxu0
  %v4141 = vadd.f32 %v4020, %v4140
  %v4142 = vpop.f32.mrb[0].mxu0
  %v4143 = vadd.f32 %v4022, %v4142
  %v4144 = vpop.f32.mrb[0].mxu0
  %v4145 = vpop.f32.mrb[0].mxu0
  %4146 = vdwg.mxu0
  %4147 = vmatprep.subr.bf16.mxu0 %v3343
  %4148 = vmatpush1.bf16.msra.mxu0 %v3342
  %4149 = vmatprep.subr.bf16.mxu0 %v3345
  %4150 = vmatpush1.bf16.msra.mxu0 %v3344
  %4151 = vmatprep.subr.bf16.mxu0 %v3347
  %4152 = vmatpush1.bf16.msra.mxu0 %v3346
  %4153 = vmatprep.subr.bf16.mxu0 %v3349
  %4154 = vmatpush1.bf16.msra.mxu0 %v3348
  %4155 = vmatprep.subr.bf16.mxu0 %v3351
  %4156 = vmatpush1.bf16.msra.mxu0 %v3350
  %4157 = vmatprep.subr.bf16.mxu0 %v3353
  %4158 = vmatpush1.bf16.msra.mxu0 %v3352
  %4159 = vmatprep.subr.bf16.mxu0 %v3355
  %4160 = vmatpush1.bf16.msra.mxu0 %v3354
  %4161 = vmatprep.subr.bf16.mxu0 %v3357
  %4162 = vmatpush1.bf16.msra.mxu0 %v3356
  %4163 = vmatprep.subr.bf16.mxu0 0
  %4164 = vmatpush1.bf16.msra.mxu0 0
  %4165 = vmatprep.subr.bf16.mxu0 0
  %4166 = vmatpush1.bf16.msra.mxu0 0
  %4167 = vmatprep.subr.bf16.mxu0 0
  %4168 = vmatpush1.bf16.msra.mxu0 0
  %4169 = vmatprep.subr.bf16.mxu0 0
  %4170 = vmatpush1.bf16.msra.mxu0 0
  %4171 = vmatprep.subr.bf16.mxu0 0
  %4172 = vmatpush1.bf16.msra.mxu0 0
  %4173 = vmatprep.subr.bf16.mxu0 0
  %4174 = vmatpush1.bf16.msra.mxu0 0
  %4175 = vmatprep.subr.bf16.mxu0 0
  %4176 = vmatpush1.bf16.msra.mxu0 0
  %4177 = vmatprep.subr.bf16.mxu0 0
  %4178 = vmatpush1.bf16.msra.mxu0 0
  %4179 = vmatprep.mubr.bf16.mxu0 0
  %4180 = vmatmul.mubr.bf16.gmra.mrb[0].mxu0 %v2092
  %v4181 = vpop.f32.mrb[0].mxu0
  %v4182 = vadd.f32 0.0, %v4181
  %v4183 = vpop.f32.mrb[0].mxu0
  %v4184 = vadd.f32 0.0, %v4183
  %v4185 = vpop.f32.mrb[0].mxu0
  %v4186 = vpop.f32.mrb[0].mxu0
  %4187 = vdwg.mxu0
  %v4188 = vadd.f32 %v4141, %v4182
  %v4189 = vadd.f32 %v4143, %v4184
  %4190 = vmatprep.subr.bf16.mxu0 %v2872
  %4191 = vmatpush1.bf16.msra.mxu0 %v2871
  %4192 = vmatprep.subr.bf16.mxu0 %v2874
  %4193 = vmatpush1.bf16.msra.mxu0 %v2873
  %4194 = vmatprep.subr.bf16.mxu0 %v2876
  %4195 = vmatpush1.bf16.msra.mxu0 %v2875
  %4196 = vmatprep.subr.bf16.mxu0 %v2878
  %4197 = vmatpush1.bf16.msra.mxu0 %v2877
  %4198 = vmatprep.subr.bf16.mxu0 %v2880
  %4199 = vmatpush1.bf16.msra.mxu0 %v2879
  %4200 = vmatprep.subr.bf16.mxu0 %v2882
  %4201 = vmatpush1.bf16.msra.mxu0 %v2881
  %4202 = vmatprep.subr.bf16.mxu0 %v2884
  %4203 = vmatpush1.bf16.msra.mxu0 %v2883
  %4204 = vmatprep.subr.bf16.mxu0 %v2886
  %4205 = vmatpush1.bf16.msra.mxu0 %v2885
  %4206 = vmatprep.subr.bf16.mxu0 0
  %4207 = vmatpush1.bf16.msra.mxu0 0
  %4208 = vmatprep.subr.bf16.mxu0 0
  %4209 = vmatpush1.bf16.msra.mxu0 0
  %4210 = vmatprep.subr.bf16.mxu0 0
  %4211 = vmatpush1.bf16.msra.mxu0 0
  %4212 = vmatprep.subr.bf16.mxu0 0
  %4213 = vmatpush1.bf16.msra.mxu0 0
  %4214 = vmatprep.subr.bf16.mxu0 0
  %4215 = vmatpush1.bf16.msra.mxu0 0
  %4216 = vmatprep.subr.bf16.mxu0 0
  %4217 = vmatpush1.bf16.msra.mxu0 0
  %4218 = vmatprep.subr.bf16.mxu0 0
  %4219 = vmatpush1.bf16.msra.mxu0 0
  %4220 = vmatprep.subr.bf16.mxu0 0
  %4221 = vmatpush1.bf16.msra.mxu0 0
  %4222 = vmatprep.mubr.bf16.mxu0 0
  %4223 = vmatmul.mubr.bf16.gmra.mrb[0].mxu0 %v2668
  %v4224 = vpop.f32.mrb[0].mxu0
  %v4225 = vadd.f32 0.0, %v4224
  %v4226 = vpop.f32.mrb[0].mxu0
  %v4227 = vadd.f32 0.0, %v4226
  %v4228 = vpop.f32.mrb[0].mxu0
  %v4229 = vpop.f32.mrb[0].mxu0
  %4230 = vdwg.mxu0
  %v4231 = vadd.f32 %v4188, %v4225
  %v4232 = vadd.f32 %v4189, %v4227
  %v4233 = vadd.f32 %v4231, %v3226
  %v4234 = vadd.f32 %v4232, %v3230
  %v4235 = vmax.f32 %v4233, 0.0
  %v4236 = vmax.f32 %v4234, 0.0
  %v4237 = vadd.f32 %v3967, %v4235
  %v4238 = vadd.f32 %v3968, %v4236
  %v4239 = vmul.f32 %v4237, 0.25
  %v4240 = vmul.f32 %v4238, 0.25
  %v4241 = vadd.f32 %v4239, %v4240
  %4242 = vadd.xlane.f32.xlu0 %v4241
  %v4243 = vpop.xlane.xlu0 %4242
  %v4244 = vrcp.pop 256.0
  %v4245 = vmul.f32 %v4243, %v4244
  %v4246 = vsub.f32 %v4239, %v4245
  %v4247 = vsub.f32 %v4240, %v4245
  %v4248 = vmul.f32 %v4246, %v4246
  %v4249 = vmul.f32 %v4247, %v4247
  %v4250 = vadd.f32 %v4248, %v4249
  %4251 = vadd.xlane.f32.xlu0 %v4250
  %v4252 = vpop.xlane.xlu0 %4251
  %v4253 = vmul.f32 %v4252, %v4244
  %v4254 = vadd.f32 %v4253, 1e-05
  %v4255 = vrsqrt.pop %v4254
  %v4256 = vmul.f32 %v4246, %v4255
  %v4257 = vmul.f32 %v4247, %v4255
  %v4258 = vld [vmem:[%s5] sm:$0x3]
  %v4260 = vlaneseq
  %v4261 = vshrl.u32 %v4260, 7
  %v4262 = vsub.s32 0, %v4261
  %v4263 = vrot.slane %v4258, %v4262
  %v4264 = vlaneseq
  %v4265 = vshrl.u32 %v4264, 7
  %v4266 = vsub.s32 1, %v4265
  %v4267 = vrot.slane %v4258, %v4266
  %v4270 = vmul.f32 %v4256, %v4263
  %v4271 = vmul.f32 %v4257, %v4267
  %v4272 = vld [vmem:[%s6] sm:$0x3]
  %v4274 = vlaneseq
  %v4275 = vshrl.u32 %v4274, 7
  %v4276 = vsub.s32 0, %v4275
  %v4277 = vrot.slane %v4272, %v4276
  %v4278 = vlaneseq
  %v4279 = vshrl.u32 %v4278, 7
  %v4280 = vsub.s32 1, %v4279
  %v4281 = vrot.slane %v4272, %v4280
  %v4284 = vadd.f32 %v4270, %v4277
  %v4285 = vadd.f32 %v4271, %v4281
  %v4286 = vsub.f32 %v4284, -1.2
  %v4287 = vsub.f32 %v4285, -1.2
  %v4288 = vmul.f32 %v4286, 0.5
  %v4289 = vmul.f32 %v4287, 0.5
  %v4290 = vtanh.pop %v4288
  %v4291 = vtanh.pop %v4289
  %v4292 = vmul.f32 %v4290, %v4290
  %v4293 = vmul.f32 %v4291, %v4291
  %v4294 = vsub.f32 1.0, %v4292
  %v4295 = vsub.f32 1.0, %v4293
  %v4296 = vpack.c.bf16 %v4294, %v4294
  %v4297 = vpack.c.bf16 %v4295, %v4295
  %v4298 = vld [vmem:[%s7] sm:$0xf]
  %v4299 = vld [vmem:[%s7 + $0x4] sm:$0xf]
  %v4300 = vld [vmem:[%s7 + $0x8] sm:$0xf]
  %v4301 = vld [vmem:[%s7 + $0xc] sm:$0xf]
  %v4302 = vld [vmem:[%s7 + $0x10] sm:$0xf]
  %v4303 = vld [vmem:[%s7 + $0x14] sm:$0xf]
  %v4304 = vld [vmem:[%s7 + $0x18] sm:$0xf]
  %v4305 = vld [vmem:[%s7 + $0x1c] sm:$0xf]
  %v4306 = vld [vmem:[%s7 + $0x20] sm:$0xf]
  %v4307 = vld [vmem:[%s7 + $0x24] sm:$0xf]
  %v4308 = vld [vmem:[%s7 + $0x28] sm:$0xf]
  %v4309 = vld [vmem:[%s7 + $0x2c] sm:$0xf]
  %v4310 = vld [vmem:[%s7 + $0x30] sm:$0xf]
  %v4311 = vld [vmem:[%s7 + $0x34] sm:$0xf]
  %v4312 = vld [vmem:[%s7 + $0x38] sm:$0xf]
  %v4313 = vld [vmem:[%s7 + $0x3c] sm:$0xf]
  %v4314 = vld [vmem:[%s7 + $0x40] sm:$0xf]
  %v4315 = vld [vmem:[%s7 + $0x44] sm:$0xf]
  %v4316 = vld [vmem:[%s7 + $0x48] sm:$0xf]
  %v4317 = vld [vmem:[%s7 + $0x4c] sm:$0xf]
  %v4318 = vld [vmem:[%s7 + $0x50] sm:$0xf]
  %v4319 = vld [vmem:[%s7 + $0x54] sm:$0xf]
  %v4320 = vld [vmem:[%s7 + $0x58] sm:$0xf]
  %v4321 = vld [vmem:[%s7 + $0x5c] sm:$0xf]
  %v4322 = vld [vmem:[%s7 + $0x60] sm:$0xf]
  %v4323 = vld [vmem:[%s7 + $0x64] sm:$0xf]
  %v4324 = vld [vmem:[%s7 + $0x68] sm:$0xf]
  %v4325 = vld [vmem:[%s7 + $0x6c] sm:$0xf]
  %v4326 = vld [vmem:[%s7 + $0x70] sm:$0xf]
  %v4327 = vld [vmem:[%s7 + $0x74] sm:$0xf]
  %v4328 = vld [vmem:[%s7 + $0x78] sm:$0xf]
  %v4329 = vld [vmem:[%s7 + $0x7c] sm:$0xf]
  %v4330 = vsub.f32 %v4284, -1.0
  %v4331 = vsub.f32 %v4285, -1.0
  %v4332 = vmul.f32 %v4330, 0.5
  %v4333 = vmul.f32 %v4331, 0.5
  %v4334 = vtanh.pop %v4332
  %v4335 = vtanh.pop %v4333
  %v4336 = vmul.f32 %v4334, %v4334
  %v4337 = vmul.f32 %v4335, %v4335
  %v4338 = vsub.f32 1.0, %v4336
  %v4339 = vsub.f32 1.0, %v4337
  %v4340 = vpack.c.bf16 %v4338, %v4338
  %v4341 = vpack.c.bf16 %v4339, %v4339
  %v4342 = vld [vmem:[%s7 + $0x80] sm:$0xf]
  %v4343 = vld [vmem:[%s7 + $0x84] sm:$0xf]
  %v4344 = vld [vmem:[%s7 + $0x88] sm:$0xf]
  %v4345 = vld [vmem:[%s7 + $0x8c] sm:$0xf]
  %v4346 = vld [vmem:[%s7 + $0x90] sm:$0xf]
  %v4347 = vld [vmem:[%s7 + $0x94] sm:$0xf]
  %v4348 = vld [vmem:[%s7 + $0x98] sm:$0xf]
  %v4349 = vld [vmem:[%s7 + $0x9c] sm:$0xf]
  %v4350 = vld [vmem:[%s7 + $0xa0] sm:$0xf]
  %v4351 = vld [vmem:[%s7 + $0xa4] sm:$0xf]
  %v4352 = vld [vmem:[%s7 + $0xa8] sm:$0xf]
  %v4353 = vld [vmem:[%s7 + $0xac] sm:$0xf]
  %v4354 = vld [vmem:[%s7 + $0xb0] sm:$0xf]
  %v4355 = vld [vmem:[%s7 + $0xb4] sm:$0xf]
  %v4356 = vld [vmem:[%s7 + $0xb8] sm:$0xf]
  %v4357 = vld [vmem:[%s7 + $0xbc] sm:$0xf]
  %v4358 = vld [vmem:[%s7 + $0xc0] sm:$0xf]
  %v4359 = vld [vmem:[%s7 + $0xc4] sm:$0xf]
  %v4360 = vld [vmem:[%s7 + $0xc8] sm:$0xf]
  %v4361 = vld [vmem:[%s7 + $0xcc] sm:$0xf]
  %v4362 = vld [vmem:[%s7 + $0xd0] sm:$0xf]
  %v4363 = vld [vmem:[%s7 + $0xd4] sm:$0xf]
  %v4364 = vld [vmem:[%s7 + $0xd8] sm:$0xf]
  %v4365 = vld [vmem:[%s7 + $0xdc] sm:$0xf]
  %v4366 = vld [vmem:[%s7 + $0xe0] sm:$0xf]
  %v4367 = vld [vmem:[%s7 + $0xe4] sm:$0xf]
  %v4368 = vld [vmem:[%s7 + $0xe8] sm:$0xf]
  %v4369 = vld [vmem:[%s7 + $0xec] sm:$0xf]
  %v4370 = vld [vmem:[%s7 + $0xf0] sm:$0xf]
  %v4371 = vld [vmem:[%s7 + $0xf4] sm:$0xf]
  %v4372 = vld [vmem:[%s7 + $0xf8] sm:$0xf]
  %v4373 = vld [vmem:[%s7 + $0xfc] sm:$0xf]
  %v4406 = vunpack.c.l.b16 %v4342
  %v4407 = vunpack.c.l.b16 %v4343
  %v4408 = vunpack.c.l.b16 %v4344
  %v4409 = vunpack.c.l.b16 %v4345
  %v4410 = vunpack.c.l.b16 %v4346
  %v4411 = vunpack.c.l.b16 %v4347
  %v4412 = vunpack.c.l.b16 %v4348
  %v4413 = vunpack.c.l.b16 %v4349
  %v4414 = vunpack.c.l.b16 %v4350
  %v4415 = vunpack.c.l.b16 %v4351
  %v4416 = vunpack.c.l.b16 %v4352
  %v4417 = vunpack.c.l.b16 %v4353
  %v4418 = vunpack.c.l.b16 %v4354
  %v4419 = vunpack.c.l.b16 %v4355
  %v4420 = vunpack.c.l.b16 %v4356
  %v4421 = vunpack.c.l.b16 %v4357
  %v4422 = vunpack.c.l.b16 %v4358
  %v4423 = vunpack.c.l.b16 %v4359
  %v4424 = vunpack.c.l.b16 %v4360
  %v4425 = vunpack.c.l.b16 %v4361
  %v4426 = vunpack.c.l.b16 %v4362
  %v4427 = vunpack.c.l.b16 %v4363
  %v4428 = vunpack.c.l.b16 %v4364
  %v4429 = vunpack.c.l.b16 %v4365
  %v4430 = vunpack.c.l.b16 %v4366
  %v4431 = vunpack.c.l.b16 %v4367
  %v4432 = vunpack.c.l.b16 %v4368
  %v4433 = vunpack.c.l.b16 %v4369
  %v4434 = vunpack.c.l.b16 %v4370
  %v4435 = vunpack.c.l.b16 %v4371
  %v4436 = vunpack.c.l.b16 %v4372
  %v4437 = vunpack.c.l.b16 %v4373
  %v4438 = vpack.c.b16 %v4407, %v4406
  %v4439 = vpack.c.b16 %v4409, %v4408
  %v4440 = vpack.c.b16 %v4411, %v4410
  %v4441 = vpack.c.b16 %v4413, %v4412
  %v4442 = vpack.c.b16 %v4415, %v4414
  %v4443 = vpack.c.b16 %v4417, %v4416
  %v4444 = vpack.c.b16 %v4419, %v4418
  %v4445 = vpack.c.b16 %v4421, %v4420
  %v4446 = vpack.c.b16 %v4423, %v4422
  %v4447 = vpack.c.b16 %v4425, %v4424
  %v4448 = vpack.c.b16 %v4427, %v4426
  %v4449 = vpack.c.b16 %v4429, %v4428
  %v4450 = vpack.c.b16 %v4431, %v4430
  %v4451 = vpack.c.b16 %v4433, %v4432
  %v4452 = vpack.c.b16 %v4435, %v4434
  %v4453 = vpack.c.b16 %v4437, %v4436
  %4470 = vmatprep.subr.bf16.mxu0 0
  %4471 = vmatpush1.bf16.msra.mxu0 %v4438
  %4472 = vmatprep.subr.bf16.mxu0 0
  %4473 = vmatpush1.bf16.msra.mxu0 %v4439
  %4474 = vmatprep.subr.bf16.mxu0 0
  %4475 = vmatpush1.bf16.msra.mxu0 %v4440
  %4476 = vmatprep.subr.bf16.mxu0 0
  %4477 = vmatpush1.bf16.msra.mxu0 %v4441
  %4478 = vmatprep.subr.bf16.mxu0 0
  %4479 = vmatpush1.bf16.msra.mxu0 %v4442
  %4480 = vmatprep.subr.bf16.mxu0 0
  %4481 = vmatpush1.bf16.msra.mxu0 %v4443
  %4482 = vmatprep.subr.bf16.mxu0 0
  %4483 = vmatpush1.bf16.msra.mxu0 %v4444
  %4484 = vmatprep.subr.bf16.mxu0 0
  %4485 = vmatpush1.bf16.msra.mxu0 %v4445
  %4486 = vmatprep.subr.bf16.mxu0 0
  %4487 = vmatpush1.bf16.msra.mxu0 %v4446
  %4488 = vmatprep.subr.bf16.mxu0 0
  %4489 = vmatpush1.bf16.msra.mxu0 %v4447
  %4490 = vmatprep.subr.bf16.mxu0 0
  %4491 = vmatpush1.bf16.msra.mxu0 %v4448
  %4492 = vmatprep.subr.bf16.mxu0 0
  %4493 = vmatpush1.bf16.msra.mxu0 %v4449
  %4494 = vmatprep.subr.bf16.mxu0 0
  %4495 = vmatpush1.bf16.msra.mxu0 %v4450
  %4496 = vmatprep.subr.bf16.mxu0 0
  %4497 = vmatpush1.bf16.msra.mxu0 %v4451
  %4498 = vmatprep.subr.bf16.mxu0 0
  %4499 = vmatpush1.bf16.msra.mxu0 %v4452
  %4500 = vmatprep.subr.bf16.mxu0 0
  %4501 = vmatpush1.bf16.msra.mxu0 %v4453
  %4502 = vmatprep.mubr.bf16.mxu0 %v4341
  %4503 = vmatmul.mubr.bf16.gmra.mrb[0].mxu0 %v4340
  %v4504 = vpop.f32.mrb[0].mxu0
  %v4505 = vadd.f32 0.0, %v4504
  %v4506 = vpop.f32.mrb[0].mxu0
  %v4507 = vpop.f32.mrb[0].mxu0
  %v4508 = vpop.f32.mrb[0].mxu0
  %4509 = vdwg.mxu0
  %v4542 = vunpack.c.l.b16 %v4298
  %v4543 = vunpack.c.l.b16 %v4299
  %v4544 = vunpack.c.l.b16 %v4300
  %v4545 = vunpack.c.l.b16 %v4301
  %v4546 = vunpack.c.l.b16 %v4302
  %v4547 = vunpack.c.l.b16 %v4303
  %v4548 = vunpack.c.l.b16 %v4304
  %v4549 = vunpack.c.l.b16 %v4305
  %v4550 = vunpack.c.l.b16 %v4306
  %v4551 = vunpack.c.l.b16 %v4307
  %v4552 = vunpack.c.l.b16 %v4308
  %v4553 = vunpack.c.l.b16 %v4309
  %v4554 = vunpack.c.l.b16 %v4310
  %v4555 = vunpack.c.l.b16 %v4311
  %v4556 = vunpack.c.l.b16 %v4312
  %v4557 = vunpack.c.l.b16 %v4313
  %v4558 = vunpack.c.l.b16 %v4314
  %v4559 = vunpack.c.l.b16 %v4315
  %v4560 = vunpack.c.l.b16 %v4316
  %v4561 = vunpack.c.l.b16 %v4317
  %v4562 = vunpack.c.l.b16 %v4318
  %v4563 = vunpack.c.l.b16 %v4319
  %v4564 = vunpack.c.l.b16 %v4320
  %v4565 = vunpack.c.l.b16 %v4321
  %v4566 = vunpack.c.l.b16 %v4322
  %v4567 = vunpack.c.l.b16 %v4323
  %v4568 = vunpack.c.l.b16 %v4324
  %v4569 = vunpack.c.l.b16 %v4325
  %v4570 = vunpack.c.l.b16 %v4326
  %v4571 = vunpack.c.l.b16 %v4327
  %v4572 = vunpack.c.l.b16 %v4328
  %v4573 = vunpack.c.l.b16 %v4329
  %v4574 = vpack.c.b16 %v4543, %v4542
  %v4575 = vpack.c.b16 %v4545, %v4544
  %v4576 = vpack.c.b16 %v4547, %v4546
  %v4577 = vpack.c.b16 %v4549, %v4548
  %v4578 = vpack.c.b16 %v4551, %v4550
  %v4579 = vpack.c.b16 %v4553, %v4552
  %v4580 = vpack.c.b16 %v4555, %v4554
  %v4581 = vpack.c.b16 %v4557, %v4556
  %v4582 = vpack.c.b16 %v4559, %v4558
  %v4583 = vpack.c.b16 %v4561, %v4560
  %v4584 = vpack.c.b16 %v4563, %v4562
  %v4585 = vpack.c.b16 %v4565, %v4564
  %v4586 = vpack.c.b16 %v4567, %v4566
  %v4587 = vpack.c.b16 %v4569, %v4568
  %v4588 = vpack.c.b16 %v4571, %v4570
  %v4589 = vpack.c.b16 %v4573, %v4572
  %4606 = vmatprep.subr.bf16.mxu0 0
  %4607 = vmatpush1.bf16.msra.mxu0 %v4574
  %4608 = vmatprep.subr.bf16.mxu0 0
  %4609 = vmatpush1.bf16.msra.mxu0 %v4575
  %4610 = vmatprep.subr.bf16.mxu0 0
  %4611 = vmatpush1.bf16.msra.mxu0 %v4576
  %4612 = vmatprep.subr.bf16.mxu0 0
  %4613 = vmatpush1.bf16.msra.mxu0 %v4577
  %4614 = vmatprep.subr.bf16.mxu0 0
  %4615 = vmatpush1.bf16.msra.mxu0 %v4578
  %4616 = vmatprep.subr.bf16.mxu0 0
  %4617 = vmatpush1.bf16.msra.mxu0 %v4579
  %4618 = vmatprep.subr.bf16.mxu0 0
  %4619 = vmatpush1.bf16.msra.mxu0 %v4580
  %4620 = vmatprep.subr.bf16.mxu0 0
  %4621 = vmatpush1.bf16.msra.mxu0 %v4581
  %4622 = vmatprep.subr.bf16.mxu0 0
  %4623 = vmatpush1.bf16.msra.mxu0 %v4582
  %4624 = vmatprep.subr.bf16.mxu0 0
  %4625 = vmatpush1.bf16.msra.mxu0 %v4583
  %4626 = vmatprep.subr.bf16.mxu0 0
  %4627 = vmatpush1.bf16.msra.mxu0 %v4584
  %4628 = vmatprep.subr.bf16.mxu0 0
  %4629 = vmatpush1.bf16.msra.mxu0 %v4585
  %4630 = vmatprep.subr.bf16.mxu0 0
  %4631 = vmatpush1.bf16.msra.mxu0 %v4586
  %4632 = vmatprep.subr.bf16.mxu0 0
  %4633 = vmatpush1.bf16.msra.mxu0 %v4587
  %4634 = vmatprep.subr.bf16.mxu0 0
  %4635 = vmatpush1.bf16.msra.mxu0 %v4588
  %4636 = vmatprep.subr.bf16.mxu0 0
  %4637 = vmatpush1.bf16.msra.mxu0 %v4589
  %4638 = vmatprep.mubr.bf16.mxu0 %v4297
  %4639 = vmatmul.mubr.bf16.gmra.mrb[0].mxu0 %v4296
  %v4640 = vpop.f32.mrb[0].mxu0
  %v4641 = vadd.f32 %v4505, %v4640
  %v4642 = vpop.f32.mrb[0].mxu0
  %v4643 = vpop.f32.mrb[0].mxu0
  %v4644 = vpop.f32.mrb[0].mxu0
  %4645 = vdwg.mxu0
  %v4646 = vsub.f32 %v4284, -0.8
  %v4647 = vsub.f32 %v4285, -0.8
  %v4648 = vmul.f32 %v4646, 0.5
  %v4649 = vmul.f32 %v4647, 0.5
  %v4650 = vtanh.pop %v4648
  %v4651 = vtanh.pop %v4649
  %v4652 = vmul.f32 %v4650, %v4650
  %v4653 = vmul.f32 %v4651, %v4651
  %v4654 = vsub.f32 1.0, %v4652
  %v4655 = vsub.f32 1.0, %v4653
  %v4656 = vpack.c.bf16 %v4654, %v4654
  %v4657 = vpack.c.bf16 %v4655, %v4655
  %v4658 = vld [vmem:[%s7 + $0x100] sm:$0xf]
  %v4659 = vld [vmem:[%s7 + $0x104] sm:$0xf]
  %v4660 = vld [vmem:[%s7 + $0x108] sm:$0xf]
  %v4661 = vld [vmem:[%s7 + $0x10c] sm:$0xf]
  %v4662 = vld [vmem:[%s7 + $0x110] sm:$0xf]
  %v4663 = vld [vmem:[%s7 + $0x114] sm:$0xf]
  %v4664 = vld [vmem:[%s7 + $0x118] sm:$0xf]
  %v4665 = vld [vmem:[%s7 + $0x11c] sm:$0xf]
  %v4666 = vld [vmem:[%s7 + $0x120] sm:$0xf]
  %v4667 = vld [vmem:[%s7 + $0x124] sm:$0xf]
  %v4668 = vld [vmem:[%s7 + $0x128] sm:$0xf]
  %v4669 = vld [vmem:[%s7 + $0x12c] sm:$0xf]
  %v4670 = vld [vmem:[%s7 + $0x130] sm:$0xf]
  %v4671 = vld [vmem:[%s7 + $0x134] sm:$0xf]
  %v4672 = vld [vmem:[%s7 + $0x138] sm:$0xf]
  %v4673 = vld [vmem:[%s7 + $0x13c] sm:$0xf]
  %v4674 = vld [vmem:[%s7 + $0x140] sm:$0xf]
  %v4675 = vld [vmem:[%s7 + $0x144] sm:$0xf]
  %v4676 = vld [vmem:[%s7 + $0x148] sm:$0xf]
  %v4677 = vld [vmem:[%s7 + $0x14c] sm:$0xf]
  %v4678 = vld [vmem:[%s7 + $0x150] sm:$0xf]
  %v4679 = vld [vmem:[%s7 + $0x154] sm:$0xf]
  %v4680 = vld [vmem:[%s7 + $0x158] sm:$0xf]
  %v4681 = vld [vmem:[%s7 + $0x15c] sm:$0xf]
  %v4682 = vld [vmem:[%s7 + $0x160] sm:$0xf]
  %v4683 = vld [vmem:[%s7 + $0x164] sm:$0xf]
  %v4684 = vld [vmem:[%s7 + $0x168] sm:$0xf]
  %v4685 = vld [vmem:[%s7 + $0x16c] sm:$0xf]
  %v4686 = vld [vmem:[%s7 + $0x170] sm:$0xf]
  %v4687 = vld [vmem:[%s7 + $0x174] sm:$0xf]
  %v4688 = vld [vmem:[%s7 + $0x178] sm:$0xf]
  %v4689 = vld [vmem:[%s7 + $0x17c] sm:$0xf]
  %v4722 = vunpack.c.l.b16 %v4658
  %v4723 = vunpack.c.l.b16 %v4659
  %v4724 = vunpack.c.l.b16 %v4660
  %v4725 = vunpack.c.l.b16 %v4661
  %v4726 = vunpack.c.l.b16 %v4662
  %v4727 = vunpack.c.l.b16 %v4663
  %v4728 = vunpack.c.l.b16 %v4664
  %v4729 = vunpack.c.l.b16 %v4665
  %v4730 = vunpack.c.l.b16 %v4666
  %v4731 = vunpack.c.l.b16 %v4667
  %v4732 = vunpack.c.l.b16 %v4668
  %v4733 = vunpack.c.l.b16 %v4669
  %v4734 = vunpack.c.l.b16 %v4670
  %v4735 = vunpack.c.l.b16 %v4671
  %v4736 = vunpack.c.l.b16 %v4672
  %v4737 = vunpack.c.l.b16 %v4673
  %v4738 = vunpack.c.l.b16 %v4674
  %v4739 = vunpack.c.l.b16 %v4675
  %v4740 = vunpack.c.l.b16 %v4676
  %v4741 = vunpack.c.l.b16 %v4677
  %v4742 = vunpack.c.l.b16 %v4678
  %v4743 = vunpack.c.l.b16 %v4679
  %v4744 = vunpack.c.l.b16 %v4680
  %v4745 = vunpack.c.l.b16 %v4681
  %v4746 = vunpack.c.l.b16 %v4682
  %v4747 = vunpack.c.l.b16 %v4683
  %v4748 = vunpack.c.l.b16 %v4684
  %v4749 = vunpack.c.l.b16 %v4685
  %v4750 = vunpack.c.l.b16 %v4686
  %v4751 = vunpack.c.l.b16 %v4687
  %v4752 = vunpack.c.l.b16 %v4688
  %v4753 = vunpack.c.l.b16 %v4689
  %v4754 = vpack.c.b16 %v4723, %v4722
  %v4755 = vpack.c.b16 %v4725, %v4724
  %v4756 = vpack.c.b16 %v4727, %v4726
  %v4757 = vpack.c.b16 %v4729, %v4728
  %v4758 = vpack.c.b16 %v4731, %v4730
  %v4759 = vpack.c.b16 %v4733, %v4732
  %v4760 = vpack.c.b16 %v4735, %v4734
  %v4761 = vpack.c.b16 %v4737, %v4736
  %v4762 = vpack.c.b16 %v4739, %v4738
  %v4763 = vpack.c.b16 %v4741, %v4740
  %v4764 = vpack.c.b16 %v4743, %v4742
  %v4765 = vpack.c.b16 %v4745, %v4744
  %v4766 = vpack.c.b16 %v4747, %v4746
  %v4767 = vpack.c.b16 %v4749, %v4748
  %v4768 = vpack.c.b16 %v4751, %v4750
  %v4769 = vpack.c.b16 %v4753, %v4752
  %4786 = vmatprep.subr.bf16.mxu0 0
  %4787 = vmatpush1.bf16.msra.mxu0 %v4754
  %4788 = vmatprep.subr.bf16.mxu0 0
  %4789 = vmatpush1.bf16.msra.mxu0 %v4755
  %4790 = vmatprep.subr.bf16.mxu0 0
  %4791 = vmatpush1.bf16.msra.mxu0 %v4756
  %4792 = vmatprep.subr.bf16.mxu0 0
  %4793 = vmatpush1.bf16.msra.mxu0 %v4757
  %4794 = vmatprep.subr.bf16.mxu0 0
  %4795 = vmatpush1.bf16.msra.mxu0 %v4758
  %4796 = vmatprep.subr.bf16.mxu0 0
  %4797 = vmatpush1.bf16.msra.mxu0 %v4759
  %4798 = vmatprep.subr.bf16.mxu0 0
  %4799 = vmatpush1.bf16.msra.mxu0 %v4760
  %4800 = vmatprep.subr.bf16.mxu0 0
  %4801 = vmatpush1.bf16.msra.mxu0 %v4761
  %4802 = vmatprep.subr.bf16.mxu0 0
  %4803 = vmatpush1.bf16.msra.mxu0 %v4762
  %4804 = vmatprep.subr.bf16.mxu0 0
  %4805 = vmatpush1.bf16.msra.mxu0 %v4763
  %4806 = vmatprep.subr.bf16.mxu0 0
  %4807 = vmatpush1.bf16.msra.mxu0 %v4764
  %4808 = vmatprep.subr.bf16.mxu0 0
  %4809 = vmatpush1.bf16.msra.mxu0 %v4765
  %4810 = vmatprep.subr.bf16.mxu0 0
  %4811 = vmatpush1.bf16.msra.mxu0 %v4766
  %4812 = vmatprep.subr.bf16.mxu0 0
  %4813 = vmatpush1.bf16.msra.mxu0 %v4767
  %4814 = vmatprep.subr.bf16.mxu0 0
  %4815 = vmatpush1.bf16.msra.mxu0 %v4768
  %4816 = vmatprep.subr.bf16.mxu0 0
  %4817 = vmatpush1.bf16.msra.mxu0 %v4769
  %4818 = vmatprep.mubr.bf16.mxu0 %v4657
  %4819 = vmatmul.mubr.bf16.gmra.mrb[0].mxu0 %v4656
  %v4820 = vpop.f32.mrb[0].mxu0
  %v4821 = vadd.f32 0.0, %v4820
  %v4822 = vpop.f32.mrb[0].mxu0
  %v4823 = vpop.f32.mrb[0].mxu0
  %v4824 = vpop.f32.mrb[0].mxu0
  %4825 = vdwg.mxu0
  %v4826 = vadd.f32 %v4641, %v4821
  %v4827 = vsub.f32 %v4284, -0.6
  %v4828 = vsub.f32 %v4285, -0.6
  %v4829 = vmul.f32 %v4827, 0.5
  %v4830 = vmul.f32 %v4828, 0.5
  %v4831 = vtanh.pop %v4829
  %v4832 = vtanh.pop %v4830
  %v4833 = vmul.f32 %v4831, %v4831
  %v4834 = vmul.f32 %v4832, %v4832
  %v4835 = vsub.f32 1.0, %v4833
  %v4836 = vsub.f32 1.0, %v4834
  %v4837 = vpack.c.bf16 %v4835, %v4835
  %v4838 = vpack.c.bf16 %v4836, %v4836
  %v4839 = vld [vmem:[%s7 + $0x180] sm:$0xf]
  %v4840 = vld [vmem:[%s7 + $0x184] sm:$0xf]
  %v4841 = vld [vmem:[%s7 + $0x188] sm:$0xf]
  %v4842 = vld [vmem:[%s7 + $0x18c] sm:$0xf]
  %v4843 = vld [vmem:[%s7 + $0x190] sm:$0xf]
  %v4844 = vld [vmem:[%s7 + $0x194] sm:$0xf]
  %v4845 = vld [vmem:[%s7 + $0x198] sm:$0xf]
  %v4846 = vld [vmem:[%s7 + $0x19c] sm:$0xf]
  %v4847 = vld [vmem:[%s7 + $0x1a0] sm:$0xf]
  %v4848 = vld [vmem:[%s7 + $0x1a4] sm:$0xf]
  %v4849 = vld [vmem:[%s7 + $0x1a8] sm:$0xf]
  %v4850 = vld [vmem:[%s7 + $0x1ac] sm:$0xf]
  %v4851 = vld [vmem:[%s7 + $0x1b0] sm:$0xf]
  %v4852 = vld [vmem:[%s7 + $0x1b4] sm:$0xf]
  %v4853 = vld [vmem:[%s7 + $0x1b8] sm:$0xf]
  %v4854 = vld [vmem:[%s7 + $0x1bc] sm:$0xf]
  %v4855 = vld [vmem:[%s7 + $0x1c0] sm:$0xf]
  %v4856 = vld [vmem:[%s7 + $0x1c4] sm:$0xf]
  %v4857 = vld [vmem:[%s7 + $0x1c8] sm:$0xf]
  %v4858 = vld [vmem:[%s7 + $0x1cc] sm:$0xf]
  %v4859 = vld [vmem:[%s7 + $0x1d0] sm:$0xf]
  %v4860 = vld [vmem:[%s7 + $0x1d4] sm:$0xf]
  %v4861 = vld [vmem:[%s7 + $0x1d8] sm:$0xf]
  %v4862 = vld [vmem:[%s7 + $0x1dc] sm:$0xf]
  %v4863 = vld [vmem:[%s7 + $0x1e0] sm:$0xf]
  %v4864 = vld [vmem:[%s7 + $0x1e4] sm:$0xf]
  %v4865 = vld [vmem:[%s7 + $0x1e8] sm:$0xf]
  %v4866 = vld [vmem:[%s7 + $0x1ec] sm:$0xf]
  %v4867 = vld [vmem:[%s7 + $0x1f0] sm:$0xf]
  %v4868 = vld [vmem:[%s7 + $0x1f4] sm:$0xf]
  %v4869 = vld [vmem:[%s7 + $0x1f8] sm:$0xf]
  %v4870 = vld [vmem:[%s7 + $0x1fc] sm:$0xf]
  %v4903 = vunpack.c.l.b16 %v4839
  %v4904 = vunpack.c.l.b16 %v4840
  %v4905 = vunpack.c.l.b16 %v4841
  %v4906 = vunpack.c.l.b16 %v4842
  %v4907 = vunpack.c.l.b16 %v4843
  %v4908 = vunpack.c.l.b16 %v4844
  %v4909 = vunpack.c.l.b16 %v4845
  %v4910 = vunpack.c.l.b16 %v4846
  %v4911 = vunpack.c.l.b16 %v4847
  %v4912 = vunpack.c.l.b16 %v4848
  %v4913 = vunpack.c.l.b16 %v4849
  %v4914 = vunpack.c.l.b16 %v4850
  %v4915 = vunpack.c.l.b16 %v4851
  %v4916 = vunpack.c.l.b16 %v4852
  %v4917 = vunpack.c.l.b16 %v4853
  %v4918 = vunpack.c.l.b16 %v4854
  %v4919 = vunpack.c.l.b16 %v4855
  %v4920 = vunpack.c.l.b16 %v4856
  %v4921 = vunpack.c.l.b16 %v4857
  %v4922 = vunpack.c.l.b16 %v4858
  %v4923 = vunpack.c.l.b16 %v4859
  %v4924 = vunpack.c.l.b16 %v4860
  %v4925 = vunpack.c.l.b16 %v4861
  %v4926 = vunpack.c.l.b16 %v4862
  %v4927 = vunpack.c.l.b16 %v4863
  %v4928 = vunpack.c.l.b16 %v4864
  %v4929 = vunpack.c.l.b16 %v4865
  %v4930 = vunpack.c.l.b16 %v4866
  %v4931 = vunpack.c.l.b16 %v4867
  %v4932 = vunpack.c.l.b16 %v4868
  %v4933 = vunpack.c.l.b16 %v4869
  %v4934 = vunpack.c.l.b16 %v4870
  %v4935 = vpack.c.b16 %v4904, %v4903
  %v4936 = vpack.c.b16 %v4906, %v4905
  %v4937 = vpack.c.b16 %v4908, %v4907
  %v4938 = vpack.c.b16 %v4910, %v4909
  %v4939 = vpack.c.b16 %v4912, %v4911
  %v4940 = vpack.c.b16 %v4914, %v4913
  %v4941 = vpack.c.b16 %v4916, %v4915
  %v4942 = vpack.c.b16 %v4918, %v4917
  %v4943 = vpack.c.b16 %v4920, %v4919
  %v4944 = vpack.c.b16 %v4922, %v4921
  %v4945 = vpack.c.b16 %v4924, %v4923
  %v4946 = vpack.c.b16 %v4926, %v4925
  %v4947 = vpack.c.b16 %v4928, %v4927
  %v4948 = vpack.c.b16 %v4930, %v4929
  %v4949 = vpack.c.b16 %v4932, %v4931
  %v4950 = vpack.c.b16 %v4934, %v4933
  %4967 = vmatprep.subr.bf16.mxu0 0
  %4968 = vmatpush1.bf16.msra.mxu0 %v4935
  %4969 = vmatprep.subr.bf16.mxu0 0
  %4970 = vmatpush1.bf16.msra.mxu0 %v4936
  %4971 = vmatprep.subr.bf16.mxu0 0
  %4972 = vmatpush1.bf16.msra.mxu0 %v4937
  %4973 = vmatprep.subr.bf16.mxu0 0
  %4974 = vmatpush1.bf16.msra.mxu0 %v4938
  %4975 = vmatprep.subr.bf16.mxu0 0
  %4976 = vmatpush1.bf16.msra.mxu0 %v4939
  %4977 = vmatprep.subr.bf16.mxu0 0
  %4978 = vmatpush1.bf16.msra.mxu0 %v4940
  %4979 = vmatprep.subr.bf16.mxu0 0
  %4980 = vmatpush1.bf16.msra.mxu0 %v4941
  %4981 = vmatprep.subr.bf16.mxu0 0
  %4982 = vmatpush1.bf16.msra.mxu0 %v4942
  %4983 = vmatprep.subr.bf16.mxu0 0
  %4984 = vmatpush1.bf16.msra.mxu0 %v4943
  %4985 = vmatprep.subr.bf16.mxu0 0
  %4986 = vmatpush1.bf16.msra.mxu0 %v4944
  %4987 = vmatprep.subr.bf16.mxu0 0
  %4988 = vmatpush1.bf16.msra.mxu0 %v4945
  %4989 = vmatprep.subr.bf16.mxu0 0
  %4990 = vmatpush1.bf16.msra.mxu0 %v4946
  %4991 = vmatprep.subr.bf16.mxu0 0
  %4992 = vmatpush1.bf16.msra.mxu0 %v4947
  %4993 = vmatprep.subr.bf16.mxu0 0
  %4994 = vmatpush1.bf16.msra.mxu0 %v4948
  %4995 = vmatprep.subr.bf16.mxu0 0
  %4996 = vmatpush1.bf16.msra.mxu0 %v4949
  %4997 = vmatprep.subr.bf16.mxu0 0
  %4998 = vmatpush1.bf16.msra.mxu0 %v4950
  %4999 = vmatprep.mubr.bf16.mxu0 %v4838
  %5000 = vmatmul.mubr.bf16.gmra.mrb[0].mxu0 %v4837
  %v5001 = vpop.f32.mrb[0].mxu0
  %v5002 = vadd.f32 0.0, %v5001
  %v5003 = vpop.f32.mrb[0].mxu0
  %v5004 = vpop.f32.mrb[0].mxu0
  %v5005 = vpop.f32.mrb[0].mxu0
  %5006 = vdwg.mxu0
  %v5007 = vadd.f32 %v4826, %v5002
  %v5008 = vsub.f32 %v4284, -0.4
  %v5009 = vsub.f32 %v4285, -0.4
  %v5010 = vmul.f32 %v5008, 0.5
  %v5011 = vmul.f32 %v5009, 0.5
  %v5012 = vtanh.pop %v5010
  %v5013 = vtanh.pop %v5011
  %v5014 = vmul.f32 %v5012, %v5012
  %v5015 = vmul.f32 %v5013, %v5013
  %v5016 = vsub.f32 1.0, %v5014
  %v5017 = vsub.f32 1.0, %v5015
  %v5018 = vpack.c.bf16 %v5016, %v5016
  %v5019 = vpack.c.bf16 %v5017, %v5017
  %v5020 = vld [vmem:[%s7 + $0x200] sm:$0xf]
  %v5021 = vld [vmem:[%s7 + $0x204] sm:$0xf]
  %v5022 = vld [vmem:[%s7 + $0x208] sm:$0xf]
  %v5023 = vld [vmem:[%s7 + $0x20c] sm:$0xf]
  %v5024 = vld [vmem:[%s7 + $0x210] sm:$0xf]
  %v5025 = vld [vmem:[%s7 + $0x214] sm:$0xf]
  %v5026 = vld [vmem:[%s7 + $0x218] sm:$0xf]
  %v5027 = vld [vmem:[%s7 + $0x21c] sm:$0xf]
  %v5028 = vld [vmem:[%s7 + $0x220] sm:$0xf]
  %v5029 = vld [vmem:[%s7 + $0x224] sm:$0xf]
  %v5030 = vld [vmem:[%s7 + $0x228] sm:$0xf]
  %v5031 = vld [vmem:[%s7 + $0x22c] sm:$0xf]
  %v5032 = vld [vmem:[%s7 + $0x230] sm:$0xf]
  %v5033 = vld [vmem:[%s7 + $0x234] sm:$0xf]
  %v5034 = vld [vmem:[%s7 + $0x238] sm:$0xf]
  %v5035 = vld [vmem:[%s7 + $0x23c] sm:$0xf]
  %v5036 = vld [vmem:[%s7 + $0x240] sm:$0xf]
  %v5037 = vld [vmem:[%s7 + $0x244] sm:$0xf]
  %v5038 = vld [vmem:[%s7 + $0x248] sm:$0xf]
  %v5039 = vld [vmem:[%s7 + $0x24c] sm:$0xf]
  %v5040 = vld [vmem:[%s7 + $0x250] sm:$0xf]
  %v5041 = vld [vmem:[%s7 + $0x254] sm:$0xf]
  %v5042 = vld [vmem:[%s7 + $0x258] sm:$0xf]
  %v5043 = vld [vmem:[%s7 + $0x25c] sm:$0xf]
  %v5044 = vld [vmem:[%s7 + $0x260] sm:$0xf]
  %v5045 = vld [vmem:[%s7 + $0x264] sm:$0xf]
  %v5046 = vld [vmem:[%s7 + $0x268] sm:$0xf]
  %v5047 = vld [vmem:[%s7 + $0x26c] sm:$0xf]
  %v5048 = vld [vmem:[%s7 + $0x270] sm:$0xf]
  %v5049 = vld [vmem:[%s7 + $0x274] sm:$0xf]
  %v5050 = vld [vmem:[%s7 + $0x278] sm:$0xf]
  %v5051 = vld [vmem:[%s7 + $0x27c] sm:$0xf]
  %v5084 = vunpack.c.l.b16 %v5020
  %v5085 = vunpack.c.l.b16 %v5021
  %v5086 = vunpack.c.l.b16 %v5022
  %v5087 = vunpack.c.l.b16 %v5023
  %v5088 = vunpack.c.l.b16 %v5024
  %v5089 = vunpack.c.l.b16 %v5025
  %v5090 = vunpack.c.l.b16 %v5026
  %v5091 = vunpack.c.l.b16 %v5027
  %v5092 = vunpack.c.l.b16 %v5028
  %v5093 = vunpack.c.l.b16 %v5029
  %v5094 = vunpack.c.l.b16 %v5030
  %v5095 = vunpack.c.l.b16 %v5031
  %v5096 = vunpack.c.l.b16 %v5032
  %v5097 = vunpack.c.l.b16 %v5033
  %v5098 = vunpack.c.l.b16 %v5034
  %v5099 = vunpack.c.l.b16 %v5035
  %v5100 = vunpack.c.l.b16 %v5036
  %v5101 = vunpack.c.l.b16 %v5037
  %v5102 = vunpack.c.l.b16 %v5038
  %v5103 = vunpack.c.l.b16 %v5039
  %v5104 = vunpack.c.l.b16 %v5040
  %v5105 = vunpack.c.l.b16 %v5041
  %v5106 = vunpack.c.l.b16 %v5042
  %v5107 = vunpack.c.l.b16 %v5043
  %v5108 = vunpack.c.l.b16 %v5044
  %v5109 = vunpack.c.l.b16 %v5045
  %v5110 = vunpack.c.l.b16 %v5046
  %v5111 = vunpack.c.l.b16 %v5047
  %v5112 = vunpack.c.l.b16 %v5048
  %v5113 = vunpack.c.l.b16 %v5049
  %v5114 = vunpack.c.l.b16 %v5050
  %v5115 = vunpack.c.l.b16 %v5051
  %v5116 = vpack.c.b16 %v5085, %v5084
  %v5117 = vpack.c.b16 %v5087, %v5086
  %v5118 = vpack.c.b16 %v5089, %v5088
  %v5119 = vpack.c.b16 %v5091, %v5090
  %v5120 = vpack.c.b16 %v5093, %v5092
  %v5121 = vpack.c.b16 %v5095, %v5094
  %v5122 = vpack.c.b16 %v5097, %v5096
  %v5123 = vpack.c.b16 %v5099, %v5098
  %v5124 = vpack.c.b16 %v5101, %v5100
  %v5125 = vpack.c.b16 %v5103, %v5102
  %v5126 = vpack.c.b16 %v5105, %v5104
  %v5127 = vpack.c.b16 %v5107, %v5106
  %v5128 = vpack.c.b16 %v5109, %v5108
  %v5129 = vpack.c.b16 %v5111, %v5110
  %v5130 = vpack.c.b16 %v5113, %v5112
  %v5131 = vpack.c.b16 %v5115, %v5114
  %5148 = vmatprep.subr.bf16.mxu0 0
  %5149 = vmatpush1.bf16.msra.mxu0 %v5116
  %5150 = vmatprep.subr.bf16.mxu0 0
  %5151 = vmatpush1.bf16.msra.mxu0 %v5117
  %5152 = vmatprep.subr.bf16.mxu0 0
  %5153 = vmatpush1.bf16.msra.mxu0 %v5118
  %5154 = vmatprep.subr.bf16.mxu0 0
  %5155 = vmatpush1.bf16.msra.mxu0 %v5119
  %5156 = vmatprep.subr.bf16.mxu0 0
  %5157 = vmatpush1.bf16.msra.mxu0 %v5120
  %5158 = vmatprep.subr.bf16.mxu0 0
  %5159 = vmatpush1.bf16.msra.mxu0 %v5121
  %5160 = vmatprep.subr.bf16.mxu0 0
  %5161 = vmatpush1.bf16.msra.mxu0 %v5122
  %5162 = vmatprep.subr.bf16.mxu0 0
  %5163 = vmatpush1.bf16.msra.mxu0 %v5123
  %5164 = vmatprep.subr.bf16.mxu0 0
  %5165 = vmatpush1.bf16.msra.mxu0 %v5124
  %5166 = vmatprep.subr.bf16.mxu0 0
  %5167 = vmatpush1.bf16.msra.mxu0 %v5125
  %5168 = vmatprep.subr.bf16.mxu0 0
  %5169 = vmatpush1.bf16.msra.mxu0 %v5126
  %5170 = vmatprep.subr.bf16.mxu0 0
  %5171 = vmatpush1.bf16.msra.mxu0 %v5127
  %5172 = vmatprep.subr.bf16.mxu0 0
  %5173 = vmatpush1.bf16.msra.mxu0 %v5128
  %5174 = vmatprep.subr.bf16.mxu0 0
  %5175 = vmatpush1.bf16.msra.mxu0 %v5129
  %5176 = vmatprep.subr.bf16.mxu0 0
  %5177 = vmatpush1.bf16.msra.mxu0 %v5130
  %5178 = vmatprep.subr.bf16.mxu0 0
  %5179 = vmatpush1.bf16.msra.mxu0 %v5131
  %5180 = vmatprep.mubr.bf16.mxu0 %v5019
  %5181 = vmatmul.mubr.bf16.gmra.mrb[0].mxu0 %v5018
  %v5182 = vpop.f32.mrb[0].mxu0
  %v5183 = vadd.f32 0.0, %v5182
  %v5184 = vpop.f32.mrb[0].mxu0
  %v5185 = vpop.f32.mrb[0].mxu0
  %v5186 = vpop.f32.mrb[0].mxu0
  %5187 = vdwg.mxu0
  %v5188 = vadd.f32 %v5007, %v5183
  %v5189 = vsub.f32 %v4284, -0.2
  %v5190 = vsub.f32 %v4285, -0.2
  %v5191 = vmul.f32 %v5189, 0.5
  %v5192 = vmul.f32 %v5190, 0.5
  %v5193 = vtanh.pop %v5191
  %v5194 = vtanh.pop %v5192
  %v5195 = vmul.f32 %v5193, %v5193
  %v5196 = vmul.f32 %v5194, %v5194
  %v5197 = vsub.f32 1.0, %v5195
  %v5198 = vsub.f32 1.0, %v5196
  %v5199 = vpack.c.bf16 %v5197, %v5197
  %v5200 = vpack.c.bf16 %v5198, %v5198
  %v5201 = vld [vmem:[%s7 + $0x280] sm:$0xf]
  %v5202 = vld [vmem:[%s7 + $0x284] sm:$0xf]
  %v5203 = vld [vmem:[%s7 + $0x288] sm:$0xf]
  %v5204 = vld [vmem:[%s7 + $0x28c] sm:$0xf]
  %v5205 = vld [vmem:[%s7 + $0x290] sm:$0xf]
  %v5206 = vld [vmem:[%s7 + $0x294] sm:$0xf]
  %v5207 = vld [vmem:[%s7 + $0x298] sm:$0xf]
  %v5208 = vld [vmem:[%s7 + $0x29c] sm:$0xf]
  %v5209 = vld [vmem:[%s7 + $0x2a0] sm:$0xf]
  %v5210 = vld [vmem:[%s7 + $0x2a4] sm:$0xf]
  %v5211 = vld [vmem:[%s7 + $0x2a8] sm:$0xf]
  %v5212 = vld [vmem:[%s7 + $0x2ac] sm:$0xf]
  %v5213 = vld [vmem:[%s7 + $0x2b0] sm:$0xf]
  %v5214 = vld [vmem:[%s7 + $0x2b4] sm:$0xf]
  %v5215 = vld [vmem:[%s7 + $0x2b8] sm:$0xf]
  %v5216 = vld [vmem:[%s7 + $0x2bc] sm:$0xf]
  %v5217 = vld [vmem:[%s7 + $0x2c0] sm:$0xf]
  %v5218 = vld [vmem:[%s7 + $0x2c4] sm:$0xf]
  %v5219 = vld [vmem:[%s7 + $0x2c8] sm:$0xf]
  %v5220 = vld [vmem:[%s7 + $0x2cc] sm:$0xf]
  %v5221 = vld [vmem:[%s7 + $0x2d0] sm:$0xf]
  %v5222 = vld [vmem:[%s7 + $0x2d4] sm:$0xf]
  %v5223 = vld [vmem:[%s7 + $0x2d8] sm:$0xf]
  %v5224 = vld [vmem:[%s7 + $0x2dc] sm:$0xf]
  %v5225 = vld [vmem:[%s7 + $0x2e0] sm:$0xf]
  %v5226 = vld [vmem:[%s7 + $0x2e4] sm:$0xf]
  %v5227 = vld [vmem:[%s7 + $0x2e8] sm:$0xf]
  %v5228 = vld [vmem:[%s7 + $0x2ec] sm:$0xf]
  %v5229 = vld [vmem:[%s7 + $0x2f0] sm:$0xf]
  %v5230 = vld [vmem:[%s7 + $0x2f4] sm:$0xf]
  %v5231 = vld [vmem:[%s7 + $0x2f8] sm:$0xf]
  %v5232 = vld [vmem:[%s7 + $0x2fc] sm:$0xf]
  %v5265 = vunpack.c.l.b16 %v5201
  %v5266 = vunpack.c.l.b16 %v5202
  %v5267 = vunpack.c.l.b16 %v5203
  %v5268 = vunpack.c.l.b16 %v5204
  %v5269 = vunpack.c.l.b16 %v5205
  %v5270 = vunpack.c.l.b16 %v5206
  %v5271 = vunpack.c.l.b16 %v5207
  %v5272 = vunpack.c.l.b16 %v5208
  %v5273 = vunpack.c.l.b16 %v5209
  %v5274 = vunpack.c.l.b16 %v5210
  %v5275 = vunpack.c.l.b16 %v5211
  %v5276 = vunpack.c.l.b16 %v5212
  %v5277 = vunpack.c.l.b16 %v5213
  %v5278 = vunpack.c.l.b16 %v5214
  %v5279 = vunpack.c.l.b16 %v5215
  %v5280 = vunpack.c.l.b16 %v5216
  %v5281 = vunpack.c.l.b16 %v5217
  %v5282 = vunpack.c.l.b16 %v5218
  %v5283 = vunpack.c.l.b16 %v5219
  %v5284 = vunpack.c.l.b16 %v5220
  %v5285 = vunpack.c.l.b16 %v5221
  %v5286 = vunpack.c.l.b16 %v5222
  %v5287 = vunpack.c.l.b16 %v5223
  %v5288 = vunpack.c.l.b16 %v5224
  %v5289 = vunpack.c.l.b16 %v5225
  %v5290 = vunpack.c.l.b16 %v5226
  %v5291 = vunpack.c.l.b16 %v5227
  %v5292 = vunpack.c.l.b16 %v5228
  %v5293 = vunpack.c.l.b16 %v5229
  %v5294 = vunpack.c.l.b16 %v5230
  %v5295 = vunpack.c.l.b16 %v5231
  %v5296 = vunpack.c.l.b16 %v5232
  %v5297 = vpack.c.b16 %v5266, %v5265
  %v5298 = vpack.c.b16 %v5268, %v5267
  %v5299 = vpack.c.b16 %v5270, %v5269
  %v5300 = vpack.c.b16 %v5272, %v5271
  %v5301 = vpack.c.b16 %v5274, %v5273
  %v5302 = vpack.c.b16 %v5276, %v5275
  %v5303 = vpack.c.b16 %v5278, %v5277
  %v5304 = vpack.c.b16 %v5280, %v5279
  %v5305 = vpack.c.b16 %v5282, %v5281
  %v5306 = vpack.c.b16 %v5284, %v5283
  %v5307 = vpack.c.b16 %v5286, %v5285
  %v5308 = vpack.c.b16 %v5288, %v5287
  %v5309 = vpack.c.b16 %v5290, %v5289
  %v5310 = vpack.c.b16 %v5292, %v5291
  %v5311 = vpack.c.b16 %v5294, %v5293
  %v5312 = vpack.c.b16 %v5296, %v5295
  %5329 = vmatprep.subr.bf16.mxu0 0
  %5330 = vmatpush1.bf16.msra.mxu0 %v5297
  %5331 = vmatprep.subr.bf16.mxu0 0
  %5332 = vmatpush1.bf16.msra.mxu0 %v5298
  %5333 = vmatprep.subr.bf16.mxu0 0
  %5334 = vmatpush1.bf16.msra.mxu0 %v5299
  %5335 = vmatprep.subr.bf16.mxu0 0
  %5336 = vmatpush1.bf16.msra.mxu0 %v5300
  %5337 = vmatprep.subr.bf16.mxu0 0
  %5338 = vmatpush1.bf16.msra.mxu0 %v5301
  %5339 = vmatprep.subr.bf16.mxu0 0
  %5340 = vmatpush1.bf16.msra.mxu0 %v5302
  %5341 = vmatprep.subr.bf16.mxu0 0
  %5342 = vmatpush1.bf16.msra.mxu0 %v5303
  %5343 = vmatprep.subr.bf16.mxu0 0
  %5344 = vmatpush1.bf16.msra.mxu0 %v5304
  %5345 = vmatprep.subr.bf16.mxu0 0
  %5346 = vmatpush1.bf16.msra.mxu0 %v5305
  %5347 = vmatprep.subr.bf16.mxu0 0
  %5348 = vmatpush1.bf16.msra.mxu0 %v5306
  %5349 = vmatprep.subr.bf16.mxu0 0
  %5350 = vmatpush1.bf16.msra.mxu0 %v5307
  %5351 = vmatprep.subr.bf16.mxu0 0
  %5352 = vmatpush1.bf16.msra.mxu0 %v5308
  %5353 = vmatprep.subr.bf16.mxu0 0
  %5354 = vmatpush1.bf16.msra.mxu0 %v5309
  %5355 = vmatprep.subr.bf16.mxu0 0
  %5356 = vmatpush1.bf16.msra.mxu0 %v5310
  %5357 = vmatprep.subr.bf16.mxu0 0
  %5358 = vmatpush1.bf16.msra.mxu0 %v5311
  %5359 = vmatprep.subr.bf16.mxu0 0
  %5360 = vmatpush1.bf16.msra.mxu0 %v5312
  %5361 = vmatprep.mubr.bf16.mxu0 %v5200
  %5362 = vmatmul.mubr.bf16.gmra.mrb[0].mxu0 %v5199
  %v5363 = vpop.f32.mrb[0].mxu0
  %v5364 = vadd.f32 0.0, %v5363
  %v5365 = vpop.f32.mrb[0].mxu0
  %v5366 = vpop.f32.mrb[0].mxu0
  %v5367 = vpop.f32.mrb[0].mxu0
  %5368 = vdwg.mxu0
  %v5369 = vadd.f32 %v5188, %v5364
  %v5370 = vmul.f32 %v4284, 0.5
  %v5371 = vmul.f32 %v4285, 0.5
  %v5372 = vtanh.pop %v5370
  %v5373 = vtanh.pop %v5371
  %v5374 = vmul.f32 %v5372, %v5372
  %v5375 = vmul.f32 %v5373, %v5373
  %v5376 = vsub.f32 1.0, %v5374
  %v5377 = vsub.f32 1.0, %v5375
  %v5378 = vpack.c.bf16 %v5376, %v5376
  %v5379 = vpack.c.bf16 %v5377, %v5377
  %v5380 = vld [vmem:[%s7 + $0x300] sm:$0xf]
  %v5381 = vld [vmem:[%s7 + $0x304] sm:$0xf]
  %v5382 = vld [vmem:[%s7 + $0x308] sm:$0xf]
  %v5383 = vld [vmem:[%s7 + $0x30c] sm:$0xf]
  %v5384 = vld [vmem:[%s7 + $0x310] sm:$0xf]
  %v5385 = vld [vmem:[%s7 + $0x314] sm:$0xf]
  %v5386 = vld [vmem:[%s7 + $0x318] sm:$0xf]
  %v5387 = vld [vmem:[%s7 + $0x31c] sm:$0xf]
  %v5388 = vld [vmem:[%s7 + $0x320] sm:$0xf]
  %v5389 = vld [vmem:[%s7 + $0x324] sm:$0xf]
  %v5390 = vld [vmem:[%s7 + $0x328] sm:$0xf]
  %v5391 = vld [vmem:[%s7 + $0x32c] sm:$0xf]
  %v5392 = vld [vmem:[%s7 + $0x330] sm:$0xf]
  %v5393 = vld [vmem:[%s7 + $0x334] sm:$0xf]
  %v5394 = vld [vmem:[%s7 + $0x338] sm:$0xf]
  %v5395 = vld [vmem:[%s7 + $0x33c] sm:$0xf]
  %v5396 = vld [vmem:[%s7 + $0x340] sm:$0xf]
  %v5397 = vld [vmem:[%s7 + $0x344] sm:$0xf]
  %v5398 = vld [vmem:[%s7 + $0x348] sm:$0xf]
  %v5399 = vld [vmem:[%s7 + $0x34c] sm:$0xf]
  %v5400 = vld [vmem:[%s7 + $0x350] sm:$0xf]
  %v5401 = vld [vmem:[%s7 + $0x354] sm:$0xf]
  %v5402 = vld [vmem:[%s7 + $0x358] sm:$0xf]
  %v5403 = vld [vmem:[%s7 + $0x35c] sm:$0xf]
  %v5404 = vld [vmem:[%s7 + $0x360] sm:$0xf]
  %v5405 = vld [vmem:[%s7 + $0x364] sm:$0xf]
  %v5406 = vld [vmem:[%s7 + $0x368] sm:$0xf]
  %v5407 = vld [vmem:[%s7 + $0x36c] sm:$0xf]
  %v5408 = vld [vmem:[%s7 + $0x370] sm:$0xf]
  %v5409 = vld [vmem:[%s7 + $0x374] sm:$0xf]
  %v5410 = vld [vmem:[%s7 + $0x378] sm:$0xf]
  %v5411 = vld [vmem:[%s7 + $0x37c] sm:$0xf]
  %v5444 = vunpack.c.l.b16 %v5380
  %v5445 = vunpack.c.l.b16 %v5381
  %v5446 = vunpack.c.l.b16 %v5382
  %v5447 = vunpack.c.l.b16 %v5383
  %v5448 = vunpack.c.l.b16 %v5384
  %v5449 = vunpack.c.l.b16 %v5385
  %v5450 = vunpack.c.l.b16 %v5386
  %v5451 = vunpack.c.l.b16 %v5387
  %v5452 = vunpack.c.l.b16 %v5388
  %v5453 = vunpack.c.l.b16 %v5389
  %v5454 = vunpack.c.l.b16 %v5390
  %v5455 = vunpack.c.l.b16 %v5391
  %v5456 = vunpack.c.l.b16 %v5392
  %v5457 = vunpack.c.l.b16 %v5393
  %v5458 = vunpack.c.l.b16 %v5394
  %v5459 = vunpack.c.l.b16 %v5395
  %v5460 = vunpack.c.l.b16 %v5396
  %v5461 = vunpack.c.l.b16 %v5397
  %v5462 = vunpack.c.l.b16 %v5398
  %v5463 = vunpack.c.l.b16 %v5399
  %v5464 = vunpack.c.l.b16 %v5400
  %v5465 = vunpack.c.l.b16 %v5401
  %v5466 = vunpack.c.l.b16 %v5402
  %v5467 = vunpack.c.l.b16 %v5403
  %v5468 = vunpack.c.l.b16 %v5404
  %v5469 = vunpack.c.l.b16 %v5405
  %v5470 = vunpack.c.l.b16 %v5406
  %v5471 = vunpack.c.l.b16 %v5407
  %v5472 = vunpack.c.l.b16 %v5408
  %v5473 = vunpack.c.l.b16 %v5409
  %v5474 = vunpack.c.l.b16 %v5410
  %v5475 = vunpack.c.l.b16 %v5411
  %v5476 = vpack.c.b16 %v5445, %v5444
  %v5477 = vpack.c.b16 %v5447, %v5446
  %v5478 = vpack.c.b16 %v5449, %v5448
  %v5479 = vpack.c.b16 %v5451, %v5450
  %v5480 = vpack.c.b16 %v5453, %v5452
  %v5481 = vpack.c.b16 %v5455, %v5454
  %v5482 = vpack.c.b16 %v5457, %v5456
  %v5483 = vpack.c.b16 %v5459, %v5458
  %v5484 = vpack.c.b16 %v5461, %v5460
  %v5485 = vpack.c.b16 %v5463, %v5462
  %v5486 = vpack.c.b16 %v5465, %v5464
  %v5487 = vpack.c.b16 %v5467, %v5466
  %v5488 = vpack.c.b16 %v5469, %v5468
  %v5489 = vpack.c.b16 %v5471, %v5470
  %v5490 = vpack.c.b16 %v5473, %v5472
  %v5491 = vpack.c.b16 %v5475, %v5474
  %5508 = vmatprep.subr.bf16.mxu0 0
  %5509 = vmatpush1.bf16.msra.mxu0 %v5476
  %5510 = vmatprep.subr.bf16.mxu0 0
  %5511 = vmatpush1.bf16.msra.mxu0 %v5477
  %5512 = vmatprep.subr.bf16.mxu0 0
  %5513 = vmatpush1.bf16.msra.mxu0 %v5478
  %5514 = vmatprep.subr.bf16.mxu0 0
  %5515 = vmatpush1.bf16.msra.mxu0 %v5479
  %5516 = vmatprep.subr.bf16.mxu0 0
  %5517 = vmatpush1.bf16.msra.mxu0 %v5480
  %5518 = vmatprep.subr.bf16.mxu0 0
  %5519 = vmatpush1.bf16.msra.mxu0 %v5481
  %5520 = vmatprep.subr.bf16.mxu0 0
  %5521 = vmatpush1.bf16.msra.mxu0 %v5482
  %5522 = vmatprep.subr.bf16.mxu0 0
  %5523 = vmatpush1.bf16.msra.mxu0 %v5483
  %5524 = vmatprep.subr.bf16.mxu0 0
  %5525 = vmatpush1.bf16.msra.mxu0 %v5484
  %5526 = vmatprep.subr.bf16.mxu0 0
  %5527 = vmatpush1.bf16.msra.mxu0 %v5485
  %5528 = vmatprep.subr.bf16.mxu0 0
  %5529 = vmatpush1.bf16.msra.mxu0 %v5486
  %5530 = vmatprep.subr.bf16.mxu0 0
  %5531 = vmatpush1.bf16.msra.mxu0 %v5487
  %5532 = vmatprep.subr.bf16.mxu0 0
  %5533 = vmatpush1.bf16.msra.mxu0 %v5488
  %5534 = vmatprep.subr.bf16.mxu0 0
  %5535 = vmatpush1.bf16.msra.mxu0 %v5489
  %5536 = vmatprep.subr.bf16.mxu0 0
  %5537 = vmatpush1.bf16.msra.mxu0 %v5490
  %5538 = vmatprep.subr.bf16.mxu0 0
  %5539 = vmatpush1.bf16.msra.mxu0 %v5491
  %5540 = vmatprep.mubr.bf16.mxu0 %v5379
  %5541 = vmatmul.mubr.bf16.gmra.mrb[0].mxu0 %v5378
  %v5542 = vpop.f32.mrb[0].mxu0
  %v5543 = vadd.f32 0.0, %v5542
  %v5544 = vpop.f32.mrb[0].mxu0
  %v5545 = vpop.f32.mrb[0].mxu0
  %v5546 = vpop.f32.mrb[0].mxu0
  %5547 = vdwg.mxu0
  %v5548 = vadd.f32 %v5369, %v5543
  %v5549 = vsub.f32 %v4284, 0.2
  %v5550 = vsub.f32 %v4285, 0.2
  %v5551 = vmul.f32 %v5549, 0.5
  %v5552 = vmul.f32 %v5550, 0.5
  %v5553 = vtanh.pop %v5551
  %v5554 = vtanh.pop %v5552
  %v5555 = vmul.f32 %v5553, %v5553
  %v5556 = vmul.f32 %v5554, %v5554
  %v5557 = vsub.f32 1.0, %v5555
  %v5558 = vsub.f32 1.0, %v5556
  %v5559 = vpack.c.bf16 %v5557, %v5557
  %v5560 = vpack.c.bf16 %v5558, %v5558
  %v5561 = vld [vmem:[%s7 + $0x380] sm:$0xf]
  %v5562 = vld [vmem:[%s7 + $0x384] sm:$0xf]
  %v5563 = vld [vmem:[%s7 + $0x388] sm:$0xf]
  %v5564 = vld [vmem:[%s7 + $0x38c] sm:$0xf]
  %v5565 = vld [vmem:[%s7 + $0x390] sm:$0xf]
  %v5566 = vld [vmem:[%s7 + $0x394] sm:$0xf]
  %v5567 = vld [vmem:[%s7 + $0x398] sm:$0xf]
  %v5568 = vld [vmem:[%s7 + $0x39c] sm:$0xf]
  %v5569 = vld [vmem:[%s7 + $0x3a0] sm:$0xf]
  %v5570 = vld [vmem:[%s7 + $0x3a4] sm:$0xf]
  %v5571 = vld [vmem:[%s7 + $0x3a8] sm:$0xf]
  %v5572 = vld [vmem:[%s7 + $0x3ac] sm:$0xf]
  %v5573 = vld [vmem:[%s7 + $0x3b0] sm:$0xf]
  %v5574 = vld [vmem:[%s7 + $0x3b4] sm:$0xf]
  %v5575 = vld [vmem:[%s7 + $0x3b8] sm:$0xf]
  %v5576 = vld [vmem:[%s7 + $0x3bc] sm:$0xf]
  %v5577 = vld [vmem:[%s7 + $0x3c0] sm:$0xf]
  %v5578 = vld [vmem:[%s7 + $0x3c4] sm:$0xf]
  %v5579 = vld [vmem:[%s7 + $0x3c8] sm:$0xf]
  %v5580 = vld [vmem:[%s7 + $0x3cc] sm:$0xf]
  %v5581 = vld [vmem:[%s7 + $0x3d0] sm:$0xf]
  %v5582 = vld [vmem:[%s7 + $0x3d4] sm:$0xf]
  %v5583 = vld [vmem:[%s7 + $0x3d8] sm:$0xf]
  %v5584 = vld [vmem:[%s7 + $0x3dc] sm:$0xf]
  %v5585 = vld [vmem:[%s7 + $0x3e0] sm:$0xf]
  %v5586 = vld [vmem:[%s7 + $0x3e4] sm:$0xf]
  %v5587 = vld [vmem:[%s7 + $0x3e8] sm:$0xf]
  %v5588 = vld [vmem:[%s7 + $0x3ec] sm:$0xf]
  %v5589 = vld [vmem:[%s7 + $0x3f0] sm:$0xf]
  %v5590 = vld [vmem:[%s7 + $0x3f4] sm:$0xf]
  %v5591 = vld [vmem:[%s7 + $0x3f8] sm:$0xf]
  %v5592 = vld [vmem:[%s7 + $0x3fc] sm:$0xf]
  %v5625 = vunpack.c.l.b16 %v5561
  %v5626 = vunpack.c.l.b16 %v5562
  %v5627 = vunpack.c.l.b16 %v5563
  %v5628 = vunpack.c.l.b16 %v5564
  %v5629 = vunpack.c.l.b16 %v5565
  %v5630 = vunpack.c.l.b16 %v5566
  %v5631 = vunpack.c.l.b16 %v5567
  %v5632 = vunpack.c.l.b16 %v5568
  %v5633 = vunpack.c.l.b16 %v5569
  %v5634 = vunpack.c.l.b16 %v5570
  %v5635 = vunpack.c.l.b16 %v5571
  %v5636 = vunpack.c.l.b16 %v5572
  %v5637 = vunpack.c.l.b16 %v5573
  %v5638 = vunpack.c.l.b16 %v5574
  %v5639 = vunpack.c.l.b16 %v5575
  %v5640 = vunpack.c.l.b16 %v5576
  %v5641 = vunpack.c.l.b16 %v5577
  %v5642 = vunpack.c.l.b16 %v5578
  %v5643 = vunpack.c.l.b16 %v5579
  %v5644 = vunpack.c.l.b16 %v5580
  %v5645 = vunpack.c.l.b16 %v5581
  %v5646 = vunpack.c.l.b16 %v5582
  %v5647 = vunpack.c.l.b16 %v5583
  %v5648 = vunpack.c.l.b16 %v5584
  %v5649 = vunpack.c.l.b16 %v5585
  %v5650 = vunpack.c.l.b16 %v5586
  %v5651 = vunpack.c.l.b16 %v5587
  %v5652 = vunpack.c.l.b16 %v5588
  %v5653 = vunpack.c.l.b16 %v5589
  %v5654 = vunpack.c.l.b16 %v5590
  %v5655 = vunpack.c.l.b16 %v5591
  %v5656 = vunpack.c.l.b16 %v5592
  %v5657 = vpack.c.b16 %v5626, %v5625
  %v5658 = vpack.c.b16 %v5628, %v5627
  %v5659 = vpack.c.b16 %v5630, %v5629
  %v5660 = vpack.c.b16 %v5632, %v5631
  %v5661 = vpack.c.b16 %v5634, %v5633
  %v5662 = vpack.c.b16 %v5636, %v5635
  %v5663 = vpack.c.b16 %v5638, %v5637
  %v5664 = vpack.c.b16 %v5640, %v5639
  %v5665 = vpack.c.b16 %v5642, %v5641
  %v5666 = vpack.c.b16 %v5644, %v5643
  %v5667 = vpack.c.b16 %v5646, %v5645
  %v5668 = vpack.c.b16 %v5648, %v5647
  %v5669 = vpack.c.b16 %v5650, %v5649
  %v5670 = vpack.c.b16 %v5652, %v5651
  %v5671 = vpack.c.b16 %v5654, %v5653
  %v5672 = vpack.c.b16 %v5656, %v5655
  %5689 = vmatprep.subr.bf16.mxu0 0
  %5690 = vmatpush1.bf16.msra.mxu0 %v5657
  %5691 = vmatprep.subr.bf16.mxu0 0
  %5692 = vmatpush1.bf16.msra.mxu0 %v5658
  %5693 = vmatprep.subr.bf16.mxu0 0
  %5694 = vmatpush1.bf16.msra.mxu0 %v5659
  %5695 = vmatprep.subr.bf16.mxu0 0
  %5696 = vmatpush1.bf16.msra.mxu0 %v5660
  %5697 = vmatprep.subr.bf16.mxu0 0
  %5698 = vmatpush1.bf16.msra.mxu0 %v5661
  %5699 = vmatprep.subr.bf16.mxu0 0
  %5700 = vmatpush1.bf16.msra.mxu0 %v5662
  %5701 = vmatprep.subr.bf16.mxu0 0
  %5702 = vmatpush1.bf16.msra.mxu0 %v5663
  %5703 = vmatprep.subr.bf16.mxu0 0
  %5704 = vmatpush1.bf16.msra.mxu0 %v5664
  %5705 = vmatprep.subr.bf16.mxu0 0
  %5706 = vmatpush1.bf16.msra.mxu0 %v5665
  %5707 = vmatprep.subr.bf16.mxu0 0
  %5708 = vmatpush1.bf16.msra.mxu0 %v5666
  %5709 = vmatprep.subr.bf16.mxu0 0
  %5710 = vmatpush1.bf16.msra.mxu0 %v5667
  %5711 = vmatprep.subr.bf16.mxu0 0
  %5712 = vmatpush1.bf16.msra.mxu0 %v5668
  %5713 = vmatprep.subr.bf16.mxu0 0
  %5714 = vmatpush1.bf16.msra.mxu0 %v5669
  %5715 = vmatprep.subr.bf16.mxu0 0
  %5716 = vmatpush1.bf16.msra.mxu0 %v5670
  %5717 = vmatprep.subr.bf16.mxu0 0
  %5718 = vmatpush1.bf16.msra.mxu0 %v5671
  %5719 = vmatprep.subr.bf16.mxu0 0
  %5720 = vmatpush1.bf16.msra.mxu0 %v5672
  %5721 = vmatprep.mubr.bf16.mxu0 %v5560
  %5722 = vmatmul.mubr.bf16.gmra.mrb[0].mxu0 %v5559
  %v5723 = vpop.f32.mrb[0].mxu0
  %v5724 = vadd.f32 0.0, %v5723
  %v5725 = vpop.f32.mrb[0].mxu0
  %v5726 = vpop.f32.mrb[0].mxu0
  %v5727 = vpop.f32.mrb[0].mxu0
  %5728 = vdwg.mxu0
  %v5729 = vadd.f32 %v5548, %v5724
  %vm5730 = vcmask 523264
  %v5731 = vsel %vm5730, %v5729, 0.0
  %5732 = vadd.xlane.f32.xlu0 %v5731
  %v5733 = vpop.xlane.xlu0 %5732
  %v5734 = vrcp.pop 64.0
  %v5735 = vmul.f32 %v5733, %v5734
  %v5736 = vsub.f32 %v5729, %v5735
  %v5737 = vmul.f32 %v5736, %v5736
  %v5738 = vsel %vm5730, %v5737, 0.0
  %5739 = vadd.xlane.f32.xlu0 %v5738
  %v5740 = vpop.xlane.xlu0 %5739
  %v5741 = vmul.f32 %v5740, %v5734
  %v5742 = vadd.f32 %v5741, 1e-05
  %v5743 = vrsqrt.pop %v5742
  %v5744 = vmul.f32 %v5736, %v5743
  %v5745 = vld [vmem:[%s8] sm:$0x1]
  %v5747 = vlaneseq
  %v5748 = vshrl.u32 %v5747, 7
  %v5749 = vsub.s32 0, %v5748
  %v5750 = vrot.slane %v5745, %v5749
  %v5752 = vmul.f32 %v5744, %v5750
  %v5753 = vld [vmem:[%s9] sm:$0x1]
  %v5755 = vlaneseq
  %v5756 = vshrl.u32 %v5755, 7
  %v5757 = vsub.s32 0, %v5756
  %v5758 = vrot.slane %v5753, %v5757
  %v5760 = vadd.f32 %v5752, %v5758
  %v5761 = vsub.f32 %v5760, -1.2
  %v5762 = vmul.f32 %v5761, 0.5
  %v5763 = vtanh.pop %v5762
  %v5764 = vmul.f32 %v5763, %v5763
  %v5765 = vsub.f32 1.0, %v5764
  %v5766 = vpack.c.bf16 %v5765, %v5765
  %v5767 = vld [vmem:[%s10] sm:$0xf]
  %v5768 = vld [vmem:[%s10 + $0x4] sm:$0xf]
  %v5769 = vld [vmem:[%s10 + $0x8] sm:$0xf]
  %v5770 = vld [vmem:[%s10 + $0xc] sm:$0xf]
  %v5771 = vld [vmem:[%s10 + $0x10] sm:$0xf]
  %v5772 = vld [vmem:[%s10 + $0x14] sm:$0xf]
  %v5773 = vld [vmem:[%s10 + $0x18] sm:$0xf]
  %v5774 = vld [vmem:[%s10 + $0x1c] sm:$0xf]
  %v5775 = vsub.f32 %v5760, -1.0
  %v5776 = vmul.f32 %v5775, 0.5
  %v5777 = vtanh.pop %v5776
  %v5778 = vmul.f32 %v5777, %v5777
  %v5779 = vsub.f32 1.0, %v5778
  %v5780 = vpack.c.bf16 %v5779, %v5779
  %v5781 = vld [vmem:[%s10 + $0x20] sm:$0xf]
  %v5782 = vld [vmem:[%s10 + $0x24] sm:$0xf]
  %v5783 = vld [vmem:[%s10 + $0x28] sm:$0xf]
  %v5784 = vld [vmem:[%s10 + $0x2c] sm:$0xf]
  %v5785 = vld [vmem:[%s10 + $0x30] sm:$0xf]
  %v5786 = vld [vmem:[%s10 + $0x34] sm:$0xf]
  %v5787 = vld [vmem:[%s10 + $0x38] sm:$0xf]
  %v5788 = vld [vmem:[%s10 + $0x3c] sm:$0xf]
  %v5797 = vunpack.c.l.b16 %v5781
  %v5798 = vunpack.c.l.b16 %v5782
  %v5799 = vunpack.c.l.b16 %v5783
  %v5800 = vunpack.c.l.b16 %v5784
  %v5801 = vunpack.c.l.b16 %v5785
  %v5802 = vunpack.c.l.b16 %v5786
  %v5803 = vunpack.c.l.b16 %v5787
  %v5804 = vunpack.c.l.b16 %v5788
  %v5805 = vpack.c.b16 %v5798, %v5797
  %v5806 = vpack.c.b16 %v5800, %v5799
  %v5807 = vpack.c.b16 %v5802, %v5801
  %v5808 = vpack.c.b16 %v5804, %v5803
  %v5814 = vsel %vm5730, %v5780, 0
  %5816 = vmatprep.subr.bf16.mxu0 0
  %5817 = vmatpush1.bf16.msra.mxu0 %v5805
  %5818 = vmatprep.subr.bf16.mxu0 0
  %5819 = vmatpush1.bf16.msra.mxu0 %v5806
  %5820 = vmatprep.subr.bf16.mxu0 0
  %5821 = vmatpush1.bf16.msra.mxu0 %v5807
  %5822 = vmatprep.subr.bf16.mxu0 0
  %5823 = vmatpush1.bf16.msra.mxu0 %v5808
  %5824 = vmatprep.subr.bf16.mxu0 0
  %5825 = vmatpush1.bf16.msra.mxu0 0
  %5826 = vmatprep.subr.bf16.mxu0 0
  %5827 = vmatpush1.bf16.msra.mxu0 0
  %5828 = vmatprep.subr.bf16.mxu0 0
  %5829 = vmatpush1.bf16.msra.mxu0 0
  %5830 = vmatprep.subr.bf16.mxu0 0
  %5831 = vmatpush1.bf16.msra.mxu0 0
  %5832 = vmatprep.subr.bf16.mxu0 0
  %5833 = vmatpush1.bf16.msra.mxu0 0
  %5834 = vmatprep.subr.bf16.mxu0 0
  %5835 = vmatpush1.bf16.msra.mxu0 0
  %5836 = vmatprep.subr.bf16.mxu0 0
  %5837 = vmatpush1.bf16.msra.mxu0 0
  %5838 = vmatprep.subr.bf16.mxu0 0
  %5839 = vmatpush1.bf16.msra.mxu0 0
  %5840 = vmatprep.subr.bf16.mxu0 0
  %5841 = vmatpush1.bf16.msra.mxu0 0
  %5842 = vmatprep.subr.bf16.mxu0 0
  %5843 = vmatpush1.bf16.msra.mxu0 0
  %5844 = vmatprep.subr.bf16.mxu0 0
  %5845 = vmatpush1.bf16.msra.mxu0 0
  %5846 = vmatprep.subr.bf16.mxu0 0
  %5847 = vmatpush1.bf16.msra.mxu0 0
  %5848 = vmatprep.mubr.bf16.mxu0 0
  %5849 = vmatmul.mubr.bf16.gmra.mrb[0].mxu0 %v5814
  %v5850 = vpop.f32.mrb[0].mxu0
  %v5851 = vadd.f32 0.0, %v5850
  %v5852 = vpop.f32.mrb[0].mxu0
  %v5853 = vpop.f32.mrb[0].mxu0
  %v5854 = vpop.f32.mrb[0].mxu0
  %5855 = vdwg.mxu0
  %v5864 = vunpack.c.l.b16 %v5767
  %v5865 = vunpack.c.l.b16 %v5768
  %v5866 = vunpack.c.l.b16 %v5769
  %v5867 = vunpack.c.l.b16 %v5770
  %v5868 = vunpack.c.l.b16 %v5771
  %v5869 = vunpack.c.l.b16 %v5772
  %v5870 = vunpack.c.l.b16 %v5773
  %v5871 = vunpack.c.l.b16 %v5774
  %v5872 = vpack.c.b16 %v5865, %v5864
  %v5873 = vpack.c.b16 %v5867, %v5866
  %v5874 = vpack.c.b16 %v5869, %v5868
  %v5875 = vpack.c.b16 %v5871, %v5870
  %v5881 = vsel %vm5730, %v5766, 0
  %5883 = vmatprep.subr.bf16.mxu0 0
  %5884 = vmatpush1.bf16.msra.mxu0 %v5872
  %5885 = vmatprep.subr.bf16.mxu0 0
  %5886 = vmatpush1.bf16.msra.mxu0 %v5873
  %5887 = vmatprep.subr.bf16.mxu0 0
  %5888 = vmatpush1.bf16.msra.mxu0 %v5874
  %5889 = vmatprep.subr.bf16.mxu0 0
  %5890 = vmatpush1.bf16.msra.mxu0 %v5875
  %5891 = vmatprep.subr.bf16.mxu0 0
  %5892 = vmatpush1.bf16.msra.mxu0 0
  %5893 = vmatprep.subr.bf16.mxu0 0
  %5894 = vmatpush1.bf16.msra.mxu0 0
  %5895 = vmatprep.subr.bf16.mxu0 0
  %5896 = vmatpush1.bf16.msra.mxu0 0
  %5897 = vmatprep.subr.bf16.mxu0 0
  %5898 = vmatpush1.bf16.msra.mxu0 0
  %5899 = vmatprep.subr.bf16.mxu0 0
  %5900 = vmatpush1.bf16.msra.mxu0 0
  %5901 = vmatprep.subr.bf16.mxu0 0
  %5902 = vmatpush1.bf16.msra.mxu0 0
  %5903 = vmatprep.subr.bf16.mxu0 0
  %5904 = vmatpush1.bf16.msra.mxu0 0
  %5905 = vmatprep.subr.bf16.mxu0 0
  %5906 = vmatpush1.bf16.msra.mxu0 0
  %5907 = vmatprep.subr.bf16.mxu0 0
  %5908 = vmatpush1.bf16.msra.mxu0 0
  %5909 = vmatprep.subr.bf16.mxu0 0
  %5910 = vmatpush1.bf16.msra.mxu0 0
  %5911 = vmatprep.subr.bf16.mxu0 0
  %5912 = vmatpush1.bf16.msra.mxu0 0
  %5913 = vmatprep.subr.bf16.mxu0 0
  %5914 = vmatpush1.bf16.msra.mxu0 0
  %5915 = vmatprep.mubr.bf16.mxu0 0
  %5916 = vmatmul.mubr.bf16.gmra.mrb[0].mxu0 %v5881
  %v5917 = vpop.f32.mrb[0].mxu0
  %v5918 = vadd.f32 %v5851, %v5917
  %v5919 = vpop.f32.mrb[0].mxu0
  %v5920 = vpop.f32.mrb[0].mxu0
  %v5921 = vpop.f32.mrb[0].mxu0
  %5922 = vdwg.mxu0
  %v5923 = vsub.f32 %v5760, -0.8
  %v5924 = vmul.f32 %v5923, 0.5
  %v5925 = vtanh.pop %v5924
  %v5926 = vmul.f32 %v5925, %v5925
  %v5927 = vsub.f32 1.0, %v5926
  %v5928 = vpack.c.bf16 %v5927, %v5927
  %v5929 = vld [vmem:[%s10 + $0x40] sm:$0xf]
  %v5930 = vld [vmem:[%s10 + $0x44] sm:$0xf]
  %v5931 = vld [vmem:[%s10 + $0x48] sm:$0xf]
  %v5932 = vld [vmem:[%s10 + $0x4c] sm:$0xf]
  %v5933 = vld [vmem:[%s10 + $0x50] sm:$0xf]
  %v5934 = vld [vmem:[%s10 + $0x54] sm:$0xf]
  %v5935 = vld [vmem:[%s10 + $0x58] sm:$0xf]
  %v5936 = vld [vmem:[%s10 + $0x5c] sm:$0xf]
  %v5945 = vunpack.c.l.b16 %v5929
  %v5946 = vunpack.c.l.b16 %v5930
  %v5947 = vunpack.c.l.b16 %v5931
  %v5948 = vunpack.c.l.b16 %v5932
  %v5949 = vunpack.c.l.b16 %v5933
  %v5950 = vunpack.c.l.b16 %v5934
  %v5951 = vunpack.c.l.b16 %v5935
  %v5952 = vunpack.c.l.b16 %v5936
  %v5953 = vpack.c.b16 %v5946, %v5945
  %v5954 = vpack.c.b16 %v5948, %v5947
  %v5955 = vpack.c.b16 %v5950, %v5949
  %v5956 = vpack.c.b16 %v5952, %v5951
  %v5962 = vsel %vm5730, %v5928, 0
  %5964 = vmatprep.subr.bf16.mxu0 0
  %5965 = vmatpush1.bf16.msra.mxu0 %v5953
  %5966 = vmatprep.subr.bf16.mxu0 0
  %5967 = vmatpush1.bf16.msra.mxu0 %v5954
  %5968 = vmatprep.subr.bf16.mxu0 0
  %5969 = vmatpush1.bf16.msra.mxu0 %v5955
  %5970 = vmatprep.subr.bf16.mxu0 0
  %5971 = vmatpush1.bf16.msra.mxu0 %v5956
  %5972 = vmatprep.subr.bf16.mxu0 0
  %5973 = vmatpush1.bf16.msra.mxu0 0
  %5974 = vmatprep.subr.bf16.mxu0 0
  %5975 = vmatpush1.bf16.msra.mxu0 0
  %5976 = vmatprep.subr.bf16.mxu0 0
  %5977 = vmatpush1.bf16.msra.mxu0 0
  %5978 = vmatprep.subr.bf16.mxu0 0
  %5979 = vmatpush1.bf16.msra.mxu0 0
  %5980 = vmatprep.subr.bf16.mxu0 0
  %5981 = vmatpush1.bf16.msra.mxu0 0
  %5982 = vmatprep.subr.bf16.mxu0 0
  %5983 = vmatpush1.bf16.msra.mxu0 0
  %5984 = vmatprep.subr.bf16.mxu0 0
  %5985 = vmatpush1.bf16.msra.mxu0 0
  %5986 = vmatprep.subr.bf16.mxu0 0
  %5987 = vmatpush1.bf16.msra.mxu0 0
  %5988 = vmatprep.subr.bf16.mxu0 0
  %5989 = vmatpush1.bf16.msra.mxu0 0
  %5990 = vmatprep.subr.bf16.mxu0 0
  %5991 = vmatpush1.bf16.msra.mxu0 0
  %5992 = vmatprep.subr.bf16.mxu0 0
  %5993 = vmatpush1.bf16.msra.mxu0 0
  %5994 = vmatprep.subr.bf16.mxu0 0
  %5995 = vmatpush1.bf16.msra.mxu0 0
  %5996 = vmatprep.mubr.bf16.mxu0 0
  %5997 = vmatmul.mubr.bf16.gmra.mrb[0].mxu0 %v5962
  %v5998 = vpop.f32.mrb[0].mxu0
  %v5999 = vadd.f32 0.0, %v5998
  %v6000 = vpop.f32.mrb[0].mxu0
  %v6001 = vpop.f32.mrb[0].mxu0
  %v6002 = vpop.f32.mrb[0].mxu0
  %6003 = vdwg.mxu0
  %v6004 = vadd.f32 %v5918, %v5999
  %v6005 = vsub.f32 %v5760, -0.6
  %v6006 = vmul.f32 %v6005, 0.5
  %v6007 = vtanh.pop %v6006
  %v6008 = vmul.f32 %v6007, %v6007
  %v6009 = vsub.f32 1.0, %v6008
  %v6010 = vpack.c.bf16 %v6009, %v6009
  %v6011 = vld [vmem:[%s10 + $0x60] sm:$0xf]
  %v6012 = vld [vmem:[%s10 + $0x64] sm:$0xf]
  %v6013 = vld [vmem:[%s10 + $0x68] sm:$0xf]
  %v6014 = vld [vmem:[%s10 + $0x6c] sm:$0xf]
  %v6015 = vld [vmem:[%s10 + $0x70] sm:$0xf]
  %v6016 = vld [vmem:[%s10 + $0x74] sm:$0xf]
  %v6017 = vld [vmem:[%s10 + $0x78] sm:$0xf]
  %v6018 = vld [vmem:[%s10 + $0x7c] sm:$0xf]
  %v6027 = vunpack.c.l.b16 %v6011
  %v6028 = vunpack.c.l.b16 %v6012
  %v6029 = vunpack.c.l.b16 %v6013
  %v6030 = vunpack.c.l.b16 %v6014
  %v6031 = vunpack.c.l.b16 %v6015
  %v6032 = vunpack.c.l.b16 %v6016
  %v6033 = vunpack.c.l.b16 %v6017
  %v6034 = vunpack.c.l.b16 %v6018
  %v6035 = vpack.c.b16 %v6028, %v6027
  %v6036 = vpack.c.b16 %v6030, %v6029
  %v6037 = vpack.c.b16 %v6032, %v6031
  %v6038 = vpack.c.b16 %v6034, %v6033
  %v6044 = vsel %vm5730, %v6010, 0
  %6046 = vmatprep.subr.bf16.mxu0 0
  %6047 = vmatpush1.bf16.msra.mxu0 %v6035
  %6048 = vmatprep.subr.bf16.mxu0 0
  %6049 = vmatpush1.bf16.msra.mxu0 %v6036
  %6050 = vmatprep.subr.bf16.mxu0 0
  %6051 = vmatpush1.bf16.msra.mxu0 %v6037
  %6052 = vmatprep.subr.bf16.mxu0 0
  %6053 = vmatpush1.bf16.msra.mxu0 %v6038
  %6054 = vmatprep.subr.bf16.mxu0 0
  %6055 = vmatpush1.bf16.msra.mxu0 0
  %6056 = vmatprep.subr.bf16.mxu0 0
  %6057 = vmatpush1.bf16.msra.mxu0 0
  %6058 = vmatprep.subr.bf16.mxu0 0
  %6059 = vmatpush1.bf16.msra.mxu0 0
  %6060 = vmatprep.subr.bf16.mxu0 0
  %6061 = vmatpush1.bf16.msra.mxu0 0
  %6062 = vmatprep.subr.bf16.mxu0 0
  %6063 = vmatpush1.bf16.msra.mxu0 0
  %6064 = vmatprep.subr.bf16.mxu0 0
  %6065 = vmatpush1.bf16.msra.mxu0 0
  %6066 = vmatprep.subr.bf16.mxu0 0
  %6067 = vmatpush1.bf16.msra.mxu0 0
  %6068 = vmatprep.subr.bf16.mxu0 0
  %6069 = vmatpush1.bf16.msra.mxu0 0
  %6070 = vmatprep.subr.bf16.mxu0 0
  %6071 = vmatpush1.bf16.msra.mxu0 0
  %6072 = vmatprep.subr.bf16.mxu0 0
  %6073 = vmatpush1.bf16.msra.mxu0 0
  %6074 = vmatprep.subr.bf16.mxu0 0
  %6075 = vmatpush1.bf16.msra.mxu0 0
  %6076 = vmatprep.subr.bf16.mxu0 0
  %6077 = vmatpush1.bf16.msra.mxu0 0
  %6078 = vmatprep.mubr.bf16.mxu0 0
  %6079 = vmatmul.mubr.bf16.gmra.mrb[0].mxu0 %v6044
  %v6080 = vpop.f32.mrb[0].mxu0
  %v6081 = vadd.f32 0.0, %v6080
  %v6082 = vpop.f32.mrb[0].mxu0
  %v6083 = vpop.f32.mrb[0].mxu0
  %v6084 = vpop.f32.mrb[0].mxu0
  %6085 = vdwg.mxu0
  %v6086 = vadd.f32 %v6004, %v6081
  %v6087 = vsub.f32 %v5760, -0.4
  %v6088 = vmul.f32 %v6087, 0.5
  %v6089 = vtanh.pop %v6088
  %v6090 = vmul.f32 %v6089, %v6089
  %v6091 = vsub.f32 1.0, %v6090
  %v6092 = vpack.c.bf16 %v6091, %v6091
  %v6093 = vld [vmem:[%s10 + $0x80] sm:$0xf]
  %v6094 = vld [vmem:[%s10 + $0x84] sm:$0xf]
  %v6095 = vld [vmem:[%s10 + $0x88] sm:$0xf]
  %v6096 = vld [vmem:[%s10 + $0x8c] sm:$0xf]
  %v6097 = vld [vmem:[%s10 + $0x90] sm:$0xf]
  %v6098 = vld [vmem:[%s10 + $0x94] sm:$0xf]
  %v6099 = vld [vmem:[%s10 + $0x98] sm:$0xf]
  %v6100 = vld [vmem:[%s10 + $0x9c] sm:$0xf]
  %v6109 = vunpack.c.l.b16 %v6093
  %v6110 = vunpack.c.l.b16 %v6094
  %v6111 = vunpack.c.l.b16 %v6095
  %v6112 = vunpack.c.l.b16 %v6096
  %v6113 = vunpack.c.l.b16 %v6097
  %v6114 = vunpack.c.l.b16 %v6098
  %v6115 = vunpack.c.l.b16 %v6099
  %v6116 = vunpack.c.l.b16 %v6100
  %v6117 = vpack.c.b16 %v6110, %v6109
  %v6118 = vpack.c.b16 %v6112, %v6111
  %v6119 = vpack.c.b16 %v6114, %v6113
  %v6120 = vpack.c.b16 %v6116, %v6115
  %v6126 = vsel %vm5730, %v6092, 0
  %6128 = vmatprep.subr.bf16.mxu0 0
  %6129 = vmatpush1.bf16.msra.mxu0 %v6117
  %6130 = vmatprep.subr.bf16.mxu0 0
  %6131 = vmatpush1.bf16.msra.mxu0 %v6118
  %6132 = vmatprep.subr.bf16.mxu0 0
  %6133 = vmatpush1.bf16.msra.mxu0 %v6119
  %6134 = vmatprep.subr.bf16.mxu0 0
  %6135 = vmatpush1.bf16.msra.mxu0 %v6120
  %6136 = vmatprep.subr.bf16.mxu0 0
  %6137 = vmatpush1.bf16.msra.mxu0 0
  %6138 = vmatprep.subr.bf16.mxu0 0
  %6139 = vmatpush1.bf16.msra.mxu0 0
  %6140 = vmatprep.subr.bf16.mxu0 0
  %6141 = vmatpush1.bf16.msra.mxu0 0
  %6142 = vmatprep.subr.bf16.mxu0 0
  %6143 = vmatpush1.bf16.msra.mxu0 0
  %6144 = vmatprep.subr.bf16.mxu0 0
  %6145 = vmatpush1.bf16.msra.mxu0 0
  %6146 = vmatprep.subr.bf16.mxu0 0
  %6147 = vmatpush1.bf16.msra.mxu0 0
  %6148 = vmatprep.subr.bf16.mxu0 0
  %6149 = vmatpush1.bf16.msra.mxu0 0
  %6150 = vmatprep.subr.bf16.mxu0 0
  %6151 = vmatpush1.bf16.msra.mxu0 0
  %6152 = vmatprep.subr.bf16.mxu0 0
  %6153 = vmatpush1.bf16.msra.mxu0 0
  %6154 = vmatprep.subr.bf16.mxu0 0
  %6155 = vmatpush1.bf16.msra.mxu0 0
  %6156 = vmatprep.subr.bf16.mxu0 0
  %6157 = vmatpush1.bf16.msra.mxu0 0
  %6158 = vmatprep.subr.bf16.mxu0 0
  %6159 = vmatpush1.bf16.msra.mxu0 0
  %6160 = vmatprep.mubr.bf16.mxu0 0
  %6161 = vmatmul.mubr.bf16.gmra.mrb[0].mxu0 %v6126
  %v6162 = vpop.f32.mrb[0].mxu0
  %v6163 = vadd.f32 0.0, %v6162
  %v6164 = vpop.f32.mrb[0].mxu0
  %v6165 = vpop.f32.mrb[0].mxu0
  %v6166 = vpop.f32.mrb[0].mxu0
  %6167 = vdwg.mxu0
  %v6168 = vadd.f32 %v6086, %v6163
  %v6169 = vsub.f32 %v5760, -0.2
  %v6170 = vmul.f32 %v6169, 0.5
  %v6171 = vtanh.pop %v6170
  %v6172 = vmul.f32 %v6171, %v6171
  %v6173 = vsub.f32 1.0, %v6172
  %v6174 = vpack.c.bf16 %v6173, %v6173
  %v6175 = vld [vmem:[%s10 + $0xa0] sm:$0xf]
  %v6176 = vld [vmem:[%s10 + $0xa4] sm:$0xf]
  %v6177 = vld [vmem:[%s10 + $0xa8] sm:$0xf]
  %v6178 = vld [vmem:[%s10 + $0xac] sm:$0xf]
  %v6179 = vld [vmem:[%s10 + $0xb0] sm:$0xf]
  %v6180 = vld [vmem:[%s10 + $0xb4] sm:$0xf]
  %v6181 = vld [vmem:[%s10 + $0xb8] sm:$0xf]
  %v6182 = vld [vmem:[%s10 + $0xbc] sm:$0xf]
  %v6191 = vunpack.c.l.b16 %v6175
  %v6192 = vunpack.c.l.b16 %v6176
  %v6193 = vunpack.c.l.b16 %v6177
  %v6194 = vunpack.c.l.b16 %v6178
  %v6195 = vunpack.c.l.b16 %v6179
  %v6196 = vunpack.c.l.b16 %v6180
  %v6197 = vunpack.c.l.b16 %v6181
  %v6198 = vunpack.c.l.b16 %v6182
  %v6199 = vpack.c.b16 %v6192, %v6191
  %v6200 = vpack.c.b16 %v6194, %v6193
  %v6201 = vpack.c.b16 %v6196, %v6195
  %v6202 = vpack.c.b16 %v6198, %v6197
  %v6208 = vsel %vm5730, %v6174, 0
  %6210 = vmatprep.subr.bf16.mxu0 0
  %6211 = vmatpush1.bf16.msra.mxu0 %v6199
  %6212 = vmatprep.subr.bf16.mxu0 0
  %6213 = vmatpush1.bf16.msra.mxu0 %v6200
  %6214 = vmatprep.subr.bf16.mxu0 0
  %6215 = vmatpush1.bf16.msra.mxu0 %v6201
  %6216 = vmatprep.subr.bf16.mxu0 0
  %6217 = vmatpush1.bf16.msra.mxu0 %v6202
  %6218 = vmatprep.subr.bf16.mxu0 0
  %6219 = vmatpush1.bf16.msra.mxu0 0
  %6220 = vmatprep.subr.bf16.mxu0 0
  %6221 = vmatpush1.bf16.msra.mxu0 0
  %6222 = vmatprep.subr.bf16.mxu0 0
  %6223 = vmatpush1.bf16.msra.mxu0 0
  %6224 = vmatprep.subr.bf16.mxu0 0
  %6225 = vmatpush1.bf16.msra.mxu0 0
  %6226 = vmatprep.subr.bf16.mxu0 0
  %6227 = vmatpush1.bf16.msra.mxu0 0
  %6228 = vmatprep.subr.bf16.mxu0 0
  %6229 = vmatpush1.bf16.msra.mxu0 0
  %6230 = vmatprep.subr.bf16.mxu0 0
  %6231 = vmatpush1.bf16.msra.mxu0 0
  %6232 = vmatprep.subr.bf16.mxu0 0
  %6233 = vmatpush1.bf16.msra.mxu0 0
  %6234 = vmatprep.subr.bf16.mxu0 0
  %6235 = vmatpush1.bf16.msra.mxu0 0
  %6236 = vmatprep.subr.bf16.mxu0 0
  %6237 = vmatpush1.bf16.msra.mxu0 0
  %6238 = vmatprep.subr.bf16.mxu0 0
  %6239 = vmatpush1.bf16.msra.mxu0 0
  %6240 = vmatprep.subr.bf16.mxu0 0
  %6241 = vmatpush1.bf16.msra.mxu0 0
  %6242 = vmatprep.mubr.bf16.mxu0 0
  %6243 = vmatmul.mubr.bf16.gmra.mrb[0].mxu0 %v6208
  %v6244 = vpop.f32.mrb[0].mxu0
  %v6245 = vadd.f32 0.0, %v6244
  %v6246 = vpop.f32.mrb[0].mxu0
  %v6247 = vpop.f32.mrb[0].mxu0
  %v6248 = vpop.f32.mrb[0].mxu0
  %6249 = vdwg.mxu0
  %v6250 = vadd.f32 %v6168, %v6245
  %v6251 = vmul.f32 %v5760, 0.5
  %v6252 = vtanh.pop %v6251
  %v6253 = vmul.f32 %v6252, %v6252
  %v6254 = vsub.f32 1.0, %v6253
  %v6255 = vpack.c.bf16 %v6254, %v6254
  %v6256 = vld [vmem:[%s10 + $0xc0] sm:$0xf]
  %v6257 = vld [vmem:[%s10 + $0xc4] sm:$0xf]
  %v6258 = vld [vmem:[%s10 + $0xc8] sm:$0xf]
  %v6259 = vld [vmem:[%s10 + $0xcc] sm:$0xf]
  %v6260 = vld [vmem:[%s10 + $0xd0] sm:$0xf]
  %v6261 = vld [vmem:[%s10 + $0xd4] sm:$0xf]
  %v6262 = vld [vmem:[%s10 + $0xd8] sm:$0xf]
  %v6263 = vld [vmem:[%s10 + $0xdc] sm:$0xf]
  %v6272 = vunpack.c.l.b16 %v6256
  %v6273 = vunpack.c.l.b16 %v6257
  %v6274 = vunpack.c.l.b16 %v6258
  %v6275 = vunpack.c.l.b16 %v6259
  %v6276 = vunpack.c.l.b16 %v6260
  %v6277 = vunpack.c.l.b16 %v6261
  %v6278 = vunpack.c.l.b16 %v6262
  %v6279 = vunpack.c.l.b16 %v6263
  %v6280 = vpack.c.b16 %v6273, %v6272
  %v6281 = vpack.c.b16 %v6275, %v6274
  %v6282 = vpack.c.b16 %v6277, %v6276
  %v6283 = vpack.c.b16 %v6279, %v6278
  %v6289 = vsel %vm5730, %v6255, 0
  %6291 = vmatprep.subr.bf16.mxu0 0
  %6292 = vmatpush1.bf16.msra.mxu0 %v6280
  %6293 = vmatprep.subr.bf16.mxu0 0
  %6294 = vmatpush1.bf16.msra.mxu0 %v6281
  %6295 = vmatprep.subr.bf16.mxu0 0
  %6296 = vmatpush1.bf16.msra.mxu0 %v6282
  %6297 = vmatprep.subr.bf16.mxu0 0
  %6298 = vmatpush1.bf16.msra.mxu0 %v6283
  %6299 = vmatprep.subr.bf16.mxu0 0
  %6300 = vmatpush1.bf16.msra.mxu0 0
  %6301 = vmatprep.subr.bf16.mxu0 0
  %6302 = vmatpush1.bf16.msra.mxu0 0
  %6303 = vmatprep.subr.bf16.mxu0 0
  %6304 = vmatpush1.bf16.msra.mxu0 0
  %6305 = vmatprep.subr.bf16.mxu0 0
  %6306 = vmatpush1.bf16.msra.mxu0 0
  %6307 = vmatprep.subr.bf16.mxu0 0
  %6308 = vmatpush1.bf16.msra.mxu0 0
  %6309 = vmatprep.subr.bf16.mxu0 0
  %6310 = vmatpush1.bf16.msra.mxu0 0
  %6311 = vmatprep.subr.bf16.mxu0 0
  %6312 = vmatpush1.bf16.msra.mxu0 0
  %6313 = vmatprep.subr.bf16.mxu0 0
  %6314 = vmatpush1.bf16.msra.mxu0 0
  %6315 = vmatprep.subr.bf16.mxu0 0
  %6316 = vmatpush1.bf16.msra.mxu0 0
  %6317 = vmatprep.subr.bf16.mxu0 0
  %6318 = vmatpush1.bf16.msra.mxu0 0
  %6319 = vmatprep.subr.bf16.mxu0 0
  %6320 = vmatpush1.bf16.msra.mxu0 0
  %6321 = vmatprep.subr.bf16.mxu0 0
  %6322 = vmatpush1.bf16.msra.mxu0 0
  %6323 = vmatprep.mubr.bf16.mxu0 0
  %6324 = vmatmul.mubr.bf16.gmra.mrb[0].mxu0 %v6289
  %v6325 = vpop.f32.mrb[0].mxu0
  %v6326 = vadd.f32 0.0, %v6325
  %v6327 = vpop.f32.mrb[0].mxu0
  %v6328 = vpop.f32.mrb[0].mxu0
  %v6329 = vpop.f32.mrb[0].mxu0
  %6330 = vdwg.mxu0
  %v6331 = vadd.f32 %v6250, %v6326
  %v6332 = vsub.f32 %v5760, 0.2
  %v6333 = vmul.f32 %v6332, 0.5
  %v6334 = vtanh.pop %v6333
  %v6335 = vmul.f32 %v6334, %v6334
  %v6336 = vsub.f32 1.0, %v6335
  %v6337 = vpack.c.bf16 %v6336, %v6336
  %v6338 = vld [vmem:[%s10 + $0xe0] sm:$0xf]
  %v6339 = vld [vmem:[%s10 + $0xe4] sm:$0xf]
  %v6340 = vld [vmem:[%s10 + $0xe8] sm:$0xf]
  %v6341 = vld [vmem:[%s10 + $0xec] sm:$0xf]
  %v6342 = vld [vmem:[%s10 + $0xf0] sm:$0xf]
  %v6343 = vld [vmem:[%s10 + $0xf4] sm:$0xf]
  %v6344 = vld [vmem:[%s10 + $0xf8] sm:$0xf]
  %v6345 = vld [vmem:[%s10 + $0xfc] sm:$0xf]
  %v6354 = vunpack.c.l.b16 %v6338
  %v6355 = vunpack.c.l.b16 %v6339
  %v6356 = vunpack.c.l.b16 %v6340
  %v6357 = vunpack.c.l.b16 %v6341
  %v6358 = vunpack.c.l.b16 %v6342
  %v6359 = vunpack.c.l.b16 %v6343
  %v6360 = vunpack.c.l.b16 %v6344
  %v6361 = vunpack.c.l.b16 %v6345
  %v6362 = vpack.c.b16 %v6355, %v6354
  %v6363 = vpack.c.b16 %v6357, %v6356
  %v6364 = vpack.c.b16 %v6359, %v6358
  %v6365 = vpack.c.b16 %v6361, %v6360
  %v6371 = vsel %vm5730, %v6337, 0
  %6373 = vmatprep.subr.bf16.mxu0 0
  %6374 = vmatpush1.bf16.msra.mxu0 %v6362
  %6375 = vmatprep.subr.bf16.mxu0 0
  %6376 = vmatpush1.bf16.msra.mxu0 %v6363
  %6377 = vmatprep.subr.bf16.mxu0 0
  %6378 = vmatpush1.bf16.msra.mxu0 %v6364
  %6379 = vmatprep.subr.bf16.mxu0 0
  %6380 = vmatpush1.bf16.msra.mxu0 %v6365
  %6381 = vmatprep.subr.bf16.mxu0 0
  %6382 = vmatpush1.bf16.msra.mxu0 0
  %6383 = vmatprep.subr.bf16.mxu0 0
  %6384 = vmatpush1.bf16.msra.mxu0 0
  %6385 = vmatprep.subr.bf16.mxu0 0
  %6386 = vmatpush1.bf16.msra.mxu0 0
  %6387 = vmatprep.subr.bf16.mxu0 0
  %6388 = vmatpush1.bf16.msra.mxu0 0
  %6389 = vmatprep.subr.bf16.mxu0 0
  %6390 = vmatpush1.bf16.msra.mxu0 0
  %6391 = vmatprep.subr.bf16.mxu0 0
  %6392 = vmatpush1.bf16.msra.mxu0 0
  %6393 = vmatprep.subr.bf16.mxu0 0
  %6394 = vmatpush1.bf16.msra.mxu0 0
  %6395 = vmatprep.subr.bf16.mxu0 0
  %6396 = vmatpush1.bf16.msra.mxu0 0
  %6397 = vmatprep.subr.bf16.mxu0 0
  %6398 = vmatpush1.bf16.msra.mxu0 0
  %6399 = vmatprep.subr.bf16.mxu0 0
  %6400 = vmatpush1.bf16.msra.mxu0 0
  %6401 = vmatprep.subr.bf16.mxu0 0
  %6402 = vmatpush1.bf16.msra.mxu0 0
  %6403 = vmatprep.subr.bf16.mxu0 0
  %6404 = vmatpush1.bf16.msra.mxu0 0
  %6405 = vmatprep.mubr.bf16.mxu0 0
  %6406 = vmatmul.mubr.bf16.gmra.mrb[0].mxu0 %v6371
  %v6407 = vpop.f32.mrb[0].mxu0
  %v6408 = vadd.f32 0.0, %v6407
  %v6409 = vpop.f32.mrb[0].mxu0
  %v6410 = vpop.f32.mrb[0].mxu0
  %v6411 = vpop.f32.mrb[0].mxu0
  %6412 = vdwg.mxu0
  %v6413 = vadd.f32 %v6331, %v6408
  %6414 = vst [vmem:[%s11] sm:$0xff] %v6413
  // Predicated region
  $region46: #{_lambda_.5} parent=0 // pred_check
    _
  $region47: #{_lambda_.5} parent=0 // pred_check_branch
    %6416 = sbr.rel (0) target = $region49
  $region48: #{_lambda_.5} parent=0 // pred_region
    _
  $region49: #{_lambda_.5} parent=0 // pred_fallthru
    _
  // Predicated region
  $region50: #{_lambda_.5} parent=0 // pred_check
    _
  $region51: #{_lambda_.5} parent=0 // pred_check_branch
    %6418 = sbr.rel (0) target = $region53
  $region52: #{_lambda_.5} parent=0 // pred_region
    _
  $region53: #{_lambda_.5} parent=0 // pred_fallthru
    _

</llo_original>
